<compile_context>
chip_gen: v7x
topology: tpu7x:2x2x1
jax: 0.10.0
libtpu: 0.0.40
codegen_flags: <defaults>
</compile_context>

<pallas_src>
import functools

import jax
import jax.numpy as jnp
import numpy as np
from jax import lax
from jax.experimental import pallas as pl
from jax.experimental.pallas import tpu as pltpu

# TODO(synk): on v6e/v7x set this to jnp.bfloat16 for MXU throughput at
# production channel counts (f32 accumulation is kept via
# preferred_element_type); f32 is used here so the check against the XLA
# reference stays tight and because v5e has no bf16 VPU.
_MXU_DTYPE = jnp.float32
_VMEM_LIMIT_BYTES = 32 * 1024 * 1024


# ----------------------------------------------------------------------------
# Fused inception kernel (one grid step = one batch element)
# ----------------------------------------------------------------------------
def _inception_kernel(xp_ref, m_ref,
                      wa_ref, sa_ref, ba_ref,
                      w3_ref, s3_ref, b3_ref,
                      w5_ref, s5_ref, b5_ref,
                      wp_ref, sp_ref, bp_ref,
                      o_ref, *, H, W, f1, f3r, f3, f5r, f5, fp):
    """xp_ref: (1, H+4, Wp, Cin) zero-padded input (Wp multiple of 8).
       m_ref : (1, H+4, Wp, 1)   interior mask (1 inside the original image).
       o_ref : (1, Ctot, H*W)    lane-dense, NCHW-friendly output layout."""
    Hp, Wpe, cin = xp_ref.shape[1], xp_ref.shape[2], xp_ref.shape[3]
    HW = H * W
    f1f = f1 + f3r + f5r

    xp = xp_ref[0]                          # (Hp, Wpe, Cin) — read x once
    m = m_ref[0]                            # (Hp, Wpe, 1)

    # ---- fused 1x1 convs: branch1 + 3x3-reduce + 5x5-reduce in ONE matmul ----
    z = jnp.dot(xp.reshape(Hp * Wpe, cin).astype(_MXU_DTYPE),
                wa_ref[...].astype(_MXU_DTYPE),
                preferred_element_type=jnp.float32)          # (Hp*Wpe, f1f)
    z = jnp.maximum(z * sa_ref[...] + ba_ref[...], 0.0)      # BN(eval)+bias+ReLU
    z = z.reshape(Hp, Wpe, f1f)

    y1 = z[2:2 + H, 2:2 + W, :f1].reshape(HW, f1)            # branch 1 output

    # zero the halo so downstream taps see PyTorch's zero padding
    zm = z * m
    r2p = zm[:, :, f1:f1 + f3r]                              # (Hp, Wpe, f3r)
    r3p = zm[:, :, f1 + f3r:]                                # (Hp, Wpe, f5r)

    # ---- KxK conv as a single MXU matmul via im2col ----
    def conv_im2col(rp, k, off, w_ref, s_ref, b_ref):
        taps = [rp[off + kh:off + kh + H, off + kw:off + kw + W, :].reshape(HW, -1)
                for kh in range(k) for kw in range(k)]
        col = jnp.concatenate(taps, axis=-1).astype(_MXU_DTYPE)   # (HW, k*k*Cr)
        y = jnp.dot(col, w_ref[...].astype(_MXU_DTYPE),
                    preferred_element_type=jnp.float32)
        return jnp.maximum(y * s_ref[...] + b_ref[...], 0.0)

    y2 = conv_im2col(r2p, 3, 1, w3_ref, s3_ref, b3_ref)      # branch 2 (3x3)
    y3 = conv_im2col(r3p, 5, 0, w5_ref, s5_ref, b5_ref)      # branch 3 (5x5)

    # ---- branch 4: 3x3/s1/p1 maxpool (-inf halo) + 1x1 conv ----
    xneg = xp * m - (1.0 - m) * 1e30                         # -inf-like halo
    pooled = xneg[1:1 + H, 1:1 + W, :]
    for kh in range(3):
        for kw in range(3):
            if kh == 0 and kw == 0:
                continue
            pooled = jnp.maximum(
                pooled, xneg[1 + kh:1 + kh + H, 1 + kw:1 + kw + W, :])
    y4 = jnp.dot(pooled.reshape(HW, cin).astype(_MXU_DTYPE),
                 wp_ref[...].astype(_MXU_DTYPE),
                 preferred_element_type=jnp.float32)
    y4 = jnp.maximum(y4 * sp_ref[...] + bp_ref[...], 0.0)

    # ---- lane-dense stores in (C, H*W) layout (== NCHW after a reshape) ----
    o_ref[0, 0:f1, :] = y1.T.astype(o_ref.dtype)
    o_ref[0, f1:f1 + f3, :] = y2.T.astype(o_ref.dtype)
    o_ref[0, f1 + f3:f1 + f3 + f5, :] = y3.T.astype(o_ref.dtype)
    o_ref[0, f1 + f3 + f5:, :] = y4.T.astype(o_ref.dtype)


# ----------------------------------------------------------------------------
# Wrapper: layout prep + pallas_call
# ----------------------------------------------------------------------------
def inception_forward(x_nchw, params):
    N, cin, H, W = x_nchw.shape
    w_1, s_1, c_1 = params["b1"]
    w_2r, s_2r, c_2r = params["b2_reduce"]
    w_2, s_2, c_2 = params["b2"]
    w_3r, s_3r, c_3r = params["b3_reduce"]
    w_3, s_3, c_3 = params["b3"]
    w_4, s_4, c_4 = params["b4"]
    f1, f3r, f3 = w_1.shape[-1], w_2r.shape[-1], w_2.shape[-1]
    f5r, f5, fp = w_3r.shape[-1], w_3.shape[-1], w_4.shape[-1]
    f1f = f1 + f3r + f5r
    ctot = f1 + f3 + f5 + fp

    # --- input layout: NCHW -> NHWC, one zero pad by the max halo (2). The
    #     right edge is padded so the padded width is a multiple of 8. ---
    x = jnp.transpose(x_nchw, (0, 2, 3, 1))
    w_extra = (-(W + 4)) % 8
    Hp, Wpe = H + 4, W + 4 + w_extra
    xp = jnp.pad(x, ((0, 0), (2, 2), (2, 2 + w_extra), (0, 0)))
    mask = jnp.pad(jnp.ones((1, H, W, 1), jnp.float32),
                   ((0, 0), (2, 2), (2, 2 + w_extra), (0, 0)))

    # --- weight prep (layout only): fused 1x1 weights + im2col reshapes ---
    wa = jnp.concatenate([w_1.reshape(cin, f1), w_2r.reshape(cin, f3r),
                          w_3r.reshape(cin, f5r)], axis=1)
    sa = jnp.concatenate([s_1, s_2r, s_3r]).reshape(1, f1f)
    ba = jnp.concatenate([c_1, c_2r, c_3r]).reshape(1, f1f)
    w3k = w_2.reshape(9 * f3r, f3)
    w5k = w_3.reshape(25 * f5r, f5)
    wpk = w_4.reshape(cin, fp)

    kernel = functools.partial(_inception_kernel, H=H, W=W, f1=f1, f3r=f3r,
                               f3=f3, f5r=f5r, f5=f5, fp=fp)

    def full(shape):
        return pl.BlockSpec(shape, lambda n: (0,) * len(shape))

    out = pl.pallas_call(
        kernel,
        out_shape=jax.ShapeDtypeStruct((N, ctot, H * W), jnp.float32),
        grid=(N,),
        in_specs=[
            pl.BlockSpec((1, Hp, Wpe, cin), lambda n: (n, 0, 0, 0)),
            pl.BlockSpec((1, Hp, Wpe, 1), lambda n: (0, 0, 0, 0)),
            full((cin, f1f)), full((1, f1f)), full((1, f1f)),
            full((9 * f3r, f3)), full((1, f3)), full((1, f3)),
            full((25 * f5r, f5)), full((1, f5)), full((1, f5)),
            full((cin, fp)), full((1, fp)), full((1, fp)),
        ],
        out_specs=pl.BlockSpec((1, ctot, H * W), lambda n: (n, 0, 0)),
        compiler_params=pltpu.CompilerParams(
            dimension_semantics=("parallel",),
            vmem_limit_bytes=_VMEM_LIMIT_BYTES),
    )(xp, mask, wa, sa, ba,
      w3k, s_2.reshape(1, f3), c_2.reshape(1, f3),
      w5k, s_3.reshape(1, f5), c_3.reshape(1, f5),
      wpk, s_4.reshape(1, fp), c_4.reshape(1, fp))

    return out.reshape(N, ctot, H, W)        # already NCHW


# ----------------------------------------------------------------------------
# Parameter construction (deterministic, synthetic)
# ----------------------------------------------------------------------------
def make_conv_block_params(key, cin, cout, k):
    kw_key, kb_key, g_key, b_key = jax.random.split(key, 4)
    fan_in = float(cin * k * k)
    w = jax.random.normal(kw_key, (k, k, cin, cout), jnp.float32) / np.sqrt(fan_in)
    conv_b = 0.1 * jax.random.normal(kb_key, (cout,), jnp.float32)
    gamma = 1.0 + 0.1 * jax.random.normal(g_key, (cout,), jnp.float32)
    beta = 0.1 * jax.random.normal(b_key, (cout,), jnp.float32)
    running_mean = jnp.zeros((cout,), jnp.float32)
    running_var = jnp.ones((cout,), jnp.float32)
    eps = 1e-5
    scale = gamma / jnp.sqrt(running_var + eps)      # eval-mode BN fold
    bias = beta + scale * (conv_b - running_mean)
    return w, scale, bias


def make_inception_params(key, in_ch, f1, f3r, f3, f5r, f5, fp):
    ks = jax.random.split(key, 6)
    return {
        "b1":        make_conv_block_params(ks[0], in_ch, f1, 1),
        "b2_reduce": make_conv_block_params(ks[1], in_ch, f3r, 1),
        "b2":        make_conv_block_params(ks[2], f3r, f3, 3),
        "b3_reduce": make_conv_block_params(ks[3], in_ch, f5r, 1),
        "b3":        make_conv_block_params(ks[4], f5r, f5, 5),
        "b4":        make_conv_block_params(ks[5], in_ch, fp, 1),
    }


# ----------------------------------------------------------------------------
# Pure-JAX reference (XLA conv / reduce_window)
# ----------------------------------------------------------------------------
def _conv_block_ref(x, w, scale, bias, pad):
    y = lax.conv_general_dilated(
        x, w, window_strides=(1, 1), padding=[(pad, pad), (pad, pad)],
        dimension_numbers=("NHWC", "HWIO", "NHWC"))
    y = y * scale.reshape(1, 1, 1, -1) + bias.reshape(1, 1, 1, -1)
    return jnp.maximum(y, 0.0)


def inception_forward_ref(x_nchw, params):
    x = jnp.transpose(x_nchw, (0, 2, 3, 1))
    b1 = _conv_block_ref(x, *params["b1"], pad=0)
    b2 = _conv_block_ref(x, *params["b2_reduce"], pad=0)
    b2 = _conv_block_ref(b2, *params["b2"], pad=1)
    b3 = _conv_block_ref(x, *params["b3_reduce"], pad=0)
    b3 = _conv_block_ref(b3, *params["b3"], pad=2)
    b4 = lax.reduce_window(x, -jnp.inf, lax.max, (1, 3, 3, 1), (1, 1, 1, 1),
                           [(0, 0), (1, 1), (1, 1), (0, 0)])
    b4 = _conv_block_ref(b4, *params["b4"], pad=0)
    y = jnp.concatenate([b1, b2, b3, b4], axis=-1)
    return jnp.transpose(y, (0, 3, 1, 2))


# ----------------------------------------------------------------------------
if __name__ == "__main__":
    key = jax.random.PRNGKey(0)
    xkey, pkey = jax.random.split(key)

    # Small shapes consistent with the module: N=2, C_in=4, H=W=16.
    N, C_in, H, W = 2, 4, 16, 16
    f1, f3r, f3, f5r, f5, fp = 8, 4, 8, 4, 8, 8   # -> 32 output channels

    x = jax.random.normal(xkey, (N, C_in, H, W), jnp.float32)
    params = make_inception_params(pkey, C_in, f1, f3r, f3, f5r, f5, fp)

    fwd = jax.jit(inception_forward)
    out = jax.block_until_ready(fwd(x, params))
    ref = jax.block_until_ready(inception_forward_ref(x, params))

    assert out.shape == (N, f1 + f3 + f5 + fp, H, W), out.shape
    np.testing.assert_allclose(np.asarray(out), np.asarray(ref),
                               rtol=2e-4, atol=2e-4)
    print("KERNEL_OK")
</pallas_src>

<mosaic_0001>
module attributes {stable_mosaic.version = 11 : i64} {
  func.func @_inception_kernel(%arg0: i32, %arg1: memref<1x20x24x4xf32, #tpu.memory_space<vmem>>, %arg2: memref<1x20x24x1xf32, #tpu.memory_space<vmem>>, %arg3: memref<4x16xf32, #tpu.memory_space<vmem>>, %arg4: memref<1x16xf32, #tpu.memory_space<vmem>>, %arg5: memref<1x16xf32, #tpu.memory_space<vmem>>, %arg6: memref<36x8xf32, #tpu.memory_space<vmem>>, %arg7: memref<1x8xf32, #tpu.memory_space<vmem>>, %arg8: memref<1x8xf32, #tpu.memory_space<vmem>>, %arg9: memref<100x8xf32, #tpu.memory_space<vmem>>, %arg10: memref<1x8xf32, #tpu.memory_space<vmem>>, %arg11: memref<1x8xf32, #tpu.memory_space<vmem>>, %arg12: memref<4x8xf32, #tpu.memory_space<vmem>>, %arg13: memref<1x8xf32, #tpu.memory_space<vmem>>, %arg14: memref<1x8xf32, #tpu.memory_space<vmem>>, %arg15: memref<1x32x256xf32, #tpu.memory_space<vmem>>) attributes {dimension_semantics = [#tpu.dimension_semantics<parallel>], iteration_bounds = array<i64: 2>, scalar_prefetch = 0 : i64, scratch_operands = 0 : i64, tpu.core_type = #tpu.core_type<tc>, window_params = [{transform_indices = @transform_0, window_bounds = array<i64: 1, 20, 24, 4>}, {pipeline_mode = #tpu.pipeline_mode<synchronous>, transform_indices = @transform_1, window_bounds = array<i64: 1, 20, 24, 1>}, {pipeline_mode = #tpu.pipeline_mode<synchronous>, transform_indices = @transform_2, window_bounds = array<i64: 4, 16>}, {pipeline_mode = #tpu.pipeline_mode<synchronous>, transform_indices = @transform_3, window_bounds = array<i64: 1, 16>}, {pipeline_mode = #tpu.pipeline_mode<synchronous>, transform_indices = @transform_4, window_bounds = array<i64: 1, 16>}, {pipeline_mode = #tpu.pipeline_mode<synchronous>, transform_indices = @transform_5, window_bounds = array<i64: 36, 8>}, {pipeline_mode = #tpu.pipeline_mode<synchronous>, transform_indices = @transform_6, window_bounds = array<i64: 1, 8>}, {pipeline_mode = #tpu.pipeline_mode<synchronous>, transform_indices = @transform_7, window_bounds = array<i64: 1, 8>}, {pipeline_mode = #tpu.pipeline_mode<synchronous>, transform_indices = @transform_8, window_bounds = array<i64: 100, 8>}, {pipeline_mode = #tpu.pipeline_mode<synchronous>, transform_indices = @transform_9, window_bounds = array<i64: 1, 8>}, {pipeline_mode = #tpu.pipeline_mode<synchronous>, transform_indices = @transform_10, window_bounds = array<i64: 1, 8>}, {pipeline_mode = #tpu.pipeline_mode<synchronous>, transform_indices = @transform_11, window_bounds = array<i64: 4, 8>}, {pipeline_mode = #tpu.pipeline_mode<synchronous>, transform_indices = @transform_12, window_bounds = array<i64: 1, 8>}, {pipeline_mode = #tpu.pipeline_mode<synchronous>, transform_indices = @transform_13, window_bounds = array<i64: 1, 8>}, {transform_indices = @transform_14, window_bounds = array<i64: 1, 32, 256>}]} {
    %c0 = arith.constant 0 : index
    %c0_0 = arith.constant 0 : index
    %c0_1 = arith.constant 0 : index
    %c0_2 = arith.constant 0 : index
    %0 = vector.load %arg1[%c0, %c0_0, %c0_1, %c0_2] : memref<1x20x24x4xf32, #tpu.memory_space<vmem>>, vector<1x20x24x4xf32>
    %1 = vector.shape_cast %0 : vector<1x20x24x4xf32> to vector<20x24x4xf32>
    %c0_3 = arith.constant 0 : index
    %c0_4 = arith.constant 0 : index
    %c0_5 = arith.constant 0 : index
    %c0_6 = arith.constant 0 : index
    %2 = vector.load %arg2[%c0_3, %c0_4, %c0_5, %c0_6] : memref<1x20x24x1xf32, #tpu.memory_space<vmem>>, vector<1x20x24x1xf32>
    %3 = vector.shape_cast %2 : vector<1x20x24x1xf32> to vector<20x24x1xf32>
    %4 = vector.shape_cast %1 : vector<20x24x4xf32> to vector<480x4xf32>
    %c0_7 = arith.constant 0 : index
    %c0_8 = arith.constant 0 : index
    %5 = vector.load %arg3[%c0_7, %c0_8] : memref<4x16xf32, #tpu.memory_space<vmem>>, vector<4x16xf32>
    %cst = arith.constant dense<0.000000e+00> : vector<480x16xf32>
    %6 = tpu.matmul %4, %5, %cst {dimension_numbers = #tpu.dot_dimension_numbers<[1], [0], [0], [1], [0, 0, 1, 1], [], []>} : vector<480x4xf32>, vector<4x16xf32>, vector<480x16xf32> -> vector<480x16xf32>
    %c0_9 = arith.constant 0 : index
    %c0_10 = arith.constant 0 : index
    %7 = vector.load %arg4[%c0_9, %c0_10] : memref<1x16xf32, #tpu.memory_space<vmem>>, vector<1x16xf32>
    %8 = vector.broadcast %7 : vector<1x16xf32> to vector<480x16xf32>
    %9 = arith.mulf %6, %8 : vector<480x16xf32>
    %c0_11 = arith.constant 0 : index
    %c0_12 = arith.constant 0 : index
    %10 = vector.load %arg5[%c0_11, %c0_12] : memref<1x16xf32, #tpu.memory_space<vmem>>, vector<1x16xf32>
    %11 = vector.broadcast %10 : vector<1x16xf32> to vector<480x16xf32>
    %12 = arith.addf %9, %11 : vector<480x16xf32>
    %cst_13 = arith.constant 0.000000e+00 : f32
    %13 = vector.broadcast %cst_13 : f32 to vector<480x16xf32>
    %14 = arith.maximumf %12, %13 : vector<480x16xf32>
    %15 = vector.shape_cast %14 : vector<480x16xf32> to vector<20x24x16xf32>
    %16 = vector.extract_strided_slice %15 {offsets = [2, 2, 0], sizes = [16, 16, 8], strides = [1, 1, 1]} : vector<20x24x16xf32> to vector<16x16x8xf32>
    %17 = vector.shape_cast %16 : vector<16x16x8xf32> to vector<256x8xf32>
    %18 = vector.broadcast %3 : vector<20x24x1xf32> to vector<20x24x16xf32>
    %19 = arith.mulf %15, %18 : vector<20x24x16xf32>
    %20 = vector.extract_strided_slice %19 {offsets = [0, 0, 8], sizes = [20, 24, 4], strides = [1, 1, 1]} : vector<20x24x16xf32> to vector<20x24x4xf32>
    %21 = vector.extract_strided_slice %19 {offsets = [0, 0, 12], sizes = [20, 24, 4], strides = [1, 1, 1]} : vector<20x24x16xf32> to vector<20x24x4xf32>
    %22 = vector.extract_strided_slice %20 {offsets = [1, 1, 0], sizes = [16, 16, 4], strides = [1, 1, 1]} : vector<20x24x4xf32> to vector<16x16x4xf32>
    %23 = vector.shape_cast %22 : vector<16x16x4xf32> to vector<256x4xf32>
    %24 = vector.extract_strided_slice %20 {offsets = [1, 2, 0], sizes = [16, 16, 4], strides = [1, 1, 1]} : vector<20x24x4xf32> to vector<16x16x4xf32>
    %25 = vector.shape_cast %24 : vector<16x16x4xf32> to vector<256x4xf32>
    %26 = vector.extract_strided_slice %20 {offsets = [1, 3, 0], sizes = [16, 16, 4], strides = [1, 1, 1]} : vector<20x24x4xf32> to vector<16x16x4xf32>
    %27 = vector.shape_cast %26 : vector<16x16x4xf32> to vector<256x4xf32>
    %28 = vector.extract_strided_slice %20 {offsets = [2, 1, 0], sizes = [16, 16, 4], strides = [1, 1, 1]} : vector<20x24x4xf32> to vector<16x16x4xf32>
    %29 = vector.shape_cast %28 : vector<16x16x4xf32> to vector<256x4xf32>
    %30 = vector.extract_strided_slice %20 {offsets = [2, 2, 0], sizes = [16, 16, 4], strides = [1, 1, 1]} : vector<20x24x4xf32> to vector<16x16x4xf32>
    %31 = vector.shape_cast %30 : vector<16x16x4xf32> to vector<256x4xf32>
    %32 = vector.extract_strided_slice %20 {offsets = [2, 3, 0], sizes = [16, 16, 4], strides = [1, 1, 1]} : vector<20x24x4xf32> to vector<16x16x4xf32>
    %33 = vector.shape_cast %32 : vector<16x16x4xf32> to vector<256x4xf32>
    %34 = vector.extract_strided_slice %20 {offsets = [3, 1, 0], sizes = [16, 16, 4], strides = [1, 1, 1]} : vector<20x24x4xf32> to vector<16x16x4xf32>
    %35 = vector.shape_cast %34 : vector<16x16x4xf32> to vector<256x4xf32>
    %36 = vector.extract_strided_slice %20 {offsets = [3, 2, 0], sizes = [16, 16, 4], strides = [1, 1, 1]} : vector<20x24x4xf32> to vector<16x16x4xf32>
    %37 = vector.shape_cast %36 : vector<16x16x4xf32> to vector<256x4xf32>
    %38 = vector.extract_strided_slice %20 {offsets = [3, 3, 0], sizes = [16, 16, 4], strides = [1, 1, 1]} : vector<20x24x4xf32> to vector<16x16x4xf32>
    %39 = vector.shape_cast %38 : vector<16x16x4xf32> to vector<256x4xf32>
    %40 = tpu.concatenate %23, %25, %27, %29, %31, %33, %35, %37, %39 in 1 : vector<256x4xf32>, vector<256x4xf32>, vector<256x4xf32>, vector<256x4xf32>, vector<256x4xf32>, vector<256x4xf32>, vector<256x4xf32>, vector<256x4xf32>, vector<256x4xf32> -> vector<256x36xf32>
    %c0_14 = arith.constant 0 : index
    %c0_15 = arith.constant 0 : index
    %41 = vector.load %arg6[%c0_14, %c0_15] : memref<36x8xf32, #tpu.memory_space<vmem>>, vector<36x8xf32>
    %cst_16 = arith.constant dense<0.000000e+00> : vector<256x8xf32>
    %42 = tpu.matmul %40, %41, %cst_16 {dimension_numbers = #tpu.dot_dimension_numbers<[1], [0], [0], [1], [0, 0, 1, 1], [], []>} : vector<256x36xf32>, vector<36x8xf32>, vector<256x8xf32> -> vector<256x8xf32>
    %c0_17 = arith.constant 0 : index
    %c0_18 = arith.constant 0 : index
    %43 = vector.load %arg7[%c0_17, %c0_18] : memref<1x8xf32, #tpu.memory_space<vmem>>, vector<1x8xf32>
    %44 = vector.broadcast %43 : vector<1x8xf32> to vector<256x8xf32>
    %45 = arith.mulf %42, %44 : vector<256x8xf32>
    %c0_19 = arith.constant 0 : index
    %c0_20 = arith.constant 0 : index
    %46 = vector.load %arg8[%c0_19, %c0_20] : memref<1x8xf32, #tpu.memory_space<vmem>>, vector<1x8xf32>
    %47 = vector.broadcast %46 : vector<1x8xf32> to vector<256x8xf32>
    %48 = arith.addf %45, %47 : vector<256x8xf32>
    %cst_21 = arith.constant 0.000000e+00 : f32
    %49 = vector.broadcast %cst_21 : f32 to vector<256x8xf32>
    %50 = arith.maximumf %48, %49 : vector<256x8xf32>
    %51 = vector.extract_strided_slice %21 {offsets = [0, 0, 0], sizes = [16, 16, 4], strides = [1, 1, 1]} : vector<20x24x4xf32> to vector<16x16x4xf32>
    %52 = vector.shape_cast %51 : vector<16x16x4xf32> to vector<256x4xf32>
    %53 = vector.extract_strided_slice %21 {offsets = [0, 1, 0], sizes = [16, 16, 4], strides = [1, 1, 1]} : vector<20x24x4xf32> to vector<16x16x4xf32>
    %54 = vector.shape_cast %53 : vector<16x16x4xf32> to vector<256x4xf32>
    %55 = vector.extract_strided_slice %21 {offsets = [0, 2, 0], sizes = [16, 16, 4], strides = [1, 1, 1]} : vector<20x24x4xf32> to vector<16x16x4xf32>
    %56 = vector.shape_cast %55 : vector<16x16x4xf32> to vector<256x4xf32>
    %57 = vector.extract_strided_slice %21 {offsets = [0, 3, 0], sizes = [16, 16, 4], strides = [1, 1, 1]} : vector<20x24x4xf32> to vector<16x16x4xf32>
    %58 = vector.shape_cast %57 : vector<16x16x4xf32> to vector<256x4xf32>
    %59 = vector.extract_strided_slice %21 {offsets = [0, 4, 0], sizes = [16, 16, 4], strides = [1, 1, 1]} : vector<20x24x4xf32> to vector<16x16x4xf32>
    %60 = vector.shape_cast %59 : vector<16x16x4xf32> to vector<256x4xf32>
    %61 = vector.extract_strided_slice %21 {offsets = [1, 0, 0], sizes = [16, 16, 4], strides = [1, 1, 1]} : vector<20x24x4xf32> to vector<16x16x4xf32>
    %62 = vector.shape_cast %61 : vector<16x16x4xf32> to vector<256x4xf32>
    %63 = vector.extract_strided_slice %21 {offsets = [1, 1, 0], sizes = [16, 16, 4], strides = [1, 1, 1]} : vector<20x24x4xf32> to vector<16x16x4xf32>
    %64 = vector.shape_cast %63 : vector<16x16x4xf32> to vector<256x4xf32>
    %65 = vector.extract_strided_slice %21 {offsets = [1, 2, 0], sizes = [16, 16, 4], strides = [1, 1, 1]} : vector<20x24x4xf32> to vector<16x16x4xf32>
    %66 = vector.shape_cast %65 : vector<16x16x4xf32> to vector<256x4xf32>
    %67 = vector.extract_strided_slice %21 {offsets = [1, 3, 0], sizes = [16, 16, 4], strides = [1, 1, 1]} : vector<20x24x4xf32> to vector<16x16x4xf32>
    %68 = vector.shape_cast %67 : vector<16x16x4xf32> to vector<256x4xf32>
    %69 = vector.extract_strided_slice %21 {offsets = [1, 4, 0], sizes = [16, 16, 4], strides = [1, 1, 1]} : vector<20x24x4xf32> to vector<16x16x4xf32>
    %70 = vector.shape_cast %69 : vector<16x16x4xf32> to vector<256x4xf32>
    %71 = vector.extract_strided_slice %21 {offsets = [2, 0, 0], sizes = [16, 16, 4], strides = [1, 1, 1]} : vector<20x24x4xf32> to vector<16x16x4xf32>
    %72 = vector.shape_cast %71 : vector<16x16x4xf32> to vector<256x4xf32>
    %73 = vector.extract_strided_slice %21 {offsets = [2, 1, 0], sizes = [16, 16, 4], strides = [1, 1, 1]} : vector<20x24x4xf32> to vector<16x16x4xf32>
    %74 = vector.shape_cast %73 : vector<16x16x4xf32> to vector<256x4xf32>
    %75 = vector.extract_strided_slice %21 {offsets = [2, 2, 0], sizes = [16, 16, 4], strides = [1, 1, 1]} : vector<20x24x4xf32> to vector<16x16x4xf32>
    %76 = vector.shape_cast %75 : vector<16x16x4xf32> to vector<256x4xf32>
    %77 = vector.extract_strided_slice %21 {offsets = [2, 3, 0], sizes = [16, 16, 4], strides = [1, 1, 1]} : vector<20x24x4xf32> to vector<16x16x4xf32>
    %78 = vector.shape_cast %77 : vector<16x16x4xf32> to vector<256x4xf32>
    %79 = vector.extract_strided_slice %21 {offsets = [2, 4, 0], sizes = [16, 16, 4], strides = [1, 1, 1]} : vector<20x24x4xf32> to vector<16x16x4xf32>
    %80 = vector.shape_cast %79 : vector<16x16x4xf32> to vector<256x4xf32>
    %81 = vector.extract_strided_slice %21 {offsets = [3, 0, 0], sizes = [16, 16, 4], strides = [1, 1, 1]} : vector<20x24x4xf32> to vector<16x16x4xf32>
    %82 = vector.shape_cast %81 : vector<16x16x4xf32> to vector<256x4xf32>
    %83 = vector.extract_strided_slice %21 {offsets = [3, 1, 0], sizes = [16, 16, 4], strides = [1, 1, 1]} : vector<20x24x4xf32> to vector<16x16x4xf32>
    %84 = vector.shape_cast %83 : vector<16x16x4xf32> to vector<256x4xf32>
    %85 = vector.extract_strided_slice %21 {offsets = [3, 2, 0], sizes = [16, 16, 4], strides = [1, 1, 1]} : vector<20x24x4xf32> to vector<16x16x4xf32>
    %86 = vector.shape_cast %85 : vector<16x16x4xf32> to vector<256x4xf32>
    %87 = vector.extract_strided_slice %21 {offsets = [3, 3, 0], sizes = [16, 16, 4], strides = [1, 1, 1]} : vector<20x24x4xf32> to vector<16x16x4xf32>
    %88 = vector.shape_cast %87 : vector<16x16x4xf32> to vector<256x4xf32>
    %89 = vector.extract_strided_slice %21 {offsets = [3, 4, 0], sizes = [16, 16, 4], strides = [1, 1, 1]} : vector<20x24x4xf32> to vector<16x16x4xf32>
    %90 = vector.shape_cast %89 : vector<16x16x4xf32> to vector<256x4xf32>
    %91 = vector.extract_strided_slice %21 {offsets = [4, 0, 0], sizes = [16, 16, 4], strides = [1, 1, 1]} : vector<20x24x4xf32> to vector<16x16x4xf32>
    %92 = vector.shape_cast %91 : vector<16x16x4xf32> to vector<256x4xf32>
    %93 = vector.extract_strided_slice %21 {offsets = [4, 1, 0], sizes = [16, 16, 4], strides = [1, 1, 1]} : vector<20x24x4xf32> to vector<16x16x4xf32>
    %94 = vector.shape_cast %93 : vector<16x16x4xf32> to vector<256x4xf32>
    %95 = vector.extract_strided_slice %21 {offsets = [4, 2, 0], sizes = [16, 16, 4], strides = [1, 1, 1]} : vector<20x24x4xf32> to vector<16x16x4xf32>
    %96 = vector.shape_cast %95 : vector<16x16x4xf32> to vector<256x4xf32>
    %97 = vector.extract_strided_slice %21 {offsets = [4, 3, 0], sizes = [16, 16, 4], strides = [1, 1, 1]} : vector<20x24x4xf32> to vector<16x16x4xf32>
    %98 = vector.shape_cast %97 : vector<16x16x4xf32> to vector<256x4xf32>
    %99 = vector.extract_strided_slice %21 {offsets = [4, 4, 0], sizes = [16, 16, 4], strides = [1, 1, 1]} : vector<20x24x4xf32> to vector<16x16x4xf32>
    %100 = vector.shape_cast %99 : vector<16x16x4xf32> to vector<256x4xf32>
    %101 = tpu.concatenate %52, %54, %56, %58, %60, %62, %64, %66, %68, %70, %72, %74, %76, %78, %80, %82 in 1 : vector<256x4xf32>, vector<256x4xf32>, vector<256x4xf32>, vector<256x4xf32>, vector<256x4xf32>, vector<256x4xf32>, vector<256x4xf32>, vector<256x4xf32>, vector<256x4xf32>, vector<256x4xf32>, vector<256x4xf32>, vector<256x4xf32>, vector<256x4xf32>, vector<256x4xf32>, vector<256x4xf32>, vector<256x4xf32> -> vector<256x64xf32>
    %102 = tpu.concatenate %84, %86, %88, %90, %92, %94, %96, %98, %100 in 1 : vector<256x4xf32>, vector<256x4xf32>, vector<256x4xf32>, vector<256x4xf32>, vector<256x4xf32>, vector<256x4xf32>, vector<256x4xf32>, vector<256x4xf32>, vector<256x4xf32> -> vector<256x36xf32>
    %103 = tpu.concatenate %101, %102 in 1 : vector<256x64xf32>, vector<256x36xf32> -> vector<256x100xf32>
    %c0_22 = arith.constant 0 : index
    %c0_23 = arith.constant 0 : index
    %104 = vector.load %arg9[%c0_22, %c0_23] : memref<100x8xf32, #tpu.memory_space<vmem>>, vector<100x8xf32>
    %cst_24 = arith.constant dense<0.000000e+00> : vector<256x8xf32>
    %105 = tpu.matmul %103, %104, %cst_24 {dimension_numbers = #tpu.dot_dimension_numbers<[1], [0], [0], [1], [0, 0, 1, 1], [], []>} : vector<256x100xf32>, vector<100x8xf32>, vector<256x8xf32> -> vector<256x8xf32>
    %c0_25 = arith.constant 0 : index
    %c0_26 = arith.constant 0 : index
    %106 = vector.load %arg10[%c0_25, %c0_26] : memref<1x8xf32, #tpu.memory_space<vmem>>, vector<1x8xf32>
    %107 = vector.broadcast %106 : vector<1x8xf32> to vector<256x8xf32>
    %108 = arith.mulf %105, %107 : vector<256x8xf32>
    %c0_27 = arith.constant 0 : index
    %c0_28 = arith.constant 0 : index
    %109 = vector.load %arg11[%c0_27, %c0_28] : memref<1x8xf32, #tpu.memory_space<vmem>>, vector<1x8xf32>
    %110 = vector.broadcast %109 : vector<1x8xf32> to vector<256x8xf32>
    %111 = arith.addf %108, %110 : vector<256x8xf32>
    %cst_29 = arith.constant 0.000000e+00 : f32
    %112 = vector.broadcast %cst_29 : f32 to vector<256x8xf32>
    %113 = arith.maximumf %111, %112 : vector<256x8xf32>
    %114 = vector.broadcast %3 : vector<20x24x1xf32> to vector<20x24x4xf32>
    %115 = arith.mulf %1, %114 : vector<20x24x4xf32>
    %cst_30 = arith.constant 1.000000e+00 : f32
    %116 = vector.broadcast %cst_30 : f32 to vector<20x24x1xf32>
    %117 = arith.subf %116, %3 : vector<20x24x1xf32>
    %cst_31 = arith.constant 1.000000e+30 : f32
    %118 = vector.broadcast %cst_31 : f32 to vector<20x24x1xf32>
    %119 = arith.mulf %117, %118 : vector<20x24x1xf32>
    %120 = vector.broadcast %119 : vector<20x24x1xf32> to vector<20x24x4xf32>
    %121 = arith.subf %115, %120 : vector<20x24x4xf32>
    %122 = vector.extract_strided_slice %121 {offsets = [1, 1, 0], sizes = [16, 16, 4], strides = [1, 1, 1]} : vector<20x24x4xf32> to vector<16x16x4xf32>
    %123 = vector.extract_strided_slice %121 {offsets = [1, 2, 0], sizes = [16, 16, 4], strides = [1, 1, 1]} : vector<20x24x4xf32> to vector<16x16x4xf32>
    %124 = arith.maximumf %122, %123 : vector<16x16x4xf32>
    %125 = vector.extract_strided_slice %121 {offsets = [1, 3, 0], sizes = [16, 16, 4], strides = [1, 1, 1]} : vector<20x24x4xf32> to vector<16x16x4xf32>
    %126 = arith.maximumf %124, %125 : vector<16x16x4xf32>
    %127 = vector.extract_strided_slice %121 {offsets = [2, 1, 0], sizes = [16, 16, 4], strides = [1, 1, 1]} : vector<20x24x4xf32> to vector<16x16x4xf32>
    %128 = arith.maximumf %126, %127 : vector<16x16x4xf32>
    %129 = vector.extract_strided_slice %121 {offsets = [2, 2, 0], sizes = [16, 16, 4], strides = [1, 1, 1]} : vector<20x24x4xf32> to vector<16x16x4xf32>
    %130 = arith.maximumf %128, %129 : vector<16x16x4xf32>
    %131 = vector.extract_strided_slice %121 {offsets = [2, 3, 0], sizes = [16, 16, 4], strides = [1, 1, 1]} : vector<20x24x4xf32> to vector<16x16x4xf32>
    %132 = arith.maximumf %130, %131 : vector<16x16x4xf32>
    %133 = vector.extract_strided_slice %121 {offsets = [3, 1, 0], sizes = [16, 16, 4], strides = [1, 1, 1]} : vector<20x24x4xf32> to vector<16x16x4xf32>
    %134 = arith.maximumf %132, %133 : vector<16x16x4xf32>
    %135 = vector.extract_strided_slice %121 {offsets = [3, 2, 0], sizes = [16, 16, 4], strides = [1, 1, 1]} : vector<20x24x4xf32> to vector<16x16x4xf32>
    %136 = arith.maximumf %134, %135 : vector<16x16x4xf32>
    %137 = vector.extract_strided_slice %121 {offsets = [3, 3, 0], sizes = [16, 16, 4], strides = [1, 1, 1]} : vector<20x24x4xf32> to vector<16x16x4xf32>
    %138 = arith.maximumf %136, %137 : vector<16x16x4xf32>
    %139 = vector.shape_cast %138 : vector<16x16x4xf32> to vector<256x4xf32>
    %c0_32 = arith.constant 0 : index
    %c0_33 = arith.constant 0 : index
    %140 = vector.load %arg12[%c0_32, %c0_33] : memref<4x8xf32, #tpu.memory_space<vmem>>, vector<4x8xf32>
    %cst_34 = arith.constant dense<0.000000e+00> : vector<256x8xf32>
    %141 = tpu.matmul %139, %140, %cst_34 {dimension_numbers = #tpu.dot_dimension_numbers<[1], [0], [0], [1], [0, 0, 1, 1], [], []>} : vector<256x4xf32>, vector<4x8xf32>, vector<256x8xf32> -> vector<256x8xf32>
    %c0_35 = arith.constant 0 : index
    %c0_36 = arith.constant 0 : index
    %142 = vector.load %arg13[%c0_35, %c0_36] : memref<1x8xf32, #tpu.memory_space<vmem>>, vector<1x8xf32>
    %143 = vector.broadcast %142 : vector<1x8xf32> to vector<256x8xf32>
    %144 = arith.mulf %141, %143 : vector<256x8xf32>
    %c0_37 = arith.constant 0 : index
    %c0_38 = arith.constant 0 : index
    %145 = vector.load %arg14[%c0_37, %c0_38] : memref<1x8xf32, #tpu.memory_space<vmem>>, vector<1x8xf32>
    %146 = vector.broadcast %145 : vector<1x8xf32> to vector<256x8xf32>
    %147 = arith.addf %144, %146 : vector<256x8xf32>
    %cst_39 = arith.constant 0.000000e+00 : f32
    %148 = vector.broadcast %cst_39 : f32 to vector<256x8xf32>
    %149 = arith.maximumf %147, %148 : vector<256x8xf32>
    %150 = tpu.transpose %17, [1, 0] : vector<256x8xf32> -> vector<8x256xf32>
    %c0_40 = arith.constant 0 : index
    %c0_41 = arith.constant 0 : index
    %c0_42 = arith.constant 0 : index
    %151 = vector.load %arg15[%c0_40, %c0_41, %c0_42] : memref<1x32x256xf32, #tpu.memory_space<vmem>>, vector<1x8x256xf32>
    %152 = vector.shape_cast %151 : vector<1x8x256xf32> to vector<8x256xf32>
    %153 = vector.shape_cast %150 : vector<8x256xf32> to vector<1x8x256xf32>
    tpu.vector_store %arg15[%c0_40, %c0_41, %c0_42], %153 {strides = array<i32>} : memref<1x32x256xf32, #tpu.memory_space<vmem>>, vector<1x8x256xf32>,
    %154 = tpu.transpose %50, [1, 0] : vector<256x8xf32> -> vector<8x256xf32>
    %c0_43 = arith.constant 0 : index
    %c8 = arith.constant 8 : index
    %c0_44 = arith.constant 0 : index
    %155 = vector.load %arg15[%c0_43, %c8, %c0_44] : memref<1x32x256xf32, #tpu.memory_space<vmem>>, vector<1x8x256xf32>
    %156 = vector.shape_cast %155 : vector<1x8x256xf32> to vector<8x256xf32>
    %157 = vector.shape_cast %154 : vector<8x256xf32> to vector<1x8x256xf32>
    tpu.vector_store %arg15[%c0_43, %c8, %c0_44], %157 {strides = array<i32>} : memref<1x32x256xf32, #tpu.memory_space<vmem>>, vector<1x8x256xf32>,
    %158 = tpu.transpose %113, [1, 0] : vector<256x8xf32> -> vector<8x256xf32>
    %c0_45 = arith.constant 0 : index
    %c16 = arith.constant 16 : index
    %c0_46 = arith.constant 0 : index
    %159 = vector.load %arg15[%c0_45, %c16, %c0_46] : memref<1x32x256xf32, #tpu.memory_space<vmem>>, vector<1x8x256xf32>
    %160 = vector.shape_cast %159 : vector<1x8x256xf32> to vector<8x256xf32>
    %161 = vector.shape_cast %158 : vector<8x256xf32> to vector<1x8x256xf32>
    tpu.vector_store %arg15[%c0_45, %c16, %c0_46], %161 {strides = array<i32>} : memref<1x32x256xf32, #tpu.memory_space<vmem>>, vector<1x8x256xf32>,
    %162 = tpu.transpose %149, [1, 0] : vector<256x8xf32> -> vector<8x256xf32>
    %c0_47 = arith.constant 0 : index
    %c24 = arith.constant 24 : index
    %c0_48 = arith.constant 0 : index
    %163 = vector.load %arg15[%c0_47, %c24, %c0_48] : memref<1x32x256xf32, #tpu.memory_space<vmem>>, vector<1x8x256xf32>
    %164 = vector.shape_cast %163 : vector<1x8x256xf32> to vector<8x256xf32>
    %165 = vector.shape_cast %162 : vector<8x256xf32> to vector<1x8x256xf32>
    tpu.vector_store %arg15[%c0_47, %c24, %c0_48], %165 {strides = array<i32>} : memref<1x32x256xf32, #tpu.memory_space<vmem>>, vector<1x8x256xf32>,
    return
  }
  func.func @transform_0(%arg0: i32) -> (i32, i32, i32, i32) {
    %c0_i32 = arith.constant 0 : i32
    %c0_i32_0 = arith.constant 0 : i32
    %c0_i32_1 = arith.constant 0 : i32
    %c0_i32_2 = arith.constant 0 : i32
    return %arg0, %c0_i32, %c0_i32_0, %c0_i32_1 : i32, i32, i32, i32
  }
  func.func @transform_1(%arg0: i32) -> (i32, i32, i32, i32) {
    %c0_i32 = arith.constant 0 : i32
    %c0_i32_0 = arith.constant 0 : i32
    %c0_i32_1 = arith.constant 0 : i32
    %c0_i32_2 = arith.constant 0 : i32
    %c0_i32_3 = arith.constant 0 : i32
    return %c0_i32, %c0_i32_0, %c0_i32_1, %c0_i32_2 : i32, i32, i32, i32
  }
  func.func @transform_2(%arg0: i32) -> (i32, i32) {
    %c0_i32 = arith.constant 0 : i32
    %c0_i32_0 = arith.constant 0 : i32
    %c0_i32_1 = arith.constant 0 : i32
    return %c0_i32, %c0_i32_0 : i32, i32
  }
  func.func @transform_3(%arg0: i32) -> (i32, i32) {
    %c0_i32 = arith.constant 0 : i32
    %c0_i32_0 = arith.constant 0 : i32
    %c0_i32_1 = arith.constant 0 : i32
    return %c0_i32, %c0_i32_0 : i32, i32
  }
  func.func @transform_4(%arg0: i32) -> (i32, i32) {
    %c0_i32 = arith.constant 0 : i32
    %c0_i32_0 = arith.constant 0 : i32
    %c0_i32_1 = arith.constant 0 : i32
    return %c0_i32, %c0_i32_0 : i32, i32
  }
  func.func @transform_5(%arg0: i32) -> (i32, i32) {
    %c0_i32 = arith.constant 0 : i32
    %c0_i32_0 = arith.constant 0 : i32
    %c0_i32_1 = arith.constant 0 : i32
    return %c0_i32, %c0_i32_0 : i32, i32
  }
  func.func @transform_6(%arg0: i32) -> (i32, i32) {
    %c0_i32 = arith.constant 0 : i32
    %c0_i32_0 = arith.constant 0 : i32
    %c0_i32_1 = arith.constant 0 : i32
    return %c0_i32, %c0_i32_0 : i32, i32
  }
  func.func @transform_7(%arg0: i32) -> (i32, i32) {
    %c0_i32 = arith.constant 0 : i32
    %c0_i32_0 = arith.constant 0 : i32
    %c0_i32_1 = arith.constant 0 : i32
    return %c0_i32, %c0_i32_0 : i32, i32
  }
  func.func @transform_8(%arg0: i32) -> (i32, i32) {
    %c0_i32 = arith.constant 0 : i32
    %c0_i32_0 = arith.constant 0 : i32
    %c0_i32_1 = arith.constant 0 : i32
    return %c0_i32, %c0_i32_0 : i32, i32
  }
  func.func @transform_9(%arg0: i32) -> (i32, i32) {
    %c0_i32 = arith.constant 0 : i32
    %c0_i32_0 = arith.constant 0 : i32
    %c0_i32_1 = arith.constant 0 : i32
    return %c0_i32, %c0_i32_0 : i32, i32
  }
  func.func @transform_10(%arg0: i32) -> (i32, i32) {
    %c0_i32 = arith.constant 0 : i32
    %c0_i32_0 = arith.constant 0 : i32
    %c0_i32_1 = arith.constant 0 : i32
    return %c0_i32, %c0_i32_0 : i32, i32
  }
  func.func @transform_11(%arg0: i32) -> (i32, i32) {
    %c0_i32 = arith.constant 0 : i32
    %c0_i32_0 = arith.constant 0 : i32
    %c0_i32_1 = arith.constant 0 : i32
    return %c0_i32, %c0_i32_0 : i32, i32
  }
  func.func @transform_12(%arg0: i32) -> (i32, i32) {
    %c0_i32 = arith.constant 0 : i32
    %c0_i32_0 = arith.constant 0 : i32
    %c0_i32_1 = arith.constant 0 : i32
    return %c0_i32, %c0_i32_0 : i32, i32
  }
  func.func @transform_13(%arg0: i32) -> (i32, i32) {
    %c0_i32 = arith.constant 0 : i32
    %c0_i32_0 = arith.constant 0 : i32
    %c0_i32_1 = arith.constant 0 : i32
    return %c0_i32, %c0_i32_0 : i32, i32
  }
  func.func @transform_14(%arg0: i32) -> (i32, i32, i32) {
    %c0_i32 = arith.constant 0 : i32
    %c0_i32_0 = arith.constant 0 : i32
    %c0_i32_1 = arith.constant 0 : i32
    return %arg0, %c0_i32, %c0_i32_0 : i32, i32, i32
  }
}

</mosaic_0001>

<llo_original>
// kernel: inception_forward.1
$region0: #{inception_forward.1}
  #allocation0 [shape = 'u32[]', space=smem, size = 0x4, offset = 0x4, fixed_abs, tag = 'smem constant byte address 0x4 - core index']
  #allocation1 [shape = 'u32[144,128]{1,0:T(1,128)}', space=vmem, size = 0x12000, scoped, tag = 'internal scratch']
  %s0 = inlined_call_operand.vmem [shape: f32[2,20,24,4], index: 0, kind: input, shape index: {}]
  %s1 = inlined_call_operand.vmem [shape: f32[1,20,24,1], index: 1, kind: input, shape index: {}]
  %s2 = inlined_call_operand.vmem [shape: f32[4,16], index: 2, kind: input, shape index: {}]
  %s3 = inlined_call_operand.vmem [shape: f32[1,16], index: 3, kind: input, shape index: {}]
  %s4 = inlined_call_operand.vmem [shape: f32[1,16], index: 4, kind: input, shape index: {}]
  %s5 = inlined_call_operand.vmem [shape: f32[36,8], index: 5, kind: input, shape index: {}]
  %s6 = inlined_call_operand.vmem [shape: f32[1,8], index: 6, kind: input, shape index: {}]
  %s7 = inlined_call_operand.vmem [shape: f32[1,8], index: 7, kind: input, shape index: {}]
  %s8 = inlined_call_operand.vmem [shape: f32[100,8], index: 8, kind: input, shape index: {}]
  %s9 = inlined_call_operand.vmem [shape: f32[1,8], index: 9, kind: input, shape index: {}]
  %s10 = inlined_call_operand.vmem [shape: f32[1,8], index: 10, kind: input, shape index: {}]
  %s11 = inlined_call_operand.vmem [shape: f32[4,8], index: 11, kind: input, shape index: {}]
  %s12 = inlined_call_operand.vmem [shape: f32[1,8], index: 12, kind: input, shape index: {}]
  %s13 = inlined_call_operand.vmem [shape: f32[1,8], index: 13, kind: input, shape index: {}]
  %s14 = inlined_call_operand.vmem [shape: f32[2,32,256], index: 14, kind: output, shape index: {}]
  %s15 = sld [smem:[#allocation0]]
  $region89: #{inception_forward.1} parent=0
    _
  %s17 = ssub.s32 1, %s15
  %s18 = scalar_select 0, %s17, %s15
  loop: start=0, step=1, limit=4
  $region2: #{inception_forward.1} parent=0 // loop_pre_header
    _
  $region3: #{inception_forward.1} parent=0 // loop_header
    %s20 = sphi 0, %s24
    %p21 = scmp.ge.s32.totalorder %s20, 4
    %s30 = sphi 0, %s32
    %s33 = sphi 0, %s30
    %s34 = sphi 0, %s33
    %s50 = sphi 0, %s34
    %s54 = sphi 0, %s54
    %s56 = sphi 0, %s54
    %s57 = sphi 0, %s56
    %s71 = sphi 0, %s57
    %s75 = sphi 0, %s75
    %s77 = sphi 0, %s75
    %s78 = sphi 0, %s77
    %s92 = sphi 0, %s78
    %s96 = sphi 0, %s96
    %s98 = sphi 0, %s96
    %s99 = sphi 0, %s98
    %s113 = sphi 0, %s99
    %s117 = sphi 0, %s117
    %s119 = sphi 0, %s117
    %s120 = sphi 0, %s119
    %s134 = sphi 0, %s120
    %s138 = sphi 0, %s138
    %s140 = sphi 0, %s138
    %s141 = sphi 0, %s140
    %s155 = sphi 0, %s141
    %s159 = sphi 0, %s159
    %s161 = sphi 0, %s159
    %s162 = sphi 0, %s161
    %s176 = sphi 0, %s162
    %s180 = sphi 0, %s180
    %s182 = sphi 0, %s180
    %s183 = sphi 0, %s182
    %s197 = sphi 0, %s183
    %s201 = sphi 0, %s201
    %s203 = sphi 0, %s201
    %s204 = sphi 0, %s203
    %s218 = sphi 0, %s204
    %s222 = sphi 0, %s222
    %s224 = sphi 0, %s222
    %s225 = sphi 0, %s224
    %s239 = sphi 0, %s225
    %s243 = sphi 0, %s243
    %s245 = sphi 0, %s243
    %s246 = sphi 0, %s245
    %s260 = sphi 0, %s246
    %s264 = sphi 0, %s264
    %s266 = sphi 0, %s264
    %s267 = sphi 0, %s266
    %s281 = sphi 0, %s267
    %s285 = sphi 0, %s285
    %s287 = sphi 0, %s285
    %s288 = sphi 0, %s287
    %s302 = sphi 0, %s288
    %s306 = sphi 0, %s306
    %s308 = sphi 0, %s306
    %s309 = sphi 0, %s308
    %s323 = sphi 0, %s309
    %s329 = sphi 0, %s331
    %s332 = sphi 0, %s329
    %s333 = sphi 0, %s332
    %s349 = sphi 0, %s333
  $region4: #{inception_forward.1} parent=0 // loop_header_branch
    %23 = sbr.rel (%p21) target = $region8
  $region5: #{inception_forward.1} parent=0 // loop_body
    %s25 = ssub.s32 %s20, 1
    %s26 = ssub.s32 %s20, 2
    %s27 = sadd.s32 %s20, 1
    %s28 = ssub.s32 %s20, %s27
    %p29 = scmp.eq.s32.totalorder %s28, 0
    %s31 = sadd.s32 %s30, 1
    %s32 = scalar_select %p29, %s30, %s31
    %p35 = pneg %p29
    %p36 = scmp.eq.s32.totalorder %s20, 1
    %p37 = por %p35, %p36
    %p38 = scmp.ne.s32.totalorder %s30, %s33
    %p39 = scmp.eq.s32.totalorder %s20, 0
    %p40 = por %p38, %p39
    %p41 = scmp.ne.s32.totalorder %s30, %s33
    %p42 = scmp.eq.s32.totalorder %s25, 1
    %p43 = por %p41, %p42
    %p44 = scmp.ne.s32.totalorder %s33, %s34
    %p45 = scmp.eq.s32.totalorder %s25, 0
    %p46 = por %p44, %p45
    %p47 = scmp.ne.s32.totalorder %s33, %s34
    %p48 = scmp.eq.s32.totalorder %s26, 1
    %p49 = por %p47, %p48
    %p51 = scmp.ne.s32.totalorder %s34, %s50
    %p52 = scmp.eq.s32.totalorder %s26, 0
    %p53 = por %p51, %p52
    %s55 = sadd.s32 %s54, 1
    %p58 = scmp.eq.s32.totalorder %s20, 1
    %p59 = scmp.ne.s32.totalorder %s54, %s56
    %p60 = scmp.eq.s32.totalorder %s20, 0
    %p61 = por %p59, %p60
    %p62 = scmp.ne.s32.totalorder %s54, %s56
    %p63 = scmp.eq.s32.totalorder %s25, 1
    %p64 = por %p62, %p63
    %p65 = scmp.ne.s32.totalorder %s56, %s57
    %p66 = scmp.eq.s32.totalorder %s25, 0
    %p67 = por %p65, %p66
    %p68 = scmp.ne.s32.totalorder %s56, %s57
    %p69 = scmp.eq.s32.totalorder %s26, 1
    %p70 = por %p68, %p69
    %p72 = scmp.ne.s32.totalorder %s57, %s71
    %p73 = scmp.eq.s32.totalorder %s26, 0
    %p74 = por %p72, %p73
    %s76 = sadd.s32 %s75, 1
    %p79 = scmp.eq.s32.totalorder %s20, 1
    %p80 = scmp.ne.s32.totalorder %s75, %s77
    %p81 = scmp.eq.s32.totalorder %s20, 0
    %p82 = por %p80, %p81
    %p83 = scmp.ne.s32.totalorder %s75, %s77
    %p84 = scmp.eq.s32.totalorder %s25, 1
    %p85 = por %p83, %p84
    %p86 = scmp.ne.s32.totalorder %s77, %s78
    %p87 = scmp.eq.s32.totalorder %s25, 0
    %p88 = por %p86, %p87
    %p89 = scmp.ne.s32.totalorder %s77, %s78
    %p90 = scmp.eq.s32.totalorder %s26, 1
    %p91 = por %p89, %p90
    %p93 = scmp.ne.s32.totalorder %s78, %s92
    %p94 = scmp.eq.s32.totalorder %s26, 0
    %p95 = por %p93, %p94
    %s97 = sadd.s32 %s96, 1
    %p100 = scmp.eq.s32.totalorder %s20, 1
    %p101 = scmp.ne.s32.totalorder %s96, %s98
    %p102 = scmp.eq.s32.totalorder %s20, 0
    %p103 = por %p101, %p102
    %p104 = scmp.ne.s32.totalorder %s96, %s98
    %p105 = scmp.eq.s32.totalorder %s25, 1
    %p106 = por %p104, %p105
    %p107 = scmp.ne.s32.totalorder %s98, %s99
    %p108 = scmp.eq.s32.totalorder %s25, 0
    %p109 = por %p107, %p108
    %p110 = scmp.ne.s32.totalorder %s98, %s99
    %p111 = scmp.eq.s32.totalorder %s26, 1
    %p112 = por %p110, %p111
    %p114 = scmp.ne.s32.totalorder %s99, %s113
    %p115 = scmp.eq.s32.totalorder %s26, 0
    %p116 = por %p114, %p115
    %s118 = sadd.s32 %s117, 1
    %p121 = scmp.eq.s32.totalorder %s20, 1
    %p122 = scmp.ne.s32.totalorder %s117, %s119
    %p123 = scmp.eq.s32.totalorder %s20, 0
    %p124 = por %p122, %p123
    %p125 = scmp.ne.s32.totalorder %s117, %s119
    %p126 = scmp.eq.s32.totalorder %s25, 1
    %p127 = por %p125, %p126
    %p128 = scmp.ne.s32.totalorder %s119, %s120
    %p129 = scmp.eq.s32.totalorder %s25, 0
    %p130 = por %p128, %p129
    %p131 = scmp.ne.s32.totalorder %s119, %s120
    %p132 = scmp.eq.s32.totalorder %s26, 1
    %p133 = por %p131, %p132
    %p135 = scmp.ne.s32.totalorder %s120, %s134
    %p136 = scmp.eq.s32.totalorder %s26, 0
    %p137 = por %p135, %p136
    %s139 = sadd.s32 %s138, 1
    %p142 = scmp.eq.s32.totalorder %s20, 1
    %p143 = scmp.ne.s32.totalorder %s138, %s140
    %p144 = scmp.eq.s32.totalorder %s20, 0
    %p145 = por %p143, %p144
    %p146 = scmp.ne.s32.totalorder %s138, %s140
    %p147 = scmp.eq.s32.totalorder %s25, 1
    %p148 = por %p146, %p147
    %p149 = scmp.ne.s32.totalorder %s140, %s141
    %p150 = scmp.eq.s32.totalorder %s25, 0
    %p151 = por %p149, %p150
    %p152 = scmp.ne.s32.totalorder %s140, %s141
    %p153 = scmp.eq.s32.totalorder %s26, 1
    %p154 = por %p152, %p153
    %p156 = scmp.ne.s32.totalorder %s141, %s155
    %p157 = scmp.eq.s32.totalorder %s26, 0
    %p158 = por %p156, %p157
    %s160 = sadd.s32 %s159, 1
    %p163 = scmp.eq.s32.totalorder %s20, 1
    %p164 = scmp.ne.s32.totalorder %s159, %s161
    %p165 = scmp.eq.s32.totalorder %s20, 0
    %p166 = por %p164, %p165
    %p167 = scmp.ne.s32.totalorder %s159, %s161
    %p168 = scmp.eq.s32.totalorder %s25, 1
    %p169 = por %p167, %p168
    %p170 = scmp.ne.s32.totalorder %s161, %s162
    %p171 = scmp.eq.s32.totalorder %s25, 0
    %p172 = por %p170, %p171
    %p173 = scmp.ne.s32.totalorder %s161, %s162
    %p174 = scmp.eq.s32.totalorder %s26, 1
    %p175 = por %p173, %p174
    %p177 = scmp.ne.s32.totalorder %s162, %s176
    %p178 = scmp.eq.s32.totalorder %s26, 0
    %p179 = por %p177, %p178
    %s181 = sadd.s32 %s180, 1
    %p184 = scmp.eq.s32.totalorder %s20, 1
    %p185 = scmp.ne.s32.totalorder %s180, %s182
    %p186 = scmp.eq.s32.totalorder %s20, 0
    %p187 = por %p185, %p186
    %p188 = scmp.ne.s32.totalorder %s180, %s182
    %p189 = scmp.eq.s32.totalorder %s25, 1
    %p190 = por %p188, %p189
    %p191 = scmp.ne.s32.totalorder %s182, %s183
    %p192 = scmp.eq.s32.totalorder %s25, 0
    %p193 = por %p191, %p192
    %p194 = scmp.ne.s32.totalorder %s182, %s183
    %p195 = scmp.eq.s32.totalorder %s26, 1
    %p196 = por %p194, %p195
    %p198 = scmp.ne.s32.totalorder %s183, %s197
    %p199 = scmp.eq.s32.totalorder %s26, 0
    %p200 = por %p198, %p199
    %s202 = sadd.s32 %s201, 1
    %p205 = scmp.eq.s32.totalorder %s20, 1
    %p206 = scmp.ne.s32.totalorder %s201, %s203
    %p207 = scmp.eq.s32.totalorder %s20, 0
    %p208 = por %p206, %p207
    %p209 = scmp.ne.s32.totalorder %s201, %s203
    %p210 = scmp.eq.s32.totalorder %s25, 1
    %p211 = por %p209, %p210
    %p212 = scmp.ne.s32.totalorder %s203, %s204
    %p213 = scmp.eq.s32.totalorder %s25, 0
    %p214 = por %p212, %p213
    %p215 = scmp.ne.s32.totalorder %s203, %s204
    %p216 = scmp.eq.s32.totalorder %s26, 1
    %p217 = por %p215, %p216
    %p219 = scmp.ne.s32.totalorder %s204, %s218
    %p220 = scmp.eq.s32.totalorder %s26, 0
    %p221 = por %p219, %p220
    %s223 = sadd.s32 %s222, 1
    %p226 = scmp.eq.s32.totalorder %s20, 1
    %p227 = scmp.ne.s32.totalorder %s222, %s224
    %p228 = scmp.eq.s32.totalorder %s20, 0
    %p229 = por %p227, %p228
    %p230 = scmp.ne.s32.totalorder %s222, %s224
    %p231 = scmp.eq.s32.totalorder %s25, 1
    %p232 = por %p230, %p231
    %p233 = scmp.ne.s32.totalorder %s224, %s225
    %p234 = scmp.eq.s32.totalorder %s25, 0
    %p235 = por %p233, %p234
    %p236 = scmp.ne.s32.totalorder %s224, %s225
    %p237 = scmp.eq.s32.totalorder %s26, 1
    %p238 = por %p236, %p237
    %p240 = scmp.ne.s32.totalorder %s225, %s239
    %p241 = scmp.eq.s32.totalorder %s26, 0
    %p242 = por %p240, %p241
    %s244 = sadd.s32 %s243, 1
    %p247 = scmp.eq.s32.totalorder %s20, 1
    %p248 = scmp.ne.s32.totalorder %s243, %s245
    %p249 = scmp.eq.s32.totalorder %s20, 0
    %p250 = por %p248, %p249
    %p251 = scmp.ne.s32.totalorder %s243, %s245
    %p252 = scmp.eq.s32.totalorder %s25, 1
    %p253 = por %p251, %p252
    %p254 = scmp.ne.s32.totalorder %s245, %s246
    %p255 = scmp.eq.s32.totalorder %s25, 0
    %p256 = por %p254, %p255
    %p257 = scmp.ne.s32.totalorder %s245, %s246
    %p258 = scmp.eq.s32.totalorder %s26, 1
    %p259 = por %p257, %p258
    %p261 = scmp.ne.s32.totalorder %s246, %s260
    %p262 = scmp.eq.s32.totalorder %s26, 0
    %p263 = por %p261, %p262
    %s265 = sadd.s32 %s264, 1
    %p268 = scmp.eq.s32.totalorder %s20, 1
    %p269 = scmp.ne.s32.totalorder %s264, %s266
    %p270 = scmp.eq.s32.totalorder %s20, 0
    %p271 = por %p269, %p270
    %p272 = scmp.ne.s32.totalorder %s264, %s266
    %p273 = scmp.eq.s32.totalorder %s25, 1
    %p274 = por %p272, %p273
    %p275 = scmp.ne.s32.totalorder %s266, %s267
    %p276 = scmp.eq.s32.totalorder %s25, 0
    %p277 = por %p275, %p276
    %p278 = scmp.ne.s32.totalorder %s266, %s267
    %p279 = scmp.eq.s32.totalorder %s26, 1
    %p280 = por %p278, %p279
    %p282 = scmp.ne.s32.totalorder %s267, %s281
    %p283 = scmp.eq.s32.totalorder %s26, 0
    %p284 = por %p282, %p283
    %s286 = sadd.s32 %s285, 1
    %p289 = scmp.eq.s32.totalorder %s20, 1
    %p290 = scmp.ne.s32.totalorder %s285, %s287
    %p291 = scmp.eq.s32.totalorder %s20, 0
    %p292 = por %p290, %p291
    %p293 = scmp.ne.s32.totalorder %s285, %s287
    %p294 = scmp.eq.s32.totalorder %s25, 1
    %p295 = por %p293, %p294
    %p296 = scmp.ne.s32.totalorder %s287, %s288
    %p297 = scmp.eq.s32.totalorder %s25, 0
    %p298 = por %p296, %p297
    %p299 = scmp.ne.s32.totalorder %s287, %s288
    %p300 = scmp.eq.s32.totalorder %s26, 1
    %p301 = por %p299, %p300
    %p303 = scmp.ne.s32.totalorder %s288, %s302
    %p304 = scmp.eq.s32.totalorder %s26, 0
    %p305 = por %p303, %p304
    %s307 = sadd.s32 %s306, 1
    %p310 = scmp.eq.s32.totalorder %s20, 1
    %p311 = scmp.ne.s32.totalorder %s306, %s308
    %p312 = scmp.eq.s32.totalorder %s20, 0
    %p313 = por %p311, %p312
    %p314 = scmp.ne.s32.totalorder %s306, %s308
    %p315 = scmp.eq.s32.totalorder %s25, 1
    %p316 = por %p314, %p315
    %p317 = scmp.ne.s32.totalorder %s308, %s309
    %p318 = scmp.eq.s32.totalorder %s25, 0
    %p319 = por %p317, %p318
    %p320 = scmp.ne.s32.totalorder %s308, %s309
    %p321 = scmp.eq.s32.totalorder %s26, 1
    %p322 = por %p320, %p321
    %p324 = scmp.ne.s32.totalorder %s309, %s323
    %p325 = scmp.eq.s32.totalorder %s26, 0
    %p326 = por %p324, %p325
    %s327 = ssub.s32 %s20, %s27
    %p328 = scmp.eq.s32.totalorder %s327, 0
    %s330 = sadd.s32 %s329, 1
    %s331 = scalar_select %p328, %s329, %s330
    %p334 = pneg %p328
    %p335 = scmp.eq.s32.totalorder %s20, 1
    %p336 = por %p334, %p335
    %p337 = scmp.ne.s32.totalorder %s329, %s332
    %p338 = scmp.eq.s32.totalorder %s20, 0
    %p339 = por %p337, %p338
    %p340 = scmp.ne.s32.totalorder %s329, %s332
    %p341 = scmp.eq.s32.totalorder %s25, 1
    %p342 = por %p340, %p341
    %p343 = scmp.ne.s32.totalorder %s332, %s333
    %p344 = scmp.eq.s32.totalorder %s25, 0
    %p345 = por %p343, %p344
    %p346 = scmp.ne.s32.totalorder %s332, %s333
    %p347 = scmp.eq.s32.totalorder %s26, 1
    %p348 = por %p346, %p347
    %p350 = scmp.ne.s32.totalorder %s333, %s349
    %p351 = scmp.eq.s32.totalorder %s26, 0
    %p352 = por %p350, %p351
    %p353 = scmp.le.s32.totalorder 1, %s20
    %p354 = scmp.lt.s32.totalorder %s20, 3
    %p355 = pnand %p353, %p354
    %p356 = pneg %p355
    // Predicated region
    $region9: #{inception_forward.1} parent=5 // pred_check
      _
    $region10: #{inception_forward.1} parent=5 // pred_check_branch
      %358 = sbr.rel (%p355) target = $region12
    $region11: #{inception_forward.1} parent=5 // pred_region
      %s359 = ssub.s32 %s20, 1
      // Predicated region
      $region13: #{inception_forward.1} parent=11 // pred_check
        %p360 = pneg %p67
      $region14: #{inception_forward.1} parent=11 // pred_check_branch
        %362 = sbr.rel (%p360) target = $region16
      $region15: #{inception_forward.1} parent=11 // pred_region
        _
      $region16: #{inception_forward.1} parent=11 // pred_fallthru
        _
      // Predicated region
      $region17: #{inception_forward.1} parent=11 // pred_check
        %p363 = pneg %p88
      $region18: #{inception_forward.1} parent=11 // pred_check_branch
        %365 = sbr.rel (%p363) target = $region20
      $region19: #{inception_forward.1} parent=11 // pred_region
        _
      $region20: #{inception_forward.1} parent=11 // pred_fallthru
        _
      // Predicated region
      $region21: #{inception_forward.1} parent=11 // pred_check
        %p366 = pneg %p109
      $region22: #{inception_forward.1} parent=11 // pred_check_branch
        %368 = sbr.rel (%p366) target = $region24
      $region23: #{inception_forward.1} parent=11 // pred_region
        _
      $region24: #{inception_forward.1} parent=11 // pred_fallthru
        _
      // Predicated region
      $region25: #{inception_forward.1} parent=11 // pred_check
        %p369 = pneg %p130
      $region26: #{inception_forward.1} parent=11 // pred_check_branch
        %371 = sbr.rel (%p369) target = $region28
      $region27: #{inception_forward.1} parent=11 // pred_region
        _
      $region28: #{inception_forward.1} parent=11 // pred_fallthru
        _
      // Predicated region
      $region29: #{inception_forward.1} parent=11 // pred_check
        %p372 = pneg %p151
      $region30: #{inception_forward.1} parent=11 // pred_check_branch
        %374 = sbr.rel (%p372) target = $region32
      $region31: #{inception_forward.1} parent=11 // pred_region
        _
      $region32: #{inception_forward.1} parent=11 // pred_fallthru
        _
      // Predicated region
      $region33: #{inception_forward.1} parent=11 // pred_check
        %p375 = pneg %p172
      $region34: #{inception_forward.1} parent=11 // pred_check_branch
        %377 = sbr.rel (%p375) target = $region36
      $region35: #{inception_forward.1} parent=11 // pred_region
        _
      $region36: #{inception_forward.1} parent=11 // pred_fallthru
        _
      // Predicated region
      $region37: #{inception_forward.1} parent=11 // pred_check
        %p378 = pneg %p193
      $region38: #{inception_forward.1} parent=11 // pred_check_branch
        %380 = sbr.rel (%p378) target = $region40
      $region39: #{inception_forward.1} parent=11 // pred_region
        _
      $region40: #{inception_forward.1} parent=11 // pred_fallthru
        _
      // Predicated region
      $region41: #{inception_forward.1} parent=11 // pred_check
        %p381 = pneg %p214
      $region42: #{inception_forward.1} parent=11 // pred_check_branch
        %383 = sbr.rel (%p381) target = $region44
      $region43: #{inception_forward.1} parent=11 // pred_region
        _
      $region44: #{inception_forward.1} parent=11 // pred_fallthru
        _
      // Predicated region
      $region45: #{inception_forward.1} parent=11 // pred_check
        %p384 = pneg %p235
      $region46: #{inception_forward.1} parent=11 // pred_check_branch
        %386 = sbr.rel (%p384) target = $region48
      $region47: #{inception_forward.1} parent=11 // pred_region
        _
      $region48: #{inception_forward.1} parent=11 // pred_fallthru
        _
      // Predicated region
      $region49: #{inception_forward.1} parent=11 // pred_check
        %p387 = pneg %p256
      $region50: #{inception_forward.1} parent=11 // pred_check_branch
        %389 = sbr.rel (%p387) target = $region52
      $region51: #{inception_forward.1} parent=11 // pred_region
        _
      $region52: #{inception_forward.1} parent=11 // pred_fallthru
        _
      // Predicated region
      $region53: #{inception_forward.1} parent=11 // pred_check
        %p390 = pneg %p277
      $region54: #{inception_forward.1} parent=11 // pred_check_branch
        %392 = sbr.rel (%p390) target = $region56
      $region55: #{inception_forward.1} parent=11 // pred_region
        _
      $region56: #{inception_forward.1} parent=11 // pred_fallthru
        _
      // Predicated region
      $region57: #{inception_forward.1} parent=11 // pred_check
        %p393 = pneg %p298
      $region58: #{inception_forward.1} parent=11 // pred_check_branch
        %395 = sbr.rel (%p393) target = $region60
      $region59: #{inception_forward.1} parent=11 // pred_region
        _
      $region60: #{inception_forward.1} parent=11 // pred_fallthru
        _
      // Predicated region
      $region61: #{inception_forward.1} parent=11 // pred_check
        %p396 = pneg %p319
      $region62: #{inception_forward.1} parent=11 // pred_check_branch
        %398 = sbr.rel (%p396) target = $region64
      $region63: #{inception_forward.1} parent=11 // pred_region
        _
      $region64: #{inception_forward.1} parent=11 // pred_fallthru
        _
    $region12: #{inception_forward.1} parent=5 // pred_fallthru
      _
    %p399 = scmp.lt.s32.totalorder %s20, 2
    // Predicated region
    $region65: #{inception_forward.1} parent=5 // pred_check
      %p400 = pneg %p399
    $region66: #{inception_forward.1} parent=5 // pred_check_branch
      %402 = sbr.rel (%p400) target = $region68
    $region67: #{inception_forward.1} parent=5 // pred_region
      // Predicated region
      $region69: #{inception_forward.1} parent=67 // pred_check
        %p403 = pneg %p40
      $region70: #{inception_forward.1} parent=67 // pred_check_branch
        %405 = sbr.rel (%p403) target = $region72
      $region71: #{inception_forward.1} parent=67 // pred_region
        %p406 = scmp.lt.s32.totalorder %s20, 1
        %s407 = scalar_select %p406, %s20, 1
        %s408 = smul.addr %s407, 60
        %s409 = smul.addr %s408, 8
        %s410 = scalar_lea.vmem %s0, %s409
      $region72: #{inception_forward.1} parent=67 // pred_fallthru
        _
    $region68: #{inception_forward.1} parent=5 // pred_fallthru
      _
    %p411 = scmp.le.s32.totalorder 1, %s20
    %p412 = scmp.lt.s32.totalorder %s20, 3
    %p413 = pnand %p411, %p412
    %p414 = pneg %p413
    // Predicated region
    $region73: #{inception_forward.1} parent=5 // pred_check
      _
    $region74: #{inception_forward.1} parent=5 // pred_check_branch
      %416 = sbr.rel (%p413) target = $region76
    $region75: #{inception_forward.1} parent=5 // pred_region
      %s417 = ssub.s32 %s20, 1
      %p418 = scmp.lt.s32.totalorder %s25, 1
      %s419 = scalar_select %p418, %s25, 1
      %s420 = smul.addr %s419, 60
      %s421 = smul.addr %s420, 8
      %s422 = scalar_lea.vmem %s0, %s421
      %p423 = pneg %p46
      %p424 = pneg %p43
      %p425 = pneg %p67
      %p426 = pneg %p64
      %p427 = pneg %p88
      %p428 = pneg %p85
      %p429 = pneg %p109
      %p430 = pneg %p106
      %p431 = pneg %p130
      %p432 = pneg %p127
      %p433 = pneg %p151
      %p434 = pneg %p148
      %p435 = pneg %p172
      %p436 = pneg %p169
      %p437 = pneg %p193
      %p438 = pneg %p190
      %p439 = pneg %p214
      %p440 = pneg %p211
      %p441 = pneg %p235
      %p442 = pneg %p232
      %p443 = pneg %p256
      %p444 = pneg %p253
      %p445 = pneg %p277
      %p446 = pneg %p274
      %p447 = pneg %p298
      %p448 = pneg %p295
      %p449 = pneg %p319
      %p450 = pneg %p316
      %p451 = pneg %p345
      %p452 = pneg %p342
      %p453 = scmp.lt.s32.totalorder %s25, 1
      %s454 = scalar_select %p453, %s25, 1
      %s455 = smul.addr %s454, 8
      %s456 = smul.addr %s455, 8
      %s457 = scalar_lea.vmem %s14, %s456
      %p458 = scmp.lt.s32.totalorder %s25, 1
      %s459 = scalar_select %p458, %s25, 1
      %s460 = smul.addr %s459, 60
      %s461 = smul.addr %s460, 8
      %s462 = scalar_lea.vmem %s0, %s461
      %p463 = scmp.lt.s32.totalorder %s25, 1
      %s464 = scalar_select %p463, %s25, 1
      %s465 = smul.addr %s464, 8
      %s466 = smul.addr %s465, 8
      %s467 = scalar_lea.vmem %s14, %s466
      %v468 = vld [vmem:[%s462] sm:$0xff]
      %v469 = vld [vmem:[%s462 + $0x8] sm:$0xff]
      %v470 = vld [vmem:[%s462 + $0x10] sm:$0xff]
      %v471 = vld [vmem:[%s462 + $0x18] sm:$0xff]
      %v472 = vld [vmem:[%s462 + $0x20] sm:$0xff]
      %v473 = vld [vmem:[%s462 + $0x28] sm:$0xff]
      %v474 = vld [vmem:[%s462 + $0x30] sm:$0xff]
      %v475 = vld [vmem:[%s462 + $0x38] sm:$0xff]
      %v476 = vld [vmem:[%s462 + $0x40] sm:$0xff]
      %v477 = vld [vmem:[%s462 + $0x48] sm:$0xff]
      %v478 = vld [vmem:[%s462 + $0x50] sm:$0xff]
      %v479 = vld [vmem:[%s462 + $0x58] sm:$0xff]
      %v480 = vld [vmem:[%s462 + $0x60] sm:$0xff]
      %v481 = vld [vmem:[%s462 + $0x68] sm:$0xff]
      %v482 = vld [vmem:[%s462 + $0x70] sm:$0xff]
      %v483 = vld [vmem:[%s462 + $0x78] sm:$0xff]
      %v484 = vld [vmem:[%s462 + $0x80] sm:$0xff]
      %v485 = vld [vmem:[%s462 + $0x88] sm:$0xff]
      %v486 = vld [vmem:[%s462 + $0x90] sm:$0xff]
      %v487 = vld [vmem:[%s462 + $0x98] sm:$0xff]
      %v488 = vld [vmem:[%s462 + $0xa0] sm:$0xff]
      %v489 = vld [vmem:[%s462 + $0xa8] sm:$0xff]
      %v490 = vld [vmem:[%s462 + $0xb0] sm:$0xff]
      %v491 = vld [vmem:[%s462 + $0xb8] sm:$0xff]
      %v492 = vld [vmem:[%s462 + $0xc0] sm:$0xff]
      %v493 = vld [vmem:[%s462 + $0xc8] sm:$0xff]
      %v494 = vld [vmem:[%s462 + $0xd0] sm:$0xff]
      %v495 = vld [vmem:[%s462 + $0xd8] sm:$0xff]
      %v496 = vld [vmem:[%s462 + $0xe0] sm:$0xff]
      %v497 = vld [vmem:[%s462 + $0xe8] sm:$0xff]
      %v498 = vld [vmem:[%s462 + $0xf0] sm:$0xff]
      %v499 = vld [vmem:[%s462 + $0xf8] sm:$0xff]
      %v500 = vld [vmem:[%s462 + $0x100] sm:$0xff]
      %v501 = vld [vmem:[%s462 + $0x108] sm:$0xff]
      %v502 = vld [vmem:[%s462 + $0x110] sm:$0xff]
      %v503 = vld [vmem:[%s462 + $0x118] sm:$0xff]
      %v504 = vld [vmem:[%s462 + $0x120] sm:$0xff]
      %v505 = vld [vmem:[%s462 + $0x128] sm:$0xff]
      %v506 = vld [vmem:[%s462 + $0x130] sm:$0xff]
      %v507 = vld [vmem:[%s462 + $0x138] sm:$0xff]
      %v508 = vld [vmem:[%s462 + $0x140] sm:$0xff]
      %v509 = vld [vmem:[%s462 + $0x148] sm:$0xff]
      %v510 = vld [vmem:[%s462 + $0x150] sm:$0xff]
      %v511 = vld [vmem:[%s462 + $0x158] sm:$0xff]
      %v512 = vld [vmem:[%s462 + $0x160] sm:$0xff]
      %v513 = vld [vmem:[%s462 + $0x168] sm:$0xff]
      %v514 = vld [vmem:[%s462 + $0x170] sm:$0xff]
      %v515 = vld [vmem:[%s462 + $0x178] sm:$0xff]
      %v516 = vld [vmem:[%s462 + $0x180] sm:$0xff]
      %v517 = vld [vmem:[%s462 + $0x188] sm:$0xff]
      %v518 = vld [vmem:[%s462 + $0x190] sm:$0xff]
      %v519 = vld [vmem:[%s462 + $0x198] sm:$0xff]
      %v520 = vld [vmem:[%s462 + $0x1a0] sm:$0xff]
      %v521 = vld [vmem:[%s462 + $0x1a8] sm:$0xff]
      %v522 = vld [vmem:[%s462 + $0x1b0] sm:$0xff]
      %v523 = vld [vmem:[%s462 + $0x1b8] sm:$0xff]
      %v524 = vld [vmem:[%s462 + $0x1c0] sm:$0xff]
      %v525 = vld [vmem:[%s462 + $0x1c8] sm:$0xff]
      %v526 = vld [vmem:[%s462 + $0x1d0] sm:$0xff]
      %v527 = vld [vmem:[%s462 + $0x1d8] sm:$0xff]
      %v528 = vld [vmem:[%s1] sm:$0xff]
      %v529 = vld [vmem:[%s1 + $0x8] sm:$0xff]
      %v530 = vld [vmem:[%s1 + $0x10] sm:$0xff]
      %v531 = vld [vmem:[%s1 + $0x18] sm:$0xff]
      %v532 = vld [vmem:[%s1 + $0x20] sm:$0xff]
      %v533 = vld [vmem:[%s1 + $0x28] sm:$0xff]
      %v534 = vld [vmem:[%s1 + $0x30] sm:$0xff]
      %v535 = vld [vmem:[%s1 + $0x38] sm:$0xff]
      %v536 = vld [vmem:[%s1 + $0x40] sm:$0xff]
      %v537 = vld [vmem:[%s1 + $0x48] sm:$0xff]
      %v538 = vld [vmem:[%s1 + $0x50] sm:$0xff]
      %v539 = vld [vmem:[%s1 + $0x58] sm:$0xff]
      %v540 = vld [vmem:[%s1 + $0x60] sm:$0xff]
      %v541 = vld [vmem:[%s1 + $0x68] sm:$0xff]
      %v542 = vld [vmem:[%s1 + $0x70] sm:$0xff]
      %v543 = vld [vmem:[%s1 + $0x78] sm:$0xff]
      %v544 = vld [vmem:[%s1 + $0x80] sm:$0xff]
      %v545 = vld [vmem:[%s1 + $0x88] sm:$0xff]
      %v546 = vld [vmem:[%s1 + $0x90] sm:$0xff]
      %v547 = vld [vmem:[%s1 + $0x98] sm:$0xff]
      %v548 = vld [vmem:[%s1 + $0xa0] sm:$0xff]
      %v549 = vld [vmem:[%s1 + $0xa8] sm:$0xff]
      %v550 = vld [vmem:[%s1 + $0xb0] sm:$0xff]
      %v551 = vld [vmem:[%s1 + $0xb8] sm:$0xff]
      %v552 = vld [vmem:[%s1 + $0xc0] sm:$0xff]
      %v553 = vld [vmem:[%s1 + $0xc8] sm:$0xff]
      %v554 = vld [vmem:[%s1 + $0xd0] sm:$0xff]
      %v555 = vld [vmem:[%s1 + $0xd8] sm:$0xff]
      %v556 = vld [vmem:[%s1 + $0xe0] sm:$0xff]
      %v557 = vld [vmem:[%s1 + $0xe8] sm:$0xff]
      %v558 = vld [vmem:[%s1 + $0xf0] sm:$0xff]
      %v559 = vld [vmem:[%s1 + $0xf8] sm:$0xff]
      %v560 = vld [vmem:[%s1 + $0x100] sm:$0xff]
      %v561 = vld [vmem:[%s1 + $0x108] sm:$0xff]
      %v562 = vld [vmem:[%s1 + $0x110] sm:$0xff]
      %v563 = vld [vmem:[%s1 + $0x118] sm:$0xff]
      %v564 = vld [vmem:[%s1 + $0x120] sm:$0xff]
      %v565 = vld [vmem:[%s1 + $0x128] sm:$0xff]
      %v566 = vld [vmem:[%s1 + $0x130] sm:$0xff]
      %v567 = vld [vmem:[%s1 + $0x138] sm:$0xff]
      %v568 = vld [vmem:[%s1 + $0x140] sm:$0xff]
      %v569 = vld [vmem:[%s1 + $0x148] sm:$0xff]
      %v570 = vld [vmem:[%s1 + $0x150] sm:$0xff]
      %v571 = vld [vmem:[%s1 + $0x158] sm:$0xff]
      %v572 = vld [vmem:[%s1 + $0x160] sm:$0xff]
      %v573 = vld [vmem:[%s1 + $0x168] sm:$0xff]
      %v574 = vld [vmem:[%s1 + $0x170] sm:$0xff]
      %v575 = vld [vmem:[%s1 + $0x178] sm:$0xff]
      %v576 = vld [vmem:[%s1 + $0x180] sm:$0xff]
      %v577 = vld [vmem:[%s1 + $0x188] sm:$0xff]
      %v578 = vld [vmem:[%s1 + $0x190] sm:$0xff]
      %v579 = vld [vmem:[%s1 + $0x198] sm:$0xff]
      %v580 = vld [vmem:[%s1 + $0x1a0] sm:$0xff]
      %v581 = vld [vmem:[%s1 + $0x1a8] sm:$0xff]
      %v582 = vld [vmem:[%s1 + $0x1b0] sm:$0xff]
      %v583 = vld [vmem:[%s1 + $0x1b8] sm:$0xff]
      %v584 = vld [vmem:[%s1 + $0x1c0] sm:$0xff]
      %v585 = vld [vmem:[%s1 + $0x1c8] sm:$0xff]
      %v586 = vld [vmem:[%s1 + $0x1d0] sm:$0xff]
      %v587 = vld [vmem:[%s1 + $0x1d8] sm:$0xff]
      %v588 = vld [vmem:[%s2] sm:$0xf]
      %vm589 = vcmask 31744
      %v591 = vsel %vm589, %v468, 0
      %v594 = vsel %vm589, %v469, 0
      %v597 = vsel %vm589, %v470, 0
      %v600 = vsel %vm589, %v471, 0
      %v603 = vsel %vm589, %v472, 0
      %v606 = vsel %vm589, %v473, 0
      %v609 = vsel %vm589, %v474, 0
      %v612 = vsel %vm589, %v475, 0
      %v615 = vsel %vm589, %v476, 0
      %v618 = vsel %vm589, %v477, 0
      %v621 = vsel %vm589, %v478, 0
      %v624 = vsel %vm589, %v479, 0
      %v627 = vsel %vm589, %v480, 0
      %v630 = vsel %vm589, %v481, 0
      %v633 = vsel %vm589, %v482, 0
      %v636 = vsel %vm589, %v483, 0
      %v639 = vsel %vm589, %v484, 0
      %v642 = vsel %vm589, %v485, 0
      %v645 = vsel %vm589, %v486, 0
      %v648 = vsel %vm589, %v487, 0
      %v651 = vsel %vm589, %v488, 0
      %v654 = vsel %vm589, %v489, 0
      %v657 = vsel %vm589, %v490, 0
      %v660 = vsel %vm589, %v491, 0
      %v663 = vsel %vm589, %v492, 0
      %v666 = vsel %vm589, %v493, 0
      %v669 = vsel %vm589, %v494, 0
      %v672 = vsel %vm589, %v495, 0
      %v675 = vsel %vm589, %v496, 0
      %v678 = vsel %vm589, %v497, 0
      %v681 = vsel %vm589, %v498, 0
      %v684 = vsel %vm589, %v499, 0
      %v687 = vsel %vm589, %v500, 0
      %v690 = vsel %vm589, %v501, 0
      %v693 = vsel %vm589, %v502, 0
      %v696 = vsel %vm589, %v503, 0
      %v699 = vsel %vm589, %v504, 0
      %v702 = vsel %vm589, %v505, 0
      %v705 = vsel %vm589, %v506, 0
      %v708 = vsel %vm589, %v507, 0
      %v711 = vsel %vm589, %v508, 0
      %v714 = vsel %vm589, %v509, 0
      %v717 = vsel %vm589, %v510, 0
      %v720 = vsel %vm589, %v511, 0
      %v723 = vsel %vm589, %v512, 0
      %v726 = vsel %vm589, %v513, 0
      %v729 = vsel %vm589, %v514, 0
      %v732 = vsel %vm589, %v515, 0
      %v735 = vsel %vm589, %v516, 0
      %v738 = vsel %vm589, %v517, 0
      %v741 = vsel %vm589, %v518, 0
      %v744 = vsel %vm589, %v519, 0
      %v747 = vsel %vm589, %v520, 0
      %v750 = vsel %vm589, %v521, 0
      %v753 = vsel %vm589, %v522, 0
      %v756 = vsel %vm589, %v523, 0
      %v759 = vsel %vm589, %v524, 0
      %v762 = vsel %vm589, %v525, 0
      %v765 = vsel %vm589, %v526, 0
      %v768 = vsel %vm589, %v527, 0
      %vm770 = vcmask 1043456
      %v772 = vsel %vm770, %v588, 0
      %774 = vmatprep.subr.mxu0 0.0
      %775 = vmatpush1.msra.mxu0 %v772
      %776 = vmatprep.subr.mxu0 0.0
      %777 = vmatpush1.msra.mxu0 0.0
      %778 = vmatprep.subr.mxu0 0.0
      %779 = vmatpush1.msra.mxu0 0.0
      %780 = vmatprep.subr.mxu0 0.0
      %781 = vmatpush1.msra.mxu0 0.0
      %782 = vmatprep.subr.mxu0 0.0
      %783 = vmatpush1.msra.mxu0 0.0
      %784 = vmatprep.subr.mxu0 0.0
      %785 = vmatpush1.msra.mxu0 0.0
      %786 = vmatprep.subr.mxu0 0.0
      %787 = vmatpush1.msra.mxu0 0.0
      %788 = vmatprep.subr.mxu0 0.0
      %789 = vmatpush1.msra.mxu0 0.0
      %790 = vmatprep.subr.mxu0 0.0
      %791 = vmatpush1.msra.mxu0 0.0
      %792 = vmatprep.subr.mxu0 0.0
      %793 = vmatpush1.msra.mxu0 0.0
      %794 = vmatprep.subr.mxu0 0.0
      %795 = vmatpush1.msra.mxu0 0.0
      %796 = vmatprep.subr.mxu0 0.0
      %797 = vmatpush1.msra.mxu0 0.0
      %798 = vmatprep.subr.mxu0 0.0
      %799 = vmatpush1.msra.mxu0 0.0
      %800 = vmatprep.subr.mxu0 0.0
      %801 = vmatpush1.msra.mxu0 0.0
      %802 = vmatprep.subr.mxu0 0.0
      %803 = vmatpush1.msra.mxu0 0.0
      %804 = vmatprep.subr.mxu0 0.0
      %805 = vmatpush1.msra.mxu0 0.0
      %806 = vmatprep.subr.mxu0 0.0
      %807 = vmatpush1.msra.mxu0 0.0
      %808 = vmatprep.subr.mxu0 0.0
      %809 = vmatpush1.msra.mxu0 0.0
      %810 = vmatprep.subr.mxu0 0.0
      %811 = vmatpush1.msra.mxu0 0.0
      %812 = vmatprep.subr.mxu0 0.0
      %813 = vmatpush1.msra.mxu0 0.0
      %814 = vmatprep.subr.mxu0 0.0
      %815 = vmatpush1.msra.mxu0 0.0
      %816 = vmatprep.subr.mxu0 0.0
      %817 = vmatpush1.msra.mxu0 0.0
      %818 = vmatprep.subr.mxu0 0.0
      %819 = vmatpush1.msra.mxu0 0.0
      %820 = vmatprep.subr.mxu0 0.0
      %821 = vmatpush1.msra.mxu0 0.0
      %822 = vmatprep.subr.mxu0 0.0
      %823 = vmatpush1.msra.mxu0 0.0
      %824 = vmatprep.subr.mxu0 0.0
      %825 = vmatpush1.msra.mxu0 0.0
      %826 = vmatprep.subr.mxu0 0.0
      %827 = vmatpush1.msra.mxu0 0.0
      %828 = vmatprep.subr.mxu0 0.0
      %829 = vmatpush1.msra.mxu0 0.0
      %830 = vmatprep.subr.mxu0 0.0
      %831 = vmatpush1.msra.mxu0 0.0
      %832 = vmatprep.subr.mxu0 0.0
      %833 = vmatpush1.msra.mxu0 0.0
      %834 = vmatprep.subr.mxu0 0.0
      %835 = vmatpush1.msra.mxu0 0.0
      %836 = vmatprep.subr.mxu0 0.0
      %837 = vmatpush1.msra.mxu0 0.0
      %838 = vmatprep.mubr.f32.mxu0 0.0
      %839 = vmatmul.mubr.f32.gmra.mrb[0].mxu0 %v591
      %v840 = vpop.f32.mrb[0].mxu0
      %v841 = vadd.f32 0.0, %v840
      %v842 = vpop.f32.mrb[0].mxu0
      %843 = vmatprep.mubr.f32.mxu0 0.0
      %844 = vmatmul.mubr.f32.gmra.mrb[0].mxu0 %v594
      %v845 = vpop.f32.mrb[0].mxu0
      %v846 = vadd.f32 0.0, %v845
      %v847 = vpop.f32.mrb[0].mxu0
      %848 = vmatprep.mubr.f32.mxu0 0.0
      %849 = vmatmul.mubr.f32.gmra.mrb[0].mxu0 %v597
      %v850 = vpop.f32.mrb[0].mxu0
      %v851 = vadd.f32 0.0, %v850
      %v852 = vpop.f32.mrb[0].mxu0
      %853 = vmatprep.mubr.f32.mxu0 0.0
      %854 = vmatmul.mubr.f32.gmra.mrb[0].mxu0 %v600
      %v855 = vpop.f32.mrb[0].mxu0
      %v856 = vadd.f32 0.0, %v855
      %v857 = vpop.f32.mrb[0].mxu0
      %858 = vmatprep.mubr.f32.mxu0 0.0
      %859 = vmatmul.mubr.f32.gmra.mrb[0].mxu0 %v603
      %v860 = vpop.f32.mrb[0].mxu0
      %v861 = vadd.f32 0.0, %v860
      %v862 = vpop.f32.mrb[0].mxu0
      %863 = vmatprep.mubr.f32.mxu0 0.0
      %864 = vmatmul.mubr.f32.gmra.mrb[0].mxu0 %v606
      %v865 = vpop.f32.mrb[0].mxu0
      %v866 = vadd.f32 0.0, %v865
      %v867 = vpop.f32.mrb[0].mxu0
      %868 = vmatprep.mubr.f32.mxu0 0.0
      %869 = vmatmul.mubr.f32.gmra.mrb[0].mxu0 %v609
      %v870 = vpop.f32.mrb[0].mxu0
      %v871 = vadd.f32 0.0, %v870
      %v872 = vpop.f32.mrb[0].mxu0
      %873 = vmatprep.mubr.f32.mxu0 0.0
      %874 = vmatmul.mubr.f32.gmra.mrb[0].mxu0 %v612
      %v875 = vpop.f32.mrb[0].mxu0
      %v876 = vadd.f32 0.0, %v875
      %v877 = vpop.f32.mrb[0].mxu0
      %878 = vmatprep.mubr.f32.mxu0 0.0
      %879 = vmatmul.mubr.f32.gmra.mrb[0].mxu0 %v615
      %v880 = vpop.f32.mrb[0].mxu0
      %v881 = vadd.f32 0.0, %v880
      %v882 = vpop.f32.mrb[0].mxu0
      %883 = vmatprep.mubr.f32.mxu0 0.0
      %884 = vmatmul.mubr.f32.gmra.mrb[0].mxu0 %v618
      %v885 = vpop.f32.mrb[0].mxu0
      %v886 = vadd.f32 0.0, %v885
      %v887 = vpop.f32.mrb[0].mxu0
      %888 = vmatprep.mubr.f32.mxu0 0.0
      %889 = vmatmul.mubr.f32.gmra.mrb[0].mxu0 %v621
      %v890 = vpop.f32.mrb[0].mxu0
      %v891 = vadd.f32 0.0, %v890
      %v892 = vpop.f32.mrb[0].mxu0
      %893 = vmatprep.mubr.f32.mxu0 0.0
      %894 = vmatmul.mubr.f32.gmra.mrb[0].mxu0 %v624
      %v895 = vpop.f32.mrb[0].mxu0
      %v896 = vadd.f32 0.0, %v895
      %v897 = vpop.f32.mrb[0].mxu0
      %898 = vmatprep.mubr.f32.mxu0 0.0
      %899 = vmatmul.mubr.f32.gmra.mrb[0].mxu0 %v627
      %v900 = vpop.f32.mrb[0].mxu0
      %v901 = vadd.f32 0.0, %v900
      %v902 = vpop.f32.mrb[0].mxu0
      %903 = vmatprep.mubr.f32.mxu0 0.0
      %904 = vmatmul.mubr.f32.gmra.mrb[0].mxu0 %v630
      %v905 = vpop.f32.mrb[0].mxu0
      %v906 = vadd.f32 0.0, %v905
      %v907 = vpop.f32.mrb[0].mxu0
      %908 = vmatprep.mubr.f32.mxu0 0.0
      %909 = vmatmul.mubr.f32.gmra.mrb[0].mxu0 %v633
      %v910 = vpop.f32.mrb[0].mxu0
      %v911 = vadd.f32 0.0, %v910
      %v912 = vpop.f32.mrb[0].mxu0
      %913 = vmatprep.mubr.f32.mxu0 0.0
      %914 = vmatmul.mubr.f32.gmra.mrb[0].mxu0 %v636
      %v915 = vpop.f32.mrb[0].mxu0
      %v916 = vadd.f32 0.0, %v915
      %v917 = vpop.f32.mrb[0].mxu0
      %918 = vmatprep.mubr.f32.mxu0 0.0
      %919 = vmatmul.mubr.f32.gmra.mrb[0].mxu0 %v639
      %v920 = vpop.f32.mrb[0].mxu0
      %v921 = vadd.f32 0.0, %v920
      %v922 = vpop.f32.mrb[0].mxu0
      %923 = vmatprep.mubr.f32.mxu0 0.0
      %924 = vmatmul.mubr.f32.gmra.mrb[0].mxu0 %v642
      %v925 = vpop.f32.mrb[0].mxu0
      %v926 = vadd.f32 0.0, %v925
      %v927 = vpop.f32.mrb[0].mxu0
      %928 = vmatprep.mubr.f32.mxu0 0.0
      %929 = vmatmul.mubr.f32.gmra.mrb[0].mxu0 %v645
      %v930 = vpop.f32.mrb[0].mxu0
      %v931 = vadd.f32 0.0, %v930
      %v932 = vpop.f32.mrb[0].mxu0
      %933 = vmatprep.mubr.f32.mxu0 0.0
      %934 = vmatmul.mubr.f32.gmra.mrb[0].mxu0 %v648
      %v935 = vpop.f32.mrb[0].mxu0
      %v936 = vadd.f32 0.0, %v935
      %v937 = vpop.f32.mrb[0].mxu0
      %938 = vmatprep.mubr.f32.mxu0 0.0
      %939 = vmatmul.mubr.f32.gmra.mrb[0].mxu0 %v651
      %v940 = vpop.f32.mrb[0].mxu0
      %v941 = vadd.f32 0.0, %v940
      %v942 = vpop.f32.mrb[0].mxu0
      %943 = vmatprep.mubr.f32.mxu0 0.0
      %944 = vmatmul.mubr.f32.gmra.mrb[0].mxu0 %v654
      %v945 = vpop.f32.mrb[0].mxu0
      %v946 = vadd.f32 0.0, %v945
      %v947 = vpop.f32.mrb[0].mxu0
      %948 = vmatprep.mubr.f32.mxu0 0.0
      %949 = vmatmul.mubr.f32.gmra.mrb[0].mxu0 %v657
      %v950 = vpop.f32.mrb[0].mxu0
      %v951 = vadd.f32 0.0, %v950
      %v952 = vpop.f32.mrb[0].mxu0
      %953 = vmatprep.mubr.f32.mxu0 0.0
      %954 = vmatmul.mubr.f32.gmra.mrb[0].mxu0 %v660
      %v955 = vpop.f32.mrb[0].mxu0
      %v956 = vadd.f32 0.0, %v955
      %v957 = vpop.f32.mrb[0].mxu0
      %958 = vmatprep.mubr.f32.mxu0 0.0
      %959 = vmatmul.mubr.f32.gmra.mrb[0].mxu0 %v663
      %v960 = vpop.f32.mrb[0].mxu0
      %v961 = vadd.f32 0.0, %v960
      %v962 = vpop.f32.mrb[0].mxu0
      %963 = vmatprep.mubr.f32.mxu0 0.0
      %964 = vmatmul.mubr.f32.gmra.mrb[0].mxu0 %v666
      %v965 = vpop.f32.mrb[0].mxu0
      %v966 = vadd.f32 0.0, %v965
      %v967 = vpop.f32.mrb[0].mxu0
      %968 = vmatprep.mubr.f32.mxu0 0.0
      %969 = vmatmul.mubr.f32.gmra.mrb[0].mxu0 %v669
      %v970 = vpop.f32.mrb[0].mxu0
      %v971 = vadd.f32 0.0, %v970
      %v972 = vpop.f32.mrb[0].mxu0
      %973 = vmatprep.mubr.f32.mxu0 0.0
      %974 = vmatmul.mubr.f32.gmra.mrb[0].mxu0 %v672
      %v975 = vpop.f32.mrb[0].mxu0
      %v976 = vadd.f32 0.0, %v975
      %v977 = vpop.f32.mrb[0].mxu0
      %978 = vmatprep.mubr.f32.mxu0 0.0
      %979 = vmatmul.mubr.f32.gmra.mrb[0].mxu0 %v675
      %v980 = vpop.f32.mrb[0].mxu0
      %v981 = vadd.f32 0.0, %v980
      %v982 = vpop.f32.mrb[0].mxu0
      %983 = vmatprep.mubr.f32.mxu0 0.0
      %984 = vmatmul.mubr.f32.gmra.mrb[0].mxu0 %v678
      %v985 = vpop.f32.mrb[0].mxu0
      %v986 = vadd.f32 0.0, %v985
      %v987 = vpop.f32.mrb[0].mxu0
      %988 = vmatprep.mubr.f32.mxu0 0.0
      %989 = vmatmul.mubr.f32.gmra.mrb[0].mxu0 %v681
      %v990 = vpop.f32.mrb[0].mxu0
      %v991 = vadd.f32 0.0, %v990
      %v992 = vpop.f32.mrb[0].mxu0
      %993 = vmatprep.mubr.f32.mxu0 0.0
      %994 = vmatmul.mubr.f32.gmra.mrb[0].mxu0 %v684
      %v995 = vpop.f32.mrb[0].mxu0
      %v996 = vadd.f32 0.0, %v995
      %v997 = vpop.f32.mrb[0].mxu0
      %998 = vmatprep.mubr.f32.mxu0 0.0
      %999 = vmatmul.mubr.f32.gmra.mrb[0].mxu0 %v687
      %v1000 = vpop.f32.mrb[0].mxu0
      %v1001 = vadd.f32 0.0, %v1000
      %v1002 = vpop.f32.mrb[0].mxu0
      %1003 = vmatprep.mubr.f32.mxu0 0.0
      %1004 = vmatmul.mubr.f32.gmra.mrb[0].mxu0 %v690
      %v1005 = vpop.f32.mrb[0].mxu0
      %v1006 = vadd.f32 0.0, %v1005
      %v1007 = vpop.f32.mrb[0].mxu0
      %1008 = vmatprep.mubr.f32.mxu0 0.0
      %1009 = vmatmul.mubr.f32.gmra.mrb[0].mxu0 %v693
      %v1010 = vpop.f32.mrb[0].mxu0
      %v1011 = vadd.f32 0.0, %v1010
      %v1012 = vpop.f32.mrb[0].mxu0
      %1013 = vmatprep.mubr.f32.mxu0 0.0
      %1014 = vmatmul.mubr.f32.gmra.mrb[0].mxu0 %v696
      %v1015 = vpop.f32.mrb[0].mxu0
      %v1016 = vadd.f32 0.0, %v1015
      %v1017 = vpop.f32.mrb[0].mxu0
      %1018 = vmatprep.mubr.f32.mxu0 0.0
      %1019 = vmatmul.mubr.f32.gmra.mrb[0].mxu0 %v699
      %v1020 = vpop.f32.mrb[0].mxu0
      %v1021 = vadd.f32 0.0, %v1020
      %v1022 = vpop.f32.mrb[0].mxu0
      %1023 = vmatprep.mubr.f32.mxu0 0.0
      %1024 = vmatmul.mubr.f32.gmra.mrb[0].mxu0 %v702
      %v1025 = vpop.f32.mrb[0].mxu0
      %v1026 = vadd.f32 0.0, %v1025
      %v1027 = vpop.f32.mrb[0].mxu0
      %1028 = vmatprep.mubr.f32.mxu0 0.0
      %1029 = vmatmul.mubr.f32.gmra.mrb[0].mxu0 %v705
      %v1030 = vpop.f32.mrb[0].mxu0
      %v1031 = vadd.f32 0.0, %v1030
      %v1032 = vpop.f32.mrb[0].mxu0
      %1033 = vmatprep.mubr.f32.mxu0 0.0
      %1034 = vmatmul.mubr.f32.gmra.mrb[0].mxu0 %v708
      %v1035 = vpop.f32.mrb[0].mxu0
      %v1036 = vadd.f32 0.0, %v1035
      %v1037 = vpop.f32.mrb[0].mxu0
      %1038 = vmatprep.mubr.f32.mxu0 0.0
      %1039 = vmatmul.mubr.f32.gmra.mrb[0].mxu0 %v711
      %v1040 = vpop.f32.mrb[0].mxu0
      %v1041 = vadd.f32 0.0, %v1040
      %v1042 = vpop.f32.mrb[0].mxu0
      %1043 = vmatprep.mubr.f32.mxu0 0.0
      %1044 = vmatmul.mubr.f32.gmra.mrb[0].mxu0 %v714
      %v1045 = vpop.f32.mrb[0].mxu0
      %v1046 = vadd.f32 0.0, %v1045
      %v1047 = vpop.f32.mrb[0].mxu0
      %1048 = vmatprep.mubr.f32.mxu0 0.0
      %1049 = vmatmul.mubr.f32.gmra.mrb[0].mxu0 %v717
      %v1050 = vpop.f32.mrb[0].mxu0
      %v1051 = vadd.f32 0.0, %v1050
      %v1052 = vpop.f32.mrb[0].mxu0
      %1053 = vmatprep.mubr.f32.mxu0 0.0
      %1054 = vmatmul.mubr.f32.gmra.mrb[0].mxu0 %v720
      %v1055 = vpop.f32.mrb[0].mxu0
      %v1056 = vadd.f32 0.0, %v1055
      %v1057 = vpop.f32.mrb[0].mxu0
      %1058 = vmatprep.mubr.f32.mxu0 0.0
      %1059 = vmatmul.mubr.f32.gmra.mrb[0].mxu0 %v723
      %v1060 = vpop.f32.mrb[0].mxu0
      %v1061 = vadd.f32 0.0, %v1060
      %v1062 = vpop.f32.mrb[0].mxu0
      %1063 = vmatprep.mubr.f32.mxu0 0.0
      %1064 = vmatmul.mubr.f32.gmra.mrb[0].mxu0 %v726
      %v1065 = vpop.f32.mrb[0].mxu0
      %v1066 = vadd.f32 0.0, %v1065
      %v1067 = vpop.f32.mrb[0].mxu0
      %1068 = vmatprep.mubr.f32.mxu0 0.0
      %1069 = vmatmul.mubr.f32.gmra.mrb[0].mxu0 %v729
      %v1070 = vpop.f32.mrb[0].mxu0
      %v1071 = vadd.f32 0.0, %v1070
      %v1072 = vpop.f32.mrb[0].mxu0
      %1073 = vmatprep.mubr.f32.mxu0 0.0
      %1074 = vmatmul.mubr.f32.gmra.mrb[0].mxu0 %v732
      %v1075 = vpop.f32.mrb[0].mxu0
      %v1076 = vadd.f32 0.0, %v1075
      %v1077 = vpop.f32.mrb[0].mxu0
      %1078 = vmatprep.mubr.f32.mxu0 0.0
      %1079 = vmatmul.mubr.f32.gmra.mrb[0].mxu0 %v735
      %v1080 = vpop.f32.mrb[0].mxu0
      %v1081 = vadd.f32 0.0, %v1080
      %v1082 = vpop.f32.mrb[0].mxu0
      %1083 = vmatprep.mubr.f32.mxu0 0.0
      %1084 = vmatmul.mubr.f32.gmra.mrb[0].mxu0 %v738
      %v1085 = vpop.f32.mrb[0].mxu0
      %v1086 = vadd.f32 0.0, %v1085
      %v1087 = vpop.f32.mrb[0].mxu0
      %1088 = vmatprep.mubr.f32.mxu0 0.0
      %1089 = vmatmul.mubr.f32.gmra.mrb[0].mxu0 %v741
      %v1090 = vpop.f32.mrb[0].mxu0
      %v1091 = vadd.f32 0.0, %v1090
      %v1092 = vpop.f32.mrb[0].mxu0
      %1093 = vmatprep.mubr.f32.mxu0 0.0
      %1094 = vmatmul.mubr.f32.gmra.mrb[0].mxu0 %v744
      %v1095 = vpop.f32.mrb[0].mxu0
      %v1096 = vadd.f32 0.0, %v1095
      %v1097 = vpop.f32.mrb[0].mxu0
      %1098 = vmatprep.mubr.f32.mxu0 0.0
      %1099 = vmatmul.mubr.f32.gmra.mrb[0].mxu0 %v747
      %v1100 = vpop.f32.mrb[0].mxu0
      %v1101 = vadd.f32 0.0, %v1100
      %v1102 = vpop.f32.mrb[0].mxu0
      %1103 = vmatprep.mubr.f32.mxu0 0.0
      %1104 = vmatmul.mubr.f32.gmra.mrb[0].mxu0 %v750
      %v1105 = vpop.f32.mrb[0].mxu0
      %v1106 = vadd.f32 0.0, %v1105
      %v1107 = vpop.f32.mrb[0].mxu0
      %1108 = vmatprep.mubr.f32.mxu0 0.0
      %1109 = vmatmul.mubr.f32.gmra.mrb[0].mxu0 %v753
      %v1110 = vpop.f32.mrb[0].mxu0
      %v1111 = vadd.f32 0.0, %v1110
      %v1112 = vpop.f32.mrb[0].mxu0
      %1113 = vmatprep.mubr.f32.mxu0 0.0
      %1114 = vmatmul.mubr.f32.gmra.mrb[0].mxu0 %v756
      %v1115 = vpop.f32.mrb[0].mxu0
      %v1116 = vadd.f32 0.0, %v1115
      %v1117 = vpop.f32.mrb[0].mxu0
      %1118 = vmatprep.mubr.f32.mxu0 0.0
      %1119 = vmatmul.mubr.f32.gmra.mrb[0].mxu0 %v759
      %v1120 = vpop.f32.mrb[0].mxu0
      %v1121 = vadd.f32 0.0, %v1120
      %v1122 = vpop.f32.mrb[0].mxu0
      %1123 = vmatprep.mubr.f32.mxu0 0.0
      %1124 = vmatmul.mubr.f32.gmra.mrb[0].mxu0 %v762
      %v1125 = vpop.f32.mrb[0].mxu0
      %v1126 = vadd.f32 0.0, %v1125
      %v1127 = vpop.f32.mrb[0].mxu0
      %1128 = vmatprep.mubr.f32.mxu0 0.0
      %1129 = vmatmul.mubr.f32.gmra.mrb[0].mxu0 %v765
      %v1130 = vpop.f32.mrb[0].mxu0
      %v1131 = vadd.f32 0.0, %v1130
      %v1132 = vpop.f32.mrb[0].mxu0
      %1133 = vmatprep.mubr.f32.mxu0 0.0
      %1134 = vmatmul.mubr.f32.gmra.mrb[0].mxu0 %v768
      %v1135 = vpop.f32.mrb[0].mxu0
      %v1136 = vadd.f32 0.0, %v1135
      %v1137 = vpop.f32.mrb[0].mxu0
      %1138 = vdwg.mxu0
      %v1139 = vld [vmem:[%s3] sm:$0x1]
      %v1141 = vlaneseq
      %v1142 = vshrl.u32 %v1141, 7
      %v1143 = vsub.s32 0, %v1142
      %v1144 = vrot.slane %v1139, %v1143
      %v1146 = vmul.f32 %v841, %v1144
      %v1147 = vmul.f32 %v846, %v1144
      %v1148 = vmul.f32 %v851, %v1144
      %v1149 = vmul.f32 %v856, %v1144
      %v1150 = vmul.f32 %v861, %v1144
      %v1151 = vmul.f32 %v866, %v1144
      %v1152 = vmul.f32 %v871, %v1144
      %v1153 = vmul.f32 %v876, %v1144
      %v1154 = vmul.f32 %v881, %v1144
      %v1155 = vmul.f32 %v886, %v1144
      %v1156 = vmul.f32 %v891, %v1144
      %v1157 = vmul.f32 %v896, %v1144
      %v1158 = vmul.f32 %v901, %v1144
      %v1159 = vmul.f32 %v906, %v1144
      %v1160 = vmul.f32 %v911, %v1144
      %v1161 = vmul.f32 %v916, %v1144
      %v1162 = vmul.f32 %v921, %v1144
      %v1163 = vmul.f32 %v926, %v1144
      %v1164 = vmul.f32 %v931, %v1144
      %v1165 = vmul.f32 %v936, %v1144
      %v1166 = vmul.f32 %v941, %v1144
      %v1167 = vmul.f32 %v946, %v1144
      %v1168 = vmul.f32 %v951, %v1144
      %v1169 = vmul.f32 %v956, %v1144
      %v1170 = vmul.f32 %v961, %v1144
      %v1171 = vmul.f32 %v966, %v1144
      %v1172 = vmul.f32 %v971, %v1144
      %v1173 = vmul.f32 %v976, %v1144
      %v1174 = vmul.f32 %v981, %v1144
      %v1175 = vmul.f32 %v986, %v1144
      %v1176 = vmul.f32 %v991, %v1144
      %v1177 = vmul.f32 %v996, %v1144
      %v1178 = vmul.f32 %v1001, %v1144
      %v1179 = vmul.f32 %v1006, %v1144
      %v1180 = vmul.f32 %v1011, %v1144
      %v1181 = vmul.f32 %v1016, %v1144
      %v1182 = vmul.f32 %v1021, %v1144
      %v1183 = vmul.f32 %v1026, %v1144
      %v1184 = vmul.f32 %v1031, %v1144
      %v1185 = vmul.f32 %v1036, %v1144
      %v1186 = vmul.f32 %v1041, %v1144
      %v1187 = vmul.f32 %v1046, %v1144
      %v1188 = vmul.f32 %v1051, %v1144
      %v1189 = vmul.f32 %v1056, %v1144
      %v1190 = vmul.f32 %v1061, %v1144
      %v1191 = vmul.f32 %v1066, %v1144
      %v1192 = vmul.f32 %v1071, %v1144
      %v1193 = vmul.f32 %v1076, %v1144
      %v1194 = vmul.f32 %v1081, %v1144
      %v1195 = vmul.f32 %v1086, %v1144
      %v1196 = vmul.f32 %v1091, %v1144
      %v1197 = vmul.f32 %v1096, %v1144
      %v1198 = vmul.f32 %v1101, %v1144
      %v1199 = vmul.f32 %v1106, %v1144
      %v1200 = vmul.f32 %v1111, %v1144
      %v1201 = vmul.f32 %v1116, %v1144
      %v1202 = vmul.f32 %v1121, %v1144
      %v1203 = vmul.f32 %v1126, %v1144
      %v1204 = vmul.f32 %v1131, %v1144
      %v1205 = vmul.f32 %v1136, %v1144
      %v1206 = vld [vmem:[%s4] sm:$0x1]
      %v1208 = vlaneseq
      %v1209 = vshrl.u32 %v1208, 7
      %v1210 = vsub.s32 0, %v1209
      %v1211 = vrot.slane %v1206, %v1210
      %v1213 = vadd.f32 %v1146, %v1211
      %v1214 = vadd.f32 %v1147, %v1211
      %v1215 = vadd.f32 %v1148, %v1211
      %v1216 = vadd.f32 %v1149, %v1211
      %v1217 = vadd.f32 %v1150, %v1211
      %v1218 = vadd.f32 %v1151, %v1211
      %v1219 = vadd.f32 %v1152, %v1211
      %v1220 = vadd.f32 %v1153, %v1211
      %v1221 = vadd.f32 %v1154, %v1211
      %v1222 = vadd.f32 %v1155, %v1211
      %v1223 = vadd.f32 %v1156, %v1211
      %v1224 = vadd.f32 %v1157, %v1211
      %v1225 = vadd.f32 %v1158, %v1211
      %v1226 = vadd.f32 %v1159, %v1211
      %v1227 = vadd.f32 %v1160, %v1211
      %v1228 = vadd.f32 %v1161, %v1211
      %v1229 = vadd.f32 %v1162, %v1211
      %v1230 = vadd.f32 %v1163, %v1211
      %v1231 = vadd.f32 %v1164, %v1211
      %v1232 = vadd.f32 %v1165, %v1211
      %v1233 = vadd.f32 %v1166, %v1211
      %v1234 = vadd.f32 %v1167, %v1211
      %v1235 = vadd.f32 %v1168, %v1211
      %v1236 = vadd.f32 %v1169, %v1211
      %v1237 = vadd.f32 %v1170, %v1211
      %v1238 = vadd.f32 %v1171, %v1211
      %v1239 = vadd.f32 %v1172, %v1211
      %v1240 = vadd.f32 %v1173, %v1211
      %v1241 = vadd.f32 %v1174, %v1211
      %v1242 = vadd.f32 %v1175, %v1211
      %v1243 = vadd.f32 %v1176, %v1211
      %v1244 = vadd.f32 %v1177, %v1211
      %v1245 = vadd.f32 %v1178, %v1211
      %v1246 = vadd.f32 %v1179, %v1211
      %v1247 = vadd.f32 %v1180, %v1211
      %v1248 = vadd.f32 %v1181, %v1211
      %v1249 = vadd.f32 %v1182, %v1211
      %v1250 = vadd.f32 %v1183, %v1211
      %v1251 = vadd.f32 %v1184, %v1211
      %v1252 = vadd.f32 %v1185, %v1211
      %v1253 = vadd.f32 %v1186, %v1211
      %v1254 = vadd.f32 %v1187, %v1211
      %v1255 = vadd.f32 %v1188, %v1211
      %v1256 = vadd.f32 %v1189, %v1211
      %v1257 = vadd.f32 %v1190, %v1211
      %v1258 = vadd.f32 %v1191, %v1211
      %v1259 = vadd.f32 %v1192, %v1211
      %v1260 = vadd.f32 %v1193, %v1211
      %v1261 = vadd.f32 %v1194, %v1211
      %v1262 = vadd.f32 %v1195, %v1211
      %v1263 = vadd.f32 %v1196, %v1211
      %v1264 = vadd.f32 %v1197, %v1211
      %v1265 = vadd.f32 %v1198, %v1211
      %v1266 = vadd.f32 %v1199, %v1211
      %v1267 = vadd.f32 %v1200, %v1211
      %v1268 = vadd.f32 %v1201, %v1211
      %v1269 = vadd.f32 %v1202, %v1211
      %v1270 = vadd.f32 %v1203, %v1211
      %v1271 = vadd.f32 %v1204, %v1211
      %v1272 = vadd.f32 %v1205, %v1211
      %v1273 = vmax.f32 %v1213, 0.0
      %v1274 = vmax.f32 %v1214, 0.0
      %v1275 = vmax.f32 %v1215, 0.0
      %v1276 = vmax.f32 %v1216, 0.0
      %v1277 = vmax.f32 %v1217, 0.0
      %v1278 = vmax.f32 %v1218, 0.0
      %v1279 = vmax.f32 %v1219, 0.0
      %v1280 = vmax.f32 %v1220, 0.0
      %v1281 = vmax.f32 %v1221, 0.0
      %v1282 = vmax.f32 %v1222, 0.0
      %v1283 = vmax.f32 %v1223, 0.0
      %v1284 = vmax.f32 %v1224, 0.0
      %v1285 = vmax.f32 %v1225, 0.0
      %v1286 = vmax.f32 %v1226, 0.0
      %v1287 = vmax.f32 %v1227, 0.0
      %v1288 = vmax.f32 %v1228, 0.0
      %v1289 = vmax.f32 %v1229, 0.0
      %v1290 = vmax.f32 %v1230, 0.0
      %v1291 = vmax.f32 %v1231, 0.0
      %v1292 = vmax.f32 %v1232, 0.0
      %v1293 = vmax.f32 %v1233, 0.0
      %v1294 = vmax.f32 %v1234, 0.0
      %v1295 = vmax.f32 %v1235, 0.0
      %v1296 = vmax.f32 %v1236, 0.0
      %v1297 = vmax.f32 %v1237, 0.0
      %v1298 = vmax.f32 %v1238, 0.0
      %v1299 = vmax.f32 %v1239, 0.0
      %v1300 = vmax.f32 %v1240, 0.0
      %v1301 = vmax.f32 %v1241, 0.0
      %v1302 = vmax.f32 %v1242, 0.0
      %v1303 = vmax.f32 %v1243, 0.0
      %v1304 = vmax.f32 %v1244, 0.0
      %v1305 = vmax.f32 %v1245, 0.0
      %v1306 = vmax.f32 %v1246, 0.0
      %v1307 = vmax.f32 %v1247, 0.0
      %v1308 = vmax.f32 %v1248, 0.0
      %v1309 = vmax.f32 %v1249, 0.0
      %v1310 = vmax.f32 %v1250, 0.0
      %v1311 = vmax.f32 %v1251, 0.0
      %v1312 = vmax.f32 %v1252, 0.0
      %v1313 = vmax.f32 %v1253, 0.0
      %v1314 = vmax.f32 %v1254, 0.0
      %v1315 = vmax.f32 %v1255, 0.0
      %v1316 = vmax.f32 %v1256, 0.0
      %v1317 = vmax.f32 %v1257, 0.0
      %v1318 = vmax.f32 %v1258, 0.0
      %v1319 = vmax.f32 %v1259, 0.0
      %v1320 = vmax.f32 %v1260, 0.0
      %v1321 = vmax.f32 %v1261, 0.0
      %v1322 = vmax.f32 %v1262, 0.0
      %v1323 = vmax.f32 %v1263, 0.0
      %v1324 = vmax.f32 %v1264, 0.0
      %v1325 = vmax.f32 %v1265, 0.0
      %v1326 = vmax.f32 %v1266, 0.0
      %v1327 = vmax.f32 %v1267, 0.0
      %v1328 = vmax.f32 %v1268, 0.0
      %v1329 = vmax.f32 %v1269, 0.0
      %v1330 = vmax.f32 %v1270, 0.0
      %v1331 = vmax.f32 %v1271, 0.0
      %v1332 = vmax.f32 %v1272, 0.0
      %vm1381 = vcmask 1045504
      %v1382 = vrot.slane %v1279, 2
      %v1383 = vrot.slane %v1280, 2
      %v1384 = vsel %vm1381, %v1382, %v1383
      %v1385 = vrot.slane %v1281, 2
      %v1386 = vsel %vm1381, %v1383, %v1385
      %v1387 = vrot.slane %v1282, 2
      %v1388 = vrot.slane %v1283, 2
      %v1389 = vsel %vm1381, %v1387, %v1388
      %v1390 = vrot.slane %v1284, 2
      %v1391 = vsel %vm1381, %v1388, %v1390
      %v1392 = vrot.slane %v1285, 2
      %v1393 = vrot.slane %v1286, 2
      %v1394 = vsel %vm1381, %v1392, %v1393
      %v1395 = vrot.slane %v1287, 2
      %v1396 = vsel %vm1381, %v1393, %v1395
      %v1397 = vrot.slane %v1288, 2
      %v1398 = vrot.slane %v1289, 2
      %v1399 = vsel %vm1381, %v1397, %v1398
      %v1400 = vrot.slane %v1290, 2
      %v1401 = vsel %vm1381, %v1398, %v1400
      %v1402 = vrot.slane %v1291, 2
      %v1403 = vrot.slane %v1292, 2
      %v1404 = vsel %vm1381, %v1402, %v1403
      %v1405 = vrot.slane %v1293, 2
      %v1406 = vsel %vm1381, %v1403, %v1405
      %v1407 = vrot.slane %v1294, 2
      %v1408 = vrot.slane %v1295, 2
      %v1409 = vsel %vm1381, %v1407, %v1408
      %v1410 = vrot.slane %v1296, 2
      %v1411 = vsel %vm1381, %v1408, %v1410
      %v1412 = vrot.slane %v1297, 2
      %v1413 = vrot.slane %v1298, 2
      %v1414 = vsel %vm1381, %v1412, %v1413
      %v1415 = vrot.slane %v1299, 2
      %v1416 = vsel %vm1381, %v1413, %v1415
      %v1417 = vrot.slane %v1300, 2
      %v1418 = vrot.slane %v1301, 2
      %v1419 = vsel %vm1381, %v1417, %v1418
      %v1420 = vrot.slane %v1302, 2
      %v1421 = vsel %vm1381, %v1418, %v1420
      %v1422 = vrot.slane %v1303, 2
      %v1423 = vrot.slane %v1304, 2
      %v1424 = vsel %vm1381, %v1422, %v1423
      %v1425 = vrot.slane %v1305, 2
      %v1426 = vsel %vm1381, %v1423, %v1425
      %v1427 = vrot.slane %v1306, 2
      %v1428 = vrot.slane %v1307, 2
      %v1429 = vsel %vm1381, %v1427, %v1428
      %v1430 = vrot.slane %v1308, 2
      %v1431 = vsel %vm1381, %v1428, %v1430
      %v1432 = vrot.slane %v1309, 2
      %v1433 = vrot.slane %v1310, 2
      %v1434 = vsel %vm1381, %v1432, %v1433
      %v1435 = vrot.slane %v1311, 2
      %v1436 = vsel %vm1381, %v1433, %v1435
      %v1437 = vrot.slane %v1312, 2
      %v1438 = vrot.slane %v1313, 2
      %v1439 = vsel %vm1381, %v1437, %v1438
      %v1440 = vrot.slane %v1314, 2
      %v1441 = vsel %vm1381, %v1438, %v1440
      %v1442 = vrot.slane %v1315, 2
      %v1443 = vrot.slane %v1316, 2
      %v1444 = vsel %vm1381, %v1442, %v1443
      %v1445 = vrot.slane %v1317, 2
      %v1446 = vsel %vm1381, %v1443, %v1445
      %v1447 = vrot.slane %v1318, 2
      %v1448 = vrot.slane %v1319, 2
      %v1449 = vsel %vm1381, %v1447, %v1448
      %v1450 = vrot.slane %v1320, 2
      %v1451 = vsel %vm1381, %v1448, %v1450
      %v1452 = vrot.slane %v1321, 2
      %v1453 = vrot.slane %v1322, 2
      %v1454 = vsel %vm1381, %v1452, %v1453
      %v1455 = vrot.slane %v1323, 2
      %v1456 = vsel %vm1381, %v1453, %v1455
      %v1457 = vrot.slane %v1324, 2
      %v1458 = vrot.slane %v1325, 2
      %v1459 = vsel %vm1381, %v1457, %v1458
      %v1460 = vrot.slane %v1326, 2
      %v1461 = vsel %vm1381, %v1458, %v1460
      %1495 = vset.pattern.permute.xlu0 0
      %1496 = vperm.xlu0 %1495, %v528
      %v1497 = vpop.permute.xlu0 %1496
      %1500 = vset.pattern.permute.xlu0 0
      %1501 = vperm.xlu0 %1500, %v529
      %v1502 = vpop.permute.xlu0 %1501
      %1505 = vset.pattern.permute.xlu0 0
      %1506 = vperm.xlu0 %1505, %v530
      %v1507 = vpop.permute.xlu0 %1506
      %1510 = vset.pattern.permute.xlu0 0
      %1511 = vperm.xlu0 %1510, %v531
      %v1512 = vpop.permute.xlu0 %1511
      %1515 = vset.pattern.permute.xlu0 0
      %1516 = vperm.xlu0 %1515, %v532
      %v1517 = vpop.permute.xlu0 %1516
      %1520 = vset.pattern.permute.xlu0 0
      %1521 = vperm.xlu0 %1520, %v533
      %v1522 = vpop.permute.xlu0 %1521
      %1525 = vset.pattern.permute.xlu0 0
      %1526 = vperm.xlu0 %1525, %v534
      %v1527 = vpop.permute.xlu0 %1526
      %1530 = vset.pattern.permute.xlu0 0
      %1531 = vperm.xlu0 %1530, %v535
      %v1532 = vpop.permute.xlu0 %1531
      %1535 = vset.pattern.permute.xlu0 0
      %1536 = vperm.xlu0 %1535, %v536
      %v1537 = vpop.permute.xlu0 %1536
      %1540 = vset.pattern.permute.xlu0 0
      %1541 = vperm.xlu0 %1540, %v537
      %v1542 = vpop.permute.xlu0 %1541
      %1545 = vset.pattern.permute.xlu0 0
      %1546 = vperm.xlu0 %1545, %v538
      %v1547 = vpop.permute.xlu0 %1546
      %1550 = vset.pattern.permute.xlu0 0
      %1551 = vperm.xlu0 %1550, %v539
      %v1552 = vpop.permute.xlu0 %1551
      %1555 = vset.pattern.permute.xlu0 0
      %1556 = vperm.xlu0 %1555, %v540
      %v1557 = vpop.permute.xlu0 %1556
      %1560 = vset.pattern.permute.xlu0 0
      %1561 = vperm.xlu0 %1560, %v541
      %v1562 = vpop.permute.xlu0 %1561
      %1565 = vset.pattern.permute.xlu0 0
      %1566 = vperm.xlu0 %1565, %v542
      %v1567 = vpop.permute.xlu0 %1566
      %1570 = vset.pattern.permute.xlu0 0
      %1571 = vperm.xlu0 %1570, %v543
      %v1572 = vpop.permute.xlu0 %1571
      %1575 = vset.pattern.permute.xlu0 0
      %1576 = vperm.xlu0 %1575, %v544
      %v1577 = vpop.permute.xlu0 %1576
      %1580 = vset.pattern.permute.xlu0 0
      %1581 = vperm.xlu0 %1580, %v545
      %v1582 = vpop.permute.xlu0 %1581
      %1585 = vset.pattern.permute.xlu0 0
      %1586 = vperm.xlu0 %1585, %v546
      %v1587 = vpop.permute.xlu0 %1586
      %1590 = vset.pattern.permute.xlu0 0
      %1591 = vperm.xlu0 %1590, %v547
      %v1592 = vpop.permute.xlu0 %1591
      %1595 = vset.pattern.permute.xlu0 0
      %1596 = vperm.xlu0 %1595, %v548
      %v1597 = vpop.permute.xlu0 %1596
      %1600 = vset.pattern.permute.xlu0 0
      %1601 = vperm.xlu0 %1600, %v549
      %v1602 = vpop.permute.xlu0 %1601
      %1605 = vset.pattern.permute.xlu0 0
      %1606 = vperm.xlu0 %1605, %v550
      %v1607 = vpop.permute.xlu0 %1606
      %1610 = vset.pattern.permute.xlu0 0
      %1611 = vperm.xlu0 %1610, %v551
      %v1612 = vpop.permute.xlu0 %1611
      %1615 = vset.pattern.permute.xlu0 0
      %1616 = vperm.xlu0 %1615, %v552
      %v1617 = vpop.permute.xlu0 %1616
      %1620 = vset.pattern.permute.xlu0 0
      %1621 = vperm.xlu0 %1620, %v553
      %v1622 = vpop.permute.xlu0 %1621
      %1625 = vset.pattern.permute.xlu0 0
      %1626 = vperm.xlu0 %1625, %v554
      %v1627 = vpop.permute.xlu0 %1626
      %1630 = vset.pattern.permute.xlu0 0
      %1631 = vperm.xlu0 %1630, %v555
      %v1632 = vpop.permute.xlu0 %1631
      %1635 = vset.pattern.permute.xlu0 0
      %1636 = vperm.xlu0 %1635, %v556
      %v1637 = vpop.permute.xlu0 %1636
      %1640 = vset.pattern.permute.xlu0 0
      %1641 = vperm.xlu0 %1640, %v557
      %v1642 = vpop.permute.xlu0 %1641
      %1645 = vset.pattern.permute.xlu0 0
      %1646 = vperm.xlu0 %1645, %v558
      %v1647 = vpop.permute.xlu0 %1646
      %1650 = vset.pattern.permute.xlu0 0
      %1651 = vperm.xlu0 %1650, %v559
      %v1652 = vpop.permute.xlu0 %1651
      %1655 = vset.pattern.permute.xlu0 0
      %1656 = vperm.xlu0 %1655, %v560
      %v1657 = vpop.permute.xlu0 %1656
      %1660 = vset.pattern.permute.xlu0 0
      %1661 = vperm.xlu0 %1660, %v561
      %v1662 = vpop.permute.xlu0 %1661
      %1665 = vset.pattern.permute.xlu0 0
      %1666 = vperm.xlu0 %1665, %v562
      %v1667 = vpop.permute.xlu0 %1666
      %1670 = vset.pattern.permute.xlu0 0
      %1671 = vperm.xlu0 %1670, %v563
      %v1672 = vpop.permute.xlu0 %1671
      %1675 = vset.pattern.permute.xlu0 0
      %1676 = vperm.xlu0 %1675, %v564
      %v1677 = vpop.permute.xlu0 %1676
      %1680 = vset.pattern.permute.xlu0 0
      %1681 = vperm.xlu0 %1680, %v565
      %v1682 = vpop.permute.xlu0 %1681
      %1685 = vset.pattern.permute.xlu0 0
      %1686 = vperm.xlu0 %1685, %v566
      %v1687 = vpop.permute.xlu0 %1686
      %1690 = vset.pattern.permute.xlu0 0
      %1691 = vperm.xlu0 %1690, %v567
      %v1692 = vpop.permute.xlu0 %1691
      %1695 = vset.pattern.permute.xlu0 0
      %1696 = vperm.xlu0 %1695, %v568
      %v1697 = vpop.permute.xlu0 %1696
      %1700 = vset.pattern.permute.xlu0 0
      %1701 = vperm.xlu0 %1700, %v569
      %v1702 = vpop.permute.xlu0 %1701
      %1705 = vset.pattern.permute.xlu0 0
      %1706 = vperm.xlu0 %1705, %v570
      %v1707 = vpop.permute.xlu0 %1706
      %1710 = vset.pattern.permute.xlu0 0
      %1711 = vperm.xlu0 %1710, %v571
      %v1712 = vpop.permute.xlu0 %1711
      %1715 = vset.pattern.permute.xlu0 0
      %1716 = vperm.xlu0 %1715, %v572
      %v1717 = vpop.permute.xlu0 %1716
      %1720 = vset.pattern.permute.xlu0 0
      %1721 = vperm.xlu0 %1720, %v573
      %v1722 = vpop.permute.xlu0 %1721
      %1725 = vset.pattern.permute.xlu0 0
      %1726 = vperm.xlu0 %1725, %v574
      %v1727 = vpop.permute.xlu0 %1726
      %1730 = vset.pattern.permute.xlu0 0
      %1731 = vperm.xlu0 %1730, %v575
      %v1732 = vpop.permute.xlu0 %1731
      %1735 = vset.pattern.permute.xlu0 0
      %1736 = vperm.xlu0 %1735, %v576
      %v1737 = vpop.permute.xlu0 %1736
      %1740 = vset.pattern.permute.xlu0 0
      %1741 = vperm.xlu0 %1740, %v577
      %v1742 = vpop.permute.xlu0 %1741
      %1745 = vset.pattern.permute.xlu0 0
      %1746 = vperm.xlu0 %1745, %v578
      %v1747 = vpop.permute.xlu0 %1746
      %1750 = vset.pattern.permute.xlu0 0
      %1751 = vperm.xlu0 %1750, %v579
      %v1752 = vpop.permute.xlu0 %1751
      %1755 = vset.pattern.permute.xlu0 0
      %1756 = vperm.xlu0 %1755, %v580
      %v1757 = vpop.permute.xlu0 %1756
      %1760 = vset.pattern.permute.xlu0 0
      %1761 = vperm.xlu0 %1760, %v581
      %v1762 = vpop.permute.xlu0 %1761
      %1765 = vset.pattern.permute.xlu0 0
      %1766 = vperm.xlu0 %1765, %v582
      %v1767 = vpop.permute.xlu0 %1766
      %1770 = vset.pattern.permute.xlu0 0
      %1771 = vperm.xlu0 %1770, %v583
      %v1772 = vpop.permute.xlu0 %1771
      %1775 = vset.pattern.permute.xlu0 0
      %1776 = vperm.xlu0 %1775, %v584
      %v1777 = vpop.permute.xlu0 %1776
      %1780 = vset.pattern.permute.xlu0 0
      %1781 = vperm.xlu0 %1780, %v585
      %v1782 = vpop.permute.xlu0 %1781
      %1785 = vset.pattern.permute.xlu0 0
      %1786 = vperm.xlu0 %1785, %v586
      %v1787 = vpop.permute.xlu0 %1786
      %1790 = vset.pattern.permute.xlu0 0
      %1791 = vperm.xlu0 %1790, %v587
      %v1792 = vpop.permute.xlu0 %1791
      %v1794 = vmul.f32 %v1273, %v1497
      %v1795 = vmul.f32 %v1274, %v1502
      %v1796 = vmul.f32 %v1275, %v1507
      %v1797 = vmul.f32 %v1276, %v1512
      %v1798 = vmul.f32 %v1277, %v1517
      %v1799 = vmul.f32 %v1278, %v1522
      %v1800 = vmul.f32 %v1279, %v1527
      %v1801 = vmul.f32 %v1280, %v1532
      %v1802 = vmul.f32 %v1281, %v1537
      %v1803 = vmul.f32 %v1282, %v1542
      %v1804 = vmul.f32 %v1283, %v1547
      %v1805 = vmul.f32 %v1284, %v1552
      %v1806 = vmul.f32 %v1285, %v1557
      %v1807 = vmul.f32 %v1286, %v1562
      %v1808 = vmul.f32 %v1287, %v1567
      %v1809 = vmul.f32 %v1288, %v1572
      %v1810 = vmul.f32 %v1289, %v1577
      %v1811 = vmul.f32 %v1290, %v1582
      %v1812 = vmul.f32 %v1291, %v1587
      %v1813 = vmul.f32 %v1292, %v1592
      %v1814 = vmul.f32 %v1293, %v1597
      %v1815 = vmul.f32 %v1294, %v1602
      %v1816 = vmul.f32 %v1295, %v1607
      %v1817 = vmul.f32 %v1296, %v1612
      %v1818 = vmul.f32 %v1297, %v1617
      %v1819 = vmul.f32 %v1298, %v1622
      %v1820 = vmul.f32 %v1299, %v1627
      %v1821 = vmul.f32 %v1300, %v1632
      %v1822 = vmul.f32 %v1301, %v1637
      %v1823 = vmul.f32 %v1302, %v1642
      %v1824 = vmul.f32 %v1303, %v1647
      %v1825 = vmul.f32 %v1304, %v1652
      %v1826 = vmul.f32 %v1305, %v1657
      %v1827 = vmul.f32 %v1306, %v1662
      %v1828 = vmul.f32 %v1307, %v1667
      %v1829 = vmul.f32 %v1308, %v1672
      %v1830 = vmul.f32 %v1309, %v1677
      %v1831 = vmul.f32 %v1310, %v1682
      %v1832 = vmul.f32 %v1311, %v1687
      %v1833 = vmul.f32 %v1312, %v1692
      %v1834 = vmul.f32 %v1313, %v1697
      %v1835 = vmul.f32 %v1314, %v1702
      %v1836 = vmul.f32 %v1315, %v1707
      %v1837 = vmul.f32 %v1316, %v1712
      %v1838 = vmul.f32 %v1317, %v1717
      %v1839 = vmul.f32 %v1318, %v1722
      %v1840 = vmul.f32 %v1319, %v1727
      %v1841 = vmul.f32 %v1320, %v1732
      %v1842 = vmul.f32 %v1321, %v1737
      %v1843 = vmul.f32 %v1322, %v1742
      %v1844 = vmul.f32 %v1323, %v1747
      %v1845 = vmul.f32 %v1324, %v1752
      %v1846 = vmul.f32 %v1325, %v1757
      %v1847 = vmul.f32 %v1326, %v1762
      %v1848 = vmul.f32 %v1327, %v1767
      %v1849 = vmul.f32 %v1328, %v1772
      %v1850 = vmul.f32 %v1329, %v1777
      %v1851 = vmul.f32 %v1330, %v1782
      %v1852 = vmul.f32 %v1331, %v1787
      %v1853 = vmul.f32 %v1332, %v1792
      %vm1902 = vcmask 1046528
      %v1903 = vrot.slane %v1797, 1
      %v1904 = vrot.slane %v1798, 1
      %v1905 = vsel %vm1902, %v1903, %v1904
      %v1906 = vrot.slane %v1799, 1
      %v1907 = vsel %vm1902, %v1904, %v1906
      %v1908 = vrot.slane %v1800, 1
      %v1909 = vrot.slane %v1801, 1
      %v1910 = vsel %vm1902, %v1908, %v1909
      %v1911 = vrot.slane %v1802, 1
      %v1912 = vsel %vm1902, %v1909, %v1911
      %v1913 = vrot.slane %v1803, 1
      %v1914 = vrot.slane %v1804, 1
      %v1915 = vsel %vm1902, %v1913, %v1914
      %v1916 = vrot.slane %v1805, 1
      %v1917 = vsel %vm1902, %v1914, %v1916
      %v1918 = vrot.slane %v1806, 1
      %v1919 = vrot.slane %v1807, 1
      %v1920 = vsel %vm1902, %v1918, %v1919
      %v1921 = vrot.slane %v1808, 1
      %v1922 = vsel %vm1902, %v1919, %v1921
      %v1923 = vrot.slane %v1809, 1
      %v1924 = vrot.slane %v1810, 1
      %v1925 = vsel %vm1902, %v1923, %v1924
      %v1926 = vrot.slane %v1811, 1
      %v1927 = vsel %vm1902, %v1924, %v1926
      %v1928 = vrot.slane %v1812, 1
      %v1929 = vrot.slane %v1813, 1
      %v1930 = vsel %vm1902, %v1928, %v1929
      %v1931 = vrot.slane %v1814, 1
      %v1932 = vsel %vm1902, %v1929, %v1931
      %v1933 = vrot.slane %v1815, 1
      %v1934 = vrot.slane %v1816, 1
      %v1935 = vsel %vm1902, %v1933, %v1934
      %v1936 = vrot.slane %v1817, 1
      %v1937 = vsel %vm1902, %v1934, %v1936
      %v1938 = vrot.slane %v1818, 1
      %v1939 = vrot.slane %v1819, 1
      %v1940 = vsel %vm1902, %v1938, %v1939
      %v1941 = vrot.slane %v1820, 1
      %v1942 = vsel %vm1902, %v1939, %v1941
      %v1943 = vrot.slane %v1821, 1
      %v1944 = vrot.slane %v1822, 1
      %v1945 = vsel %vm1902, %v1943, %v1944
      %v1946 = vrot.slane %v1823, 1
      %v1947 = vsel %vm1902, %v1944, %v1946
      %v1948 = vrot.slane %v1824, 1
      %v1949 = vrot.slane %v1825, 1
      %v1950 = vsel %vm1902, %v1948, %v1949
      %v1951 = vrot.slane %v1826, 1
      %v1952 = vsel %vm1902, %v1949, %v1951
      %v1953 = vrot.slane %v1827, 1
      %v1954 = vrot.slane %v1828, 1
      %v1955 = vsel %vm1902, %v1953, %v1954
      %v1956 = vrot.slane %v1829, 1
      %v1957 = vsel %vm1902, %v1954, %v1956
      %v1958 = vrot.slane %v1830, 1
      %v1959 = vrot.slane %v1831, 1
      %v1960 = vsel %vm1902, %v1958, %v1959
      %v1961 = vrot.slane %v1832, 1
      %v1962 = vsel %vm1902, %v1959, %v1961
      %v1963 = vrot.slane %v1833, 1
      %v1964 = vrot.slane %v1834, 1
      %v1965 = vsel %vm1902, %v1963, %v1964
      %v1966 = vrot.slane %v1835, 1
      %v1967 = vsel %vm1902, %v1964, %v1966
      %v1968 = vrot.slane %v1836, 1
      %v1969 = vrot.slane %v1837, 1
      %v1970 = vsel %vm1902, %v1968, %v1969
      %v1971 = vrot.slane %v1838, 1
      %v1972 = vsel %vm1902, %v1969, %v1971
      %v1973 = vrot.slane %v1839, 1
      %v1974 = vrot.slane %v1840, 1
      %v1975 = vsel %vm1902, %v1973, %v1974
      %v1976 = vrot.slane %v1841, 1
      %v1977 = vsel %vm1902, %v1974, %v1976
      %v1978 = vrot.slane %v1842, 1
      %v1979 = vrot.slane %v1843, 1
      %v1980 = vsel %vm1902, %v1978, %v1979
      %v1981 = vrot.slane %v1844, 1
      %v1982 = vsel %vm1902, %v1979, %v1981
      %v1983 = vrot.slane %v1797, 2
      %v1984 = vrot.slane %v1798, 2
      %v1985 = vsel %vm1381, %v1983, %v1984
      %v1986 = vrot.slane %v1799, 2
      %v1987 = vsel %vm1381, %v1984, %v1986
      %v1988 = vrot.slane %v1800, 2
      %v1989 = vrot.slane %v1801, 2
      %v1990 = vsel %vm1381, %v1988, %v1989
      %v1991 = vrot.slane %v1802, 2
      %v1992 = vsel %vm1381, %v1989, %v1991
      %v1993 = vrot.slane %v1803, 2
      %v1994 = vrot.slane %v1804, 2
      %v1995 = vsel %vm1381, %v1993, %v1994
      %v1996 = vrot.slane %v1805, 2
      %v1997 = vsel %vm1381, %v1994, %v1996
      %v1998 = vrot.slane %v1806, 2
      %v1999 = vrot.slane %v1807, 2
      %v2000 = vsel %vm1381, %v1998, %v1999
      %v2001 = vrot.slane %v1808, 2
      %v2002 = vsel %vm1381, %v1999, %v2001
      %v2003 = vrot.slane %v1809, 2
      %v2004 = vrot.slane %v1810, 2
      %v2005 = vsel %vm1381, %v2003, %v2004
      %v2006 = vrot.slane %v1811, 2
      %v2007 = vsel %vm1381, %v2004, %v2006
      %v2008 = vrot.slane %v1812, 2
      %v2009 = vrot.slane %v1813, 2
      %v2010 = vsel %vm1381, %v2008, %v2009
      %v2011 = vrot.slane %v1814, 2
      %v2012 = vsel %vm1381, %v2009, %v2011
      %v2013 = vrot.slane %v1815, 2
      %v2014 = vrot.slane %v1816, 2
      %v2015 = vsel %vm1381, %v2013, %v2014
      %v2016 = vrot.slane %v1817, 2
      %v2017 = vsel %vm1381, %v2014, %v2016
      %v2018 = vrot.slane %v1818, 2
      %v2019 = vrot.slane %v1819, 2
      %v2020 = vsel %vm1381, %v2018, %v2019
      %v2021 = vrot.slane %v1820, 2
      %v2022 = vsel %vm1381, %v2019, %v2021
      %v2023 = vrot.slane %v1821, 2
      %v2024 = vrot.slane %v1822, 2
      %v2025 = vsel %vm1381, %v2023, %v2024
      %v2026 = vrot.slane %v1823, 2
      %v2027 = vsel %vm1381, %v2024, %v2026
      %v2028 = vrot.slane %v1824, 2
      %v2029 = vrot.slane %v1825, 2
      %v2030 = vsel %vm1381, %v2028, %v2029
      %v2031 = vrot.slane %v1826, 2
      %v2032 = vsel %vm1381, %v2029, %v2031
      %v2033 = vrot.slane %v1827, 2
      %v2034 = vrot.slane %v1828, 2
      %v2035 = vsel %vm1381, %v2033, %v2034
      %v2036 = vrot.slane %v1829, 2
      %v2037 = vsel %vm1381, %v2034, %v2036
      %v2038 = vrot.slane %v1830, 2
      %v2039 = vrot.slane %v1831, 2
      %v2040 = vsel %vm1381, %v2038, %v2039
      %v2041 = vrot.slane %v1832, 2
      %v2042 = vsel %vm1381, %v2039, %v2041
      %v2043 = vrot.slane %v1833, 2
      %v2044 = vrot.slane %v1834, 2
      %v2045 = vsel %vm1381, %v2043, %v2044
      %v2046 = vrot.slane %v1835, 2
      %v2047 = vsel %vm1381, %v2044, %v2046
      %v2048 = vrot.slane %v1836, 2
      %v2049 = vrot.slane %v1837, 2
      %v2050 = vsel %vm1381, %v2048, %v2049
      %v2051 = vrot.slane %v1838, 2
      %v2052 = vsel %vm1381, %v2049, %v2051
      %v2053 = vrot.slane %v1839, 2
      %v2054 = vrot.slane %v1840, 2
      %v2055 = vsel %vm1381, %v2053, %v2054
      %v2056 = vrot.slane %v1841, 2
      %v2057 = vsel %vm1381, %v2054, %v2056
      %v2058 = vrot.slane %v1842, 2
      %v2059 = vrot.slane %v1843, 2
      %v2060 = vsel %vm1381, %v2058, %v2059
      %v2061 = vrot.slane %v1844, 2
      %v2062 = vsel %vm1381, %v2059, %v2061
      %vm2063 = vcmask 1044480
      %v2064 = vrot.slane %v1797, 3
      %v2065 = vrot.slane %v1798, 3
      %v2066 = vsel %vm2063, %v2064, %v2065
      %v2067 = vrot.slane %v1799, 3
      %v2068 = vsel %vm2063, %v2065, %v2067
      %v2069 = vrot.slane %v1800, 3
      %v2070 = vrot.slane %v1801, 3
      %v2071 = vsel %vm2063, %v2069, %v2070
      %v2072 = vrot.slane %v1802, 3
      %v2073 = vsel %vm2063, %v2070, %v2072
      %v2074 = vrot.slane %v1803, 3
      %v2075 = vrot.slane %v1804, 3
      %v2076 = vsel %vm2063, %v2074, %v2075
      %v2077 = vrot.slane %v1805, 3
      %v2078 = vsel %vm2063, %v2075, %v2077
      %v2079 = vrot.slane %v1806, 3
      %v2080 = vrot.slane %v1807, 3
      %v2081 = vsel %vm2063, %v2079, %v2080
      %v2082 = vrot.slane %v1808, 3
      %v2083 = vsel %vm2063, %v2080, %v2082
      %v2084 = vrot.slane %v1809, 3
      %v2085 = vrot.slane %v1810, 3
      %v2086 = vsel %vm2063, %v2084, %v2085
      %v2087 = vrot.slane %v1811, 3
      %v2088 = vsel %vm2063, %v2085, %v2087
      %v2089 = vrot.slane %v1812, 3
      %v2090 = vrot.slane %v1813, 3
      %v2091 = vsel %vm2063, %v2089, %v2090
      %v2092 = vrot.slane %v1814, 3
      %v2093 = vsel %vm2063, %v2090, %v2092
      %v2094 = vrot.slane %v1815, 3
      %v2095 = vrot.slane %v1816, 3
      %v2096 = vsel %vm2063, %v2094, %v2095
      %v2097 = vrot.slane %v1817, 3
      %v2098 = vsel %vm2063, %v2095, %v2097
      %v2099 = vrot.slane %v1818, 3
      %v2100 = vrot.slane %v1819, 3
      %v2101 = vsel %vm2063, %v2099, %v2100
      %v2102 = vrot.slane %v1820, 3
      %v2103 = vsel %vm2063, %v2100, %v2102
      %v2104 = vrot.slane %v1821, 3
      %v2105 = vrot.slane %v1822, 3
      %v2106 = vsel %vm2063, %v2104, %v2105
      %v2107 = vrot.slane %v1823, 3
      %v2108 = vsel %vm2063, %v2105, %v2107
      %v2109 = vrot.slane %v1824, 3
      %v2110 = vrot.slane %v1825, 3
      %v2111 = vsel %vm2063, %v2109, %v2110
      %v2112 = vrot.slane %v1826, 3
      %v2113 = vsel %vm2063, %v2110, %v2112
      %v2114 = vrot.slane %v1827, 3
      %v2115 = vrot.slane %v1828, 3
      %v2116 = vsel %vm2063, %v2114, %v2115
      %v2117 = vrot.slane %v1829, 3
      %v2118 = vsel %vm2063, %v2115, %v2117
      %v2119 = vrot.slane %v1830, 3
      %v2120 = vrot.slane %v1831, 3
      %v2121 = vsel %vm2063, %v2119, %v2120
      %v2122 = vrot.slane %v1832, 3
      %v2123 = vsel %vm2063, %v2120, %v2122
      %v2124 = vrot.slane %v1833, 3
      %v2125 = vrot.slane %v1834, 3
      %v2126 = vsel %vm2063, %v2124, %v2125
      %v2127 = vrot.slane %v1835, 3
      %v2128 = vsel %vm2063, %v2125, %v2127
      %v2129 = vrot.slane %v1836, 3
      %v2130 = vrot.slane %v1837, 3
      %v2131 = vsel %vm2063, %v2129, %v2130
      %v2132 = vrot.slane %v1838, 3
      %v2133 = vsel %vm2063, %v2130, %v2132
      %v2134 = vrot.slane %v1839, 3
      %v2135 = vrot.slane %v1840, 3
      %v2136 = vsel %vm2063, %v2134, %v2135
      %v2137 = vrot.slane %v1841, 3
      %v2138 = vsel %vm2063, %v2135, %v2137
      %v2139 = vrot.slane %v1842, 3
      %v2140 = vrot.slane %v1843, 3
      %v2141 = vsel %vm2063, %v2139, %v2140
      %v2142 = vrot.slane %v1844, 3
      %v2143 = vsel %vm2063, %v2140, %v2142
      %v2179 = vrot.slane %v1845, 1
      %v2180 = vrot.slane %v1846, 1
      %v2181 = vsel %vm1902, %v2179, %v2180
      %v2182 = vrot.slane %v1847, 1
      %v2183 = vsel %vm1902, %v2180, %v2182
      %v2184 = vrot.slane %v1845, 2
      %v2185 = vrot.slane %v1846, 2
      %v2186 = vsel %vm1381, %v2184, %v2185
      %v2187 = vrot.slane %v1847, 2
      %v2188 = vsel %vm1381, %v2185, %v2187
      %v2189 = vrot.slane %v1845, 3
      %v2190 = vrot.slane %v1846, 3
      %v2191 = vsel %vm2063, %v2189, %v2190
      %v2192 = vrot.slane %v1847, 3
      %v2193 = vsel %vm2063, %v2190, %v2192
      %v2197 = vrot.slane %v1848, 1
      %v2198 = vrot.slane %v1849, 1
      %v2199 = vsel %vm1902, %v2197, %v2198
      %v2200 = vrot.slane %v1850, 1
      %v2201 = vsel %vm1902, %v2198, %v2200
      %v2202 = vrot.slane %v1848, 2
      %v2203 = vrot.slane %v1849, 2
      %v2204 = vsel %vm1381, %v2202, %v2203
      %v2205 = vrot.slane %v1850, 2
      %v2206 = vsel %vm1381, %v2203, %v2205
      %v2207 = vrot.slane %v1848, 3
      %v2208 = vrot.slane %v1849, 3
      %v2209 = vsel %vm2063, %v2207, %v2208
      %v2210 = vrot.slane %v1850, 3
      %v2211 = vsel %vm2063, %v2208, %v2210
      %2212 = vrot.lane.b32.xlu0 %v1905, 120
      %v2213 = vpop.permute.xlu0 %2212
      %2214 = vrot.lane.b32.xlu0 %v1907, 120
      %v2215 = vpop.permute.xlu0 %2214
      %2216 = vrot.lane.b32.xlu0 %v1910, 120
      %v2217 = vpop.permute.xlu0 %2216
      %2218 = vrot.lane.b32.xlu0 %v1912, 120
      %v2219 = vpop.permute.xlu0 %2218
      %2220 = vrot.lane.b32.xlu0 %v1915, 120
      %v2221 = vpop.permute.xlu0 %2220
      %2222 = vrot.lane.b32.xlu0 %v1917, 120
      %v2223 = vpop.permute.xlu0 %2222
      %2224 = vrot.lane.b32.xlu0 %v1920, 120
      %v2225 = vpop.permute.xlu0 %2224
      %2226 = vrot.lane.b32.xlu0 %v1922, 120
      %v2227 = vpop.permute.xlu0 %2226
      %2228 = vrot.lane.b32.xlu0 %v1925, 120
      %v2229 = vpop.permute.xlu0 %2228
      %2230 = vrot.lane.b32.xlu0 %v1927, 120
      %v2231 = vpop.permute.xlu0 %2230
      %2232 = vrot.lane.b32.xlu0 %v1930, 120
      %v2233 = vpop.permute.xlu0 %2232
      %2234 = vrot.lane.b32.xlu0 %v1932, 120
      %v2235 = vpop.permute.xlu0 %2234
      %2236 = vrot.lane.b32.xlu0 %v1935, 120
      %v2237 = vpop.permute.xlu0 %2236
      %2238 = vrot.lane.b32.xlu0 %v1937, 120
      %v2239 = vpop.permute.xlu0 %2238
      %2240 = vrot.lane.b32.xlu0 %v1940, 120
      %v2241 = vpop.permute.xlu0 %2240
      %2242 = vrot.lane.b32.xlu0 %v1942, 120
      %v2243 = vpop.permute.xlu0 %2242
      %2244 = vrot.lane.b32.xlu0 %v1945, 120
      %v2245 = vpop.permute.xlu0 %2244
      %2246 = vrot.lane.b32.xlu0 %v1947, 120
      %v2247 = vpop.permute.xlu0 %2246
      %2248 = vrot.lane.b32.xlu0 %v1950, 120
      %v2249 = vpop.permute.xlu0 %2248
      %2250 = vrot.lane.b32.xlu0 %v1952, 120
      %v2251 = vpop.permute.xlu0 %2250
      %2252 = vrot.lane.b32.xlu0 %v1955, 120
      %v2253 = vpop.permute.xlu0 %2252
      %2254 = vrot.lane.b32.xlu0 %v1957, 120
      %v2255 = vpop.permute.xlu0 %2254
      %2256 = vrot.lane.b32.xlu0 %v1960, 120
      %v2257 = vpop.permute.xlu0 %2256
      %2258 = vrot.lane.b32.xlu0 %v1962, 120
      %v2259 = vpop.permute.xlu0 %2258
      %2260 = vrot.lane.b32.xlu0 %v1965, 120
      %v2261 = vpop.permute.xlu0 %2260
      %2262 = vrot.lane.b32.xlu0 %v1967, 120
      %v2263 = vpop.permute.xlu0 %2262
      %2264 = vrot.lane.b32.xlu0 %v1970, 120
      %v2265 = vpop.permute.xlu0 %2264
      %2266 = vrot.lane.b32.xlu0 %v1972, 120
      %v2267 = vpop.permute.xlu0 %2266
      %2268 = vrot.lane.b32.xlu0 %v1975, 120
      %v2269 = vpop.permute.xlu0 %2268
      %2270 = vrot.lane.b32.xlu0 %v1977, 120
      %v2271 = vpop.permute.xlu0 %2270
      %2272 = vrot.lane.b32.xlu0 %v1980, 120
      %v2273 = vpop.permute.xlu0 %2272
      %2274 = vrot.lane.b32.xlu0 %v1982, 120
      %v2275 = vpop.permute.xlu0 %2274
      %2308 = vrot.lane.b32.xlu0 %v1985, 124
      %v2309 = vpop.permute.xlu0 %2308
      %2310 = vrot.lane.b32.xlu0 %v1987, 124
      %v2311 = vpop.permute.xlu0 %2310
      %2312 = vrot.lane.b32.xlu0 %v1990, 124
      %v2313 = vpop.permute.xlu0 %2312
      %2314 = vrot.lane.b32.xlu0 %v1992, 124
      %v2315 = vpop.permute.xlu0 %2314
      %2316 = vrot.lane.b32.xlu0 %v1995, 124
      %v2317 = vpop.permute.xlu0 %2316
      %2318 = vrot.lane.b32.xlu0 %v1997, 124
      %v2319 = vpop.permute.xlu0 %2318
      %2320 = vrot.lane.b32.xlu0 %v2000, 124
      %v2321 = vpop.permute.xlu0 %2320
      %2322 = vrot.lane.b32.xlu0 %v2002, 124
      %v2323 = vpop.permute.xlu0 %2322
      %2324 = vrot.lane.b32.xlu0 %v2005, 124
      %v2325 = vpop.permute.xlu0 %2324
      %2326 = vrot.lane.b32.xlu0 %v2007, 124
      %v2327 = vpop.permute.xlu0 %2326
      %2328 = vrot.lane.b32.xlu0 %v2010, 124
      %v2329 = vpop.permute.xlu0 %2328
      %2330 = vrot.lane.b32.xlu0 %v2012, 124
      %v2331 = vpop.permute.xlu0 %2330
      %2332 = vrot.lane.b32.xlu0 %v2015, 124
      %v2333 = vpop.permute.xlu0 %2332
      %2334 = vrot.lane.b32.xlu0 %v2017, 124
      %v2335 = vpop.permute.xlu0 %2334
      %2336 = vrot.lane.b32.xlu0 %v2020, 124
      %v2337 = vpop.permute.xlu0 %2336
      %2338 = vrot.lane.b32.xlu0 %v2022, 124
      %v2339 = vpop.permute.xlu0 %2338
      %2340 = vrot.lane.b32.xlu0 %v2025, 124
      %v2341 = vpop.permute.xlu0 %2340
      %2342 = vrot.lane.b32.xlu0 %v2027, 124
      %v2343 = vpop.permute.xlu0 %2342
      %2344 = vrot.lane.b32.xlu0 %v2030, 124
      %v2345 = vpop.permute.xlu0 %2344
      %2346 = vrot.lane.b32.xlu0 %v2032, 124
      %v2347 = vpop.permute.xlu0 %2346
      %2348 = vrot.lane.b32.xlu0 %v2035, 124
      %v2349 = vpop.permute.xlu0 %2348
      %2350 = vrot.lane.b32.xlu0 %v2037, 124
      %v2351 = vpop.permute.xlu0 %2350
      %2352 = vrot.lane.b32.xlu0 %v2040, 124
      %v2353 = vpop.permute.xlu0 %2352
      %2354 = vrot.lane.b32.xlu0 %v2042, 124
      %v2355 = vpop.permute.xlu0 %2354
      %2356 = vrot.lane.b32.xlu0 %v2045, 124
      %v2357 = vpop.permute.xlu0 %2356
      %2358 = vrot.lane.b32.xlu0 %v2047, 124
      %v2359 = vpop.permute.xlu0 %2358
      %2360 = vrot.lane.b32.xlu0 %v2050, 124
      %v2361 = vpop.permute.xlu0 %2360
      %2362 = vrot.lane.b32.xlu0 %v2052, 124
      %v2363 = vpop.permute.xlu0 %2362
      %2364 = vrot.lane.b32.xlu0 %v2055, 124
      %v2365 = vpop.permute.xlu0 %2364
      %2366 = vrot.lane.b32.xlu0 %v2057, 124
      %v2367 = vpop.permute.xlu0 %2366
      %2368 = vrot.lane.b32.xlu0 %v2060, 124
      %v2369 = vpop.permute.xlu0 %2368
      %2370 = vrot.lane.b32.xlu0 %v2062, 124
      %v2371 = vpop.permute.xlu0 %2370
      %2404 = vrot.lane.b32.xlu0 %v1910, 4
      %v2405 = vpop.permute.xlu0 %2404
      %2406 = vrot.lane.b32.xlu0 %v1912, 4
      %v2407 = vpop.permute.xlu0 %2406
      %2408 = vrot.lane.b32.xlu0 %v1915, 4
      %v2409 = vpop.permute.xlu0 %2408
      %2410 = vrot.lane.b32.xlu0 %v1917, 4
      %v2411 = vpop.permute.xlu0 %2410
      %2412 = vrot.lane.b32.xlu0 %v1920, 4
      %v2413 = vpop.permute.xlu0 %2412
      %2414 = vrot.lane.b32.xlu0 %v1922, 4
      %v2415 = vpop.permute.xlu0 %2414
      %2416 = vrot.lane.b32.xlu0 %v1925, 4
      %v2417 = vpop.permute.xlu0 %2416
      %2418 = vrot.lane.b32.xlu0 %v1927, 4
      %v2419 = vpop.permute.xlu0 %2418
      %2420 = vrot.lane.b32.xlu0 %v1930, 4
      %v2421 = vpop.permute.xlu0 %2420
      %2422 = vrot.lane.b32.xlu0 %v1932, 4
      %v2423 = vpop.permute.xlu0 %2422
      %2424 = vrot.lane.b32.xlu0 %v1935, 4
      %v2425 = vpop.permute.xlu0 %2424
      %2426 = vrot.lane.b32.xlu0 %v1937, 4
      %v2427 = vpop.permute.xlu0 %2426
      %2428 = vrot.lane.b32.xlu0 %v1940, 4
      %v2429 = vpop.permute.xlu0 %2428
      %2430 = vrot.lane.b32.xlu0 %v1942, 4
      %v2431 = vpop.permute.xlu0 %2430
      %2432 = vrot.lane.b32.xlu0 %v1945, 4
      %v2433 = vpop.permute.xlu0 %2432
      %2434 = vrot.lane.b32.xlu0 %v1947, 4
      %v2435 = vpop.permute.xlu0 %2434
      %2436 = vrot.lane.b32.xlu0 %v1950, 4
      %v2437 = vpop.permute.xlu0 %2436
      %2438 = vrot.lane.b32.xlu0 %v1952, 4
      %v2439 = vpop.permute.xlu0 %2438
      %2440 = vrot.lane.b32.xlu0 %v1955, 4
      %v2441 = vpop.permute.xlu0 %2440
      %2442 = vrot.lane.b32.xlu0 %v1957, 4
      %v2443 = vpop.permute.xlu0 %2442
      %2444 = vrot.lane.b32.xlu0 %v1960, 4
      %v2445 = vpop.permute.xlu0 %2444
      %2446 = vrot.lane.b32.xlu0 %v1962, 4
      %v2447 = vpop.permute.xlu0 %2446
      %2448 = vrot.lane.b32.xlu0 %v1965, 4
      %v2449 = vpop.permute.xlu0 %2448
      %2450 = vrot.lane.b32.xlu0 %v1967, 4
      %v2451 = vpop.permute.xlu0 %2450
      %2452 = vrot.lane.b32.xlu0 %v1970, 4
      %v2453 = vpop.permute.xlu0 %2452
      %2454 = vrot.lane.b32.xlu0 %v1972, 4
      %v2455 = vpop.permute.xlu0 %2454
      %2456 = vrot.lane.b32.xlu0 %v1975, 4
      %v2457 = vpop.permute.xlu0 %2456
      %2458 = vrot.lane.b32.xlu0 %v1977, 4
      %v2459 = vpop.permute.xlu0 %2458
      %2460 = vrot.lane.b32.xlu0 %v1980, 4
      %v2461 = vpop.permute.xlu0 %2460
      %2462 = vrot.lane.b32.xlu0 %v1982, 4
      %v2463 = vpop.permute.xlu0 %2462
      %2464 = vrot.lane.b32.xlu0 %v2181, 4
      %v2465 = vpop.permute.xlu0 %2464
      %2466 = vrot.lane.b32.xlu0 %v2183, 4
      %v2467 = vpop.permute.xlu0 %2466
      %2500 = vrot.lane.b32.xlu0 %v1990, 8
      %v2501 = vpop.permute.xlu0 %2500
      %2502 = vrot.lane.b32.xlu0 %v1992, 8
      %v2503 = vpop.permute.xlu0 %2502
      %2504 = vrot.lane.b32.xlu0 %v1995, 8
      %v2505 = vpop.permute.xlu0 %2504
      %2506 = vrot.lane.b32.xlu0 %v1997, 8
      %v2507 = vpop.permute.xlu0 %2506
      %2508 = vrot.lane.b32.xlu0 %v2000, 8
      %v2509 = vpop.permute.xlu0 %2508
      %2510 = vrot.lane.b32.xlu0 %v2002, 8
      %v2511 = vpop.permute.xlu0 %2510
      %2512 = vrot.lane.b32.xlu0 %v2005, 8
      %v2513 = vpop.permute.xlu0 %2512
      %2514 = vrot.lane.b32.xlu0 %v2007, 8
      %v2515 = vpop.permute.xlu0 %2514
      %2516 = vrot.lane.b32.xlu0 %v2010, 8
      %v2517 = vpop.permute.xlu0 %2516
      %2518 = vrot.lane.b32.xlu0 %v2012, 8
      %v2519 = vpop.permute.xlu0 %2518
      %2520 = vrot.lane.b32.xlu0 %v2015, 8
      %v2521 = vpop.permute.xlu0 %2520
      %2522 = vrot.lane.b32.xlu0 %v2017, 8
      %v2523 = vpop.permute.xlu0 %2522
      %2524 = vrot.lane.b32.xlu0 %v2020, 8
      %v2525 = vpop.permute.xlu0 %2524
      %2526 = vrot.lane.b32.xlu0 %v2022, 8
      %v2527 = vpop.permute.xlu0 %2526
      %2528 = vrot.lane.b32.xlu0 %v2025, 8
      %v2529 = vpop.permute.xlu0 %2528
      %2530 = vrot.lane.b32.xlu0 %v2027, 8
      %v2531 = vpop.permute.xlu0 %2530
      %2532 = vrot.lane.b32.xlu0 %v2030, 8
      %v2533 = vpop.permute.xlu0 %2532
      %2534 = vrot.lane.b32.xlu0 %v2032, 8
      %v2535 = vpop.permute.xlu0 %2534
      %2536 = vrot.lane.b32.xlu0 %v2035, 8
      %v2537 = vpop.permute.xlu0 %2536
      %2538 = vrot.lane.b32.xlu0 %v2037, 8
      %v2539 = vpop.permute.xlu0 %2538
      %2540 = vrot.lane.b32.xlu0 %v2040, 8
      %v2541 = vpop.permute.xlu0 %2540
      %2542 = vrot.lane.b32.xlu0 %v2042, 8
      %v2543 = vpop.permute.xlu0 %2542
      %2544 = vrot.lane.b32.xlu0 %v2045, 8
      %v2545 = vpop.permute.xlu0 %2544
      %2546 = vrot.lane.b32.xlu0 %v2047, 8
      %v2547 = vpop.permute.xlu0 %2546
      %2548 = vrot.lane.b32.xlu0 %v2050, 8
      %v2549 = vpop.permute.xlu0 %2548
      %2550 = vrot.lane.b32.xlu0 %v2052, 8
      %v2551 = vpop.permute.xlu0 %2550
      %2552 = vrot.lane.b32.xlu0 %v2055, 8
      %v2553 = vpop.permute.xlu0 %2552
      %2554 = vrot.lane.b32.xlu0 %v2057, 8
      %v2555 = vpop.permute.xlu0 %2554
      %2556 = vrot.lane.b32.xlu0 %v2060, 8
      %v2557 = vpop.permute.xlu0 %2556
      %2558 = vrot.lane.b32.xlu0 %v2062, 8
      %v2559 = vpop.permute.xlu0 %2558
      %2560 = vrot.lane.b32.xlu0 %v2186, 8
      %v2561 = vpop.permute.xlu0 %2560
      %2562 = vrot.lane.b32.xlu0 %v2188, 8
      %v2563 = vpop.permute.xlu0 %2562
      %2596 = vrot.lane.b32.xlu0 %v2071, 12
      %v2597 = vpop.permute.xlu0 %2596
      %2598 = vrot.lane.b32.xlu0 %v2073, 12
      %v2599 = vpop.permute.xlu0 %2598
      %2600 = vrot.lane.b32.xlu0 %v2076, 12
      %v2601 = vpop.permute.xlu0 %2600
      %2602 = vrot.lane.b32.xlu0 %v2078, 12
      %v2603 = vpop.permute.xlu0 %2602
      %2604 = vrot.lane.b32.xlu0 %v2081, 12
      %v2605 = vpop.permute.xlu0 %2604
      %2606 = vrot.lane.b32.xlu0 %v2083, 12
      %v2607 = vpop.permute.xlu0 %2606
      %2608 = vrot.lane.b32.xlu0 %v2086, 12
      %v2609 = vpop.permute.xlu0 %2608
      %2610 = vrot.lane.b32.xlu0 %v2088, 12
      %v2611 = vpop.permute.xlu0 %2610
      %2612 = vrot.lane.b32.xlu0 %v2091, 12
      %v2613 = vpop.permute.xlu0 %2612
      %2614 = vrot.lane.b32.xlu0 %v2093, 12
      %v2615 = vpop.permute.xlu0 %2614
      %2616 = vrot.lane.b32.xlu0 %v2096, 12
      %v2617 = vpop.permute.xlu0 %2616
      %2618 = vrot.lane.b32.xlu0 %v2098, 12
      %v2619 = vpop.permute.xlu0 %2618
      %2620 = vrot.lane.b32.xlu0 %v2101, 12
      %v2621 = vpop.permute.xlu0 %2620
      %2622 = vrot.lane.b32.xlu0 %v2103, 12
      %v2623 = vpop.permute.xlu0 %2622
      %2624 = vrot.lane.b32.xlu0 %v2106, 12
      %v2625 = vpop.permute.xlu0 %2624
      %2626 = vrot.lane.b32.xlu0 %v2108, 12
      %v2627 = vpop.permute.xlu0 %2626
      %2628 = vrot.lane.b32.xlu0 %v2111, 12
      %v2629 = vpop.permute.xlu0 %2628
      %2630 = vrot.lane.b32.xlu0 %v2113, 12
      %v2631 = vpop.permute.xlu0 %2630
      %2632 = vrot.lane.b32.xlu0 %v2116, 12
      %v2633 = vpop.permute.xlu0 %2632
      %2634 = vrot.lane.b32.xlu0 %v2118, 12
      %v2635 = vpop.permute.xlu0 %2634
      %2636 = vrot.lane.b32.xlu0 %v2121, 12
      %v2637 = vpop.permute.xlu0 %2636
      %2638 = vrot.lane.b32.xlu0 %v2123, 12
      %v2639 = vpop.permute.xlu0 %2638
      %2640 = vrot.lane.b32.xlu0 %v2126, 12
      %v2641 = vpop.permute.xlu0 %2640
      %2642 = vrot.lane.b32.xlu0 %v2128, 12
      %v2643 = vpop.permute.xlu0 %2642
      %2644 = vrot.lane.b32.xlu0 %v2131, 12
      %v2645 = vpop.permute.xlu0 %2644
      %2646 = vrot.lane.b32.xlu0 %v2133, 12
      %v2647 = vpop.permute.xlu0 %2646
      %2648 = vrot.lane.b32.xlu0 %v2136, 12
      %v2649 = vpop.permute.xlu0 %2648
      %2650 = vrot.lane.b32.xlu0 %v2138, 12
      %v2651 = vpop.permute.xlu0 %2650
      %2652 = vrot.lane.b32.xlu0 %v2141, 12
      %v2653 = vpop.permute.xlu0 %2652
      %2654 = vrot.lane.b32.xlu0 %v2143, 12
      %v2655 = vpop.permute.xlu0 %2654
      %2656 = vrot.lane.b32.xlu0 %v2191, 12
      %v2657 = vpop.permute.xlu0 %2656
      %2658 = vrot.lane.b32.xlu0 %v2193, 12
      %v2659 = vpop.permute.xlu0 %2658
      %2692 = vrot.lane.b32.xlu0 %v1915, 16
      %v2693 = vpop.permute.xlu0 %2692
      %2694 = vrot.lane.b32.xlu0 %v1917, 16
      %v2695 = vpop.permute.xlu0 %2694
      %2696 = vrot.lane.b32.xlu0 %v1920, 16
      %v2697 = vpop.permute.xlu0 %2696
      %2698 = vrot.lane.b32.xlu0 %v1922, 16
      %v2699 = vpop.permute.xlu0 %2698
      %2700 = vrot.lane.b32.xlu0 %v1925, 16
      %v2701 = vpop.permute.xlu0 %2700
      %2702 = vrot.lane.b32.xlu0 %v1927, 16
      %v2703 = vpop.permute.xlu0 %2702
      %2704 = vrot.lane.b32.xlu0 %v1930, 16
      %v2705 = vpop.permute.xlu0 %2704
      %2706 = vrot.lane.b32.xlu0 %v1932, 16
      %v2707 = vpop.permute.xlu0 %2706
      %2708 = vrot.lane.b32.xlu0 %v1935, 16
      %v2709 = vpop.permute.xlu0 %2708
      %2710 = vrot.lane.b32.xlu0 %v1937, 16
      %v2711 = vpop.permute.xlu0 %2710
      %2712 = vrot.lane.b32.xlu0 %v1940, 16
      %v2713 = vpop.permute.xlu0 %2712
      %2714 = vrot.lane.b32.xlu0 %v1942, 16
      %v2715 = vpop.permute.xlu0 %2714
      %2716 = vrot.lane.b32.xlu0 %v1945, 16
      %v2717 = vpop.permute.xlu0 %2716
      %2718 = vrot.lane.b32.xlu0 %v1947, 16
      %v2719 = vpop.permute.xlu0 %2718
      %2720 = vrot.lane.b32.xlu0 %v1950, 16
      %v2721 = vpop.permute.xlu0 %2720
      %2722 = vrot.lane.b32.xlu0 %v1952, 16
      %v2723 = vpop.permute.xlu0 %2722
      %2724 = vrot.lane.b32.xlu0 %v1955, 16
      %v2725 = vpop.permute.xlu0 %2724
      %2726 = vrot.lane.b32.xlu0 %v1957, 16
      %v2727 = vpop.permute.xlu0 %2726
      %2728 = vrot.lane.b32.xlu0 %v1960, 16
      %v2729 = vpop.permute.xlu0 %2728
      %2730 = vrot.lane.b32.xlu0 %v1962, 16
      %v2731 = vpop.permute.xlu0 %2730
      %2732 = vrot.lane.b32.xlu0 %v1965, 16
      %v2733 = vpop.permute.xlu0 %2732
      %2734 = vrot.lane.b32.xlu0 %v1967, 16
      %v2735 = vpop.permute.xlu0 %2734
      %2736 = vrot.lane.b32.xlu0 %v1970, 16
      %v2737 = vpop.permute.xlu0 %2736
      %2738 = vrot.lane.b32.xlu0 %v1972, 16
      %v2739 = vpop.permute.xlu0 %2738
      %2740 = vrot.lane.b32.xlu0 %v1975, 16
      %v2741 = vpop.permute.xlu0 %2740
      %2742 = vrot.lane.b32.xlu0 %v1977, 16
      %v2743 = vpop.permute.xlu0 %2742
      %2744 = vrot.lane.b32.xlu0 %v1980, 16
      %v2745 = vpop.permute.xlu0 %2744
      %2746 = vrot.lane.b32.xlu0 %v1982, 16
      %v2747 = vpop.permute.xlu0 %2746
      %2748 = vrot.lane.b32.xlu0 %v2181, 16
      %v2749 = vpop.permute.xlu0 %2748
      %2750 = vrot.lane.b32.xlu0 %v2183, 16
      %v2751 = vpop.permute.xlu0 %2750
      %2752 = vrot.lane.b32.xlu0 %v2199, 16
      %v2753 = vpop.permute.xlu0 %2752
      %2754 = vrot.lane.b32.xlu0 %v2201, 16
      %v2755 = vpop.permute.xlu0 %2754
      %2788 = vrot.lane.b32.xlu0 %v1995, 20
      %v2789 = vpop.permute.xlu0 %2788
      %2790 = vrot.lane.b32.xlu0 %v1997, 20
      %v2791 = vpop.permute.xlu0 %2790
      %2792 = vrot.lane.b32.xlu0 %v2000, 20
      %v2793 = vpop.permute.xlu0 %2792
      %2794 = vrot.lane.b32.xlu0 %v2002, 20
      %v2795 = vpop.permute.xlu0 %2794
      %2796 = vrot.lane.b32.xlu0 %v2005, 20
      %v2797 = vpop.permute.xlu0 %2796
      %2798 = vrot.lane.b32.xlu0 %v2007, 20
      %v2799 = vpop.permute.xlu0 %2798
      %2800 = vrot.lane.b32.xlu0 %v2010, 20
      %v2801 = vpop.permute.xlu0 %2800
      %2802 = vrot.lane.b32.xlu0 %v2012, 20
      %v2803 = vpop.permute.xlu0 %2802
      %2804 = vrot.lane.b32.xlu0 %v2015, 20
      %v2805 = vpop.permute.xlu0 %2804
      %2806 = vrot.lane.b32.xlu0 %v2017, 20
      %v2807 = vpop.permute.xlu0 %2806
      %2808 = vrot.lane.b32.xlu0 %v2020, 20
      %v2809 = vpop.permute.xlu0 %2808
      %2810 = vrot.lane.b32.xlu0 %v2022, 20
      %v2811 = vpop.permute.xlu0 %2810
      %2812 = vrot.lane.b32.xlu0 %v2025, 20
      %v2813 = vpop.permute.xlu0 %2812
      %2814 = vrot.lane.b32.xlu0 %v2027, 20
      %v2815 = vpop.permute.xlu0 %2814
      %2816 = vrot.lane.b32.xlu0 %v2030, 20
      %v2817 = vpop.permute.xlu0 %2816
      %2818 = vrot.lane.b32.xlu0 %v2032, 20
      %v2819 = vpop.permute.xlu0 %2818
      %2820 = vrot.lane.b32.xlu0 %v2035, 20
      %v2821 = vpop.permute.xlu0 %2820
      %2822 = vrot.lane.b32.xlu0 %v2037, 20
      %v2823 = vpop.permute.xlu0 %2822
      %2824 = vrot.lane.b32.xlu0 %v2040, 20
      %v2825 = vpop.permute.xlu0 %2824
      %2826 = vrot.lane.b32.xlu0 %v2042, 20
      %v2827 = vpop.permute.xlu0 %2826
      %2828 = vrot.lane.b32.xlu0 %v2045, 20
      %v2829 = vpop.permute.xlu0 %2828
      %2830 = vrot.lane.b32.xlu0 %v2047, 20
      %v2831 = vpop.permute.xlu0 %2830
      %2832 = vrot.lane.b32.xlu0 %v2050, 20
      %v2833 = vpop.permute.xlu0 %2832
      %2834 = vrot.lane.b32.xlu0 %v2052, 20
      %v2835 = vpop.permute.xlu0 %2834
      %2836 = vrot.lane.b32.xlu0 %v2055, 20
      %v2837 = vpop.permute.xlu0 %2836
      %2838 = vrot.lane.b32.xlu0 %v2057, 20
      %v2839 = vpop.permute.xlu0 %2838
      %2840 = vrot.lane.b32.xlu0 %v2060, 20
      %v2841 = vpop.permute.xlu0 %2840
      %2842 = vrot.lane.b32.xlu0 %v2062, 20
      %v2843 = vpop.permute.xlu0 %2842
      %2844 = vrot.lane.b32.xlu0 %v2186, 20
      %v2845 = vpop.permute.xlu0 %2844
      %2846 = vrot.lane.b32.xlu0 %v2188, 20
      %v2847 = vpop.permute.xlu0 %2846
      %2848 = vrot.lane.b32.xlu0 %v2204, 20
      %v2849 = vpop.permute.xlu0 %2848
      %2850 = vrot.lane.b32.xlu0 %v2206, 20
      %v2851 = vpop.permute.xlu0 %2850
      %2884 = vrot.lane.b32.xlu0 %v2076, 24
      %v2885 = vpop.permute.xlu0 %2884
      %2886 = vrot.lane.b32.xlu0 %v2078, 24
      %v2887 = vpop.permute.xlu0 %2886
      %2888 = vrot.lane.b32.xlu0 %v2081, 24
      %v2889 = vpop.permute.xlu0 %2888
      %2890 = vrot.lane.b32.xlu0 %v2083, 24
      %v2891 = vpop.permute.xlu0 %2890
      %2892 = vrot.lane.b32.xlu0 %v2086, 24
      %v2893 = vpop.permute.xlu0 %2892
      %2894 = vrot.lane.b32.xlu0 %v2088, 24
      %v2895 = vpop.permute.xlu0 %2894
      %2896 = vrot.lane.b32.xlu0 %v2091, 24
      %v2897 = vpop.permute.xlu0 %2896
      %2898 = vrot.lane.b32.xlu0 %v2093, 24
      %v2899 = vpop.permute.xlu0 %2898
      %2900 = vrot.lane.b32.xlu0 %v2096, 24
      %v2901 = vpop.permute.xlu0 %2900
      %2902 = vrot.lane.b32.xlu0 %v2098, 24
      %v2903 = vpop.permute.xlu0 %2902
      %2904 = vrot.lane.b32.xlu0 %v2101, 24
      %v2905 = vpop.permute.xlu0 %2904
      %2906 = vrot.lane.b32.xlu0 %v2103, 24
      %v2907 = vpop.permute.xlu0 %2906
      %2908 = vrot.lane.b32.xlu0 %v2106, 24
      %v2909 = vpop.permute.xlu0 %2908
      %2910 = vrot.lane.b32.xlu0 %v2108, 24
      %v2911 = vpop.permute.xlu0 %2910
      %2912 = vrot.lane.b32.xlu0 %v2111, 24
      %v2913 = vpop.permute.xlu0 %2912
      %2914 = vrot.lane.b32.xlu0 %v2113, 24
      %v2915 = vpop.permute.xlu0 %2914
      %2916 = vrot.lane.b32.xlu0 %v2116, 24
      %v2917 = vpop.permute.xlu0 %2916
      %2918 = vrot.lane.b32.xlu0 %v2118, 24
      %v2919 = vpop.permute.xlu0 %2918
      %2920 = vrot.lane.b32.xlu0 %v2121, 24
      %v2921 = vpop.permute.xlu0 %2920
      %2922 = vrot.lane.b32.xlu0 %v2123, 24
      %v2923 = vpop.permute.xlu0 %2922
      %2924 = vrot.lane.b32.xlu0 %v2126, 24
      %v2925 = vpop.permute.xlu0 %2924
      %2926 = vrot.lane.b32.xlu0 %v2128, 24
      %v2927 = vpop.permute.xlu0 %2926
      %2928 = vrot.lane.b32.xlu0 %v2131, 24
      %v2929 = vpop.permute.xlu0 %2928
      %2930 = vrot.lane.b32.xlu0 %v2133, 24
      %v2931 = vpop.permute.xlu0 %2930
      %2932 = vrot.lane.b32.xlu0 %v2136, 24
      %v2933 = vpop.permute.xlu0 %2932
      %2934 = vrot.lane.b32.xlu0 %v2138, 24
      %v2935 = vpop.permute.xlu0 %2934
      %2936 = vrot.lane.b32.xlu0 %v2141, 24
      %v2937 = vpop.permute.xlu0 %2936
      %2938 = vrot.lane.b32.xlu0 %v2143, 24
      %v2939 = vpop.permute.xlu0 %2938
      %2940 = vrot.lane.b32.xlu0 %v2191, 24
      %v2941 = vpop.permute.xlu0 %2940
      %2942 = vrot.lane.b32.xlu0 %v2193, 24
      %v2943 = vpop.permute.xlu0 %2942
      %2944 = vrot.lane.b32.xlu0 %v2209, 24
      %v2945 = vpop.permute.xlu0 %2944
      %2946 = vrot.lane.b32.xlu0 %v2211, 24
      %v2947 = vpop.permute.xlu0 %2946
      %v2980 = vsel %vm589, %v2213, %v2309
      %v2981 = vsel %vm589, %v2215, %v2311
      %v2982 = vsel %vm589, %v2217, %v2313
      %v2983 = vsel %vm589, %v2219, %v2315
      %v2984 = vsel %vm589, %v2221, %v2317
      %v2985 = vsel %vm589, %v2223, %v2319
      %v2986 = vsel %vm589, %v2225, %v2321
      %v2987 = vsel %vm589, %v2227, %v2323
      %v2988 = vsel %vm589, %v2229, %v2325
      %v2989 = vsel %vm589, %v2231, %v2327
      %v2990 = vsel %vm589, %v2233, %v2329
      %v2991 = vsel %vm589, %v2235, %v2331
      %v2992 = vsel %vm589, %v2237, %v2333
      %v2993 = vsel %vm589, %v2239, %v2335
      %v2994 = vsel %vm589, %v2241, %v2337
      %v2995 = vsel %vm589, %v2243, %v2339
      %v2996 = vsel %vm589, %v2245, %v2341
      %v2997 = vsel %vm589, %v2247, %v2343
      %v2998 = vsel %vm589, %v2249, %v2345
      %v2999 = vsel %vm589, %v2251, %v2347
      %v3000 = vsel %vm589, %v2253, %v2349
      %v3001 = vsel %vm589, %v2255, %v2351
      %v3002 = vsel %vm589, %v2257, %v2353
      %v3003 = vsel %vm589, %v2259, %v2355
      %v3004 = vsel %vm589, %v2261, %v2357
      %v3005 = vsel %vm589, %v2263, %v2359
      %v3006 = vsel %vm589, %v2265, %v2361
      %v3007 = vsel %vm589, %v2267, %v2363
      %v3008 = vsel %vm589, %v2269, %v2365
      %v3009 = vsel %vm589, %v2271, %v2367
      %v3010 = vsel %vm589, %v2273, %v2369
      %v3011 = vsel %vm589, %v2275, %v2371
      %vm3012 = vcmask 64512
      %v3013 = vsel %vm3012, %v2980, %v2066
      %v3014 = vsel %vm3012, %v2981, %v2068
      %v3015 = vsel %vm3012, %v2982, %v2071
      %v3016 = vsel %vm3012, %v2983, %v2073
      %v3017 = vsel %vm3012, %v2984, %v2076
      %v3018 = vsel %vm3012, %v2985, %v2078
      %v3019 = vsel %vm3012, %v2986, %v2081
      %v3020 = vsel %vm3012, %v2987, %v2083
      %v3021 = vsel %vm3012, %v2988, %v2086
      %v3022 = vsel %vm3012, %v2989, %v2088
      %v3023 = vsel %vm3012, %v2990, %v2091
      %v3024 = vsel %vm3012, %v2991, %v2093
      %v3025 = vsel %vm3012, %v2992, %v2096
      %v3026 = vsel %vm3012, %v2993, %v2098
      %v3027 = vsel %vm3012, %v2994, %v2101
      %v3028 = vsel %vm3012, %v2995, %v2103
      %v3029 = vsel %vm3012, %v2996, %v2106
      %v3030 = vsel %vm3012, %v2997, %v2108
      %v3031 = vsel %vm3012, %v2998, %v2111
      %v3032 = vsel %vm3012, %v2999, %v2113
      %v3033 = vsel %vm3012, %v3000, %v2116
      %v3034 = vsel %vm3012, %v3001, %v2118
      %v3035 = vsel %vm3012, %v3002, %v2121
      %v3036 = vsel %vm3012, %v3003, %v2123
      %v3037 = vsel %vm3012, %v3004, %v2126
      %v3038 = vsel %vm3012, %v3005, %v2128
      %v3039 = vsel %vm3012, %v3006, %v2131
      %v3040 = vsel %vm3012, %v3007, %v2133
      %v3041 = vsel %vm3012, %v3008, %v2136
      %v3042 = vsel %vm3012, %v3009, %v2138
      %v3043 = vsel %vm3012, %v3010, %v2141
      %v3044 = vsel %vm3012, %v3011, %v2143
      %vm3045 = vcmask 97280
      %v3046 = vsel %vm3045, %v3013, %v2405
      %v3047 = vsel %vm3045, %v3014, %v2407
      %v3048 = vsel %vm3045, %v3015, %v2409
      %v3049 = vsel %vm3045, %v3016, %v2411
      %v3050 = vsel %vm3045, %v3017, %v2413
      %v3051 = vsel %vm3045, %v3018, %v2415
      %v3052 = vsel %vm3045, %v3019, %v2417
      %v3053 = vsel %vm3045, %v3020, %v2419
      %v3054 = vsel %vm3045, %v3021, %v2421
      %v3055 = vsel %vm3045, %v3022, %v2423
      %v3056 = vsel %vm3045, %v3023, %v2425
      %v3057 = vsel %vm3045, %v3024, %v2427
      %v3058 = vsel %vm3045, %v3025, %v2429
      %v3059 = vsel %vm3045, %v3026, %v2431
      %v3060 = vsel %vm3045, %v3027, %v2433
      %v3061 = vsel %vm3045, %v3028, %v2435
      %v3062 = vsel %vm3045, %v3029, %v2437
      %v3063 = vsel %vm3045, %v3030, %v2439
      %v3064 = vsel %vm3045, %v3031, %v2441
      %v3065 = vsel %vm3045, %v3032, %v2443
      %v3066 = vsel %vm3045, %v3033, %v2445
      %v3067 = vsel %vm3045, %v3034, %v2447
      %v3068 = vsel %vm3045, %v3035, %v2449
      %v3069 = vsel %vm3045, %v3036, %v2451
      %v3070 = vsel %vm3045, %v3037, %v2453
      %v3071 = vsel %vm3045, %v3038, %v2455
      %v3072 = vsel %vm3045, %v3039, %v2457
      %v3073 = vsel %vm3045, %v3040, %v2459
      %v3074 = vsel %vm3045, %v3041, %v2461
      %v3075 = vsel %vm3045, %v3042, %v2463
      %v3076 = vsel %vm3045, %v3043, %v2465
      %v3077 = vsel %vm3045, %v3044, %v2467
      %vm3078 = vcmask 130048
      %v3079 = vsel %vm3078, %v3046, %v2501
      %v3080 = vsel %vm3078, %v3047, %v2503
      %v3081 = vsel %vm3078, %v3048, %v2505
      %v3082 = vsel %vm3078, %v3049, %v2507
      %v3083 = vsel %vm3078, %v3050, %v2509
      %v3084 = vsel %vm3078, %v3051, %v2511
      %v3085 = vsel %vm3078, %v3052, %v2513
      %v3086 = vsel %vm3078, %v3053, %v2515
      %v3087 = vsel %vm3078, %v3054, %v2517
      %v3088 = vsel %vm3078, %v3055, %v2519
      %v3089 = vsel %vm3078, %v3056, %v2521
      %v3090 = vsel %vm3078, %v3057, %v2523
      %v3091 = vsel %vm3078, %v3058, %v2525
      %v3092 = vsel %vm3078, %v3059, %v2527
      %v3093 = vsel %vm3078, %v3060, %v2529
      %v3094 = vsel %vm3078, %v3061, %v2531
      %v3095 = vsel %vm3078, %v3062, %v2533
      %v3096 = vsel %vm3078, %v3063, %v2535
      %v3097 = vsel %vm3078, %v3064, %v2537
      %v3098 = vsel %vm3078, %v3065, %v2539
      %v3099 = vsel %vm3078, %v3066, %v2541
      %v3100 = vsel %vm3078, %v3067, %v2543
      %v3101 = vsel %vm3078, %v3068, %v2545
      %v3102 = vsel %vm3078, %v3069, %v2547
      %v3103 = vsel %vm3078, %v3070, %v2549
      %v3104 = vsel %vm3078, %v3071, %v2551
      %v3105 = vsel %vm3078, %v3072, %v2553
      %v3106 = vsel %vm3078, %v3073, %v2555
      %v3107 = vsel %vm3078, %v3074, %v2557
      %v3108 = vsel %vm3078, %v3075, %v2559
      %v3109 = vsel %vm3078, %v3076, %v2561
      %v3110 = vsel %vm3078, %v3077, %v2563
      %vm3111 = vcmask 162816
      %v3112 = vsel %vm3111, %v3079, %v2597
      %v3113 = vsel %vm3111, %v3080, %v2599
      %v3114 = vsel %vm3111, %v3081, %v2601
      %v3115 = vsel %vm3111, %v3082, %v2603
      %v3116 = vsel %vm3111, %v3083, %v2605
      %v3117 = vsel %vm3111, %v3084, %v2607
      %v3118 = vsel %vm3111, %v3085, %v2609
      %v3119 = vsel %vm3111, %v3086, %v2611
      %v3120 = vsel %vm3111, %v3087, %v2613
      %v3121 = vsel %vm3111, %v3088, %v2615
      %v3122 = vsel %vm3111, %v3089, %v2617
      %v3123 = vsel %vm3111, %v3090, %v2619
      %v3124 = vsel %vm3111, %v3091, %v2621
      %v3125 = vsel %vm3111, %v3092, %v2623
      %v3126 = vsel %vm3111, %v3093, %v2625
      %v3127 = vsel %vm3111, %v3094, %v2627
      %v3128 = vsel %vm3111, %v3095, %v2629
      %v3129 = vsel %vm3111, %v3096, %v2631
      %v3130 = vsel %vm3111, %v3097, %v2633
      %v3131 = vsel %vm3111, %v3098, %v2635
      %v3132 = vsel %vm3111, %v3099, %v2637
      %v3133 = vsel %vm3111, %v3100, %v2639
      %v3134 = vsel %vm3111, %v3101, %v2641
      %v3135 = vsel %vm3111, %v3102, %v2643
      %v3136 = vsel %vm3111, %v3103, %v2645
      %v3137 = vsel %vm3111, %v3104, %v2647
      %v3138 = vsel %vm3111, %v3105, %v2649
      %v3139 = vsel %vm3111, %v3106, %v2651
      %v3140 = vsel %vm3111, %v3107, %v2653
      %v3141 = vsel %vm3111, %v3108, %v2655
      %v3142 = vsel %vm3111, %v3109, %v2657
      %v3143 = vsel %vm3111, %v3110, %v2659
      %vm3144 = vcmask 195584
      %v3145 = vsel %vm3144, %v3112, %v2693
      %v3146 = vsel %vm3144, %v3113, %v2695
      %v3147 = vsel %vm3144, %v3114, %v2697
      %v3148 = vsel %vm3144, %v3115, %v2699
      %v3149 = vsel %vm3144, %v3116, %v2701
      %v3150 = vsel %vm3144, %v3117, %v2703
      %v3151 = vsel %vm3144, %v3118, %v2705
      %v3152 = vsel %vm3144, %v3119, %v2707
      %v3153 = vsel %vm3144, %v3120, %v2709
      %v3154 = vsel %vm3144, %v3121, %v2711
      %v3155 = vsel %vm3144, %v3122, %v2713
      %v3156 = vsel %vm3144, %v3123, %v2715
      %v3157 = vsel %vm3144, %v3124, %v2717
      %v3158 = vsel %vm3144, %v3125, %v2719
      %v3159 = vsel %vm3144, %v3126, %v2721
      %v3160 = vsel %vm3144, %v3127, %v2723
      %v3161 = vsel %vm3144, %v3128, %v2725
      %v3162 = vsel %vm3144, %v3129, %v2727
      %v3163 = vsel %vm3144, %v3130, %v2729
      %v3164 = vsel %vm3144, %v3131, %v2731
      %v3165 = vsel %vm3144, %v3132, %v2733
      %v3166 = vsel %vm3144, %v3133, %v2735
      %v3167 = vsel %vm3144, %v3134, %v2737
      %v3168 = vsel %vm3144, %v3135, %v2739
      %v3169 = vsel %vm3144, %v3136, %v2741
      %v3170 = vsel %vm3144, %v3137, %v2743
      %v3171 = vsel %vm3144, %v3138, %v2745
      %v3172 = vsel %vm3144, %v3139, %v2747
      %v3173 = vsel %vm3144, %v3140, %v2749
      %v3174 = vsel %vm3144, %v3141, %v2751
      %v3175 = vsel %vm3144, %v3142, %v2753
      %v3176 = vsel %vm3144, %v3143, %v2755
      %vm3177 = vcmask 228352
      %v3178 = vsel %vm3177, %v3145, %v2789
      %v3179 = vsel %vm3177, %v3146, %v2791
      %v3180 = vsel %vm3177, %v3147, %v2793
      %v3181 = vsel %vm3177, %v3148, %v2795
      %v3182 = vsel %vm3177, %v3149, %v2797
      %v3183 = vsel %vm3177, %v3150, %v2799
      %v3184 = vsel %vm3177, %v3151, %v2801
      %v3185 = vsel %vm3177, %v3152, %v2803
      %v3186 = vsel %vm3177, %v3153, %v2805
      %v3187 = vsel %vm3177, %v3154, %v2807
      %v3188 = vsel %vm3177, %v3155, %v2809
      %v3189 = vsel %vm3177, %v3156, %v2811
      %v3190 = vsel %vm3177, %v3157, %v2813
      %v3191 = vsel %vm3177, %v3158, %v2815
      %v3192 = vsel %vm3177, %v3159, %v2817
      %v3193 = vsel %vm3177, %v3160, %v2819
      %v3194 = vsel %vm3177, %v3161, %v2821
      %v3195 = vsel %vm3177, %v3162, %v2823
      %v3196 = vsel %vm3177, %v3163, %v2825
      %v3197 = vsel %vm3177, %v3164, %v2827
      %v3198 = vsel %vm3177, %v3165, %v2829
      %v3199 = vsel %vm3177, %v3166, %v2831
      %v3200 = vsel %vm3177, %v3167, %v2833
      %v3201 = vsel %vm3177, %v3168, %v2835
      %v3202 = vsel %vm3177, %v3169, %v2837
      %v3203 = vsel %vm3177, %v3170, %v2839
      %v3204 = vsel %vm3177, %v3171, %v2841
      %v3205 = vsel %vm3177, %v3172, %v2843
      %v3206 = vsel %vm3177, %v3173, %v2845
      %v3207 = vsel %vm3177, %v3174, %v2847
      %v3208 = vsel %vm3177, %v3175, %v2849
      %v3209 = vsel %vm3177, %v3176, %v2851
      %vm3210 = vcmask 261120
      %v3211 = vsel %vm3210, %v3178, %v2885
      %v3212 = vsel %vm3210, %v3179, %v2887
      %v3213 = vsel %vm3210, %v3180, %v2889
      %v3214 = vsel %vm3210, %v3181, %v2891
      %v3215 = vsel %vm3210, %v3182, %v2893
      %v3216 = vsel %vm3210, %v3183, %v2895
      %v3217 = vsel %vm3210, %v3184, %v2897
      %v3218 = vsel %vm3210, %v3185, %v2899
      %v3219 = vsel %vm3210, %v3186, %v2901
      %v3220 = vsel %vm3210, %v3187, %v2903
      %v3221 = vsel %vm3210, %v3188, %v2905
      %v3222 = vsel %vm3210, %v3189, %v2907
      %v3223 = vsel %vm3210, %v3190, %v2909
      %v3224 = vsel %vm3210, %v3191, %v2911
      %v3225 = vsel %vm3210, %v3192, %v2913
      %v3226 = vsel %vm3210, %v3193, %v2915
      %v3227 = vsel %vm3210, %v3194, %v2917
      %v3228 = vsel %vm3210, %v3195, %v2919
      %v3229 = vsel %vm3210, %v3196, %v2921
      %v3230 = vsel %vm3210, %v3197, %v2923
      %v3231 = vsel %vm3210, %v3198, %v2925
      %v3232 = vsel %vm3210, %v3199, %v2927
      %v3233 = vsel %vm3210, %v3200, %v2929
      %v3234 = vsel %vm3210, %v3201, %v2931
      %v3235 = vsel %vm3210, %v3202, %v2933
      %v3236 = vsel %vm3210, %v3203, %v2935
      %v3237 = vsel %vm3210, %v3204, %v2937
      %v3238 = vsel %vm3210, %v3205, %v2939
      %v3239 = vsel %vm3210, %v3206, %v2941
      %v3240 = vsel %vm3210, %v3207, %v2943
      %v3241 = vsel %vm3210, %v3208, %v2945
      %v3242 = vsel %vm3210, %v3209, %v2947
      %v3243 = vld [vmem:[%s5] sm:$0xff]
      %v3244 = vld [vmem:[%s5 + $0x8] sm:$0xff]
      %v3245 = vld [vmem:[%s5 + $0x10] sm:$0xff]
      %v3246 = vld [vmem:[%s5 + $0x18] sm:$0xff]
      %v3247 = vld [vmem:[%s5 + $0x20] sm:$0xf]
      %vm3248 = vcmask 293888
      %v3250 = vsel %vm3248, %v3211, 0
      %v3253 = vsel %vm3248, %v3212, 0
      %v3256 = vsel %vm3248, %v3213, 0
      %v3259 = vsel %vm3248, %v3214, 0
      %v3262 = vsel %vm3248, %v3215, 0
      %v3265 = vsel %vm3248, %v3216, 0
      %v3268 = vsel %vm3248, %v3217, 0
      %v3271 = vsel %vm3248, %v3218, 0
      %v3274 = vsel %vm3248, %v3219, 0
      %v3277 = vsel %vm3248, %v3220, 0
      %v3280 = vsel %vm3248, %v3221, 0
      %v3283 = vsel %vm3248, %v3222, 0
      %v3286 = vsel %vm3248, %v3223, 0
      %v3289 = vsel %vm3248, %v3224, 0
      %v3292 = vsel %vm3248, %v3225, 0
      %v3295 = vsel %vm3248, %v3226, 0
      %v3298 = vsel %vm3248, %v3227, 0
      %v3301 = vsel %vm3248, %v3228, 0
      %v3304 = vsel %vm3248, %v3229, 0
      %v3307 = vsel %vm3248, %v3230, 0
      %v3310 = vsel %vm3248, %v3231, 0
      %v3313 = vsel %vm3248, %v3232, 0
      %v3316 = vsel %vm3248, %v3233, 0
      %v3319 = vsel %vm3248, %v3234, 0
      %v3322 = vsel %vm3248, %v3235, 0
      %v3325 = vsel %vm3248, %v3236, 0
      %v3328 = vsel %vm3248, %v3237, 0
      %v3331 = vsel %vm3248, %v3238, 0
      %v3334 = vsel %vm3248, %v3239, 0
      %v3337 = vsel %vm3248, %v3240, 0
      %v3340 = vsel %vm3248, %v3241, 0
      %v3343 = vsel %vm3248, %v3242, 0
      %v3346 = vsel %vm770, %v3247, 0
      %3348 = vmatprep.subr.mxu0 0.0
      %3349 = vmatpush1.msra.mxu0 %v3243
      %3350 = vmatprep.subr.mxu0 0.0
      %3351 = vmatpush1.msra.mxu0 %v3244
      %3352 = vmatprep.subr.mxu0 0.0
      %3353 = vmatpush1.msra.mxu0 %v3245
      %3354 = vmatprep.subr.mxu0 0.0
      %3355 = vmatpush1.msra.mxu0 %v3246
      %3356 = vmatprep.subr.mxu0 0.0
      %3357 = vmatpush1.msra.mxu0 %v3346
      %3358 = vmatprep.subr.mxu0 0.0
      %3359 = vmatpush1.msra.mxu0 0.0
      %3360 = vmatprep.subr.mxu0 0.0
      %3361 = vmatpush1.msra.mxu0 0.0
      %3362 = vmatprep.subr.mxu0 0.0
      %3363 = vmatpush1.msra.mxu0 0.0
      %3364 = vmatprep.subr.mxu0 0.0
      %3365 = vmatpush1.msra.mxu0 0.0
      %3366 = vmatprep.subr.mxu0 0.0
      %3367 = vmatpush1.msra.mxu0 0.0
      %3368 = vmatprep.subr.mxu0 0.0
      %3369 = vmatpush1.msra.mxu0 0.0
      %3370 = vmatprep.subr.mxu0 0.0
      %3371 = vmatpush1.msra.mxu0 0.0
      %3372 = vmatprep.subr.mxu0 0.0
      %3373 = vmatpush1.msra.mxu0 0.0
      %3374 = vmatprep.subr.mxu0 0.0
      %3375 = vmatpush1.msra.mxu0 0.0
      %3376 = vmatprep.subr.mxu0 0.0
      %3377 = vmatpush1.msra.mxu0 0.0
      %3378 = vmatprep.subr.mxu0 0.0
      %3379 = vmatpush1.msra.mxu0 0.0
      %3380 = vmatprep.subr.mxu0 0.0
      %3381 = vmatpush1.msra.mxu0 0.0
      %3382 = vmatprep.subr.mxu0 0.0
      %3383 = vmatpush1.msra.mxu0 0.0
      %3384 = vmatprep.subr.mxu0 0.0
      %3385 = vmatpush1.msra.mxu0 0.0
      %3386 = vmatprep.subr.mxu0 0.0
      %3387 = vmatpush1.msra.mxu0 0.0
      %3388 = vmatprep.subr.mxu0 0.0
      %3389 = vmatpush1.msra.mxu0 0.0
      %3390 = vmatprep.subr.mxu0 0.0
      %3391 = vmatpush1.msra.mxu0 0.0
      %3392 = vmatprep.subr.mxu0 0.0
      %3393 = vmatpush1.msra.mxu0 0.0
      %3394 = vmatprep.subr.mxu0 0.0
      %3395 = vmatpush1.msra.mxu0 0.0
      %3396 = vmatprep.subr.mxu0 0.0
      %3397 = vmatpush1.msra.mxu0 0.0
      %3398 = vmatprep.subr.mxu0 0.0
      %3399 = vmatpush1.msra.mxu0 0.0
      %3400 = vmatprep.subr.mxu0 0.0
      %3401 = vmatpush1.msra.mxu0 0.0
      %3402 = vmatprep.subr.mxu0 0.0
      %3403 = vmatpush1.msra.mxu0 0.0
      %3404 = vmatprep.subr.mxu0 0.0
      %3405 = vmatpush1.msra.mxu0 0.0
      %3406 = vmatprep.subr.mxu0 0.0
      %3407 = vmatpush1.msra.mxu0 0.0
      %3408 = vmatprep.subr.mxu0 0.0
      %3409 = vmatpush1.msra.mxu0 0.0
      %3410 = vmatprep.subr.mxu0 0.0
      %3411 = vmatpush1.msra.mxu0 0.0
      %3412 = vmatprep.mubr.f32.mxu0 0.0
      %3413 = vmatmul.mubr.f32.gmra.mrb[0].mxu0 %v3250
      %v3414 = vpop.f32.mrb[0].mxu0
      %v3415 = vadd.f32 0.0, %v3414
      %v3416 = vpop.f32.mrb[0].mxu0
      %3417 = vmatprep.mubr.f32.mxu0 0.0
      %3418 = vmatmul.mubr.f32.gmra.mrb[0].mxu0 %v3253
      %v3419 = vpop.f32.mrb[0].mxu0
      %v3420 = vadd.f32 0.0, %v3419
      %v3421 = vpop.f32.mrb[0].mxu0
      %3422 = vmatprep.mubr.f32.mxu0 0.0
      %3423 = vmatmul.mubr.f32.gmra.mrb[0].mxu0 %v3256
      %v3424 = vpop.f32.mrb[0].mxu0
      %v3425 = vadd.f32 0.0, %v3424
      %v3426 = vpop.f32.mrb[0].mxu0
      %3427 = vmatprep.mubr.f32.mxu0 0.0
      %3428 = vmatmul.mubr.f32.gmra.mrb[0].mxu0 %v3259
      %v3429 = vpop.f32.mrb[0].mxu0
      %v3430 = vadd.f32 0.0, %v3429
      %v3431 = vpop.f32.mrb[0].mxu0
      %3432 = vmatprep.mubr.f32.mxu0 0.0
      %3433 = vmatmul.mubr.f32.gmra.mrb[0].mxu0 %v3262
      %v3434 = vpop.f32.mrb[0].mxu0
      %v3435 = vadd.f32 0.0, %v3434
      %v3436 = vpop.f32.mrb[0].mxu0
      %3437 = vmatprep.mubr.f32.mxu0 0.0
      %3438 = vmatmul.mubr.f32.gmra.mrb[0].mxu0 %v3265
      %v3439 = vpop.f32.mrb[0].mxu0
      %v3440 = vadd.f32 0.0, %v3439
      %v3441 = vpop.f32.mrb[0].mxu0
      %3442 = vmatprep.mubr.f32.mxu0 0.0
      %3443 = vmatmul.mubr.f32.gmra.mrb[0].mxu0 %v3268
      %v3444 = vpop.f32.mrb[0].mxu0
      %v3445 = vadd.f32 0.0, %v3444
      %v3446 = vpop.f32.mrb[0].mxu0
      %3447 = vmatprep.mubr.f32.mxu0 0.0
      %3448 = vmatmul.mubr.f32.gmra.mrb[0].mxu0 %v3271
      %v3449 = vpop.f32.mrb[0].mxu0
      %v3450 = vadd.f32 0.0, %v3449
      %v3451 = vpop.f32.mrb[0].mxu0
      %3452 = vmatprep.mubr.f32.mxu0 0.0
      %3453 = vmatmul.mubr.f32.gmra.mrb[0].mxu0 %v3274
      %v3454 = vpop.f32.mrb[0].mxu0
      %v3455 = vadd.f32 0.0, %v3454
      %v3456 = vpop.f32.mrb[0].mxu0
      %3457 = vmatprep.mubr.f32.mxu0 0.0
      %3458 = vmatmul.mubr.f32.gmra.mrb[0].mxu0 %v3277
      %v3459 = vpop.f32.mrb[0].mxu0
      %v3460 = vadd.f32 0.0, %v3459
      %v3461 = vpop.f32.mrb[0].mxu0
      %3462 = vmatprep.mubr.f32.mxu0 0.0
      %3463 = vmatmul.mubr.f32.gmra.mrb[0].mxu0 %v3280
      %v3464 = vpop.f32.mrb[0].mxu0
      %v3465 = vadd.f32 0.0, %v3464
      %v3466 = vpop.f32.mrb[0].mxu0
      %3467 = vmatprep.mubr.f32.mxu0 0.0
      %3468 = vmatmul.mubr.f32.gmra.mrb[0].mxu0 %v3283
      %v3469 = vpop.f32.mrb[0].mxu0
      %v3470 = vadd.f32 0.0, %v3469
      %v3471 = vpop.f32.mrb[0].mxu0
      %3472 = vmatprep.mubr.f32.mxu0 0.0
      %3473 = vmatmul.mubr.f32.gmra.mrb[0].mxu0 %v3286
      %v3474 = vpop.f32.mrb[0].mxu0
      %v3475 = vadd.f32 0.0, %v3474
      %v3476 = vpop.f32.mrb[0].mxu0
      %3477 = vmatprep.mubr.f32.mxu0 0.0
      %3478 = vmatmul.mubr.f32.gmra.mrb[0].mxu0 %v3289
      %v3479 = vpop.f32.mrb[0].mxu0
      %v3480 = vadd.f32 0.0, %v3479
      %v3481 = vpop.f32.mrb[0].mxu0
      %3482 = vmatprep.mubr.f32.mxu0 0.0
      %3483 = vmatmul.mubr.f32.gmra.mrb[0].mxu0 %v3292
      %v3484 = vpop.f32.mrb[0].mxu0
      %v3485 = vadd.f32 0.0, %v3484
      %v3486 = vpop.f32.mrb[0].mxu0
      %3487 = vmatprep.mubr.f32.mxu0 0.0
      %3488 = vmatmul.mubr.f32.gmra.mrb[0].mxu0 %v3295
      %v3489 = vpop.f32.mrb[0].mxu0
      %v3490 = vadd.f32 0.0, %v3489
      %v3491 = vpop.f32.mrb[0].mxu0
      %3492 = vmatprep.mubr.f32.mxu0 0.0
      %3493 = vmatmul.mubr.f32.gmra.mrb[0].mxu0 %v3298
      %v3494 = vpop.f32.mrb[0].mxu0
      %v3495 = vadd.f32 0.0, %v3494
      %v3496 = vpop.f32.mrb[0].mxu0
      %3497 = vmatprep.mubr.f32.mxu0 0.0
      %3498 = vmatmul.mubr.f32.gmra.mrb[0].mxu0 %v3301
      %v3499 = vpop.f32.mrb[0].mxu0
      %v3500 = vadd.f32 0.0, %v3499
      %v3501 = vpop.f32.mrb[0].mxu0
      %3502 = vmatprep.mubr.f32.mxu0 0.0
      %3503 = vmatmul.mubr.f32.gmra.mrb[0].mxu0 %v3304
      %v3504 = vpop.f32.mrb[0].mxu0
      %v3505 = vadd.f32 0.0, %v3504
      %v3506 = vpop.f32.mrb[0].mxu0
      %3507 = vmatprep.mubr.f32.mxu0 0.0
      %3508 = vmatmul.mubr.f32.gmra.mrb[0].mxu0 %v3307
      %v3509 = vpop.f32.mrb[0].mxu0
      %v3510 = vadd.f32 0.0, %v3509
      %v3511 = vpop.f32.mrb[0].mxu0
      %3512 = vmatprep.mubr.f32.mxu0 0.0
      %3513 = vmatmul.mubr.f32.gmra.mrb[0].mxu0 %v3310
      %v3514 = vpop.f32.mrb[0].mxu0
      %v3515 = vadd.f32 0.0, %v3514
      %v3516 = vpop.f32.mrb[0].mxu0
      %3517 = vmatprep.mubr.f32.mxu0 0.0
      %3518 = vmatmul.mubr.f32.gmra.mrb[0].mxu0 %v3313
      %v3519 = vpop.f32.mrb[0].mxu0
      %v3520 = vadd.f32 0.0, %v3519
      %v3521 = vpop.f32.mrb[0].mxu0
      %3522 = vmatprep.mubr.f32.mxu0 0.0
      %3523 = vmatmul.mubr.f32.gmra.mrb[0].mxu0 %v3316
      %v3524 = vpop.f32.mrb[0].mxu0
      %v3525 = vadd.f32 0.0, %v3524
      %v3526 = vpop.f32.mrb[0].mxu0
      %3527 = vmatprep.mubr.f32.mxu0 0.0
      %3528 = vmatmul.mubr.f32.gmra.mrb[0].mxu0 %v3319
      %v3529 = vpop.f32.mrb[0].mxu0
      %v3530 = vadd.f32 0.0, %v3529
      %v3531 = vpop.f32.mrb[0].mxu0
      %3532 = vmatprep.mubr.f32.mxu0 0.0
      %3533 = vmatmul.mubr.f32.gmra.mrb[0].mxu0 %v3322
      %v3534 = vpop.f32.mrb[0].mxu0
      %v3535 = vadd.f32 0.0, %v3534
      %v3536 = vpop.f32.mrb[0].mxu0
      %3537 = vmatprep.mubr.f32.mxu0 0.0
      %3538 = vmatmul.mubr.f32.gmra.mrb[0].mxu0 %v3325
      %v3539 = vpop.f32.mrb[0].mxu0
      %v3540 = vadd.f32 0.0, %v3539
      %v3541 = vpop.f32.mrb[0].mxu0
      %3542 = vmatprep.mubr.f32.mxu0 0.0
      %3543 = vmatmul.mubr.f32.gmra.mrb[0].mxu0 %v3328
      %v3544 = vpop.f32.mrb[0].mxu0
      %v3545 = vadd.f32 0.0, %v3544
      %v3546 = vpop.f32.mrb[0].mxu0
      %3547 = vmatprep.mubr.f32.mxu0 0.0
      %3548 = vmatmul.mubr.f32.gmra.mrb[0].mxu0 %v3331
      %v3549 = vpop.f32.mrb[0].mxu0
      %v3550 = vadd.f32 0.0, %v3549
      %v3551 = vpop.f32.mrb[0].mxu0
      %3552 = vmatprep.mubr.f32.mxu0 0.0
      %3553 = vmatmul.mubr.f32.gmra.mrb[0].mxu0 %v3334
      %v3554 = vpop.f32.mrb[0].mxu0
      %v3555 = vadd.f32 0.0, %v3554
      %v3556 = vpop.f32.mrb[0].mxu0
      %3557 = vmatprep.mubr.f32.mxu0 0.0
      %3558 = vmatmul.mubr.f32.gmra.mrb[0].mxu0 %v3337
      %v3559 = vpop.f32.mrb[0].mxu0
      %v3560 = vadd.f32 0.0, %v3559
      %v3561 = vpop.f32.mrb[0].mxu0
      %3562 = vmatprep.mubr.f32.mxu0 0.0
      %3563 = vmatmul.mubr.f32.gmra.mrb[0].mxu0 %v3340
      %v3564 = vpop.f32.mrb[0].mxu0
      %v3565 = vadd.f32 0.0, %v3564
      %v3566 = vpop.f32.mrb[0].mxu0
      %3567 = vmatprep.mubr.f32.mxu0 0.0
      %3568 = vmatmul.mubr.f32.gmra.mrb[0].mxu0 %v3343
      %v3569 = vpop.f32.mrb[0].mxu0
      %v3570 = vadd.f32 0.0, %v3569
      %v3571 = vpop.f32.mrb[0].mxu0
      %3572 = vdwg.mxu0
      %v3573 = vld [vmem:[%s6] sm:$0x1]
      %v3575 = vlaneseq
      %v3576 = vshrl.u32 %v3575, 7
      %v3577 = vsub.s32 0, %v3576
      %v3578 = vrot.slane %v3573, %v3577
      %v3580 = vmul.f32 %v3415, %v3578
      %v3581 = vmul.f32 %v3420, %v3578
      %v3582 = vmul.f32 %v3425, %v3578
      %v3583 = vmul.f32 %v3430, %v3578
      %v3584 = vmul.f32 %v3435, %v3578
      %v3585 = vmul.f32 %v3440, %v3578
      %v3586 = vmul.f32 %v3445, %v3578
      %v3587 = vmul.f32 %v3450, %v3578
      %v3588 = vmul.f32 %v3455, %v3578
      %v3589 = vmul.f32 %v3460, %v3578
      %v3590 = vmul.f32 %v3465, %v3578
      %v3591 = vmul.f32 %v3470, %v3578
      %v3592 = vmul.f32 %v3475, %v3578
      %v3593 = vmul.f32 %v3480, %v3578
      %v3594 = vmul.f32 %v3485, %v3578
      %v3595 = vmul.f32 %v3490, %v3578
      %v3596 = vmul.f32 %v3495, %v3578
      %v3597 = vmul.f32 %v3500, %v3578
      %v3598 = vmul.f32 %v3505, %v3578
      %v3599 = vmul.f32 %v3510, %v3578
      %v3600 = vmul.f32 %v3515, %v3578
      %v3601 = vmul.f32 %v3520, %v3578
      %v3602 = vmul.f32 %v3525, %v3578
      %v3603 = vmul.f32 %v3530, %v3578
      %v3604 = vmul.f32 %v3535, %v3578
      %v3605 = vmul.f32 %v3540, %v3578
      %v3606 = vmul.f32 %v3545, %v3578
      %v3607 = vmul.f32 %v3550, %v3578
      %v3608 = vmul.f32 %v3555, %v3578
      %v3609 = vmul.f32 %v3560, %v3578
      %v3610 = vmul.f32 %v3565, %v3578
      %v3611 = vmul.f32 %v3570, %v3578
      %v3612 = vld [vmem:[%s7] sm:$0x1]
      %v3614 = vlaneseq
      %v3615 = vshrl.u32 %v3614, 7
      %v3616 = vsub.s32 0, %v3615
      %v3617 = vrot.slane %v3612, %v3616
      %v3619 = vadd.f32 %v3580, %v3617
      %v3620 = vadd.f32 %v3581, %v3617
      %v3621 = vadd.f32 %v3582, %v3617
      %v3622 = vadd.f32 %v3583, %v3617
      %v3623 = vadd.f32 %v3584, %v3617
      %v3624 = vadd.f32 %v3585, %v3617
      %v3625 = vadd.f32 %v3586, %v3617
      %v3626 = vadd.f32 %v3587, %v3617
      %v3627 = vadd.f32 %v3588, %v3617
      %v3628 = vadd.f32 %v3589, %v3617
      %v3629 = vadd.f32 %v3590, %v3617
      %v3630 = vadd.f32 %v3591, %v3617
      %v3631 = vadd.f32 %v3592, %v3617
      %v3632 = vadd.f32 %v3593, %v3617
      %v3633 = vadd.f32 %v3594, %v3617
      %v3634 = vadd.f32 %v3595, %v3617
      %v3635 = vadd.f32 %v3596, %v3617
      %v3636 = vadd.f32 %v3597, %v3617
      %v3637 = vadd.f32 %v3598, %v3617
      %v3638 = vadd.f32 %v3599, %v3617
      %v3639 = vadd.f32 %v3600, %v3617
      %v3640 = vadd.f32 %v3601, %v3617
      %v3641 = vadd.f32 %v3602, %v3617
      %v3642 = vadd.f32 %v3603, %v3617
      %v3643 = vadd.f32 %v3604, %v3617
      %v3644 = vadd.f32 %v3605, %v3617
      %v3645 = vadd.f32 %v3606, %v3617
      %v3646 = vadd.f32 %v3607, %v3617
      %v3647 = vadd.f32 %v3608, %v3617
      %v3648 = vadd.f32 %v3609, %v3617
      %v3649 = vadd.f32 %v3610, %v3617
      %v3650 = vadd.f32 %v3611, %v3617
      %v3651 = vmax.f32 %v3619, 0.0
      %v3652 = vmax.f32 %v3620, 0.0
      %v3653 = vmax.f32 %v3621, 0.0
      %v3654 = vmax.f32 %v3622, 0.0
      %v3655 = vmax.f32 %v3623, 0.0
      %v3656 = vmax.f32 %v3624, 0.0
      %v3657 = vmax.f32 %v3625, 0.0
      %v3658 = vmax.f32 %v3626, 0.0
      %v3659 = vmax.f32 %v3627, 0.0
      %v3660 = vmax.f32 %v3628, 0.0
      %v3661 = vmax.f32 %v3629, 0.0
      %v3662 = vmax.f32 %v3630, 0.0
      %v3663 = vmax.f32 %v3631, 0.0
      %v3664 = vmax.f32 %v3632, 0.0
      %v3665 = vmax.f32 %v3633, 0.0
      %v3666 = vmax.f32 %v3634, 0.0
      %v3667 = vmax.f32 %v3635, 0.0
      %v3668 = vmax.f32 %v3636, 0.0
      %v3669 = vmax.f32 %v3637, 0.0
      %v3670 = vmax.f32 %v3638, 0.0
      %v3671 = vmax.f32 %v3639, 0.0
      %v3672 = vmax.f32 %v3640, 0.0
      %v3673 = vmax.f32 %v3641, 0.0
      %v3674 = vmax.f32 %v3642, 0.0
      %v3675 = vmax.f32 %v3643, 0.0
      %v3676 = vmax.f32 %v3644, 0.0
      %v3677 = vmax.f32 %v3645, 0.0
      %v3678 = vmax.f32 %v3646, 0.0
      %v3679 = vmax.f32 %v3647, 0.0
      %v3680 = vmax.f32 %v3648, 0.0
      %v3681 = vmax.f32 %v3649, 0.0
      %v3682 = vmax.f32 %v3650, 0.0
      %v3686 = vrot.slane %v1794, 1
      %v3687 = vrot.slane %v1795, 1
      %v3688 = vsel %vm1902, %v3686, %v3687
      %v3689 = vrot.slane %v1796, 1
      %v3690 = vsel %vm1902, %v3687, %v3689
      %v3691 = vrot.slane %v1794, 2
      %v3692 = vrot.slane %v1795, 2
      %v3693 = vsel %vm1381, %v3691, %v3692
      %v3694 = vrot.slane %v1796, 2
      %v3695 = vsel %vm1381, %v3692, %v3694
      %v3696 = vrot.slane %v1794, 3
      %v3697 = vrot.slane %v1795, 3
      %v3698 = vsel %vm2063, %v3696, %v3697
      %v3699 = vrot.slane %v1796, 3
      %v3700 = vsel %vm2063, %v3697, %v3699
      %v3703 = vrot.slane %v1794, 4
      %v3704 = vrot.slane %v1795, 4
      %v3705 = vsel %vm770, %v3703, %v3704
      %v3706 = vrot.slane %v1796, 4
      %v3707 = vsel %vm770, %v3704, %v3706
      %v3708 = vrot.slane %v1797, 4
      %v3709 = vrot.slane %v1798, 4
      %v3710 = vsel %vm770, %v3708, %v3709
      %v3711 = vrot.slane %v1799, 4
      %v3712 = vsel %vm770, %v3709, %v3711
      %v3713 = vrot.slane %v1800, 4
      %v3714 = vrot.slane %v1801, 4
      %v3715 = vsel %vm770, %v3713, %v3714
      %v3716 = vrot.slane %v1802, 4
      %v3717 = vsel %vm770, %v3714, %v3716
      %v3718 = vrot.slane %v1803, 4
      %v3719 = vrot.slane %v1804, 4
      %v3720 = vsel %vm770, %v3718, %v3719
      %v3721 = vrot.slane %v1805, 4
      %v3722 = vsel %vm770, %v3719, %v3721
      %v3723 = vrot.slane %v1806, 4
      %v3724 = vrot.slane %v1807, 4
      %v3725 = vsel %vm770, %v3723, %v3724
      %v3726 = vrot.slane %v1808, 4
      %v3727 = vsel %vm770, %v3724, %v3726
      %v3728 = vrot.slane %v1809, 4
      %v3729 = vrot.slane %v1810, 4
      %v3730 = vsel %vm770, %v3728, %v3729
      %v3731 = vrot.slane %v1811, 4
      %v3732 = vsel %vm770, %v3729, %v3731
      %v3733 = vrot.slane %v1812, 4
      %v3734 = vrot.slane %v1813, 4
      %v3735 = vsel %vm770, %v3733, %v3734
      %v3736 = vrot.slane %v1814, 4
      %v3737 = vsel %vm770, %v3734, %v3736
      %v3738 = vrot.slane %v1815, 4
      %v3739 = vrot.slane %v1816, 4
      %v3740 = vsel %vm770, %v3738, %v3739
      %v3741 = vrot.slane %v1817, 4
      %v3742 = vsel %vm770, %v3739, %v3741
      %v3743 = vrot.slane %v1818, 4
      %v3744 = vrot.slane %v1819, 4
      %v3745 = vsel %vm770, %v3743, %v3744
      %v3746 = vrot.slane %v1820, 4
      %v3747 = vsel %vm770, %v3744, %v3746
      %v3748 = vrot.slane %v1821, 4
      %v3749 = vrot.slane %v1822, 4
      %v3750 = vsel %vm770, %v3748, %v3749
      %v3751 = vrot.slane %v1823, 4
      %v3752 = vsel %vm770, %v3749, %v3751
      %v3753 = vrot.slane %v1824, 4
      %v3754 = vrot.slane %v1825, 4
      %v3755 = vsel %vm770, %v3753, %v3754
      %v3756 = vrot.slane %v1826, 4
      %v3757 = vsel %vm770, %v3754, %v3756
      %v3758 = vrot.slane %v1827, 4
      %v3759 = vrot.slane %v1828, 4
      %v3760 = vsel %vm770, %v3758, %v3759
      %v3761 = vrot.slane %v1829, 4
      %v3762 = vsel %vm770, %v3759, %v3761
      %v3763 = vrot.slane %v1830, 4
      %v3764 = vrot.slane %v1831, 4
      %v3765 = vsel %vm770, %v3763, %v3764
      %v3766 = vrot.slane %v1832, 4
      %v3767 = vsel %vm770, %v3764, %v3766
      %v3768 = vrot.slane %v1833, 4
      %v3769 = vrot.slane %v1834, 4
      %v3770 = vsel %vm770, %v3768, %v3769
      %v3771 = vrot.slane %v1835, 4
      %v3772 = vsel %vm770, %v3769, %v3771
      %v3773 = vrot.slane %v1836, 4
      %v3774 = vrot.slane %v1837, 4
      %v3775 = vsel %vm770, %v3773, %v3774
      %v3776 = vrot.slane %v1838, 4
      %v3777 = vsel %vm770, %v3774, %v3776
      %v3778 = vrot.slane %v1839, 4
      %v3779 = vrot.slane %v1840, 4
      %v3780 = vsel %vm770, %v3778, %v3779
      %v3781 = vrot.slane %v1841, 4
      %v3782 = vsel %vm770, %v3779, %v3781
      %v3783 = vrot.slane %v1842, 4
      %v3784 = vrot.slane %v1843, 4
      %v3785 = vsel %vm770, %v3783, %v3784
      %v3786 = vrot.slane %v1844, 4
      %v3787 = vsel %vm770, %v3784, %v3786
      %v3788 = vrot.slane %v1845, 4
      %v3789 = vrot.slane %v1846, 4
      %v3790 = vsel %vm770, %v3788, %v3789
      %v3791 = vrot.slane %v1847, 4
      %v3792 = vsel %vm770, %v3789, %v3791
      %v3793 = vrot.slane %v1848, 4
      %v3794 = vrot.slane %v1849, 4
      %v3795 = vsel %vm770, %v3793, %v3794
      %v3796 = vrot.slane %v1850, 4
      %v3797 = vsel %vm770, %v3794, %v3796
      %v3833 = vrot.slane %v1851, 1
      %v3834 = vrot.slane %v1852, 1
      %v3835 = vsel %vm1902, %v3833, %v3834
      %v3836 = vrot.slane %v1853, 1
      %v3837 = vsel %vm1902, %v3834, %v3836
      %v3838 = vrot.slane %v1851, 2
      %v3839 = vrot.slane %v1852, 2
      %v3840 = vsel %vm1381, %v3838, %v3839
      %v3841 = vrot.slane %v1853, 2
      %v3842 = vsel %vm1381, %v3839, %v3841
      %v3843 = vrot.slane %v1851, 3
      %v3844 = vrot.slane %v1852, 3
      %v3845 = vsel %vm2063, %v3843, %v3844
      %v3846 = vrot.slane %v1853, 3
      %v3847 = vsel %vm2063, %v3844, %v3846
      %v3848 = vrot.slane %v1851, 4
      %v3849 = vrot.slane %v1852, 4
      %v3850 = vsel %vm770, %v3848, %v3849
      %v3851 = vrot.slane %v1853, 4
      %v3852 = vsel %vm770, %v3849, %v3851
      %3853 = vrot.lane.b32.xlu0 %v1794, 116
      %v3854 = vpop.permute.xlu0 %3853
      %3855 = vrot.lane.b32.xlu0 %v1795, 116
      %v3856 = vpop.permute.xlu0 %3855
      %3857 = vrot.lane.b32.xlu0 %v1797, 116
      %v3858 = vpop.permute.xlu0 %3857
      %3859 = vrot.lane.b32.xlu0 %v1798, 116
      %v3860 = vpop.permute.xlu0 %3859
      %3861 = vrot.lane.b32.xlu0 %v1800, 116
      %v3862 = vpop.permute.xlu0 %3861
      %3863 = vrot.lane.b32.xlu0 %v1801, 116
      %v3864 = vpop.permute.xlu0 %3863
      %3865 = vrot.lane.b32.xlu0 %v1803, 116
      %v3866 = vpop.permute.xlu0 %3865
      %3867 = vrot.lane.b32.xlu0 %v1804, 116
      %v3868 = vpop.permute.xlu0 %3867
      %3869 = vrot.lane.b32.xlu0 %v1806, 116
      %v3870 = vpop.permute.xlu0 %3869
      %3871 = vrot.lane.b32.xlu0 %v1807, 116
      %v3872 = vpop.permute.xlu0 %3871
      %3873 = vrot.lane.b32.xlu0 %v1809, 116
      %v3874 = vpop.permute.xlu0 %3873
      %3875 = vrot.lane.b32.xlu0 %v1810, 116
      %v3876 = vpop.permute.xlu0 %3875
      %3877 = vrot.lane.b32.xlu0 %v1812, 116
      %v3878 = vpop.permute.xlu0 %3877
      %3879 = vrot.lane.b32.xlu0 %v1813, 116
      %v3880 = vpop.permute.xlu0 %3879
      %3881 = vrot.lane.b32.xlu0 %v1815, 116
      %v3882 = vpop.permute.xlu0 %3881
      %3883 = vrot.lane.b32.xlu0 %v1816, 116
      %v3884 = vpop.permute.xlu0 %3883
      %3885 = vrot.lane.b32.xlu0 %v1818, 116
      %v3886 = vpop.permute.xlu0 %3885
      %3887 = vrot.lane.b32.xlu0 %v1819, 116
      %v3888 = vpop.permute.xlu0 %3887
      %3889 = vrot.lane.b32.xlu0 %v1821, 116
      %v3890 = vpop.permute.xlu0 %3889
      %3891 = vrot.lane.b32.xlu0 %v1822, 116
      %v3892 = vpop.permute.xlu0 %3891
      %3893 = vrot.lane.b32.xlu0 %v1824, 116
      %v3894 = vpop.permute.xlu0 %3893
      %3895 = vrot.lane.b32.xlu0 %v1825, 116
      %v3896 = vpop.permute.xlu0 %3895
      %3897 = vrot.lane.b32.xlu0 %v1827, 116
      %v3898 = vpop.permute.xlu0 %3897
      %3899 = vrot.lane.b32.xlu0 %v1828, 116
      %v3900 = vpop.permute.xlu0 %3899
      %3901 = vrot.lane.b32.xlu0 %v1830, 116
      %v3902 = vpop.permute.xlu0 %3901
      %3903 = vrot.lane.b32.xlu0 %v1831, 116
      %v3904 = vpop.permute.xlu0 %3903
      %3905 = vrot.lane.b32.xlu0 %v1833, 116
      %v3906 = vpop.permute.xlu0 %3905
      %3907 = vrot.lane.b32.xlu0 %v1834, 116
      %v3908 = vpop.permute.xlu0 %3907
      %3909 = vrot.lane.b32.xlu0 %v1836, 116
      %v3910 = vpop.permute.xlu0 %3909
      %3911 = vrot.lane.b32.xlu0 %v1837, 116
      %v3912 = vpop.permute.xlu0 %3911
      %3913 = vrot.lane.b32.xlu0 %v1839, 116
      %v3914 = vpop.permute.xlu0 %3913
      %3915 = vrot.lane.b32.xlu0 %v1840, 116
      %v3916 = vpop.permute.xlu0 %3915
      %3949 = vrot.lane.b32.xlu0 %v3688, 120
      %v3950 = vpop.permute.xlu0 %3949
      %3951 = vrot.lane.b32.xlu0 %v3690, 120
      %v3952 = vpop.permute.xlu0 %3951
      %3955 = vrot.lane.b32.xlu0 %v3693, 124
      %v3956 = vpop.permute.xlu0 %3955
      %3957 = vrot.lane.b32.xlu0 %v3695, 124
      %v3958 = vpop.permute.xlu0 %3957
      %3961 = vrot.lane.b32.xlu0 %v3705, 4
      %v3962 = vpop.permute.xlu0 %3961
      %3963 = vrot.lane.b32.xlu0 %v3707, 4
      %v3964 = vpop.permute.xlu0 %3963
      %3965 = vrot.lane.b32.xlu0 %v3710, 4
      %v3966 = vpop.permute.xlu0 %3965
      %3967 = vrot.lane.b32.xlu0 %v3712, 4
      %v3968 = vpop.permute.xlu0 %3967
      %3969 = vrot.lane.b32.xlu0 %v3715, 4
      %v3970 = vpop.permute.xlu0 %3969
      %3971 = vrot.lane.b32.xlu0 %v3717, 4
      %v3972 = vpop.permute.xlu0 %3971
      %3973 = vrot.lane.b32.xlu0 %v3720, 4
      %v3974 = vpop.permute.xlu0 %3973
      %3975 = vrot.lane.b32.xlu0 %v3722, 4
      %v3976 = vpop.permute.xlu0 %3975
      %3977 = vrot.lane.b32.xlu0 %v3725, 4
      %v3978 = vpop.permute.xlu0 %3977
      %3979 = vrot.lane.b32.xlu0 %v3727, 4
      %v3980 = vpop.permute.xlu0 %3979
      %3981 = vrot.lane.b32.xlu0 %v3730, 4
      %v3982 = vpop.permute.xlu0 %3981
      %3983 = vrot.lane.b32.xlu0 %v3732, 4
      %v3984 = vpop.permute.xlu0 %3983
      %3985 = vrot.lane.b32.xlu0 %v3735, 4
      %v3986 = vpop.permute.xlu0 %3985
      %3987 = vrot.lane.b32.xlu0 %v3737, 4
      %v3988 = vpop.permute.xlu0 %3987
      %3989 = vrot.lane.b32.xlu0 %v3740, 4
      %v3990 = vpop.permute.xlu0 %3989
      %3991 = vrot.lane.b32.xlu0 %v3742, 4
      %v3992 = vpop.permute.xlu0 %3991
      %3993 = vrot.lane.b32.xlu0 %v3745, 4
      %v3994 = vpop.permute.xlu0 %3993
      %3995 = vrot.lane.b32.xlu0 %v3747, 4
      %v3996 = vpop.permute.xlu0 %3995
      %3997 = vrot.lane.b32.xlu0 %v3750, 4
      %v3998 = vpop.permute.xlu0 %3997
      %3999 = vrot.lane.b32.xlu0 %v3752, 4
      %v4000 = vpop.permute.xlu0 %3999
      %4001 = vrot.lane.b32.xlu0 %v3755, 4
      %v4002 = vpop.permute.xlu0 %4001
      %4003 = vrot.lane.b32.xlu0 %v3757, 4
      %v4004 = vpop.permute.xlu0 %4003
      %4005 = vrot.lane.b32.xlu0 %v3760, 4
      %v4006 = vpop.permute.xlu0 %4005
      %4007 = vrot.lane.b32.xlu0 %v3762, 4
      %v4008 = vpop.permute.xlu0 %4007
      %4009 = vrot.lane.b32.xlu0 %v3765, 4
      %v4010 = vpop.permute.xlu0 %4009
      %4011 = vrot.lane.b32.xlu0 %v3767, 4
      %v4012 = vpop.permute.xlu0 %4011
      %4013 = vrot.lane.b32.xlu0 %v3770, 4
      %v4014 = vpop.permute.xlu0 %4013
      %4015 = vrot.lane.b32.xlu0 %v3772, 4
      %v4016 = vpop.permute.xlu0 %4015
      %4017 = vrot.lane.b32.xlu0 %v3775, 4
      %v4018 = vpop.permute.xlu0 %4017
      %4019 = vrot.lane.b32.xlu0 %v3777, 4
      %v4020 = vpop.permute.xlu0 %4019
      %4021 = vrot.lane.b32.xlu0 %v3780, 4
      %v4022 = vpop.permute.xlu0 %4021
      %4023 = vrot.lane.b32.xlu0 %v3782, 4
      %v4024 = vpop.permute.xlu0 %4023
      %4057 = vrot.lane.b32.xlu0 %v1797, 8
      %v4058 = vpop.permute.xlu0 %4057
      %4059 = vrot.lane.b32.xlu0 %v1798, 8
      %v4060 = vpop.permute.xlu0 %4059
      %4061 = vrot.lane.b32.xlu0 %v1800, 8
      %v4062 = vpop.permute.xlu0 %4061
      %4063 = vrot.lane.b32.xlu0 %v1801, 8
      %v4064 = vpop.permute.xlu0 %4063
      %4065 = vrot.lane.b32.xlu0 %v1803, 8
      %v4066 = vpop.permute.xlu0 %4065
      %4067 = vrot.lane.b32.xlu0 %v1804, 8
      %v4068 = vpop.permute.xlu0 %4067
      %4069 = vrot.lane.b32.xlu0 %v1806, 8
      %v4070 = vpop.permute.xlu0 %4069
      %4071 = vrot.lane.b32.xlu0 %v1807, 8
      %v4072 = vpop.permute.xlu0 %4071
      %4073 = vrot.lane.b32.xlu0 %v1809, 8
      %v4074 = vpop.permute.xlu0 %4073
      %4075 = vrot.lane.b32.xlu0 %v1810, 8
      %v4076 = vpop.permute.xlu0 %4075
      %4077 = vrot.lane.b32.xlu0 %v1812, 8
      %v4078 = vpop.permute.xlu0 %4077
      %4079 = vrot.lane.b32.xlu0 %v1813, 8
      %v4080 = vpop.permute.xlu0 %4079
      %4081 = vrot.lane.b32.xlu0 %v1815, 8
      %v4082 = vpop.permute.xlu0 %4081
      %4083 = vrot.lane.b32.xlu0 %v1816, 8
      %v4084 = vpop.permute.xlu0 %4083
      %4085 = vrot.lane.b32.xlu0 %v1818, 8
      %v4086 = vpop.permute.xlu0 %4085
      %4087 = vrot.lane.b32.xlu0 %v1819, 8
      %v4088 = vpop.permute.xlu0 %4087
      %4089 = vrot.lane.b32.xlu0 %v1821, 8
      %v4090 = vpop.permute.xlu0 %4089
      %4091 = vrot.lane.b32.xlu0 %v1822, 8
      %v4092 = vpop.permute.xlu0 %4091
      %4093 = vrot.lane.b32.xlu0 %v1824, 8
      %v4094 = vpop.permute.xlu0 %4093
      %4095 = vrot.lane.b32.xlu0 %v1825, 8
      %v4096 = vpop.permute.xlu0 %4095
      %4097 = vrot.lane.b32.xlu0 %v1827, 8
      %v4098 = vpop.permute.xlu0 %4097
      %4099 = vrot.lane.b32.xlu0 %v1828, 8
      %v4100 = vpop.permute.xlu0 %4099
      %4101 = vrot.lane.b32.xlu0 %v1830, 8
      %v4102 = vpop.permute.xlu0 %4101
      %4103 = vrot.lane.b32.xlu0 %v1831, 8
      %v4104 = vpop.permute.xlu0 %4103
      %4105 = vrot.lane.b32.xlu0 %v1833, 8
      %v4106 = vpop.permute.xlu0 %4105
      %4107 = vrot.lane.b32.xlu0 %v1834, 8
      %v4108 = vpop.permute.xlu0 %4107
      %4109 = vrot.lane.b32.xlu0 %v1836, 8
      %v4110 = vpop.permute.xlu0 %4109
      %4111 = vrot.lane.b32.xlu0 %v1837, 8
      %v4112 = vpop.permute.xlu0 %4111
      %4113 = vrot.lane.b32.xlu0 %v1839, 8
      %v4114 = vpop.permute.xlu0 %4113
      %4115 = vrot.lane.b32.xlu0 %v1840, 8
      %v4116 = vpop.permute.xlu0 %4115
      %4117 = vrot.lane.b32.xlu0 %v1842, 8
      %v4118 = vpop.permute.xlu0 %4117
      %4119 = vrot.lane.b32.xlu0 %v1843, 8
      %v4120 = vpop.permute.xlu0 %4119
      %4153 = vrot.lane.b32.xlu0 %v1905, 12
      %v4154 = vpop.permute.xlu0 %4153
      %4155 = vrot.lane.b32.xlu0 %v1907, 12
      %v4156 = vpop.permute.xlu0 %4155
      %4157 = vrot.lane.b32.xlu0 %v1910, 12
      %v4158 = vpop.permute.xlu0 %4157
      %4159 = vrot.lane.b32.xlu0 %v1912, 12
      %v4160 = vpop.permute.xlu0 %4159
      %4161 = vrot.lane.b32.xlu0 %v1915, 12
      %v4162 = vpop.permute.xlu0 %4161
      %4163 = vrot.lane.b32.xlu0 %v1917, 12
      %v4164 = vpop.permute.xlu0 %4163
      %4165 = vrot.lane.b32.xlu0 %v1920, 12
      %v4166 = vpop.permute.xlu0 %4165
      %4167 = vrot.lane.b32.xlu0 %v1922, 12
      %v4168 = vpop.permute.xlu0 %4167
      %4169 = vrot.lane.b32.xlu0 %v1925, 12
      %v4170 = vpop.permute.xlu0 %4169
      %4171 = vrot.lane.b32.xlu0 %v1927, 12
      %v4172 = vpop.permute.xlu0 %4171
      %4173 = vrot.lane.b32.xlu0 %v1930, 12
      %v4174 = vpop.permute.xlu0 %4173
      %4175 = vrot.lane.b32.xlu0 %v1932, 12
      %v4176 = vpop.permute.xlu0 %4175
      %4177 = vrot.lane.b32.xlu0 %v1935, 12
      %v4178 = vpop.permute.xlu0 %4177
      %4179 = vrot.lane.b32.xlu0 %v1937, 12
      %v4180 = vpop.permute.xlu0 %4179
      %4181 = vrot.lane.b32.xlu0 %v1940, 12
      %v4182 = vpop.permute.xlu0 %4181
      %4183 = vrot.lane.b32.xlu0 %v1942, 12
      %v4184 = vpop.permute.xlu0 %4183
      %4185 = vrot.lane.b32.xlu0 %v1945, 12
      %v4186 = vpop.permute.xlu0 %4185
      %4187 = vrot.lane.b32.xlu0 %v1947, 12
      %v4188 = vpop.permute.xlu0 %4187
      %4189 = vrot.lane.b32.xlu0 %v1950, 12
      %v4190 = vpop.permute.xlu0 %4189
      %4191 = vrot.lane.b32.xlu0 %v1952, 12
      %v4192 = vpop.permute.xlu0 %4191
      %4193 = vrot.lane.b32.xlu0 %v1955, 12
      %v4194 = vpop.permute.xlu0 %4193
      %4195 = vrot.lane.b32.xlu0 %v1957, 12
      %v4196 = vpop.permute.xlu0 %4195
      %4197 = vrot.lane.b32.xlu0 %v1960, 12
      %v4198 = vpop.permute.xlu0 %4197
      %4199 = vrot.lane.b32.xlu0 %v1962, 12
      %v4200 = vpop.permute.xlu0 %4199
      %4201 = vrot.lane.b32.xlu0 %v1965, 12
      %v4202 = vpop.permute.xlu0 %4201
      %4203 = vrot.lane.b32.xlu0 %v1967, 12
      %v4204 = vpop.permute.xlu0 %4203
      %4205 = vrot.lane.b32.xlu0 %v1970, 12
      %v4206 = vpop.permute.xlu0 %4205
      %4207 = vrot.lane.b32.xlu0 %v1972, 12
      %v4208 = vpop.permute.xlu0 %4207
      %4209 = vrot.lane.b32.xlu0 %v1975, 12
      %v4210 = vpop.permute.xlu0 %4209
      %4211 = vrot.lane.b32.xlu0 %v1977, 12
      %v4212 = vpop.permute.xlu0 %4211
      %4213 = vrot.lane.b32.xlu0 %v1980, 12
      %v4214 = vpop.permute.xlu0 %4213
      %4215 = vrot.lane.b32.xlu0 %v1982, 12
      %v4216 = vpop.permute.xlu0 %4215
      %4249 = vrot.lane.b32.xlu0 %v1985, 16
      %v4250 = vpop.permute.xlu0 %4249
      %4251 = vrot.lane.b32.xlu0 %v1987, 16
      %v4252 = vpop.permute.xlu0 %4251
      %4253 = vrot.lane.b32.xlu0 %v1990, 16
      %v4254 = vpop.permute.xlu0 %4253
      %4255 = vrot.lane.b32.xlu0 %v1992, 16
      %v4256 = vpop.permute.xlu0 %4255
      %4257 = vrot.lane.b32.xlu0 %v1995, 16
      %v4258 = vpop.permute.xlu0 %4257
      %4259 = vrot.lane.b32.xlu0 %v1997, 16
      %v4260 = vpop.permute.xlu0 %4259
      %4261 = vrot.lane.b32.xlu0 %v2000, 16
      %v4262 = vpop.permute.xlu0 %4261
      %4263 = vrot.lane.b32.xlu0 %v2002, 16
      %v4264 = vpop.permute.xlu0 %4263
      %4265 = vrot.lane.b32.xlu0 %v2005, 16
      %v4266 = vpop.permute.xlu0 %4265
      %4267 = vrot.lane.b32.xlu0 %v2007, 16
      %v4268 = vpop.permute.xlu0 %4267
      %4269 = vrot.lane.b32.xlu0 %v2010, 16
      %v4270 = vpop.permute.xlu0 %4269
      %4271 = vrot.lane.b32.xlu0 %v2012, 16
      %v4272 = vpop.permute.xlu0 %4271
      %4273 = vrot.lane.b32.xlu0 %v2015, 16
      %v4274 = vpop.permute.xlu0 %4273
      %4275 = vrot.lane.b32.xlu0 %v2017, 16
      %v4276 = vpop.permute.xlu0 %4275
      %4277 = vrot.lane.b32.xlu0 %v2020, 16
      %v4278 = vpop.permute.xlu0 %4277
      %4279 = vrot.lane.b32.xlu0 %v2022, 16
      %v4280 = vpop.permute.xlu0 %4279
      %4281 = vrot.lane.b32.xlu0 %v2025, 16
      %v4282 = vpop.permute.xlu0 %4281
      %4283 = vrot.lane.b32.xlu0 %v2027, 16
      %v4284 = vpop.permute.xlu0 %4283
      %4285 = vrot.lane.b32.xlu0 %v2030, 16
      %v4286 = vpop.permute.xlu0 %4285
      %4287 = vrot.lane.b32.xlu0 %v2032, 16
      %v4288 = vpop.permute.xlu0 %4287
      %4289 = vrot.lane.b32.xlu0 %v2035, 16
      %v4290 = vpop.permute.xlu0 %4289
      %4291 = vrot.lane.b32.xlu0 %v2037, 16
      %v4292 = vpop.permute.xlu0 %4291
      %4293 = vrot.lane.b32.xlu0 %v2040, 16
      %v4294 = vpop.permute.xlu0 %4293
      %4295 = vrot.lane.b32.xlu0 %v2042, 16
      %v4296 = vpop.permute.xlu0 %4295
      %4297 = vrot.lane.b32.xlu0 %v2045, 16
      %v4298 = vpop.permute.xlu0 %4297
      %4299 = vrot.lane.b32.xlu0 %v2047, 16
      %v4300 = vpop.permute.xlu0 %4299
      %4301 = vrot.lane.b32.xlu0 %v2050, 16
      %v4302 = vpop.permute.xlu0 %4301
      %4303 = vrot.lane.b32.xlu0 %v2052, 16
      %v4304 = vpop.permute.xlu0 %4303
      %4305 = vrot.lane.b32.xlu0 %v2055, 16
      %v4306 = vpop.permute.xlu0 %4305
      %4307 = vrot.lane.b32.xlu0 %v2057, 16
      %v4308 = vpop.permute.xlu0 %4307
      %4309 = vrot.lane.b32.xlu0 %v2060, 16
      %v4310 = vpop.permute.xlu0 %4309
      %4311 = vrot.lane.b32.xlu0 %v2062, 16
      %v4312 = vpop.permute.xlu0 %4311
      %4345 = vrot.lane.b32.xlu0 %v2066, 20
      %v4346 = vpop.permute.xlu0 %4345
      %4347 = vrot.lane.b32.xlu0 %v2068, 20
      %v4348 = vpop.permute.xlu0 %4347
      %4349 = vrot.lane.b32.xlu0 %v2071, 20
      %v4350 = vpop.permute.xlu0 %4349
      %4351 = vrot.lane.b32.xlu0 %v2073, 20
      %v4352 = vpop.permute.xlu0 %4351
      %4353 = vrot.lane.b32.xlu0 %v2076, 20
      %v4354 = vpop.permute.xlu0 %4353
      %4355 = vrot.lane.b32.xlu0 %v2078, 20
      %v4356 = vpop.permute.xlu0 %4355
      %4357 = vrot.lane.b32.xlu0 %v2081, 20
      %v4358 = vpop.permute.xlu0 %4357
      %4359 = vrot.lane.b32.xlu0 %v2083, 20
      %v4360 = vpop.permute.xlu0 %4359
      %4361 = vrot.lane.b32.xlu0 %v2086, 20
      %v4362 = vpop.permute.xlu0 %4361
      %4363 = vrot.lane.b32.xlu0 %v2088, 20
      %v4364 = vpop.permute.xlu0 %4363
      %4365 = vrot.lane.b32.xlu0 %v2091, 20
      %v4366 = vpop.permute.xlu0 %4365
      %4367 = vrot.lane.b32.xlu0 %v2093, 20
      %v4368 = vpop.permute.xlu0 %4367
      %4369 = vrot.lane.b32.xlu0 %v2096, 20
      %v4370 = vpop.permute.xlu0 %4369
      %4371 = vrot.lane.b32.xlu0 %v2098, 20
      %v4372 = vpop.permute.xlu0 %4371
      %4373 = vrot.lane.b32.xlu0 %v2101, 20
      %v4374 = vpop.permute.xlu0 %4373
      %4375 = vrot.lane.b32.xlu0 %v2103, 20
      %v4376 = vpop.permute.xlu0 %4375
      %4377 = vrot.lane.b32.xlu0 %v2106, 20
      %v4378 = vpop.permute.xlu0 %4377
      %4379 = vrot.lane.b32.xlu0 %v2108, 20
      %v4380 = vpop.permute.xlu0 %4379
      %4381 = vrot.lane.b32.xlu0 %v2111, 20
      %v4382 = vpop.permute.xlu0 %4381
      %4383 = vrot.lane.b32.xlu0 %v2113, 20
      %v4384 = vpop.permute.xlu0 %4383
      %4385 = vrot.lane.b32.xlu0 %v2116, 20
      %v4386 = vpop.permute.xlu0 %4385
      %4387 = vrot.lane.b32.xlu0 %v2118, 20
      %v4388 = vpop.permute.xlu0 %4387
      %4389 = vrot.lane.b32.xlu0 %v2121, 20
      %v4390 = vpop.permute.xlu0 %4389
      %4391 = vrot.lane.b32.xlu0 %v2123, 20
      %v4392 = vpop.permute.xlu0 %4391
      %4393 = vrot.lane.b32.xlu0 %v2126, 20
      %v4394 = vpop.permute.xlu0 %4393
      %4395 = vrot.lane.b32.xlu0 %v2128, 20
      %v4396 = vpop.permute.xlu0 %4395
      %4397 = vrot.lane.b32.xlu0 %v2131, 20
      %v4398 = vpop.permute.xlu0 %4397
      %4399 = vrot.lane.b32.xlu0 %v2133, 20
      %v4400 = vpop.permute.xlu0 %4399
      %4401 = vrot.lane.b32.xlu0 %v2136, 20
      %v4402 = vpop.permute.xlu0 %4401
      %4403 = vrot.lane.b32.xlu0 %v2138, 20
      %v4404 = vpop.permute.xlu0 %4403
      %4405 = vrot.lane.b32.xlu0 %v2141, 20
      %v4406 = vpop.permute.xlu0 %4405
      %4407 = vrot.lane.b32.xlu0 %v2143, 20
      %v4408 = vpop.permute.xlu0 %4407
      %4441 = vrot.lane.b32.xlu0 %v3710, 24
      %v4442 = vpop.permute.xlu0 %4441
      %4443 = vrot.lane.b32.xlu0 %v3712, 24
      %v4444 = vpop.permute.xlu0 %4443
      %4445 = vrot.lane.b32.xlu0 %v3715, 24
      %v4446 = vpop.permute.xlu0 %4445
      %4447 = vrot.lane.b32.xlu0 %v3717, 24
      %v4448 = vpop.permute.xlu0 %4447
      %4449 = vrot.lane.b32.xlu0 %v3720, 24
      %v4450 = vpop.permute.xlu0 %4449
      %4451 = vrot.lane.b32.xlu0 %v3722, 24
      %v4452 = vpop.permute.xlu0 %4451
      %4453 = vrot.lane.b32.xlu0 %v3725, 24
      %v4454 = vpop.permute.xlu0 %4453
      %4455 = vrot.lane.b32.xlu0 %v3727, 24
      %v4456 = vpop.permute.xlu0 %4455
      %4457 = vrot.lane.b32.xlu0 %v3730, 24
      %v4458 = vpop.permute.xlu0 %4457
      %4459 = vrot.lane.b32.xlu0 %v3732, 24
      %v4460 = vpop.permute.xlu0 %4459
      %4461 = vrot.lane.b32.xlu0 %v3735, 24
      %v4462 = vpop.permute.xlu0 %4461
      %4463 = vrot.lane.b32.xlu0 %v3737, 24
      %v4464 = vpop.permute.xlu0 %4463
      %4465 = vrot.lane.b32.xlu0 %v3740, 24
      %v4466 = vpop.permute.xlu0 %4465
      %4467 = vrot.lane.b32.xlu0 %v3742, 24
      %v4468 = vpop.permute.xlu0 %4467
      %4469 = vrot.lane.b32.xlu0 %v3745, 24
      %v4470 = vpop.permute.xlu0 %4469
      %4471 = vrot.lane.b32.xlu0 %v3747, 24
      %v4472 = vpop.permute.xlu0 %4471
      %4473 = vrot.lane.b32.xlu0 %v3750, 24
      %v4474 = vpop.permute.xlu0 %4473
      %4475 = vrot.lane.b32.xlu0 %v3752, 24
      %v4476 = vpop.permute.xlu0 %4475
      %4477 = vrot.lane.b32.xlu0 %v3755, 24
      %v4478 = vpop.permute.xlu0 %4477
      %4479 = vrot.lane.b32.xlu0 %v3757, 24
      %v4480 = vpop.permute.xlu0 %4479
      %4481 = vrot.lane.b32.xlu0 %v3760, 24
      %v4482 = vpop.permute.xlu0 %4481
      %4483 = vrot.lane.b32.xlu0 %v3762, 24
      %v4484 = vpop.permute.xlu0 %4483
      %4485 = vrot.lane.b32.xlu0 %v3765, 24
      %v4486 = vpop.permute.xlu0 %4485
      %4487 = vrot.lane.b32.xlu0 %v3767, 24
      %v4488 = vpop.permute.xlu0 %4487
      %4489 = vrot.lane.b32.xlu0 %v3770, 24
      %v4490 = vpop.permute.xlu0 %4489
      %4491 = vrot.lane.b32.xlu0 %v3772, 24
      %v4492 = vpop.permute.xlu0 %4491
      %4493 = vrot.lane.b32.xlu0 %v3775, 24
      %v4494 = vpop.permute.xlu0 %4493
      %4495 = vrot.lane.b32.xlu0 %v3777, 24
      %v4496 = vpop.permute.xlu0 %4495
      %4497 = vrot.lane.b32.xlu0 %v3780, 24
      %v4498 = vpop.permute.xlu0 %4497
      %4499 = vrot.lane.b32.xlu0 %v3782, 24
      %v4500 = vpop.permute.xlu0 %4499
      %4501 = vrot.lane.b32.xlu0 %v3785, 24
      %v4502 = vpop.permute.xlu0 %4501
      %4503 = vrot.lane.b32.xlu0 %v3787, 24
      %v4504 = vpop.permute.xlu0 %4503
      %4537 = vrot.lane.b32.xlu0 %v1800, 28
      %v4538 = vpop.permute.xlu0 %4537
      %4539 = vrot.lane.b32.xlu0 %v1801, 28
      %v4540 = vpop.permute.xlu0 %4539
      %4541 = vrot.lane.b32.xlu0 %v1803, 28
      %v4542 = vpop.permute.xlu0 %4541
      %4543 = vrot.lane.b32.xlu0 %v1804, 28
      %v4544 = vpop.permute.xlu0 %4543
      %4545 = vrot.lane.b32.xlu0 %v1806, 28
      %v4546 = vpop.permute.xlu0 %4545
      %4547 = vrot.lane.b32.xlu0 %v1807, 28
      %v4548 = vpop.permute.xlu0 %4547
      %4549 = vrot.lane.b32.xlu0 %v1809, 28
      %v4550 = vpop.permute.xlu0 %4549
      %4551 = vrot.lane.b32.xlu0 %v1810, 28
      %v4552 = vpop.permute.xlu0 %4551
      %4553 = vrot.lane.b32.xlu0 %v1812, 28
      %v4554 = vpop.permute.xlu0 %4553
      %4555 = vrot.lane.b32.xlu0 %v1813, 28
      %v4556 = vpop.permute.xlu0 %4555
      %4557 = vrot.lane.b32.xlu0 %v1815, 28
      %v4558 = vpop.permute.xlu0 %4557
      %4559 = vrot.lane.b32.xlu0 %v1816, 28
      %v4560 = vpop.permute.xlu0 %4559
      %4561 = vrot.lane.b32.xlu0 %v1818, 28
      %v4562 = vpop.permute.xlu0 %4561
      %4563 = vrot.lane.b32.xlu0 %v1819, 28
      %v4564 = vpop.permute.xlu0 %4563
      %4565 = vrot.lane.b32.xlu0 %v1821, 28
      %v4566 = vpop.permute.xlu0 %4565
      %4567 = vrot.lane.b32.xlu0 %v1822, 28
      %v4568 = vpop.permute.xlu0 %4567
      %4569 = vrot.lane.b32.xlu0 %v1824, 28
      %v4570 = vpop.permute.xlu0 %4569
      %4571 = vrot.lane.b32.xlu0 %v1825, 28
      %v4572 = vpop.permute.xlu0 %4571
      %4573 = vrot.lane.b32.xlu0 %v1827, 28
      %v4574 = vpop.permute.xlu0 %4573
      %4575 = vrot.lane.b32.xlu0 %v1828, 28
      %v4576 = vpop.permute.xlu0 %4575
      %4577 = vrot.lane.b32.xlu0 %v1830, 28
      %v4578 = vpop.permute.xlu0 %4577
      %4579 = vrot.lane.b32.xlu0 %v1831, 28
      %v4580 = vpop.permute.xlu0 %4579
      %4581 = vrot.lane.b32.xlu0 %v1833, 28
      %v4582 = vpop.permute.xlu0 %4581
      %4583 = vrot.lane.b32.xlu0 %v1834, 28
      %v4584 = vpop.permute.xlu0 %4583
      %4585 = vrot.lane.b32.xlu0 %v1836, 28
      %v4586 = vpop.permute.xlu0 %4585
      %4587 = vrot.lane.b32.xlu0 %v1837, 28
      %v4588 = vpop.permute.xlu0 %4587
      %4589 = vrot.lane.b32.xlu0 %v1839, 28
      %v4590 = vpop.permute.xlu0 %4589
      %4591 = vrot.lane.b32.xlu0 %v1840, 28
      %v4592 = vpop.permute.xlu0 %4591
      %4593 = vrot.lane.b32.xlu0 %v1842, 28
      %v4594 = vpop.permute.xlu0 %4593
      %4595 = vrot.lane.b32.xlu0 %v1843, 28
      %v4596 = vpop.permute.xlu0 %4595
      %4597 = vrot.lane.b32.xlu0 %v1845, 28
      %v4598 = vpop.permute.xlu0 %4597
      %4599 = vrot.lane.b32.xlu0 %v1846, 28
      %v4600 = vpop.permute.xlu0 %4599
      %4633 = vrot.lane.b32.xlu0 %v1910, 32
      %v4634 = vpop.permute.xlu0 %4633
      %4635 = vrot.lane.b32.xlu0 %v1912, 32
      %v4636 = vpop.permute.xlu0 %4635
      %4637 = vrot.lane.b32.xlu0 %v1915, 32
      %v4638 = vpop.permute.xlu0 %4637
      %4639 = vrot.lane.b32.xlu0 %v1917, 32
      %v4640 = vpop.permute.xlu0 %4639
      %4641 = vrot.lane.b32.xlu0 %v1920, 32
      %v4642 = vpop.permute.xlu0 %4641
      %4643 = vrot.lane.b32.xlu0 %v1922, 32
      %v4644 = vpop.permute.xlu0 %4643
      %4645 = vrot.lane.b32.xlu0 %v1925, 32
      %v4646 = vpop.permute.xlu0 %4645
      %4647 = vrot.lane.b32.xlu0 %v1927, 32
      %v4648 = vpop.permute.xlu0 %4647
      %4649 = vrot.lane.b32.xlu0 %v1930, 32
      %v4650 = vpop.permute.xlu0 %4649
      %4651 = vrot.lane.b32.xlu0 %v1932, 32
      %v4652 = vpop.permute.xlu0 %4651
      %4653 = vrot.lane.b32.xlu0 %v1935, 32
      %v4654 = vpop.permute.xlu0 %4653
      %4655 = vrot.lane.b32.xlu0 %v1937, 32
      %v4656 = vpop.permute.xlu0 %4655
      %4657 = vrot.lane.b32.xlu0 %v1940, 32
      %v4658 = vpop.permute.xlu0 %4657
      %4659 = vrot.lane.b32.xlu0 %v1942, 32
      %v4660 = vpop.permute.xlu0 %4659
      %4661 = vrot.lane.b32.xlu0 %v1945, 32
      %v4662 = vpop.permute.xlu0 %4661
      %4663 = vrot.lane.b32.xlu0 %v1947, 32
      %v4664 = vpop.permute.xlu0 %4663
      %4665 = vrot.lane.b32.xlu0 %v1950, 32
      %v4666 = vpop.permute.xlu0 %4665
      %4667 = vrot.lane.b32.xlu0 %v1952, 32
      %v4668 = vpop.permute.xlu0 %4667
      %4669 = vrot.lane.b32.xlu0 %v1955, 32
      %v4670 = vpop.permute.xlu0 %4669
      %4671 = vrot.lane.b32.xlu0 %v1957, 32
      %v4672 = vpop.permute.xlu0 %4671
      %4673 = vrot.lane.b32.xlu0 %v1960, 32
      %v4674 = vpop.permute.xlu0 %4673
      %4675 = vrot.lane.b32.xlu0 %v1962, 32
      %v4676 = vpop.permute.xlu0 %4675
      %4677 = vrot.lane.b32.xlu0 %v1965, 32
      %v4678 = vpop.permute.xlu0 %4677
      %4679 = vrot.lane.b32.xlu0 %v1967, 32
      %v4680 = vpop.permute.xlu0 %4679
      %4681 = vrot.lane.b32.xlu0 %v1970, 32
      %v4682 = vpop.permute.xlu0 %4681
      %4683 = vrot.lane.b32.xlu0 %v1972, 32
      %v4684 = vpop.permute.xlu0 %4683
      %4685 = vrot.lane.b32.xlu0 %v1975, 32
      %v4686 = vpop.permute.xlu0 %4685
      %4687 = vrot.lane.b32.xlu0 %v1977, 32
      %v4688 = vpop.permute.xlu0 %4687
      %4689 = vrot.lane.b32.xlu0 %v1980, 32
      %v4690 = vpop.permute.xlu0 %4689
      %4691 = vrot.lane.b32.xlu0 %v1982, 32
      %v4692 = vpop.permute.xlu0 %4691
      %4693 = vrot.lane.b32.xlu0 %v2181, 32
      %v4694 = vpop.permute.xlu0 %4693
      %4695 = vrot.lane.b32.xlu0 %v2183, 32
      %v4696 = vpop.permute.xlu0 %4695
      %4729 = vrot.lane.b32.xlu0 %v1990, 36
      %v4730 = vpop.permute.xlu0 %4729
      %4731 = vrot.lane.b32.xlu0 %v1992, 36
      %v4732 = vpop.permute.xlu0 %4731
      %4733 = vrot.lane.b32.xlu0 %v1995, 36
      %v4734 = vpop.permute.xlu0 %4733
      %4735 = vrot.lane.b32.xlu0 %v1997, 36
      %v4736 = vpop.permute.xlu0 %4735
      %4737 = vrot.lane.b32.xlu0 %v2000, 36
      %v4738 = vpop.permute.xlu0 %4737
      %4739 = vrot.lane.b32.xlu0 %v2002, 36
      %v4740 = vpop.permute.xlu0 %4739
      %4741 = vrot.lane.b32.xlu0 %v2005, 36
      %v4742 = vpop.permute.xlu0 %4741
      %4743 = vrot.lane.b32.xlu0 %v2007, 36
      %v4744 = vpop.permute.xlu0 %4743
      %4745 = vrot.lane.b32.xlu0 %v2010, 36
      %v4746 = vpop.permute.xlu0 %4745
      %4747 = vrot.lane.b32.xlu0 %v2012, 36
      %v4748 = vpop.permute.xlu0 %4747
      %4749 = vrot.lane.b32.xlu0 %v2015, 36
      %v4750 = vpop.permute.xlu0 %4749
      %4751 = vrot.lane.b32.xlu0 %v2017, 36
      %v4752 = vpop.permute.xlu0 %4751
      %4753 = vrot.lane.b32.xlu0 %v2020, 36
      %v4754 = vpop.permute.xlu0 %4753
      %4755 = vrot.lane.b32.xlu0 %v2022, 36
      %v4756 = vpop.permute.xlu0 %4755
      %4757 = vrot.lane.b32.xlu0 %v2025, 36
      %v4758 = vpop.permute.xlu0 %4757
      %4759 = vrot.lane.b32.xlu0 %v2027, 36
      %v4760 = vpop.permute.xlu0 %4759
      %4761 = vrot.lane.b32.xlu0 %v2030, 36
      %v4762 = vpop.permute.xlu0 %4761
      %4763 = vrot.lane.b32.xlu0 %v2032, 36
      %v4764 = vpop.permute.xlu0 %4763
      %4765 = vrot.lane.b32.xlu0 %v2035, 36
      %v4766 = vpop.permute.xlu0 %4765
      %4767 = vrot.lane.b32.xlu0 %v2037, 36
      %v4768 = vpop.permute.xlu0 %4767
      %4769 = vrot.lane.b32.xlu0 %v2040, 36
      %v4770 = vpop.permute.xlu0 %4769
      %4771 = vrot.lane.b32.xlu0 %v2042, 36
      %v4772 = vpop.permute.xlu0 %4771
      %4773 = vrot.lane.b32.xlu0 %v2045, 36
      %v4774 = vpop.permute.xlu0 %4773
      %4775 = vrot.lane.b32.xlu0 %v2047, 36
      %v4776 = vpop.permute.xlu0 %4775
      %4777 = vrot.lane.b32.xlu0 %v2050, 36
      %v4778 = vpop.permute.xlu0 %4777
      %4779 = vrot.lane.b32.xlu0 %v2052, 36
      %v4780 = vpop.permute.xlu0 %4779
      %4781 = vrot.lane.b32.xlu0 %v2055, 36
      %v4782 = vpop.permute.xlu0 %4781
      %4783 = vrot.lane.b32.xlu0 %v2057, 36
      %v4784 = vpop.permute.xlu0 %4783
      %4785 = vrot.lane.b32.xlu0 %v2060, 36
      %v4786 = vpop.permute.xlu0 %4785
      %4787 = vrot.lane.b32.xlu0 %v2062, 36
      %v4788 = vpop.permute.xlu0 %4787
      %4789 = vrot.lane.b32.xlu0 %v2186, 36
      %v4790 = vpop.permute.xlu0 %4789
      %4791 = vrot.lane.b32.xlu0 %v2188, 36
      %v4792 = vpop.permute.xlu0 %4791
      %4825 = vrot.lane.b32.xlu0 %v2071, 40
      %v4826 = vpop.permute.xlu0 %4825
      %4827 = vrot.lane.b32.xlu0 %v2073, 40
      %v4828 = vpop.permute.xlu0 %4827
      %4829 = vrot.lane.b32.xlu0 %v2076, 40
      %v4830 = vpop.permute.xlu0 %4829
      %4831 = vrot.lane.b32.xlu0 %v2078, 40
      %v4832 = vpop.permute.xlu0 %4831
      %4833 = vrot.lane.b32.xlu0 %v2081, 40
      %v4834 = vpop.permute.xlu0 %4833
      %4835 = vrot.lane.b32.xlu0 %v2083, 40
      %v4836 = vpop.permute.xlu0 %4835
      %4837 = vrot.lane.b32.xlu0 %v2086, 40
      %v4838 = vpop.permute.xlu0 %4837
      %4839 = vrot.lane.b32.xlu0 %v2088, 40
      %v4840 = vpop.permute.xlu0 %4839
      %4841 = vrot.lane.b32.xlu0 %v2091, 40
      %v4842 = vpop.permute.xlu0 %4841
      %4843 = vrot.lane.b32.xlu0 %v2093, 40
      %v4844 = vpop.permute.xlu0 %4843
      %4845 = vrot.lane.b32.xlu0 %v2096, 40
      %v4846 = vpop.permute.xlu0 %4845
      %4847 = vrot.lane.b32.xlu0 %v2098, 40
      %v4848 = vpop.permute.xlu0 %4847
      %4849 = vrot.lane.b32.xlu0 %v2101, 40
      %v4850 = vpop.permute.xlu0 %4849
      %4851 = vrot.lane.b32.xlu0 %v2103, 40
      %v4852 = vpop.permute.xlu0 %4851
      %4853 = vrot.lane.b32.xlu0 %v2106, 40
      %v4854 = vpop.permute.xlu0 %4853
      %4855 = vrot.lane.b32.xlu0 %v2108, 40
      %v4856 = vpop.permute.xlu0 %4855
      %4857 = vrot.lane.b32.xlu0 %v2111, 40
      %v4858 = vpop.permute.xlu0 %4857
      %4859 = vrot.lane.b32.xlu0 %v2113, 40
      %v4860 = vpop.permute.xlu0 %4859
      %4861 = vrot.lane.b32.xlu0 %v2116, 40
      %v4862 = vpop.permute.xlu0 %4861
      %4863 = vrot.lane.b32.xlu0 %v2118, 40
      %v4864 = vpop.permute.xlu0 %4863
      %4865 = vrot.lane.b32.xlu0 %v2121, 40
      %v4866 = vpop.permute.xlu0 %4865
      %4867 = vrot.lane.b32.xlu0 %v2123, 40
      %v4868 = vpop.permute.xlu0 %4867
      %4869 = vrot.lane.b32.xlu0 %v2126, 40
      %v4870 = vpop.permute.xlu0 %4869
      %4871 = vrot.lane.b32.xlu0 %v2128, 40
      %v4872 = vpop.permute.xlu0 %4871
      %4873 = vrot.lane.b32.xlu0 %v2131, 40
      %v4874 = vpop.permute.xlu0 %4873
      %4875 = vrot.lane.b32.xlu0 %v2133, 40
      %v4876 = vpop.permute.xlu0 %4875
      %4877 = vrot.lane.b32.xlu0 %v2136, 40
      %v4878 = vpop.permute.xlu0 %4877
      %4879 = vrot.lane.b32.xlu0 %v2138, 40
      %v4880 = vpop.permute.xlu0 %4879
      %4881 = vrot.lane.b32.xlu0 %v2141, 40
      %v4882 = vpop.permute.xlu0 %4881
      %4883 = vrot.lane.b32.xlu0 %v2143, 40
      %v4884 = vpop.permute.xlu0 %4883
      %4885 = vrot.lane.b32.xlu0 %v2191, 40
      %v4886 = vpop.permute.xlu0 %4885
      %4887 = vrot.lane.b32.xlu0 %v2193, 40
      %v4888 = vpop.permute.xlu0 %4887
      %4921 = vrot.lane.b32.xlu0 %v3715, 44
      %v4922 = vpop.permute.xlu0 %4921
      %4923 = vrot.lane.b32.xlu0 %v3717, 44
      %v4924 = vpop.permute.xlu0 %4923
      %4925 = vrot.lane.b32.xlu0 %v3720, 44
      %v4926 = vpop.permute.xlu0 %4925
      %4927 = vrot.lane.b32.xlu0 %v3722, 44
      %v4928 = vpop.permute.xlu0 %4927
      %4929 = vrot.lane.b32.xlu0 %v3725, 44
      %v4930 = vpop.permute.xlu0 %4929
      %4931 = vrot.lane.b32.xlu0 %v3727, 44
      %v4932 = vpop.permute.xlu0 %4931
      %4933 = vrot.lane.b32.xlu0 %v3730, 44
      %v4934 = vpop.permute.xlu0 %4933
      %4935 = vrot.lane.b32.xlu0 %v3732, 44
      %v4936 = vpop.permute.xlu0 %4935
      %4937 = vrot.lane.b32.xlu0 %v3735, 44
      %v4938 = vpop.permute.xlu0 %4937
      %4939 = vrot.lane.b32.xlu0 %v3737, 44
      %v4940 = vpop.permute.xlu0 %4939
      %4941 = vrot.lane.b32.xlu0 %v3740, 44
      %v4942 = vpop.permute.xlu0 %4941
      %4943 = vrot.lane.b32.xlu0 %v3742, 44
      %v4944 = vpop.permute.xlu0 %4943
      %4945 = vrot.lane.b32.xlu0 %v3745, 44
      %v4946 = vpop.permute.xlu0 %4945
      %4947 = vrot.lane.b32.xlu0 %v3747, 44
      %v4948 = vpop.permute.xlu0 %4947
      %4949 = vrot.lane.b32.xlu0 %v3750, 44
      %v4950 = vpop.permute.xlu0 %4949
      %4951 = vrot.lane.b32.xlu0 %v3752, 44
      %v4952 = vpop.permute.xlu0 %4951
      %4953 = vrot.lane.b32.xlu0 %v3755, 44
      %v4954 = vpop.permute.xlu0 %4953
      %4955 = vrot.lane.b32.xlu0 %v3757, 44
      %v4956 = vpop.permute.xlu0 %4955
      %4957 = vrot.lane.b32.xlu0 %v3760, 44
      %v4958 = vpop.permute.xlu0 %4957
      %4959 = vrot.lane.b32.xlu0 %v3762, 44
      %v4960 = vpop.permute.xlu0 %4959
      %4961 = vrot.lane.b32.xlu0 %v3765, 44
      %v4962 = vpop.permute.xlu0 %4961
      %4963 = vrot.lane.b32.xlu0 %v3767, 44
      %v4964 = vpop.permute.xlu0 %4963
      %4965 = vrot.lane.b32.xlu0 %v3770, 44
      %v4966 = vpop.permute.xlu0 %4965
      %4967 = vrot.lane.b32.xlu0 %v3772, 44
      %v4968 = vpop.permute.xlu0 %4967
      %4969 = vrot.lane.b32.xlu0 %v3775, 44
      %v4970 = vpop.permute.xlu0 %4969
      %4971 = vrot.lane.b32.xlu0 %v3777, 44
      %v4972 = vpop.permute.xlu0 %4971
      %4973 = vrot.lane.b32.xlu0 %v3780, 44
      %v4974 = vpop.permute.xlu0 %4973
      %4975 = vrot.lane.b32.xlu0 %v3782, 44
      %v4976 = vpop.permute.xlu0 %4975
      %4977 = vrot.lane.b32.xlu0 %v3785, 44
      %v4978 = vpop.permute.xlu0 %4977
      %4979 = vrot.lane.b32.xlu0 %v3787, 44
      %v4980 = vpop.permute.xlu0 %4979
      %4981 = vrot.lane.b32.xlu0 %v3790, 44
      %v4982 = vpop.permute.xlu0 %4981
      %4983 = vrot.lane.b32.xlu0 %v3792, 44
      %v4984 = vpop.permute.xlu0 %4983
      %5017 = vrot.lane.b32.xlu0 %v1803, 48
      %v5018 = vpop.permute.xlu0 %5017
      %5019 = vrot.lane.b32.xlu0 %v1804, 48
      %v5020 = vpop.permute.xlu0 %5019
      %5021 = vrot.lane.b32.xlu0 %v1806, 48
      %v5022 = vpop.permute.xlu0 %5021
      %5023 = vrot.lane.b32.xlu0 %v1807, 48
      %v5024 = vpop.permute.xlu0 %5023
      %5025 = vrot.lane.b32.xlu0 %v1809, 48
      %v5026 = vpop.permute.xlu0 %5025
      %5027 = vrot.lane.b32.xlu0 %v1810, 48
      %v5028 = vpop.permute.xlu0 %5027
      %5029 = vrot.lane.b32.xlu0 %v1812, 48
      %v5030 = vpop.permute.xlu0 %5029
      %5031 = vrot.lane.b32.xlu0 %v1813, 48
      %v5032 = vpop.permute.xlu0 %5031
      %5033 = vrot.lane.b32.xlu0 %v1815, 48
      %v5034 = vpop.permute.xlu0 %5033
      %5035 = vrot.lane.b32.xlu0 %v1816, 48
      %v5036 = vpop.permute.xlu0 %5035
      %5037 = vrot.lane.b32.xlu0 %v1818, 48
      %v5038 = vpop.permute.xlu0 %5037
      %5039 = vrot.lane.b32.xlu0 %v1819, 48
      %v5040 = vpop.permute.xlu0 %5039
      %5041 = vrot.lane.b32.xlu0 %v1821, 48
      %v5042 = vpop.permute.xlu0 %5041
      %5043 = vrot.lane.b32.xlu0 %v1822, 48
      %v5044 = vpop.permute.xlu0 %5043
      %5045 = vrot.lane.b32.xlu0 %v1824, 48
      %v5046 = vpop.permute.xlu0 %5045
      %5047 = vrot.lane.b32.xlu0 %v1825, 48
      %v5048 = vpop.permute.xlu0 %5047
      %5049 = vrot.lane.b32.xlu0 %v1827, 48
      %v5050 = vpop.permute.xlu0 %5049
      %5051 = vrot.lane.b32.xlu0 %v1828, 48
      %v5052 = vpop.permute.xlu0 %5051
      %5053 = vrot.lane.b32.xlu0 %v1830, 48
      %v5054 = vpop.permute.xlu0 %5053
      %5055 = vrot.lane.b32.xlu0 %v1831, 48
      %v5056 = vpop.permute.xlu0 %5055
      %5057 = vrot.lane.b32.xlu0 %v1833, 48
      %v5058 = vpop.permute.xlu0 %5057
      %5059 = vrot.lane.b32.xlu0 %v1834, 48
      %v5060 = vpop.permute.xlu0 %5059
      %5061 = vrot.lane.b32.xlu0 %v1836, 48
      %v5062 = vpop.permute.xlu0 %5061
      %5063 = vrot.lane.b32.xlu0 %v1837, 48
      %v5064 = vpop.permute.xlu0 %5063
      %5065 = vrot.lane.b32.xlu0 %v1839, 48
      %v5066 = vpop.permute.xlu0 %5065
      %5067 = vrot.lane.b32.xlu0 %v1840, 48
      %v5068 = vpop.permute.xlu0 %5067
      %5069 = vrot.lane.b32.xlu0 %v1842, 48
      %v5070 = vpop.permute.xlu0 %5069
      %5071 = vrot.lane.b32.xlu0 %v1843, 48
      %v5072 = vpop.permute.xlu0 %5071
      %5073 = vrot.lane.b32.xlu0 %v1845, 48
      %v5074 = vpop.permute.xlu0 %5073
      %5075 = vrot.lane.b32.xlu0 %v1846, 48
      %v5076 = vpop.permute.xlu0 %5075
      %5077 = vrot.lane.b32.xlu0 %v1848, 48
      %v5078 = vpop.permute.xlu0 %5077
      %5079 = vrot.lane.b32.xlu0 %v1849, 48
      %v5080 = vpop.permute.xlu0 %5079
      %v5113 = vsel %vm589, %v3854, %v3950
      %v5114 = vsel %vm589, %v3856, %v3952
      %v5115 = vsel %vm589, %v3858, %v2213
      %v5116 = vsel %vm589, %v3860, %v2215
      %v5117 = vsel %vm589, %v3862, %v2217
      %v5118 = vsel %vm589, %v3864, %v2219
      %v5119 = vsel %vm589, %v3866, %v2221
      %v5120 = vsel %vm589, %v3868, %v2223
      %v5121 = vsel %vm589, %v3870, %v2225
      %v5122 = vsel %vm589, %v3872, %v2227
      %v5123 = vsel %vm589, %v3874, %v2229
      %v5124 = vsel %vm589, %v3876, %v2231
      %v5125 = vsel %vm589, %v3878, %v2233
      %v5126 = vsel %vm589, %v3880, %v2235
      %v5127 = vsel %vm589, %v3882, %v2237
      %v5128 = vsel %vm589, %v3884, %v2239
      %v5129 = vsel %vm589, %v3886, %v2241
      %v5130 = vsel %vm589, %v3888, %v2243
      %v5131 = vsel %vm589, %v3890, %v2245
      %v5132 = vsel %vm589, %v3892, %v2247
      %v5133 = vsel %vm589, %v3894, %v2249
      %v5134 = vsel %vm589, %v3896, %v2251
      %v5135 = vsel %vm589, %v3898, %v2253
      %v5136 = vsel %vm589, %v3900, %v2255
      %v5137 = vsel %vm589, %v3902, %v2257
      %v5138 = vsel %vm589, %v3904, %v2259
      %v5139 = vsel %vm589, %v3906, %v2261
      %v5140 = vsel %vm589, %v3908, %v2263
      %v5141 = vsel %vm589, %v3910, %v2265
      %v5142 = vsel %vm589, %v3912, %v2267
      %v5143 = vsel %vm589, %v3914, %v2269
      %v5144 = vsel %vm589, %v3916, %v2271
      %v5145 = vsel %vm3012, %v5113, %v3956
      %v5146 = vsel %vm3012, %v5114, %v3958
      %v5147 = vsel %vm3012, %v5115, %v2309
      %v5148 = vsel %vm3012, %v5116, %v2311
      %v5149 = vsel %vm3012, %v5117, %v2313
      %v5150 = vsel %vm3012, %v5118, %v2315
      %v5151 = vsel %vm3012, %v5119, %v2317
      %v5152 = vsel %vm3012, %v5120, %v2319
      %v5153 = vsel %vm3012, %v5121, %v2321
      %v5154 = vsel %vm3012, %v5122, %v2323
      %v5155 = vsel %vm3012, %v5123, %v2325
      %v5156 = vsel %vm3012, %v5124, %v2327
      %v5157 = vsel %vm3012, %v5125, %v2329
      %v5158 = vsel %vm3012, %v5126, %v2331
      %v5159 = vsel %vm3012, %v5127, %v2333
      %v5160 = vsel %vm3012, %v5128, %v2335
      %v5161 = vsel %vm3012, %v5129, %v2337
      %v5162 = vsel %vm3012, %v5130, %v2339
      %v5163 = vsel %vm3012, %v5131, %v2341
      %v5164 = vsel %vm3012, %v5132, %v2343
      %v5165 = vsel %vm3012, %v5133, %v2345
      %v5166 = vsel %vm3012, %v5134, %v2347
      %v5167 = vsel %vm3012, %v5135, %v2349
      %v5168 = vsel %vm3012, %v5136, %v2351
      %v5169 = vsel %vm3012, %v5137, %v2353
      %v5170 = vsel %vm3012, %v5138, %v2355
      %v5171 = vsel %vm3012, %v5139, %v2357
      %v5172 = vsel %vm3012, %v5140, %v2359
      %v5173 = vsel %vm3012, %v5141, %v2361
      %v5174 = vsel %vm3012, %v5142, %v2363
      %v5175 = vsel %vm3012, %v5143, %v2365
      %v5176 = vsel %vm3012, %v5144, %v2367
      %v5177 = vsel %vm3045, %v5145, %v3698
      %v5178 = vsel %vm3045, %v5146, %v3700
      %v5179 = vsel %vm3045, %v5147, %v2066
      %v5180 = vsel %vm3045, %v5148, %v2068
      %v5181 = vsel %vm3045, %v5149, %v2071
      %v5182 = vsel %vm3045, %v5150, %v2073
      %v5183 = vsel %vm3045, %v5151, %v2076
      %v5184 = vsel %vm3045, %v5152, %v2078
      %v5185 = vsel %vm3045, %v5153, %v2081
      %v5186 = vsel %vm3045, %v5154, %v2083
      %v5187 = vsel %vm3045, %v5155, %v2086
      %v5188 = vsel %vm3045, %v5156, %v2088
      %v5189 = vsel %vm3045, %v5157, %v2091
      %v5190 = vsel %vm3045, %v5158, %v2093
      %v5191 = vsel %vm3045, %v5159, %v2096
      %v5192 = vsel %vm3045, %v5160, %v2098
      %v5193 = vsel %vm3045, %v5161, %v2101
      %v5194 = vsel %vm3045, %v5162, %v2103
      %v5195 = vsel %vm3045, %v5163, %v2106
      %v5196 = vsel %vm3045, %v5164, %v2108
      %v5197 = vsel %vm3045, %v5165, %v2111
      %v5198 = vsel %vm3045, %v5166, %v2113
      %v5199 = vsel %vm3045, %v5167, %v2116
      %v5200 = vsel %vm3045, %v5168, %v2118
      %v5201 = vsel %vm3045, %v5169, %v2121
      %v5202 = vsel %vm3045, %v5170, %v2123
      %v5203 = vsel %vm3045, %v5171, %v2126
      %v5204 = vsel %vm3045, %v5172, %v2128
      %v5205 = vsel %vm3045, %v5173, %v2131
      %v5206 = vsel %vm3045, %v5174, %v2133
      %v5207 = vsel %vm3045, %v5175, %v2136
      %v5208 = vsel %vm3045, %v5176, %v2138
      %v5209 = vsel %vm3078, %v5177, %v3962
      %v5210 = vsel %vm3078, %v5178, %v3964
      %v5211 = vsel %vm3078, %v5179, %v3966
      %v5212 = vsel %vm3078, %v5180, %v3968
      %v5213 = vsel %vm3078, %v5181, %v3970
      %v5214 = vsel %vm3078, %v5182, %v3972
      %v5215 = vsel %vm3078, %v5183, %v3974
      %v5216 = vsel %vm3078, %v5184, %v3976
      %v5217 = vsel %vm3078, %v5185, %v3978
      %v5218 = vsel %vm3078, %v5186, %v3980
      %v5219 = vsel %vm3078, %v5187, %v3982
      %v5220 = vsel %vm3078, %v5188, %v3984
      %v5221 = vsel %vm3078, %v5189, %v3986
      %v5222 = vsel %vm3078, %v5190, %v3988
      %v5223 = vsel %vm3078, %v5191, %v3990
      %v5224 = vsel %vm3078, %v5192, %v3992
      %v5225 = vsel %vm3078, %v5193, %v3994
      %v5226 = vsel %vm3078, %v5194, %v3996
      %v5227 = vsel %vm3078, %v5195, %v3998
      %v5228 = vsel %vm3078, %v5196, %v4000
      %v5229 = vsel %vm3078, %v5197, %v4002
      %v5230 = vsel %vm3078, %v5198, %v4004
      %v5231 = vsel %vm3078, %v5199, %v4006
      %v5232 = vsel %vm3078, %v5200, %v4008
      %v5233 = vsel %vm3078, %v5201, %v4010
      %v5234 = vsel %vm3078, %v5202, %v4012
      %v5235 = vsel %vm3078, %v5203, %v4014
      %v5236 = vsel %vm3078, %v5204, %v4016
      %v5237 = vsel %vm3078, %v5205, %v4018
      %v5238 = vsel %vm3078, %v5206, %v4020
      %v5239 = vsel %vm3078, %v5207, %v4022
      %v5240 = vsel %vm3078, %v5208, %v4024
      %v5241 = vsel %vm3111, %v5209, %v4058
      %v5242 = vsel %vm3111, %v5210, %v4060
      %v5243 = vsel %vm3111, %v5211, %v4062
      %v5244 = vsel %vm3111, %v5212, %v4064
      %v5245 = vsel %vm3111, %v5213, %v4066
      %v5246 = vsel %vm3111, %v5214, %v4068
      %v5247 = vsel %vm3111, %v5215, %v4070
      %v5248 = vsel %vm3111, %v5216, %v4072
      %v5249 = vsel %vm3111, %v5217, %v4074
      %v5250 = vsel %vm3111, %v5218, %v4076
      %v5251 = vsel %vm3111, %v5219, %v4078
      %v5252 = vsel %vm3111, %v5220, %v4080
      %v5253 = vsel %vm3111, %v5221, %v4082
      %v5254 = vsel %vm3111, %v5222, %v4084
      %v5255 = vsel %vm3111, %v5223, %v4086
      %v5256 = vsel %vm3111, %v5224, %v4088
      %v5257 = vsel %vm3111, %v5225, %v4090
      %v5258 = vsel %vm3111, %v5226, %v4092
      %v5259 = vsel %vm3111, %v5227, %v4094
      %v5260 = vsel %vm3111, %v5228, %v4096
      %v5261 = vsel %vm3111, %v5229, %v4098
      %v5262 = vsel %vm3111, %v5230, %v4100
      %v5263 = vsel %vm3111, %v5231, %v4102
      %v5264 = vsel %vm3111, %v5232, %v4104
      %v5265 = vsel %vm3111, %v5233, %v4106
      %v5266 = vsel %vm3111, %v5234, %v4108
      %v5267 = vsel %vm3111, %v5235, %v4110
      %v5268 = vsel %vm3111, %v5236, %v4112
      %v5269 = vsel %vm3111, %v5237, %v4114
      %v5270 = vsel %vm3111, %v5238, %v4116
      %v5271 = vsel %vm3111, %v5239, %v4118
      %v5272 = vsel %vm3111, %v5240, %v4120
      %v5273 = vsel %vm3144, %v5241, %v4154
      %v5274 = vsel %vm3144, %v5242, %v4156
      %v5275 = vsel %vm3144, %v5243, %v4158
      %v5276 = vsel %vm3144, %v5244, %v4160
      %v5277 = vsel %vm3144, %v5245, %v4162
      %v5278 = vsel %vm3144, %v5246, %v4164
      %v5279 = vsel %vm3144, %v5247, %v4166
      %v5280 = vsel %vm3144, %v5248, %v4168
      %v5281 = vsel %vm3144, %v5249, %v4170
      %v5282 = vsel %vm3144, %v5250, %v4172
      %v5283 = vsel %vm3144, %v5251, %v4174
      %v5284 = vsel %vm3144, %v5252, %v4176
      %v5285 = vsel %vm3144, %v5253, %v4178
      %v5286 = vsel %vm3144, %v5254, %v4180
      %v5287 = vsel %vm3144, %v5255, %v4182
      %v5288 = vsel %vm3144, %v5256, %v4184
      %v5289 = vsel %vm3144, %v5257, %v4186
      %v5290 = vsel %vm3144, %v5258, %v4188
      %v5291 = vsel %vm3144, %v5259, %v4190
      %v5292 = vsel %vm3144, %v5260, %v4192
      %v5293 = vsel %vm3144, %v5261, %v4194
      %v5294 = vsel %vm3144, %v5262, %v4196
      %v5295 = vsel %vm3144, %v5263, %v4198
      %v5296 = vsel %vm3144, %v5264, %v4200
      %v5297 = vsel %vm3144, %v5265, %v4202
      %v5298 = vsel %vm3144, %v5266, %v4204
      %v5299 = vsel %vm3144, %v5267, %v4206
      %v5300 = vsel %vm3144, %v5268, %v4208
      %v5301 = vsel %vm3144, %v5269, %v4210
      %v5302 = vsel %vm3144, %v5270, %v4212
      %v5303 = vsel %vm3144, %v5271, %v4214
      %v5304 = vsel %vm3144, %v5272, %v4216
      %v5305 = vsel %vm3177, %v5273, %v4250
      %v5306 = vsel %vm3177, %v5274, %v4252
      %v5307 = vsel %vm3177, %v5275, %v4254
      %v5308 = vsel %vm3177, %v5276, %v4256
      %v5309 = vsel %vm3177, %v5277, %v4258
      %v5310 = vsel %vm3177, %v5278, %v4260
      %v5311 = vsel %vm3177, %v5279, %v4262
      %v5312 = vsel %vm3177, %v5280, %v4264
      %v5313 = vsel %vm3177, %v5281, %v4266
      %v5314 = vsel %vm3177, %v5282, %v4268
      %v5315 = vsel %vm3177, %v5283, %v4270
      %v5316 = vsel %vm3177, %v5284, %v4272
      %v5317 = vsel %vm3177, %v5285, %v4274
      %v5318 = vsel %vm3177, %v5286, %v4276
      %v5319 = vsel %vm3177, %v5287, %v4278
      %v5320 = vsel %vm3177, %v5288, %v4280
      %v5321 = vsel %vm3177, %v5289, %v4282
      %v5322 = vsel %vm3177, %v5290, %v4284
      %v5323 = vsel %vm3177, %v5291, %v4286
      %v5324 = vsel %vm3177, %v5292, %v4288
      %v5325 = vsel %vm3177, %v5293, %v4290
      %v5326 = vsel %vm3177, %v5294, %v4292
      %v5327 = vsel %vm3177, %v5295, %v4294
      %v5328 = vsel %vm3177, %v5296, %v4296
      %v5329 = vsel %vm3177, %v5297, %v4298
      %v5330 = vsel %vm3177, %v5298, %v4300
      %v5331 = vsel %vm3177, %v5299, %v4302
      %v5332 = vsel %vm3177, %v5300, %v4304
      %v5333 = vsel %vm3177, %v5301, %v4306
      %v5334 = vsel %vm3177, %v5302, %v4308
      %v5335 = vsel %vm3177, %v5303, %v4310
      %v5336 = vsel %vm3177, %v5304, %v4312
      %v5337 = vsel %vm3210, %v5305, %v4346
      %v5338 = vsel %vm3210, %v5306, %v4348
      %v5339 = vsel %vm3210, %v5307, %v4350
      %v5340 = vsel %vm3210, %v5308, %v4352
      %v5341 = vsel %vm3210, %v5309, %v4354
      %v5342 = vsel %vm3210, %v5310, %v4356
      %v5343 = vsel %vm3210, %v5311, %v4358
      %v5344 = vsel %vm3210, %v5312, %v4360
      %v5345 = vsel %vm3210, %v5313, %v4362
      %v5346 = vsel %vm3210, %v5314, %v4364
      %v5347 = vsel %vm3210, %v5315, %v4366
      %v5348 = vsel %vm3210, %v5316, %v4368
      %v5349 = vsel %vm3210, %v5317, %v4370
      %v5350 = vsel %vm3210, %v5318, %v4372
      %v5351 = vsel %vm3210, %v5319, %v4374
      %v5352 = vsel %vm3210, %v5320, %v4376
      %v5353 = vsel %vm3210, %v5321, %v4378
      %v5354 = vsel %vm3210, %v5322, %v4380
      %v5355 = vsel %vm3210, %v5323, %v4382
      %v5356 = vsel %vm3210, %v5324, %v4384
      %v5357 = vsel %vm3210, %v5325, %v4386
      %v5358 = vsel %vm3210, %v5326, %v4388
      %v5359 = vsel %vm3210, %v5327, %v4390
      %v5360 = vsel %vm3210, %v5328, %v4392
      %v5361 = vsel %vm3210, %v5329, %v4394
      %v5362 = vsel %vm3210, %v5330, %v4396
      %v5363 = vsel %vm3210, %v5331, %v4398
      %v5364 = vsel %vm3210, %v5332, %v4400
      %v5365 = vsel %vm3210, %v5333, %v4402
      %v5366 = vsel %vm3210, %v5334, %v4404
      %v5367 = vsel %vm3210, %v5335, %v4406
      %v5368 = vsel %vm3210, %v5336, %v4408
      %v5369 = vsel %vm3248, %v5337, %v4442
      %v5370 = vsel %vm3248, %v5338, %v4444
      %v5371 = vsel %vm3248, %v5339, %v4446
      %v5372 = vsel %vm3248, %v5340, %v4448
      %v5373 = vsel %vm3248, %v5341, %v4450
      %v5374 = vsel %vm3248, %v5342, %v4452
      %v5375 = vsel %vm3248, %v5343, %v4454
      %v5376 = vsel %vm3248, %v5344, %v4456
      %v5377 = vsel %vm3248, %v5345, %v4458
      %v5378 = vsel %vm3248, %v5346, %v4460
      %v5379 = vsel %vm3248, %v5347, %v4462
      %v5380 = vsel %vm3248, %v5348, %v4464
      %v5381 = vsel %vm3248, %v5349, %v4466
      %v5382 = vsel %vm3248, %v5350, %v4468
      %v5383 = vsel %vm3248, %v5351, %v4470
      %v5384 = vsel %vm3248, %v5352, %v4472
      %v5385 = vsel %vm3248, %v5353, %v4474
      %v5386 = vsel %vm3248, %v5354, %v4476
      %v5387 = vsel %vm3248, %v5355, %v4478
      %v5388 = vsel %vm3248, %v5356, %v4480
      %v5389 = vsel %vm3248, %v5357, %v4482
      %v5390 = vsel %vm3248, %v5358, %v4484
      %v5391 = vsel %vm3248, %v5359, %v4486
      %v5392 = vsel %vm3248, %v5360, %v4488
      %v5393 = vsel %vm3248, %v5361, %v4490
      %v5394 = vsel %vm3248, %v5362, %v4492
      %v5395 = vsel %vm3248, %v5363, %v4494
      %v5396 = vsel %vm3248, %v5364, %v4496
      %v5397 = vsel %vm3248, %v5365, %v4498
      %v5398 = vsel %vm3248, %v5366, %v4500
      %v5399 = vsel %vm3248, %v5367, %v4502
      %v5400 = vsel %vm3248, %v5368, %v4504
      %vm5401 = vcmask 326656
      %v5402 = vsel %vm5401, %v5369, %v4538
      %v5403 = vsel %vm5401, %v5370, %v4540
      %v5404 = vsel %vm5401, %v5371, %v4542
      %v5405 = vsel %vm5401, %v5372, %v4544
      %v5406 = vsel %vm5401, %v5373, %v4546
      %v5407 = vsel %vm5401, %v5374, %v4548
      %v5408 = vsel %vm5401, %v5375, %v4550
      %v5409 = vsel %vm5401, %v5376, %v4552
      %v5410 = vsel %vm5401, %v5377, %v4554
      %v5411 = vsel %vm5401, %v5378, %v4556
      %v5412 = vsel %vm5401, %v5379, %v4558
      %v5413 = vsel %vm5401, %v5380, %v4560
      %v5414 = vsel %vm5401, %v5381, %v4562
      %v5415 = vsel %vm5401, %v5382, %v4564
      %v5416 = vsel %vm5401, %v5383, %v4566
      %v5417 = vsel %vm5401, %v5384, %v4568
      %v5418 = vsel %vm5401, %v5385, %v4570
      %v5419 = vsel %vm5401, %v5386, %v4572
      %v5420 = vsel %vm5401, %v5387, %v4574
      %v5421 = vsel %vm5401, %v5388, %v4576
      %v5422 = vsel %vm5401, %v5389, %v4578
      %v5423 = vsel %vm5401, %v5390, %v4580
      %v5424 = vsel %vm5401, %v5391, %v4582
      %v5425 = vsel %vm5401, %v5392, %v4584
      %v5426 = vsel %vm5401, %v5393, %v4586
      %v5427 = vsel %vm5401, %v5394, %v4588
      %v5428 = vsel %vm5401, %v5395, %v4590
      %v5429 = vsel %vm5401, %v5396, %v4592
      %v5430 = vsel %vm5401, %v5397, %v4594
      %v5431 = vsel %vm5401, %v5398, %v4596
      %v5432 = vsel %vm5401, %v5399, %v4598
      %v5433 = vsel %vm5401, %v5400, %v4600
      %vm5434 = vcmask 359424
      %v5435 = vsel %vm5434, %v5402, %v4634
      %v5436 = vsel %vm5434, %v5403, %v4636
      %v5437 = vsel %vm5434, %v5404, %v4638
      %v5438 = vsel %vm5434, %v5405, %v4640
      %v5439 = vsel %vm5434, %v5406, %v4642
      %v5440 = vsel %vm5434, %v5407, %v4644
      %v5441 = vsel %vm5434, %v5408, %v4646
      %v5442 = vsel %vm5434, %v5409, %v4648
      %v5443 = vsel %vm5434, %v5410, %v4650
      %v5444 = vsel %vm5434, %v5411, %v4652
      %v5445 = vsel %vm5434, %v5412, %v4654
      %v5446 = vsel %vm5434, %v5413, %v4656
      %v5447 = vsel %vm5434, %v5414, %v4658
      %v5448 = vsel %vm5434, %v5415, %v4660
      %v5449 = vsel %vm5434, %v5416, %v4662
      %v5450 = vsel %vm5434, %v5417, %v4664
      %v5451 = vsel %vm5434, %v5418, %v4666
      %v5452 = vsel %vm5434, %v5419, %v4668
      %v5453 = vsel %vm5434, %v5420, %v4670
      %v5454 = vsel %vm5434, %v5421, %v4672
      %v5455 = vsel %vm5434, %v5422, %v4674
      %v5456 = vsel %vm5434, %v5423, %v4676
      %v5457 = vsel %vm5434, %v5424, %v4678
      %v5458 = vsel %vm5434, %v5425, %v4680
      %v5459 = vsel %vm5434, %v5426, %v4682
      %v5460 = vsel %vm5434, %v5427, %v4684
      %v5461 = vsel %vm5434, %v5428, %v4686
      %v5462 = vsel %vm5434, %v5429, %v4688
      %v5463 = vsel %vm5434, %v5430, %v4690
      %v5464 = vsel %vm5434, %v5431, %v4692
      %v5465 = vsel %vm5434, %v5432, %v4694
      %v5466 = vsel %vm5434, %v5433, %v4696
      %vm5467 = vcmask 392192
      %v5468 = vsel %vm5467, %v5435, %v4730
      %v5469 = vsel %vm5467, %v5436, %v4732
      %v5470 = vsel %vm5467, %v5437, %v4734
      %v5471 = vsel %vm5467, %v5438, %v4736
      %v5472 = vsel %vm5467, %v5439, %v4738
      %v5473 = vsel %vm5467, %v5440, %v4740
      %v5474 = vsel %vm5467, %v5441, %v4742
      %v5475 = vsel %vm5467, %v5442, %v4744
      %v5476 = vsel %vm5467, %v5443, %v4746
      %v5477 = vsel %vm5467, %v5444, %v4748
      %v5478 = vsel %vm5467, %v5445, %v4750
      %v5479 = vsel %vm5467, %v5446, %v4752
      %v5480 = vsel %vm5467, %v5447, %v4754
      %v5481 = vsel %vm5467, %v5448, %v4756
      %v5482 = vsel %vm5467, %v5449, %v4758
      %v5483 = vsel %vm5467, %v5450, %v4760
      %v5484 = vsel %vm5467, %v5451, %v4762
      %v5485 = vsel %vm5467, %v5452, %v4764
      %v5486 = vsel %vm5467, %v5453, %v4766
      %v5487 = vsel %vm5467, %v5454, %v4768
      %v5488 = vsel %vm5467, %v5455, %v4770
      %v5489 = vsel %vm5467, %v5456, %v4772
      %v5490 = vsel %vm5467, %v5457, %v4774
      %v5491 = vsel %vm5467, %v5458, %v4776
      %v5492 = vsel %vm5467, %v5459, %v4778
      %v5493 = vsel %vm5467, %v5460, %v4780
      %v5494 = vsel %vm5467, %v5461, %v4782
      %v5495 = vsel %vm5467, %v5462, %v4784
      %v5496 = vsel %vm5467, %v5463, %v4786
      %v5497 = vsel %vm5467, %v5464, %v4788
      %v5498 = vsel %vm5467, %v5465, %v4790
      %v5499 = vsel %vm5467, %v5466, %v4792
      %vm5500 = vcmask 424960
      %v5501 = vsel %vm5500, %v5468, %v4826
      %v5502 = vsel %vm5500, %v5469, %v4828
      %v5503 = vsel %vm5500, %v5470, %v4830
      %v5504 = vsel %vm5500, %v5471, %v4832
      %v5505 = vsel %vm5500, %v5472, %v4834
      %v5506 = vsel %vm5500, %v5473, %v4836
      %v5507 = vsel %vm5500, %v5474, %v4838
      %v5508 = vsel %vm5500, %v5475, %v4840
      %v5509 = vsel %vm5500, %v5476, %v4842
      %v5510 = vsel %vm5500, %v5477, %v4844
      %v5511 = vsel %vm5500, %v5478, %v4846
      %v5512 = vsel %vm5500, %v5479, %v4848
      %v5513 = vsel %vm5500, %v5480, %v4850
      %v5514 = vsel %vm5500, %v5481, %v4852
      %v5515 = vsel %vm5500, %v5482, %v4854
      %v5516 = vsel %vm5500, %v5483, %v4856
      %v5517 = vsel %vm5500, %v5484, %v4858
      %v5518 = vsel %vm5500, %v5485, %v4860
      %v5519 = vsel %vm5500, %v5486, %v4862
      %v5520 = vsel %vm5500, %v5487, %v4864
      %v5521 = vsel %vm5500, %v5488, %v4866
      %v5522 = vsel %vm5500, %v5489, %v4868
      %v5523 = vsel %vm5500, %v5490, %v4870
      %v5524 = vsel %vm5500, %v5491, %v4872
      %v5525 = vsel %vm5500, %v5492, %v4874
      %v5526 = vsel %vm5500, %v5493, %v4876
      %v5527 = vsel %vm5500, %v5494, %v4878
      %v5528 = vsel %vm5500, %v5495, %v4880
      %v5529 = vsel %vm5500, %v5496, %v4882
      %v5530 = vsel %vm5500, %v5497, %v4884
      %v5531 = vsel %vm5500, %v5498, %v4886
      %v5532 = vsel %vm5500, %v5499, %v4888
      %vm5533 = vcmask 457728
      %v5534 = vsel %vm5533, %v5501, %v4922
      %v5535 = vsel %vm5533, %v5502, %v4924
      %v5536 = vsel %vm5533, %v5503, %v4926
      %v5537 = vsel %vm5533, %v5504, %v4928
      %v5538 = vsel %vm5533, %v5505, %v4930
      %v5539 = vsel %vm5533, %v5506, %v4932
      %v5540 = vsel %vm5533, %v5507, %v4934
      %v5541 = vsel %vm5533, %v5508, %v4936
      %v5542 = vsel %vm5533, %v5509, %v4938
      %v5543 = vsel %vm5533, %v5510, %v4940
      %v5544 = vsel %vm5533, %v5511, %v4942
      %v5545 = vsel %vm5533, %v5512, %v4944
      %v5546 = vsel %vm5533, %v5513, %v4946
      %v5547 = vsel %vm5533, %v5514, %v4948
      %v5548 = vsel %vm5533, %v5515, %v4950
      %v5549 = vsel %vm5533, %v5516, %v4952
      %v5550 = vsel %vm5533, %v5517, %v4954
      %v5551 = vsel %vm5533, %v5518, %v4956
      %v5552 = vsel %vm5533, %v5519, %v4958
      %v5553 = vsel %vm5533, %v5520, %v4960
      %v5554 = vsel %vm5533, %v5521, %v4962
      %v5555 = vsel %vm5533, %v5522, %v4964
      %v5556 = vsel %vm5533, %v5523, %v4966
      %v5557 = vsel %vm5533, %v5524, %v4968
      %v5558 = vsel %vm5533, %v5525, %v4970
      %v5559 = vsel %vm5533, %v5526, %v4972
      %v5560 = vsel %vm5533, %v5527, %v4974
      %v5561 = vsel %vm5533, %v5528, %v4976
      %v5562 = vsel %vm5533, %v5529, %v4978
      %v5563 = vsel %vm5533, %v5530, %v4980
      %v5564 = vsel %vm5533, %v5531, %v4982
      %v5565 = vsel %vm5533, %v5532, %v4984
      %vm5566 = vcmask 490496
      %v5567 = vsel %vm5566, %v5534, %v5018
      %v5568 = vsel %vm5566, %v5535, %v5020
      %v5569 = vsel %vm5566, %v5536, %v5022
      %v5570 = vsel %vm5566, %v5537, %v5024
      %v5571 = vsel %vm5566, %v5538, %v5026
      %v5572 = vsel %vm5566, %v5539, %v5028
      %v5573 = vsel %vm5566, %v5540, %v5030
      %v5574 = vsel %vm5566, %v5541, %v5032
      %v5575 = vsel %vm5566, %v5542, %v5034
      %v5576 = vsel %vm5566, %v5543, %v5036
      %v5577 = vsel %vm5566, %v5544, %v5038
      %v5578 = vsel %vm5566, %v5545, %v5040
      %v5579 = vsel %vm5566, %v5546, %v5042
      %v5580 = vsel %vm5566, %v5547, %v5044
      %v5581 = vsel %vm5566, %v5548, %v5046
      %v5582 = vsel %vm5566, %v5549, %v5048
      %v5583 = vsel %vm5566, %v5550, %v5050
      %v5584 = vsel %vm5566, %v5551, %v5052
      %v5585 = vsel %vm5566, %v5552, %v5054
      %v5586 = vsel %vm5566, %v5553, %v5056
      %v5587 = vsel %vm5566, %v5554, %v5058
      %v5588 = vsel %vm5566, %v5555, %v5060
      %v5589 = vsel %vm5566, %v5556, %v5062
      %v5590 = vsel %vm5566, %v5557, %v5064
      %v5591 = vsel %vm5566, %v5558, %v5066
      %v5592 = vsel %vm5566, %v5559, %v5068
      %v5593 = vsel %vm5566, %v5560, %v5070
      %v5594 = vsel %vm5566, %v5561, %v5072
      %v5595 = vsel %vm5566, %v5562, %v5074
      %v5596 = vsel %vm5566, %v5563, %v5076
      %v5597 = vsel %vm5566, %v5564, %v5078
      %v5598 = vsel %vm5566, %v5565, %v5080
      %5599 = vrot.lane.b32.xlu0 %v1915, 116
      %v5600 = vpop.permute.xlu0 %5599
      %5601 = vrot.lane.b32.xlu0 %v1917, 116
      %v5602 = vpop.permute.xlu0 %5601
      %5603 = vrot.lane.b32.xlu0 %v1920, 116
      %v5604 = vpop.permute.xlu0 %5603
      %5605 = vrot.lane.b32.xlu0 %v1922, 116
      %v5606 = vpop.permute.xlu0 %5605
      %5607 = vrot.lane.b32.xlu0 %v1925, 116
      %v5608 = vpop.permute.xlu0 %5607
      %5609 = vrot.lane.b32.xlu0 %v1927, 116
      %v5610 = vpop.permute.xlu0 %5609
      %5611 = vrot.lane.b32.xlu0 %v1930, 116
      %v5612 = vpop.permute.xlu0 %5611
      %5613 = vrot.lane.b32.xlu0 %v1932, 116
      %v5614 = vpop.permute.xlu0 %5613
      %5615 = vrot.lane.b32.xlu0 %v1935, 116
      %v5616 = vpop.permute.xlu0 %5615
      %5617 = vrot.lane.b32.xlu0 %v1937, 116
      %v5618 = vpop.permute.xlu0 %5617
      %5619 = vrot.lane.b32.xlu0 %v1940, 116
      %v5620 = vpop.permute.xlu0 %5619
      %5621 = vrot.lane.b32.xlu0 %v1942, 116
      %v5622 = vpop.permute.xlu0 %5621
      %5623 = vrot.lane.b32.xlu0 %v1945, 116
      %v5624 = vpop.permute.xlu0 %5623
      %5625 = vrot.lane.b32.xlu0 %v1947, 116
      %v5626 = vpop.permute.xlu0 %5625
      %5627 = vrot.lane.b32.xlu0 %v1950, 116
      %v5628 = vpop.permute.xlu0 %5627
      %5629 = vrot.lane.b32.xlu0 %v1952, 116
      %v5630 = vpop.permute.xlu0 %5629
      %5631 = vrot.lane.b32.xlu0 %v1955, 116
      %v5632 = vpop.permute.xlu0 %5631
      %5633 = vrot.lane.b32.xlu0 %v1957, 116
      %v5634 = vpop.permute.xlu0 %5633
      %5635 = vrot.lane.b32.xlu0 %v1960, 116
      %v5636 = vpop.permute.xlu0 %5635
      %5637 = vrot.lane.b32.xlu0 %v1962, 116
      %v5638 = vpop.permute.xlu0 %5637
      %5639 = vrot.lane.b32.xlu0 %v1965, 116
      %v5640 = vpop.permute.xlu0 %5639
      %5641 = vrot.lane.b32.xlu0 %v1967, 116
      %v5642 = vpop.permute.xlu0 %5641
      %5643 = vrot.lane.b32.xlu0 %v1970, 116
      %v5644 = vpop.permute.xlu0 %5643
      %5645 = vrot.lane.b32.xlu0 %v1972, 116
      %v5646 = vpop.permute.xlu0 %5645
      %5647 = vrot.lane.b32.xlu0 %v1975, 116
      %v5648 = vpop.permute.xlu0 %5647
      %5649 = vrot.lane.b32.xlu0 %v1977, 116
      %v5650 = vpop.permute.xlu0 %5649
      %5651 = vrot.lane.b32.xlu0 %v1980, 116
      %v5652 = vpop.permute.xlu0 %5651
      %5653 = vrot.lane.b32.xlu0 %v1982, 116
      %v5654 = vpop.permute.xlu0 %5653
      %5655 = vrot.lane.b32.xlu0 %v2181, 116
      %v5656 = vpop.permute.xlu0 %5655
      %5657 = vrot.lane.b32.xlu0 %v2183, 116
      %v5658 = vpop.permute.xlu0 %5657
      %5659 = vrot.lane.b32.xlu0 %v2199, 116
      %v5660 = vpop.permute.xlu0 %5659
      %5661 = vrot.lane.b32.xlu0 %v2201, 116
      %v5662 = vpop.permute.xlu0 %5661
      %5695 = vrot.lane.b32.xlu0 %v1995, 120
      %v5696 = vpop.permute.xlu0 %5695
      %5697 = vrot.lane.b32.xlu0 %v1997, 120
      %v5698 = vpop.permute.xlu0 %5697
      %5699 = vrot.lane.b32.xlu0 %v2000, 120
      %v5700 = vpop.permute.xlu0 %5699
      %5701 = vrot.lane.b32.xlu0 %v2002, 120
      %v5702 = vpop.permute.xlu0 %5701
      %5703 = vrot.lane.b32.xlu0 %v2005, 120
      %v5704 = vpop.permute.xlu0 %5703
      %5705 = vrot.lane.b32.xlu0 %v2007, 120
      %v5706 = vpop.permute.xlu0 %5705
      %5707 = vrot.lane.b32.xlu0 %v2010, 120
      %v5708 = vpop.permute.xlu0 %5707
      %5709 = vrot.lane.b32.xlu0 %v2012, 120
      %v5710 = vpop.permute.xlu0 %5709
      %5711 = vrot.lane.b32.xlu0 %v2015, 120
      %v5712 = vpop.permute.xlu0 %5711
      %5713 = vrot.lane.b32.xlu0 %v2017, 120
      %v5714 = vpop.permute.xlu0 %5713
      %5715 = vrot.lane.b32.xlu0 %v2020, 120
      %v5716 = vpop.permute.xlu0 %5715
      %5717 = vrot.lane.b32.xlu0 %v2022, 120
      %v5718 = vpop.permute.xlu0 %5717
      %5719 = vrot.lane.b32.xlu0 %v2025, 120
      %v5720 = vpop.permute.xlu0 %5719
      %5721 = vrot.lane.b32.xlu0 %v2027, 120
      %v5722 = vpop.permute.xlu0 %5721
      %5723 = vrot.lane.b32.xlu0 %v2030, 120
      %v5724 = vpop.permute.xlu0 %5723
      %5725 = vrot.lane.b32.xlu0 %v2032, 120
      %v5726 = vpop.permute.xlu0 %5725
      %5727 = vrot.lane.b32.xlu0 %v2035, 120
      %v5728 = vpop.permute.xlu0 %5727
      %5729 = vrot.lane.b32.xlu0 %v2037, 120
      %v5730 = vpop.permute.xlu0 %5729
      %5731 = vrot.lane.b32.xlu0 %v2040, 120
      %v5732 = vpop.permute.xlu0 %5731
      %5733 = vrot.lane.b32.xlu0 %v2042, 120
      %v5734 = vpop.permute.xlu0 %5733
      %5735 = vrot.lane.b32.xlu0 %v2045, 120
      %v5736 = vpop.permute.xlu0 %5735
      %5737 = vrot.lane.b32.xlu0 %v2047, 120
      %v5738 = vpop.permute.xlu0 %5737
      %5739 = vrot.lane.b32.xlu0 %v2050, 120
      %v5740 = vpop.permute.xlu0 %5739
      %5741 = vrot.lane.b32.xlu0 %v2052, 120
      %v5742 = vpop.permute.xlu0 %5741
      %5743 = vrot.lane.b32.xlu0 %v2055, 120
      %v5744 = vpop.permute.xlu0 %5743
      %5745 = vrot.lane.b32.xlu0 %v2057, 120
      %v5746 = vpop.permute.xlu0 %5745
      %5747 = vrot.lane.b32.xlu0 %v2060, 120
      %v5748 = vpop.permute.xlu0 %5747
      %5749 = vrot.lane.b32.xlu0 %v2062, 120
      %v5750 = vpop.permute.xlu0 %5749
      %5751 = vrot.lane.b32.xlu0 %v2186, 120
      %v5752 = vpop.permute.xlu0 %5751
      %5753 = vrot.lane.b32.xlu0 %v2188, 120
      %v5754 = vpop.permute.xlu0 %5753
      %5755 = vrot.lane.b32.xlu0 %v2204, 120
      %v5756 = vpop.permute.xlu0 %5755
      %5757 = vrot.lane.b32.xlu0 %v2206, 120
      %v5758 = vpop.permute.xlu0 %5757
      %5791 = vrot.lane.b32.xlu0 %v2076, 124
      %v5792 = vpop.permute.xlu0 %5791
      %5793 = vrot.lane.b32.xlu0 %v2078, 124
      %v5794 = vpop.permute.xlu0 %5793
      %5795 = vrot.lane.b32.xlu0 %v2081, 124
      %v5796 = vpop.permute.xlu0 %5795
      %5797 = vrot.lane.b32.xlu0 %v2083, 124
      %v5798 = vpop.permute.xlu0 %5797
      %5799 = vrot.lane.b32.xlu0 %v2086, 124
      %v5800 = vpop.permute.xlu0 %5799
      %5801 = vrot.lane.b32.xlu0 %v2088, 124
      %v5802 = vpop.permute.xlu0 %5801
      %5803 = vrot.lane.b32.xlu0 %v2091, 124
      %v5804 = vpop.permute.xlu0 %5803
      %5805 = vrot.lane.b32.xlu0 %v2093, 124
      %v5806 = vpop.permute.xlu0 %5805
      %5807 = vrot.lane.b32.xlu0 %v2096, 124
      %v5808 = vpop.permute.xlu0 %5807
      %5809 = vrot.lane.b32.xlu0 %v2098, 124
      %v5810 = vpop.permute.xlu0 %5809
      %5811 = vrot.lane.b32.xlu0 %v2101, 124
      %v5812 = vpop.permute.xlu0 %5811
      %5813 = vrot.lane.b32.xlu0 %v2103, 124
      %v5814 = vpop.permute.xlu0 %5813
      %5815 = vrot.lane.b32.xlu0 %v2106, 124
      %v5816 = vpop.permute.xlu0 %5815
      %5817 = vrot.lane.b32.xlu0 %v2108, 124
      %v5818 = vpop.permute.xlu0 %5817
      %5819 = vrot.lane.b32.xlu0 %v2111, 124
      %v5820 = vpop.permute.xlu0 %5819
      %5821 = vrot.lane.b32.xlu0 %v2113, 124
      %v5822 = vpop.permute.xlu0 %5821
      %5823 = vrot.lane.b32.xlu0 %v2116, 124
      %v5824 = vpop.permute.xlu0 %5823
      %5825 = vrot.lane.b32.xlu0 %v2118, 124
      %v5826 = vpop.permute.xlu0 %5825
      %5827 = vrot.lane.b32.xlu0 %v2121, 124
      %v5828 = vpop.permute.xlu0 %5827
      %5829 = vrot.lane.b32.xlu0 %v2123, 124
      %v5830 = vpop.permute.xlu0 %5829
      %5831 = vrot.lane.b32.xlu0 %v2126, 124
      %v5832 = vpop.permute.xlu0 %5831
      %5833 = vrot.lane.b32.xlu0 %v2128, 124
      %v5834 = vpop.permute.xlu0 %5833
      %5835 = vrot.lane.b32.xlu0 %v2131, 124
      %v5836 = vpop.permute.xlu0 %5835
      %5837 = vrot.lane.b32.xlu0 %v2133, 124
      %v5838 = vpop.permute.xlu0 %5837
      %5839 = vrot.lane.b32.xlu0 %v2136, 124
      %v5840 = vpop.permute.xlu0 %5839
      %5841 = vrot.lane.b32.xlu0 %v2138, 124
      %v5842 = vpop.permute.xlu0 %5841
      %5843 = vrot.lane.b32.xlu0 %v2141, 124
      %v5844 = vpop.permute.xlu0 %5843
      %5845 = vrot.lane.b32.xlu0 %v2143, 124
      %v5846 = vpop.permute.xlu0 %5845
      %5847 = vrot.lane.b32.xlu0 %v2191, 124
      %v5848 = vpop.permute.xlu0 %5847
      %5849 = vrot.lane.b32.xlu0 %v2193, 124
      %v5850 = vpop.permute.xlu0 %5849
      %5851 = vrot.lane.b32.xlu0 %v2209, 124
      %v5852 = vpop.permute.xlu0 %5851
      %5853 = vrot.lane.b32.xlu0 %v2211, 124
      %v5854 = vpop.permute.xlu0 %5853
      %5887 = vrot.lane.b32.xlu0 %v1806, 4
      %v5888 = vpop.permute.xlu0 %5887
      %5889 = vrot.lane.b32.xlu0 %v1807, 4
      %v5890 = vpop.permute.xlu0 %5889
      %5891 = vrot.lane.b32.xlu0 %v1809, 4
      %v5892 = vpop.permute.xlu0 %5891
      %5893 = vrot.lane.b32.xlu0 %v1810, 4
      %v5894 = vpop.permute.xlu0 %5893
      %5895 = vrot.lane.b32.xlu0 %v1812, 4
      %v5896 = vpop.permute.xlu0 %5895
      %5897 = vrot.lane.b32.xlu0 %v1813, 4
      %v5898 = vpop.permute.xlu0 %5897
      %5899 = vrot.lane.b32.xlu0 %v1815, 4
      %v5900 = vpop.permute.xlu0 %5899
      %5901 = vrot.lane.b32.xlu0 %v1816, 4
      %v5902 = vpop.permute.xlu0 %5901
      %5903 = vrot.lane.b32.xlu0 %v1818, 4
      %v5904 = vpop.permute.xlu0 %5903
      %5905 = vrot.lane.b32.xlu0 %v1819, 4
      %v5906 = vpop.permute.xlu0 %5905
      %5907 = vrot.lane.b32.xlu0 %v1821, 4
      %v5908 = vpop.permute.xlu0 %5907
      %5909 = vrot.lane.b32.xlu0 %v1822, 4
      %v5910 = vpop.permute.xlu0 %5909
      %5911 = vrot.lane.b32.xlu0 %v1824, 4
      %v5912 = vpop.permute.xlu0 %5911
      %5913 = vrot.lane.b32.xlu0 %v1825, 4
      %v5914 = vpop.permute.xlu0 %5913
      %5915 = vrot.lane.b32.xlu0 %v1827, 4
      %v5916 = vpop.permute.xlu0 %5915
      %5917 = vrot.lane.b32.xlu0 %v1828, 4
      %v5918 = vpop.permute.xlu0 %5917
      %5919 = vrot.lane.b32.xlu0 %v1830, 4
      %v5920 = vpop.permute.xlu0 %5919
      %5921 = vrot.lane.b32.xlu0 %v1831, 4
      %v5922 = vpop.permute.xlu0 %5921
      %5923 = vrot.lane.b32.xlu0 %v1833, 4
      %v5924 = vpop.permute.xlu0 %5923
      %5925 = vrot.lane.b32.xlu0 %v1834, 4
      %v5926 = vpop.permute.xlu0 %5925
      %5927 = vrot.lane.b32.xlu0 %v1836, 4
      %v5928 = vpop.permute.xlu0 %5927
      %5929 = vrot.lane.b32.xlu0 %v1837, 4
      %v5930 = vpop.permute.xlu0 %5929
      %5931 = vrot.lane.b32.xlu0 %v1839, 4
      %v5932 = vpop.permute.xlu0 %5931
      %5933 = vrot.lane.b32.xlu0 %v1840, 4
      %v5934 = vpop.permute.xlu0 %5933
      %5935 = vrot.lane.b32.xlu0 %v1842, 4
      %v5936 = vpop.permute.xlu0 %5935
      %5937 = vrot.lane.b32.xlu0 %v1843, 4
      %v5938 = vpop.permute.xlu0 %5937
      %5939 = vrot.lane.b32.xlu0 %v1845, 4
      %v5940 = vpop.permute.xlu0 %5939
      %5941 = vrot.lane.b32.xlu0 %v1846, 4
      %v5942 = vpop.permute.xlu0 %5941
      %5943 = vrot.lane.b32.xlu0 %v1848, 4
      %v5944 = vpop.permute.xlu0 %5943
      %5945 = vrot.lane.b32.xlu0 %v1849, 4
      %v5946 = vpop.permute.xlu0 %5945
      %5947 = vrot.lane.b32.xlu0 %v1851, 4
      %v5948 = vpop.permute.xlu0 %5947
      %5949 = vrot.lane.b32.xlu0 %v1852, 4
      %v5950 = vpop.permute.xlu0 %5949
      %5983 = vrot.lane.b32.xlu0 %v1920, 8
      %v5984 = vpop.permute.xlu0 %5983
      %5985 = vrot.lane.b32.xlu0 %v1922, 8
      %v5986 = vpop.permute.xlu0 %5985
      %5987 = vrot.lane.b32.xlu0 %v1925, 8
      %v5988 = vpop.permute.xlu0 %5987
      %5989 = vrot.lane.b32.xlu0 %v1927, 8
      %v5990 = vpop.permute.xlu0 %5989
      %5991 = vrot.lane.b32.xlu0 %v1930, 8
      %v5992 = vpop.permute.xlu0 %5991
      %5993 = vrot.lane.b32.xlu0 %v1932, 8
      %v5994 = vpop.permute.xlu0 %5993
      %5995 = vrot.lane.b32.xlu0 %v1935, 8
      %v5996 = vpop.permute.xlu0 %5995
      %5997 = vrot.lane.b32.xlu0 %v1937, 8
      %v5998 = vpop.permute.xlu0 %5997
      %5999 = vrot.lane.b32.xlu0 %v1940, 8
      %v6000 = vpop.permute.xlu0 %5999
      %6001 = vrot.lane.b32.xlu0 %v1942, 8
      %v6002 = vpop.permute.xlu0 %6001
      %6003 = vrot.lane.b32.xlu0 %v1945, 8
      %v6004 = vpop.permute.xlu0 %6003
      %6005 = vrot.lane.b32.xlu0 %v1947, 8
      %v6006 = vpop.permute.xlu0 %6005
      %6007 = vrot.lane.b32.xlu0 %v1950, 8
      %v6008 = vpop.permute.xlu0 %6007
      %6009 = vrot.lane.b32.xlu0 %v1952, 8
      %v6010 = vpop.permute.xlu0 %6009
      %6011 = vrot.lane.b32.xlu0 %v1955, 8
      %v6012 = vpop.permute.xlu0 %6011
      %6013 = vrot.lane.b32.xlu0 %v1957, 8
      %v6014 = vpop.permute.xlu0 %6013
      %6015 = vrot.lane.b32.xlu0 %v1960, 8
      %v6016 = vpop.permute.xlu0 %6015
      %6017 = vrot.lane.b32.xlu0 %v1962, 8
      %v6018 = vpop.permute.xlu0 %6017
      %6019 = vrot.lane.b32.xlu0 %v1965, 8
      %v6020 = vpop.permute.xlu0 %6019
      %6021 = vrot.lane.b32.xlu0 %v1967, 8
      %v6022 = vpop.permute.xlu0 %6021
      %6023 = vrot.lane.b32.xlu0 %v1970, 8
      %v6024 = vpop.permute.xlu0 %6023
      %6025 = vrot.lane.b32.xlu0 %v1972, 8
      %v6026 = vpop.permute.xlu0 %6025
      %6027 = vrot.lane.b32.xlu0 %v1975, 8
      %v6028 = vpop.permute.xlu0 %6027
      %6029 = vrot.lane.b32.xlu0 %v1977, 8
      %v6030 = vpop.permute.xlu0 %6029
      %6031 = vrot.lane.b32.xlu0 %v1980, 8
      %v6032 = vpop.permute.xlu0 %6031
      %6033 = vrot.lane.b32.xlu0 %v1982, 8
      %v6034 = vpop.permute.xlu0 %6033
      %6035 = vrot.lane.b32.xlu0 %v2181, 8
      %v6036 = vpop.permute.xlu0 %6035
      %6037 = vrot.lane.b32.xlu0 %v2183, 8
      %v6038 = vpop.permute.xlu0 %6037
      %6039 = vrot.lane.b32.xlu0 %v2199, 8
      %v6040 = vpop.permute.xlu0 %6039
      %6041 = vrot.lane.b32.xlu0 %v2201, 8
      %v6042 = vpop.permute.xlu0 %6041
      %6043 = vrot.lane.b32.xlu0 %v3835, 8
      %v6044 = vpop.permute.xlu0 %6043
      %6045 = vrot.lane.b32.xlu0 %v3837, 8
      %v6046 = vpop.permute.xlu0 %6045
      %6079 = vrot.lane.b32.xlu0 %v2000, 12
      %v6080 = vpop.permute.xlu0 %6079
      %6081 = vrot.lane.b32.xlu0 %v2002, 12
      %v6082 = vpop.permute.xlu0 %6081
      %6083 = vrot.lane.b32.xlu0 %v2005, 12
      %v6084 = vpop.permute.xlu0 %6083
      %6085 = vrot.lane.b32.xlu0 %v2007, 12
      %v6086 = vpop.permute.xlu0 %6085
      %6087 = vrot.lane.b32.xlu0 %v2010, 12
      %v6088 = vpop.permute.xlu0 %6087
      %6089 = vrot.lane.b32.xlu0 %v2012, 12
      %v6090 = vpop.permute.xlu0 %6089
      %6091 = vrot.lane.b32.xlu0 %v2015, 12
      %v6092 = vpop.permute.xlu0 %6091
      %6093 = vrot.lane.b32.xlu0 %v2017, 12
      %v6094 = vpop.permute.xlu0 %6093
      %6095 = vrot.lane.b32.xlu0 %v2020, 12
      %v6096 = vpop.permute.xlu0 %6095
      %6097 = vrot.lane.b32.xlu0 %v2022, 12
      %v6098 = vpop.permute.xlu0 %6097
      %6099 = vrot.lane.b32.xlu0 %v2025, 12
      %v6100 = vpop.permute.xlu0 %6099
      %6101 = vrot.lane.b32.xlu0 %v2027, 12
      %v6102 = vpop.permute.xlu0 %6101
      %6103 = vrot.lane.b32.xlu0 %v2030, 12
      %v6104 = vpop.permute.xlu0 %6103
      %6105 = vrot.lane.b32.xlu0 %v2032, 12
      %v6106 = vpop.permute.xlu0 %6105
      %6107 = vrot.lane.b32.xlu0 %v2035, 12
      %v6108 = vpop.permute.xlu0 %6107
      %6109 = vrot.lane.b32.xlu0 %v2037, 12
      %v6110 = vpop.permute.xlu0 %6109
      %6111 = vrot.lane.b32.xlu0 %v2040, 12
      %v6112 = vpop.permute.xlu0 %6111
      %6113 = vrot.lane.b32.xlu0 %v2042, 12
      %v6114 = vpop.permute.xlu0 %6113
      %6115 = vrot.lane.b32.xlu0 %v2045, 12
      %v6116 = vpop.permute.xlu0 %6115
      %6117 = vrot.lane.b32.xlu0 %v2047, 12
      %v6118 = vpop.permute.xlu0 %6117
      %6119 = vrot.lane.b32.xlu0 %v2050, 12
      %v6120 = vpop.permute.xlu0 %6119
      %6121 = vrot.lane.b32.xlu0 %v2052, 12
      %v6122 = vpop.permute.xlu0 %6121
      %6123 = vrot.lane.b32.xlu0 %v2055, 12
      %v6124 = vpop.permute.xlu0 %6123
      %6125 = vrot.lane.b32.xlu0 %v2057, 12
      %v6126 = vpop.permute.xlu0 %6125
      %6127 = vrot.lane.b32.xlu0 %v2060, 12
      %v6128 = vpop.permute.xlu0 %6127
      %6129 = vrot.lane.b32.xlu0 %v2062, 12
      %v6130 = vpop.permute.xlu0 %6129
      %6131 = vrot.lane.b32.xlu0 %v2186, 12
      %v6132 = vpop.permute.xlu0 %6131
      %6133 = vrot.lane.b32.xlu0 %v2188, 12
      %v6134 = vpop.permute.xlu0 %6133
      %6135 = vrot.lane.b32.xlu0 %v2204, 12
      %v6136 = vpop.permute.xlu0 %6135
      %6137 = vrot.lane.b32.xlu0 %v2206, 12
      %v6138 = vpop.permute.xlu0 %6137
      %6139 = vrot.lane.b32.xlu0 %v3840, 12
      %v6140 = vpop.permute.xlu0 %6139
      %6141 = vrot.lane.b32.xlu0 %v3842, 12
      %v6142 = vpop.permute.xlu0 %6141
      %6175 = vrot.lane.b32.xlu0 %v2081, 16
      %v6176 = vpop.permute.xlu0 %6175
      %6177 = vrot.lane.b32.xlu0 %v2083, 16
      %v6178 = vpop.permute.xlu0 %6177
      %6179 = vrot.lane.b32.xlu0 %v2086, 16
      %v6180 = vpop.permute.xlu0 %6179
      %6181 = vrot.lane.b32.xlu0 %v2088, 16
      %v6182 = vpop.permute.xlu0 %6181
      %6183 = vrot.lane.b32.xlu0 %v2091, 16
      %v6184 = vpop.permute.xlu0 %6183
      %6185 = vrot.lane.b32.xlu0 %v2093, 16
      %v6186 = vpop.permute.xlu0 %6185
      %6187 = vrot.lane.b32.xlu0 %v2096, 16
      %v6188 = vpop.permute.xlu0 %6187
      %6189 = vrot.lane.b32.xlu0 %v2098, 16
      %v6190 = vpop.permute.xlu0 %6189
      %6191 = vrot.lane.b32.xlu0 %v2101, 16
      %v6192 = vpop.permute.xlu0 %6191
      %6193 = vrot.lane.b32.xlu0 %v2103, 16
      %v6194 = vpop.permute.xlu0 %6193
      %6195 = vrot.lane.b32.xlu0 %v2106, 16
      %v6196 = vpop.permute.xlu0 %6195
      %6197 = vrot.lane.b32.xlu0 %v2108, 16
      %v6198 = vpop.permute.xlu0 %6197
      %6199 = vrot.lane.b32.xlu0 %v2111, 16
      %v6200 = vpop.permute.xlu0 %6199
      %6201 = vrot.lane.b32.xlu0 %v2113, 16
      %v6202 = vpop.permute.xlu0 %6201
      %6203 = vrot.lane.b32.xlu0 %v2116, 16
      %v6204 = vpop.permute.xlu0 %6203
      %6205 = vrot.lane.b32.xlu0 %v2118, 16
      %v6206 = vpop.permute.xlu0 %6205
      %6207 = vrot.lane.b32.xlu0 %v2121, 16
      %v6208 = vpop.permute.xlu0 %6207
      %6209 = vrot.lane.b32.xlu0 %v2123, 16
      %v6210 = vpop.permute.xlu0 %6209
      %6211 = vrot.lane.b32.xlu0 %v2126, 16
      %v6212 = vpop.permute.xlu0 %6211
      %6213 = vrot.lane.b32.xlu0 %v2128, 16
      %v6214 = vpop.permute.xlu0 %6213
      %6215 = vrot.lane.b32.xlu0 %v2131, 16
      %v6216 = vpop.permute.xlu0 %6215
      %6217 = vrot.lane.b32.xlu0 %v2133, 16
      %v6218 = vpop.permute.xlu0 %6217
      %6219 = vrot.lane.b32.xlu0 %v2136, 16
      %v6220 = vpop.permute.xlu0 %6219
      %6221 = vrot.lane.b32.xlu0 %v2138, 16
      %v6222 = vpop.permute.xlu0 %6221
      %6223 = vrot.lane.b32.xlu0 %v2141, 16
      %v6224 = vpop.permute.xlu0 %6223
      %6225 = vrot.lane.b32.xlu0 %v2143, 16
      %v6226 = vpop.permute.xlu0 %6225
      %6227 = vrot.lane.b32.xlu0 %v2191, 16
      %v6228 = vpop.permute.xlu0 %6227
      %6229 = vrot.lane.b32.xlu0 %v2193, 16
      %v6230 = vpop.permute.xlu0 %6229
      %6231 = vrot.lane.b32.xlu0 %v2209, 16
      %v6232 = vpop.permute.xlu0 %6231
      %6233 = vrot.lane.b32.xlu0 %v2211, 16
      %v6234 = vpop.permute.xlu0 %6233
      %6235 = vrot.lane.b32.xlu0 %v3845, 16
      %v6236 = vpop.permute.xlu0 %6235
      %6237 = vrot.lane.b32.xlu0 %v3847, 16
      %v6238 = vpop.permute.xlu0 %6237
      %6271 = vrot.lane.b32.xlu0 %v3725, 20
      %v6272 = vpop.permute.xlu0 %6271
      %6273 = vrot.lane.b32.xlu0 %v3727, 20
      %v6274 = vpop.permute.xlu0 %6273
      %6275 = vrot.lane.b32.xlu0 %v3730, 20
      %v6276 = vpop.permute.xlu0 %6275
      %6277 = vrot.lane.b32.xlu0 %v3732, 20
      %v6278 = vpop.permute.xlu0 %6277
      %6279 = vrot.lane.b32.xlu0 %v3735, 20
      %v6280 = vpop.permute.xlu0 %6279
      %6281 = vrot.lane.b32.xlu0 %v3737, 20
      %v6282 = vpop.permute.xlu0 %6281
      %6283 = vrot.lane.b32.xlu0 %v3740, 20
      %v6284 = vpop.permute.xlu0 %6283
      %6285 = vrot.lane.b32.xlu0 %v3742, 20
      %v6286 = vpop.permute.xlu0 %6285
      %6287 = vrot.lane.b32.xlu0 %v3745, 20
      %v6288 = vpop.permute.xlu0 %6287
      %6289 = vrot.lane.b32.xlu0 %v3747, 20
      %v6290 = vpop.permute.xlu0 %6289
      %6291 = vrot.lane.b32.xlu0 %v3750, 20
      %v6292 = vpop.permute.xlu0 %6291
      %6293 = vrot.lane.b32.xlu0 %v3752, 20
      %v6294 = vpop.permute.xlu0 %6293
      %6295 = vrot.lane.b32.xlu0 %v3755, 20
      %v6296 = vpop.permute.xlu0 %6295
      %6297 = vrot.lane.b32.xlu0 %v3757, 20
      %v6298 = vpop.permute.xlu0 %6297
      %6299 = vrot.lane.b32.xlu0 %v3760, 20
      %v6300 = vpop.permute.xlu0 %6299
      %6301 = vrot.lane.b32.xlu0 %v3762, 20
      %v6302 = vpop.permute.xlu0 %6301
      %6303 = vrot.lane.b32.xlu0 %v3765, 20
      %v6304 = vpop.permute.xlu0 %6303
      %6305 = vrot.lane.b32.xlu0 %v3767, 20
      %v6306 = vpop.permute.xlu0 %6305
      %6307 = vrot.lane.b32.xlu0 %v3770, 20
      %v6308 = vpop.permute.xlu0 %6307
      %6309 = vrot.lane.b32.xlu0 %v3772, 20
      %v6310 = vpop.permute.xlu0 %6309
      %6311 = vrot.lane.b32.xlu0 %v3775, 20
      %v6312 = vpop.permute.xlu0 %6311
      %6313 = vrot.lane.b32.xlu0 %v3777, 20
      %v6314 = vpop.permute.xlu0 %6313
      %6315 = vrot.lane.b32.xlu0 %v3780, 20
      %v6316 = vpop.permute.xlu0 %6315
      %6317 = vrot.lane.b32.xlu0 %v3782, 20
      %v6318 = vpop.permute.xlu0 %6317
      %6319 = vrot.lane.b32.xlu0 %v3785, 20
      %v6320 = vpop.permute.xlu0 %6319
      %6321 = vrot.lane.b32.xlu0 %v3787, 20
      %v6322 = vpop.permute.xlu0 %6321
      %6323 = vrot.lane.b32.xlu0 %v3790, 20
      %v6324 = vpop.permute.xlu0 %6323
      %6325 = vrot.lane.b32.xlu0 %v3792, 20
      %v6326 = vpop.permute.xlu0 %6325
      %6327 = vrot.lane.b32.xlu0 %v3795, 20
      %v6328 = vpop.permute.xlu0 %6327
      %6329 = vrot.lane.b32.xlu0 %v3797, 20
      %v6330 = vpop.permute.xlu0 %6329
      %6331 = vrot.lane.b32.xlu0 %v3850, 20
      %v6332 = vpop.permute.xlu0 %6331
      %6333 = vrot.lane.b32.xlu0 %v3852, 20
      %v6334 = vpop.permute.xlu0 %6333
      %v6367 = vsel %vm589, %v5600, %v5696
      %v6368 = vsel %vm589, %v5602, %v5698
      %v6369 = vsel %vm589, %v5604, %v5700
      %v6370 = vsel %vm589, %v5606, %v5702
      %v6371 = vsel %vm589, %v5608, %v5704
      %v6372 = vsel %vm589, %v5610, %v5706
      %v6373 = vsel %vm589, %v5612, %v5708
      %v6374 = vsel %vm589, %v5614, %v5710
      %v6375 = vsel %vm589, %v5616, %v5712
      %v6376 = vsel %vm589, %v5618, %v5714
      %v6377 = vsel %vm589, %v5620, %v5716
      %v6378 = vsel %vm589, %v5622, %v5718
      %v6379 = vsel %vm589, %v5624, %v5720
      %v6380 = vsel %vm589, %v5626, %v5722
      %v6381 = vsel %vm589, %v5628, %v5724
      %v6382 = vsel %vm589, %v5630, %v5726
      %v6383 = vsel %vm589, %v5632, %v5728
      %v6384 = vsel %vm589, %v5634, %v5730
      %v6385 = vsel %vm589, %v5636, %v5732
      %v6386 = vsel %vm589, %v5638, %v5734
      %v6387 = vsel %vm589, %v5640, %v5736
      %v6388 = vsel %vm589, %v5642, %v5738
      %v6389 = vsel %vm589, %v5644, %v5740
      %v6390 = vsel %vm589, %v5646, %v5742
      %v6391 = vsel %vm589, %v5648, %v5744
      %v6392 = vsel %vm589, %v5650, %v5746
      %v6393 = vsel %vm589, %v5652, %v5748
      %v6394 = vsel %vm589, %v5654, %v5750
      %v6395 = vsel %vm589, %v5656, %v5752
      %v6396 = vsel %vm589, %v5658, %v5754
      %v6397 = vsel %vm589, %v5660, %v5756
      %v6398 = vsel %vm589, %v5662, %v5758
      %v6399 = vsel %vm3012, %v6367, %v5792
      %v6400 = vsel %vm3012, %v6368, %v5794
      %v6401 = vsel %vm3012, %v6369, %v5796
      %v6402 = vsel %vm3012, %v6370, %v5798
      %v6403 = vsel %vm3012, %v6371, %v5800
      %v6404 = vsel %vm3012, %v6372, %v5802
      %v6405 = vsel %vm3012, %v6373, %v5804
      %v6406 = vsel %vm3012, %v6374, %v5806
      %v6407 = vsel %vm3012, %v6375, %v5808
      %v6408 = vsel %vm3012, %v6376, %v5810
      %v6409 = vsel %vm3012, %v6377, %v5812
      %v6410 = vsel %vm3012, %v6378, %v5814
      %v6411 = vsel %vm3012, %v6379, %v5816
      %v6412 = vsel %vm3012, %v6380, %v5818
      %v6413 = vsel %vm3012, %v6381, %v5820
      %v6414 = vsel %vm3012, %v6382, %v5822
      %v6415 = vsel %vm3012, %v6383, %v5824
      %v6416 = vsel %vm3012, %v6384, %v5826
      %v6417 = vsel %vm3012, %v6385, %v5828
      %v6418 = vsel %vm3012, %v6386, %v5830
      %v6419 = vsel %vm3012, %v6387, %v5832
      %v6420 = vsel %vm3012, %v6388, %v5834
      %v6421 = vsel %vm3012, %v6389, %v5836
      %v6422 = vsel %vm3012, %v6390, %v5838
      %v6423 = vsel %vm3012, %v6391, %v5840
      %v6424 = vsel %vm3012, %v6392, %v5842
      %v6425 = vsel %vm3012, %v6393, %v5844
      %v6426 = vsel %vm3012, %v6394, %v5846
      %v6427 = vsel %vm3012, %v6395, %v5848
      %v6428 = vsel %vm3012, %v6396, %v5850
      %v6429 = vsel %vm3012, %v6397, %v5852
      %v6430 = vsel %vm3012, %v6398, %v5854
      %v6431 = vsel %vm3045, %v6399, %v3720
      %v6432 = vsel %vm3045, %v6400, %v3722
      %v6433 = vsel %vm3045, %v6401, %v3725
      %v6434 = vsel %vm3045, %v6402, %v3727
      %v6435 = vsel %vm3045, %v6403, %v3730
      %v6436 = vsel %vm3045, %v6404, %v3732
      %v6437 = vsel %vm3045, %v6405, %v3735
      %v6438 = vsel %vm3045, %v6406, %v3737
      %v6439 = vsel %vm3045, %v6407, %v3740
      %v6440 = vsel %vm3045, %v6408, %v3742
      %v6441 = vsel %vm3045, %v6409, %v3745
      %v6442 = vsel %vm3045, %v6410, %v3747
      %v6443 = vsel %vm3045, %v6411, %v3750
      %v6444 = vsel %vm3045, %v6412, %v3752
      %v6445 = vsel %vm3045, %v6413, %v3755
      %v6446 = vsel %vm3045, %v6414, %v3757
      %v6447 = vsel %vm3045, %v6415, %v3760
      %v6448 = vsel %vm3045, %v6416, %v3762
      %v6449 = vsel %vm3045, %v6417, %v3765
      %v6450 = vsel %vm3045, %v6418, %v3767
      %v6451 = vsel %vm3045, %v6419, %v3770
      %v6452 = vsel %vm3045, %v6420, %v3772
      %v6453 = vsel %vm3045, %v6421, %v3775
      %v6454 = vsel %vm3045, %v6422, %v3777
      %v6455 = vsel %vm3045, %v6423, %v3780
      %v6456 = vsel %vm3045, %v6424, %v3782
      %v6457 = vsel %vm3045, %v6425, %v3785
      %v6458 = vsel %vm3045, %v6426, %v3787
      %v6459 = vsel %vm3045, %v6427, %v3790
      %v6460 = vsel %vm3045, %v6428, %v3792
      %v6461 = vsel %vm3045, %v6429, %v3795
      %v6462 = vsel %vm3045, %v6430, %v3797
      %v6463 = vsel %vm3078, %v6431, %v5888
      %v6464 = vsel %vm3078, %v6432, %v5890
      %v6465 = vsel %vm3078, %v6433, %v5892
      %v6466 = vsel %vm3078, %v6434, %v5894
      %v6467 = vsel %vm3078, %v6435, %v5896
      %v6468 = vsel %vm3078, %v6436, %v5898
      %v6469 = vsel %vm3078, %v6437, %v5900
      %v6470 = vsel %vm3078, %v6438, %v5902
      %v6471 = vsel %vm3078, %v6439, %v5904
      %v6472 = vsel %vm3078, %v6440, %v5906
      %v6473 = vsel %vm3078, %v6441, %v5908
      %v6474 = vsel %vm3078, %v6442, %v5910
      %v6475 = vsel %vm3078, %v6443, %v5912
      %v6476 = vsel %vm3078, %v6444, %v5914
      %v6477 = vsel %vm3078, %v6445, %v5916
      %v6478 = vsel %vm3078, %v6446, %v5918
      %v6479 = vsel %vm3078, %v6447, %v5920
      %v6480 = vsel %vm3078, %v6448, %v5922
      %v6481 = vsel %vm3078, %v6449, %v5924
      %v6482 = vsel %vm3078, %v6450, %v5926
      %v6483 = vsel %vm3078, %v6451, %v5928
      %v6484 = vsel %vm3078, %v6452, %v5930
      %v6485 = vsel %vm3078, %v6453, %v5932
      %v6486 = vsel %vm3078, %v6454, %v5934
      %v6487 = vsel %vm3078, %v6455, %v5936
      %v6488 = vsel %vm3078, %v6456, %v5938
      %v6489 = vsel %vm3078, %v6457, %v5940
      %v6490 = vsel %vm3078, %v6458, %v5942
      %v6491 = vsel %vm3078, %v6459, %v5944
      %v6492 = vsel %vm3078, %v6460, %v5946
      %v6493 = vsel %vm3078, %v6461, %v5948
      %v6494 = vsel %vm3078, %v6462, %v5950
      %v6495 = vsel %vm3111, %v6463, %v5984
      %v6496 = vsel %vm3111, %v6464, %v5986
      %v6497 = vsel %vm3111, %v6465, %v5988
      %v6498 = vsel %vm3111, %v6466, %v5990
      %v6499 = vsel %vm3111, %v6467, %v5992
      %v6500 = vsel %vm3111, %v6468, %v5994
      %v6501 = vsel %vm3111, %v6469, %v5996
      %v6502 = vsel %vm3111, %v6470, %v5998
      %v6503 = vsel %vm3111, %v6471, %v6000
      %v6504 = vsel %vm3111, %v6472, %v6002
      %v6505 = vsel %vm3111, %v6473, %v6004
      %v6506 = vsel %vm3111, %v6474, %v6006
      %v6507 = vsel %vm3111, %v6475, %v6008
      %v6508 = vsel %vm3111, %v6476, %v6010
      %v6509 = vsel %vm3111, %v6477, %v6012
      %v6510 = vsel %vm3111, %v6478, %v6014
      %v6511 = vsel %vm3111, %v6479, %v6016
      %v6512 = vsel %vm3111, %v6480, %v6018
      %v6513 = vsel %vm3111, %v6481, %v6020
      %v6514 = vsel %vm3111, %v6482, %v6022
      %v6515 = vsel %vm3111, %v6483, %v6024
      %v6516 = vsel %vm3111, %v6484, %v6026
      %v6517 = vsel %vm3111, %v6485, %v6028
      %v6518 = vsel %vm3111, %v6486, %v6030
      %v6519 = vsel %vm3111, %v6487, %v6032
      %v6520 = vsel %vm3111, %v6488, %v6034
      %v6521 = vsel %vm3111, %v6489, %v6036
      %v6522 = vsel %vm3111, %v6490, %v6038
      %v6523 = vsel %vm3111, %v6491, %v6040
      %v6524 = vsel %vm3111, %v6492, %v6042
      %v6525 = vsel %vm3111, %v6493, %v6044
      %v6526 = vsel %vm3111, %v6494, %v6046
      %v6527 = vsel %vm3144, %v6495, %v6080
      %v6528 = vsel %vm3144, %v6496, %v6082
      %v6529 = vsel %vm3144, %v6497, %v6084
      %v6530 = vsel %vm3144, %v6498, %v6086
      %v6531 = vsel %vm3144, %v6499, %v6088
      %v6532 = vsel %vm3144, %v6500, %v6090
      %v6533 = vsel %vm3144, %v6501, %v6092
      %v6534 = vsel %vm3144, %v6502, %v6094
      %v6535 = vsel %vm3144, %v6503, %v6096
      %v6536 = vsel %vm3144, %v6504, %v6098
      %v6537 = vsel %vm3144, %v6505, %v6100
      %v6538 = vsel %vm3144, %v6506, %v6102
      %v6539 = vsel %vm3144, %v6507, %v6104
      %v6540 = vsel %vm3144, %v6508, %v6106
      %v6541 = vsel %vm3144, %v6509, %v6108
      %v6542 = vsel %vm3144, %v6510, %v6110
      %v6543 = vsel %vm3144, %v6511, %v6112
      %v6544 = vsel %vm3144, %v6512, %v6114
      %v6545 = vsel %vm3144, %v6513, %v6116
      %v6546 = vsel %vm3144, %v6514, %v6118
      %v6547 = vsel %vm3144, %v6515, %v6120
      %v6548 = vsel %vm3144, %v6516, %v6122
      %v6549 = vsel %vm3144, %v6517, %v6124
      %v6550 = vsel %vm3144, %v6518, %v6126
      %v6551 = vsel %vm3144, %v6519, %v6128
      %v6552 = vsel %vm3144, %v6520, %v6130
      %v6553 = vsel %vm3144, %v6521, %v6132
      %v6554 = vsel %vm3144, %v6522, %v6134
      %v6555 = vsel %vm3144, %v6523, %v6136
      %v6556 = vsel %vm3144, %v6524, %v6138
      %v6557 = vsel %vm3144, %v6525, %v6140
      %v6558 = vsel %vm3144, %v6526, %v6142
      %v6559 = vsel %vm3177, %v6527, %v6176
      %v6560 = vsel %vm3177, %v6528, %v6178
      %v6561 = vsel %vm3177, %v6529, %v6180
      %v6562 = vsel %vm3177, %v6530, %v6182
      %v6563 = vsel %vm3177, %v6531, %v6184
      %v6564 = vsel %vm3177, %v6532, %v6186
      %v6565 = vsel %vm3177, %v6533, %v6188
      %v6566 = vsel %vm3177, %v6534, %v6190
      %v6567 = vsel %vm3177, %v6535, %v6192
      %v6568 = vsel %vm3177, %v6536, %v6194
      %v6569 = vsel %vm3177, %v6537, %v6196
      %v6570 = vsel %vm3177, %v6538, %v6198
      %v6571 = vsel %vm3177, %v6539, %v6200
      %v6572 = vsel %vm3177, %v6540, %v6202
      %v6573 = vsel %vm3177, %v6541, %v6204
      %v6574 = vsel %vm3177, %v6542, %v6206
      %v6575 = vsel %vm3177, %v6543, %v6208
      %v6576 = vsel %vm3177, %v6544, %v6210
      %v6577 = vsel %vm3177, %v6545, %v6212
      %v6578 = vsel %vm3177, %v6546, %v6214
      %v6579 = vsel %vm3177, %v6547, %v6216
      %v6580 = vsel %vm3177, %v6548, %v6218
      %v6581 = vsel %vm3177, %v6549, %v6220
      %v6582 = vsel %vm3177, %v6550, %v6222
      %v6583 = vsel %vm3177, %v6551, %v6224
      %v6584 = vsel %vm3177, %v6552, %v6226
      %v6585 = vsel %vm3177, %v6553, %v6228
      %v6586 = vsel %vm3177, %v6554, %v6230
      %v6587 = vsel %vm3177, %v6555, %v6232
      %v6588 = vsel %vm3177, %v6556, %v6234
      %v6589 = vsel %vm3177, %v6557, %v6236
      %v6590 = vsel %vm3177, %v6558, %v6238
      %v6591 = vsel %vm3210, %v6559, %v6272
      %v6592 = vsel %vm3210, %v6560, %v6274
      %v6593 = vsel %vm3210, %v6561, %v6276
      %v6594 = vsel %vm3210, %v6562, %v6278
      %v6595 = vsel %vm3210, %v6563, %v6280
      %v6596 = vsel %vm3210, %v6564, %v6282
      %v6597 = vsel %vm3210, %v6565, %v6284
      %v6598 = vsel %vm3210, %v6566, %v6286
      %v6599 = vsel %vm3210, %v6567, %v6288
      %v6600 = vsel %vm3210, %v6568, %v6290
      %v6601 = vsel %vm3210, %v6569, %v6292
      %v6602 = vsel %vm3210, %v6570, %v6294
      %v6603 = vsel %vm3210, %v6571, %v6296
      %v6604 = vsel %vm3210, %v6572, %v6298
      %v6605 = vsel %vm3210, %v6573, %v6300
      %v6606 = vsel %vm3210, %v6574, %v6302
      %v6607 = vsel %vm3210, %v6575, %v6304
      %v6608 = vsel %vm3210, %v6576, %v6306
      %v6609 = vsel %vm3210, %v6577, %v6308
      %v6610 = vsel %vm3210, %v6578, %v6310
      %v6611 = vsel %vm3210, %v6579, %v6312
      %v6612 = vsel %vm3210, %v6580, %v6314
      %v6613 = vsel %vm3210, %v6581, %v6316
      %v6614 = vsel %vm3210, %v6582, %v6318
      %v6615 = vsel %vm3210, %v6583, %v6320
      %v6616 = vsel %vm3210, %v6584, %v6322
      %v6617 = vsel %vm3210, %v6585, %v6324
      %v6618 = vsel %vm3210, %v6586, %v6326
      %v6619 = vsel %vm3210, %v6587, %v6328
      %v6620 = vsel %vm3210, %v6588, %v6330
      %v6621 = vsel %vm3210, %v6589, %v6332
      %v6622 = vsel %vm3210, %v6590, %v6334
      %6655 = vrot.lane.b32.xlu0 %v6591, 64
      %v6656 = vpop.permute.xlu0 %6655
      %6657 = vrot.lane.b32.xlu0 %v6592, 64
      %v6658 = vpop.permute.xlu0 %6657
      %6659 = vrot.lane.b32.xlu0 %v6593, 64
      %v6660 = vpop.permute.xlu0 %6659
      %6661 = vrot.lane.b32.xlu0 %v6594, 64
      %v6662 = vpop.permute.xlu0 %6661
      %6663 = vrot.lane.b32.xlu0 %v6595, 64
      %v6664 = vpop.permute.xlu0 %6663
      %6665 = vrot.lane.b32.xlu0 %v6596, 64
      %v6666 = vpop.permute.xlu0 %6665
      %6667 = vrot.lane.b32.xlu0 %v6597, 64
      %v6668 = vpop.permute.xlu0 %6667
      %6669 = vrot.lane.b32.xlu0 %v6598, 64
      %v6670 = vpop.permute.xlu0 %6669
      %6671 = vrot.lane.b32.xlu0 %v6599, 64
      %v6672 = vpop.permute.xlu0 %6671
      %6673 = vrot.lane.b32.xlu0 %v6600, 64
      %v6674 = vpop.permute.xlu0 %6673
      %6675 = vrot.lane.b32.xlu0 %v6601, 64
      %v6676 = vpop.permute.xlu0 %6675
      %6677 = vrot.lane.b32.xlu0 %v6602, 64
      %v6678 = vpop.permute.xlu0 %6677
      %6679 = vrot.lane.b32.xlu0 %v6603, 64
      %v6680 = vpop.permute.xlu0 %6679
      %6681 = vrot.lane.b32.xlu0 %v6604, 64
      %v6682 = vpop.permute.xlu0 %6681
      %6683 = vrot.lane.b32.xlu0 %v6605, 64
      %v6684 = vpop.permute.xlu0 %6683
      %6685 = vrot.lane.b32.xlu0 %v6606, 64
      %v6686 = vpop.permute.xlu0 %6685
      %6687 = vrot.lane.b32.xlu0 %v6607, 64
      %v6688 = vpop.permute.xlu0 %6687
      %6689 = vrot.lane.b32.xlu0 %v6608, 64
      %v6690 = vpop.permute.xlu0 %6689
      %6691 = vrot.lane.b32.xlu0 %v6609, 64
      %v6692 = vpop.permute.xlu0 %6691
      %6693 = vrot.lane.b32.xlu0 %v6610, 64
      %v6694 = vpop.permute.xlu0 %6693
      %6695 = vrot.lane.b32.xlu0 %v6611, 64
      %v6696 = vpop.permute.xlu0 %6695
      %6697 = vrot.lane.b32.xlu0 %v6612, 64
      %v6698 = vpop.permute.xlu0 %6697
      %6699 = vrot.lane.b32.xlu0 %v6613, 64
      %v6700 = vpop.permute.xlu0 %6699
      %6701 = vrot.lane.b32.xlu0 %v6614, 64
      %v6702 = vpop.permute.xlu0 %6701
      %6703 = vrot.lane.b32.xlu0 %v6615, 64
      %v6704 = vpop.permute.xlu0 %6703
      %6705 = vrot.lane.b32.xlu0 %v6616, 64
      %v6706 = vpop.permute.xlu0 %6705
      %6707 = vrot.lane.b32.xlu0 %v6617, 64
      %v6708 = vpop.permute.xlu0 %6707
      %6709 = vrot.lane.b32.xlu0 %v6618, 64
      %v6710 = vpop.permute.xlu0 %6709
      %6711 = vrot.lane.b32.xlu0 %v6619, 64
      %v6712 = vpop.permute.xlu0 %6711
      %6713 = vrot.lane.b32.xlu0 %v6620, 64
      %v6714 = vpop.permute.xlu0 %6713
      %6715 = vrot.lane.b32.xlu0 %v6621, 64
      %v6716 = vpop.permute.xlu0 %6715
      %6717 = vrot.lane.b32.xlu0 %v6622, 64
      %v6718 = vpop.permute.xlu0 %6717
      %vm6751 = vcmask 523264
      %v6752 = vsel %vm6751, %v5567, %v6656
      %v6753 = vsel %vm6751, %v5568, %v6658
      %v6754 = vsel %vm6751, %v5569, %v6660
      %v6755 = vsel %vm6751, %v5570, %v6662
      %v6756 = vsel %vm6751, %v5571, %v6664
      %v6757 = vsel %vm6751, %v5572, %v6666
      %v6758 = vsel %vm6751, %v5573, %v6668
      %v6759 = vsel %vm6751, %v5574, %v6670
      %v6760 = vsel %vm6751, %v5575, %v6672
      %v6761 = vsel %vm6751, %v5576, %v6674
      %v6762 = vsel %vm6751, %v5577, %v6676
      %v6763 = vsel %vm6751, %v5578, %v6678
      %v6764 = vsel %vm6751, %v5579, %v6680
      %v6765 = vsel %vm6751, %v5580, %v6682
      %v6766 = vsel %vm6751, %v5581, %v6684
      %v6767 = vsel %vm6751, %v5582, %v6686
      %v6768 = vsel %vm6751, %v5583, %v6688
      %v6769 = vsel %vm6751, %v5584, %v6690
      %v6770 = vsel %vm6751, %v5585, %v6692
      %v6771 = vsel %vm6751, %v5586, %v6694
      %v6772 = vsel %vm6751, %v5587, %v6696
      %v6773 = vsel %vm6751, %v5588, %v6698
      %v6774 = vsel %vm6751, %v5589, %v6700
      %v6775 = vsel %vm6751, %v5590, %v6702
      %v6776 = vsel %vm6751, %v5591, %v6704
      %v6777 = vsel %vm6751, %v5592, %v6706
      %v6778 = vsel %vm6751, %v5593, %v6708
      %v6779 = vsel %vm6751, %v5594, %v6710
      %v6780 = vsel %vm6751, %v5595, %v6712
      %v6781 = vsel %vm6751, %v5596, %v6714
      %v6782 = vsel %vm6751, %v5597, %v6716
      %v6783 = vsel %vm6751, %v5598, %v6718
      %v6784 = vld [vmem:[%s8] sm:$0xff]
      %v6785 = vld [vmem:[%s8 + $0x8] sm:$0xff]
      %v6786 = vld [vmem:[%s8 + $0x10] sm:$0xff]
      %v6787 = vld [vmem:[%s8 + $0x18] sm:$0xff]
      %v6788 = vld [vmem:[%s8 + $0x20] sm:$0xff]
      %v6789 = vld [vmem:[%s8 + $0x28] sm:$0xff]
      %v6790 = vld [vmem:[%s8 + $0x30] sm:$0xff]
      %v6791 = vld [vmem:[%s8 + $0x38] sm:$0xff]
      %v6792 = vld [vmem:[%s8 + $0x40] sm:$0xff]
      %v6793 = vld [vmem:[%s8 + $0x48] sm:$0xff]
      %v6794 = vld [vmem:[%s8 + $0x50] sm:$0xff]
      %v6795 = vld [vmem:[%s8 + $0x58] sm:$0xff]
      %v6796 = vld [vmem:[%s8 + $0x60] sm:$0xf]
      %vm6797 = vcmask 818176
      %v6799 = vsel %vm6797, %v6752, 0
      %v6802 = vsel %vm6797, %v6753, 0
      %v6805 = vsel %vm6797, %v6754, 0
      %v6808 = vsel %vm6797, %v6755, 0
      %v6811 = vsel %vm6797, %v6756, 0
      %v6814 = vsel %vm6797, %v6757, 0
      %v6817 = vsel %vm6797, %v6758, 0
      %v6820 = vsel %vm6797, %v6759, 0
      %v6823 = vsel %vm6797, %v6760, 0
      %v6826 = vsel %vm6797, %v6761, 0
      %v6829 = vsel %vm6797, %v6762, 0
      %v6832 = vsel %vm6797, %v6763, 0
      %v6835 = vsel %vm6797, %v6764, 0
      %v6838 = vsel %vm6797, %v6765, 0
      %v6841 = vsel %vm6797, %v6766, 0
      %v6844 = vsel %vm6797, %v6767, 0
      %v6847 = vsel %vm6797, %v6768, 0
      %v6850 = vsel %vm6797, %v6769, 0
      %v6853 = vsel %vm6797, %v6770, 0
      %v6856 = vsel %vm6797, %v6771, 0
      %v6859 = vsel %vm6797, %v6772, 0
      %v6862 = vsel %vm6797, %v6773, 0
      %v6865 = vsel %vm6797, %v6774, 0
      %v6868 = vsel %vm6797, %v6775, 0
      %v6871 = vsel %vm6797, %v6776, 0
      %v6874 = vsel %vm6797, %v6777, 0
      %v6877 = vsel %vm6797, %v6778, 0
      %v6880 = vsel %vm6797, %v6779, 0
      %v6883 = vsel %vm6797, %v6780, 0
      %v6886 = vsel %vm6797, %v6781, 0
      %v6889 = vsel %vm6797, %v6782, 0
      %v6892 = vsel %vm6797, %v6783, 0
      %v6895 = vsel %vm770, %v6796, 0
      %6897 = vmatprep.subr.mxu0 0.0
      %6898 = vmatpush1.msra.mxu0 %v6784
      %6899 = vmatprep.subr.mxu0 0.0
      %6900 = vmatpush1.msra.mxu0 %v6785
      %6901 = vmatprep.subr.mxu0 0.0
      %6902 = vmatpush1.msra.mxu0 %v6786
      %6903 = vmatprep.subr.mxu0 0.0
      %6904 = vmatpush1.msra.mxu0 %v6787
      %6905 = vmatprep.subr.mxu0 0.0
      %6906 = vmatpush1.msra.mxu0 %v6788
      %6907 = vmatprep.subr.mxu0 0.0
      %6908 = vmatpush1.msra.mxu0 %v6789
      %6909 = vmatprep.subr.mxu0 0.0
      %6910 = vmatpush1.msra.mxu0 %v6790
      %6911 = vmatprep.subr.mxu0 0.0
      %6912 = vmatpush1.msra.mxu0 %v6791
      %6913 = vmatprep.subr.mxu0 0.0
      %6914 = vmatpush1.msra.mxu0 %v6792
      %6915 = vmatprep.subr.mxu0 0.0
      %6916 = vmatpush1.msra.mxu0 %v6793
      %6917 = vmatprep.subr.mxu0 0.0
      %6918 = vmatpush1.msra.mxu0 %v6794
      %6919 = vmatprep.subr.mxu0 0.0
      %6920 = vmatpush1.msra.mxu0 %v6795
      %6921 = vmatprep.subr.mxu0 0.0
      %6922 = vmatpush1.msra.mxu0 %v6895
      %6923 = vmatprep.subr.mxu0 0.0
      %6924 = vmatpush1.msra.mxu0 0.0
      %6925 = vmatprep.subr.mxu0 0.0
      %6926 = vmatpush1.msra.mxu0 0.0
      %6927 = vmatprep.subr.mxu0 0.0
      %6928 = vmatpush1.msra.mxu0 0.0
      %6929 = vmatprep.subr.mxu0 0.0
      %6930 = vmatpush1.msra.mxu0 0.0
      %6931 = vmatprep.subr.mxu0 0.0
      %6932 = vmatpush1.msra.mxu0 0.0
      %6933 = vmatprep.subr.mxu0 0.0
      %6934 = vmatpush1.msra.mxu0 0.0
      %6935 = vmatprep.subr.mxu0 0.0
      %6936 = vmatpush1.msra.mxu0 0.0
      %6937 = vmatprep.subr.mxu0 0.0
      %6938 = vmatpush1.msra.mxu0 0.0
      %6939 = vmatprep.subr.mxu0 0.0
      %6940 = vmatpush1.msra.mxu0 0.0
      %6941 = vmatprep.subr.mxu0 0.0
      %6942 = vmatpush1.msra.mxu0 0.0
      %6943 = vmatprep.subr.mxu0 0.0
      %6944 = vmatpush1.msra.mxu0 0.0
      %6945 = vmatprep.subr.mxu0 0.0
      %6946 = vmatpush1.msra.mxu0 0.0
      %6947 = vmatprep.subr.mxu0 0.0
      %6948 = vmatpush1.msra.mxu0 0.0
      %6949 = vmatprep.subr.mxu0 0.0
      %6950 = vmatpush1.msra.mxu0 0.0
      %6951 = vmatprep.subr.mxu0 0.0
      %6952 = vmatpush1.msra.mxu0 0.0
      %6953 = vmatprep.subr.mxu0 0.0
      %6954 = vmatpush1.msra.mxu0 0.0
      %6955 = vmatprep.subr.mxu0 0.0
      %6956 = vmatpush1.msra.mxu0 0.0
      %6957 = vmatprep.subr.mxu0 0.0
      %6958 = vmatpush1.msra.mxu0 0.0
      %6959 = vmatprep.subr.mxu0 0.0
      %6960 = vmatpush1.msra.mxu0 0.0
      %6961 = vmatprep.mubr.f32.mxu0 0.0
      %6962 = vmatmul.mubr.f32.gmra.mrb[0].mxu0 %v6799
      %v6963 = vpop.f32.mrb[0].mxu0
      %v6964 = vadd.f32 0.0, %v6963
      %v6965 = vpop.f32.mrb[0].mxu0
      %6966 = vmatprep.mubr.f32.mxu0 0.0
      %6967 = vmatmul.mubr.f32.gmra.mrb[0].mxu0 %v6802
      %v6968 = vpop.f32.mrb[0].mxu0
      %v6969 = vadd.f32 0.0, %v6968
      %v6970 = vpop.f32.mrb[0].mxu0
      %6971 = vmatprep.mubr.f32.mxu0 0.0
      %6972 = vmatmul.mubr.f32.gmra.mrb[0].mxu0 %v6805
      %v6973 = vpop.f32.mrb[0].mxu0
      %v6974 = vadd.f32 0.0, %v6973
      %v6975 = vpop.f32.mrb[0].mxu0
      %6976 = vmatprep.mubr.f32.mxu0 0.0
      %6977 = vmatmul.mubr.f32.gmra.mrb[0].mxu0 %v6808
      %v6978 = vpop.f32.mrb[0].mxu0
      %v6979 = vadd.f32 0.0, %v6978
      %v6980 = vpop.f32.mrb[0].mxu0
      %6981 = vmatprep.mubr.f32.mxu0 0.0
      %6982 = vmatmul.mubr.f32.gmra.mrb[0].mxu0 %v6811
      %v6983 = vpop.f32.mrb[0].mxu0
      %v6984 = vadd.f32 0.0, %v6983
      %v6985 = vpop.f32.mrb[0].mxu0
      %6986 = vmatprep.mubr.f32.mxu0 0.0
      %6987 = vmatmul.mubr.f32.gmra.mrb[0].mxu0 %v6814
      %v6988 = vpop.f32.mrb[0].mxu0
      %v6989 = vadd.f32 0.0, %v6988
      %v6990 = vpop.f32.mrb[0].mxu0
      %6991 = vmatprep.mubr.f32.mxu0 0.0
      %6992 = vmatmul.mubr.f32.gmra.mrb[0].mxu0 %v6817
      %v6993 = vpop.f32.mrb[0].mxu0
      %v6994 = vadd.f32 0.0, %v6993
      %v6995 = vpop.f32.mrb[0].mxu0
      %6996 = vmatprep.mubr.f32.mxu0 0.0
      %6997 = vmatmul.mubr.f32.gmra.mrb[0].mxu0 %v6820
      %v6998 = vpop.f32.mrb[0].mxu0
      %v6999 = vadd.f32 0.0, %v6998
      %v7000 = vpop.f32.mrb[0].mxu0
      %7001 = vmatprep.mubr.f32.mxu0 0.0
      %7002 = vmatmul.mubr.f32.gmra.mrb[0].mxu0 %v6823
      %v7003 = vpop.f32.mrb[0].mxu0
      %v7004 = vadd.f32 0.0, %v7003
      %v7005 = vpop.f32.mrb[0].mxu0
      %7006 = vmatprep.mubr.f32.mxu0 0.0
      %7007 = vmatmul.mubr.f32.gmra.mrb[0].mxu0 %v6826
      %v7008 = vpop.f32.mrb[0].mxu0
      %v7009 = vadd.f32 0.0, %v7008
      %v7010 = vpop.f32.mrb[0].mxu0
      %7011 = vmatprep.mubr.f32.mxu0 0.0
      %7012 = vmatmul.mubr.f32.gmra.mrb[0].mxu0 %v6829
      %v7013 = vpop.f32.mrb[0].mxu0
      %v7014 = vadd.f32 0.0, %v7013
      %v7015 = vpop.f32.mrb[0].mxu0
      %7016 = vmatprep.mubr.f32.mxu0 0.0
      %7017 = vmatmul.mubr.f32.gmra.mrb[0].mxu0 %v6832
      %v7018 = vpop.f32.mrb[0].mxu0
      %v7019 = vadd.f32 0.0, %v7018
      %v7020 = vpop.f32.mrb[0].mxu0
      %7021 = vmatprep.mubr.f32.mxu0 0.0
      %7022 = vmatmul.mubr.f32.gmra.mrb[0].mxu0 %v6835
      %v7023 = vpop.f32.mrb[0].mxu0
      %v7024 = vadd.f32 0.0, %v7023
      %v7025 = vpop.f32.mrb[0].mxu0
      %7026 = vmatprep.mubr.f32.mxu0 0.0
      %7027 = vmatmul.mubr.f32.gmra.mrb[0].mxu0 %v6838
      %v7028 = vpop.f32.mrb[0].mxu0
      %v7029 = vadd.f32 0.0, %v7028
      %v7030 = vpop.f32.mrb[0].mxu0
      %7031 = vmatprep.mubr.f32.mxu0 0.0
      %7032 = vmatmul.mubr.f32.gmra.mrb[0].mxu0 %v6841
      %v7033 = vpop.f32.mrb[0].mxu0
      %v7034 = vadd.f32 0.0, %v7033
      %v7035 = vpop.f32.mrb[0].mxu0
      %7036 = vmatprep.mubr.f32.mxu0 0.0
      %7037 = vmatmul.mubr.f32.gmra.mrb[0].mxu0 %v6844
      %v7038 = vpop.f32.mrb[0].mxu0
      %v7039 = vadd.f32 0.0, %v7038
      %v7040 = vpop.f32.mrb[0].mxu0
      %7041 = vmatprep.mubr.f32.mxu0 0.0
      %7042 = vmatmul.mubr.f32.gmra.mrb[0].mxu0 %v6847
      %v7043 = vpop.f32.mrb[0].mxu0
      %v7044 = vadd.f32 0.0, %v7043
      %v7045 = vpop.f32.mrb[0].mxu0
      %7046 = vmatprep.mubr.f32.mxu0 0.0
      %7047 = vmatmul.mubr.f32.gmra.mrb[0].mxu0 %v6850
      %v7048 = vpop.f32.mrb[0].mxu0
      %v7049 = vadd.f32 0.0, %v7048
      %v7050 = vpop.f32.mrb[0].mxu0
      %7051 = vmatprep.mubr.f32.mxu0 0.0
      %7052 = vmatmul.mubr.f32.gmra.mrb[0].mxu0 %v6853
      %v7053 = vpop.f32.mrb[0].mxu0
      %v7054 = vadd.f32 0.0, %v7053
      %v7055 = vpop.f32.mrb[0].mxu0
      %7056 = vmatprep.mubr.f32.mxu0 0.0
      %7057 = vmatmul.mubr.f32.gmra.mrb[0].mxu0 %v6856
      %v7058 = vpop.f32.mrb[0].mxu0
      %v7059 = vadd.f32 0.0, %v7058
      %v7060 = vpop.f32.mrb[0].mxu0
      %7061 = vmatprep.mubr.f32.mxu0 0.0
      %7062 = vmatmul.mubr.f32.gmra.mrb[0].mxu0 %v6859
      %v7063 = vpop.f32.mrb[0].mxu0
      %v7064 = vadd.f32 0.0, %v7063
      %v7065 = vpop.f32.mrb[0].mxu0
      %7066 = vmatprep.mubr.f32.mxu0 0.0
      %7067 = vmatmul.mubr.f32.gmra.mrb[0].mxu0 %v6862
      %v7068 = vpop.f32.mrb[0].mxu0
      %v7069 = vadd.f32 0.0, %v7068
      %v7070 = vpop.f32.mrb[0].mxu0
      %7071 = vmatprep.mubr.f32.mxu0 0.0
      %7072 = vmatmul.mubr.f32.gmra.mrb[0].mxu0 %v6865
      %v7073 = vpop.f32.mrb[0].mxu0
      %v7074 = vadd.f32 0.0, %v7073
      %v7075 = vpop.f32.mrb[0].mxu0
      %7076 = vmatprep.mubr.f32.mxu0 0.0
      %7077 = vmatmul.mubr.f32.gmra.mrb[0].mxu0 %v6868
      %v7078 = vpop.f32.mrb[0].mxu0
      %v7079 = vadd.f32 0.0, %v7078
      %v7080 = vpop.f32.mrb[0].mxu0
      %7081 = vmatprep.mubr.f32.mxu0 0.0
      %7082 = vmatmul.mubr.f32.gmra.mrb[0].mxu0 %v6871
      %v7083 = vpop.f32.mrb[0].mxu0
      %v7084 = vadd.f32 0.0, %v7083
      %v7085 = vpop.f32.mrb[0].mxu0
      %7086 = vmatprep.mubr.f32.mxu0 0.0
      %7087 = vmatmul.mubr.f32.gmra.mrb[0].mxu0 %v6874
      %v7088 = vpop.f32.mrb[0].mxu0
      %v7089 = vadd.f32 0.0, %v7088
      %v7090 = vpop.f32.mrb[0].mxu0
      %7091 = vmatprep.mubr.f32.mxu0 0.0
      %7092 = vmatmul.mubr.f32.gmra.mrb[0].mxu0 %v6877
      %v7093 = vpop.f32.mrb[0].mxu0
      %v7094 = vadd.f32 0.0, %v7093
      %v7095 = vpop.f32.mrb[0].mxu0
      %7096 = vmatprep.mubr.f32.mxu0 0.0
      %7097 = vmatmul.mubr.f32.gmra.mrb[0].mxu0 %v6880
      %v7098 = vpop.f32.mrb[0].mxu0
      %v7099 = vadd.f32 0.0, %v7098
      %v7100 = vpop.f32.mrb[0].mxu0
      %7101 = vmatprep.mubr.f32.mxu0 0.0
      %7102 = vmatmul.mubr.f32.gmra.mrb[0].mxu0 %v6883
      %v7103 = vpop.f32.mrb[0].mxu0
      %v7104 = vadd.f32 0.0, %v7103
      %v7105 = vpop.f32.mrb[0].mxu0
      %7106 = vmatprep.mubr.f32.mxu0 0.0
      %7107 = vmatmul.mubr.f32.gmra.mrb[0].mxu0 %v6886
      %v7108 = vpop.f32.mrb[0].mxu0
      %v7109 = vadd.f32 0.0, %v7108
      %v7110 = vpop.f32.mrb[0].mxu0
      %7111 = vmatprep.mubr.f32.mxu0 0.0
      %7112 = vmatmul.mubr.f32.gmra.mrb[0].mxu0 %v6889
      %v7113 = vpop.f32.mrb[0].mxu0
      %v7114 = vadd.f32 0.0, %v7113
      %v7115 = vpop.f32.mrb[0].mxu0
      %7116 = vmatprep.mubr.f32.mxu0 0.0
      %7117 = vmatmul.mubr.f32.gmra.mrb[0].mxu0 %v6892
      %v7118 = vpop.f32.mrb[0].mxu0
      %v7119 = vadd.f32 0.0, %v7118
      %v7120 = vpop.f32.mrb[0].mxu0
      %7121 = vdwg.mxu0
      %v7122 = vld [vmem:[%s9] sm:$0x1]
      %v7124 = vlaneseq
      %v7125 = vshrl.u32 %v7124, 7
      %v7126 = vsub.s32 0, %v7125
      %v7127 = vrot.slane %v7122, %v7126
      %v7129 = vmul.f32 %v6964, %v7127
      %v7130 = vmul.f32 %v6969, %v7127
      %v7131 = vmul.f32 %v6974, %v7127
      %v7132 = vmul.f32 %v6979, %v7127
      %v7133 = vmul.f32 %v6984, %v7127
      %v7134 = vmul.f32 %v6989, %v7127
      %v7135 = vmul.f32 %v6994, %v7127
      %v7136 = vmul.f32 %v6999, %v7127
      %v7137 = vmul.f32 %v7004, %v7127
      %v7138 = vmul.f32 %v7009, %v7127
      %v7139 = vmul.f32 %v7014, %v7127
      %v7140 = vmul.f32 %v7019, %v7127
      %v7141 = vmul.f32 %v7024, %v7127
      %v7142 = vmul.f32 %v7029, %v7127
      %v7143 = vmul.f32 %v7034, %v7127
      %v7144 = vmul.f32 %v7039, %v7127
      %v7145 = vmul.f32 %v7044, %v7127
      %v7146 = vmul.f32 %v7049, %v7127
      %v7147 = vmul.f32 %v7054, %v7127
      %v7148 = vmul.f32 %v7059, %v7127
      %v7149 = vmul.f32 %v7064, %v7127
      %v7150 = vmul.f32 %v7069, %v7127
      %v7151 = vmul.f32 %v7074, %v7127
      %v7152 = vmul.f32 %v7079, %v7127
      %v7153 = vmul.f32 %v7084, %v7127
      %v7154 = vmul.f32 %v7089, %v7127
      %v7155 = vmul.f32 %v7094, %v7127
      %v7156 = vmul.f32 %v7099, %v7127
      %v7157 = vmul.f32 %v7104, %v7127
      %v7158 = vmul.f32 %v7109, %v7127
      %v7159 = vmul.f32 %v7114, %v7127
      %v7160 = vmul.f32 %v7119, %v7127
      %v7161 = vld [vmem:[%s10] sm:$0x1]
      %v7163 = vlaneseq
      %v7164 = vshrl.u32 %v7163, 7
      %v7165 = vsub.s32 0, %v7164
      %v7166 = vrot.slane %v7161, %v7165
      %v7168 = vadd.f32 %v7129, %v7166
      %v7169 = vadd.f32 %v7130, %v7166
      %v7170 = vadd.f32 %v7131, %v7166
      %v7171 = vadd.f32 %v7132, %v7166
      %v7172 = vadd.f32 %v7133, %v7166
      %v7173 = vadd.f32 %v7134, %v7166
      %v7174 = vadd.f32 %v7135, %v7166
      %v7175 = vadd.f32 %v7136, %v7166
      %v7176 = vadd.f32 %v7137, %v7166
      %v7177 = vadd.f32 %v7138, %v7166
      %v7178 = vadd.f32 %v7139, %v7166
      %v7179 = vadd.f32 %v7140, %v7166
      %v7180 = vadd.f32 %v7141, %v7166
      %v7181 = vadd.f32 %v7142, %v7166
      %v7182 = vadd.f32 %v7143, %v7166
      %v7183 = vadd.f32 %v7144, %v7166
      %v7184 = vadd.f32 %v7145, %v7166
      %v7185 = vadd.f32 %v7146, %v7166
      %v7186 = vadd.f32 %v7147, %v7166
      %v7187 = vadd.f32 %v7148, %v7166
      %v7188 = vadd.f32 %v7149, %v7166
      %v7189 = vadd.f32 %v7150, %v7166
      %v7190 = vadd.f32 %v7151, %v7166
      %v7191 = vadd.f32 %v7152, %v7166
      %v7192 = vadd.f32 %v7153, %v7166
      %v7193 = vadd.f32 %v7154, %v7166
      %v7194 = vadd.f32 %v7155, %v7166
      %v7195 = vadd.f32 %v7156, %v7166
      %v7196 = vadd.f32 %v7157, %v7166
      %v7197 = vadd.f32 %v7158, %v7166
      %v7198 = vadd.f32 %v7159, %v7166
      %v7199 = vadd.f32 %v7160, %v7166
      %v7200 = vmax.f32 %v7168, 0.0
      %v7201 = vmax.f32 %v7169, 0.0
      %v7202 = vmax.f32 %v7170, 0.0
      %v7203 = vmax.f32 %v7171, 0.0
      %v7204 = vmax.f32 %v7172, 0.0
      %v7205 = vmax.f32 %v7173, 0.0
      %v7206 = vmax.f32 %v7174, 0.0
      %v7207 = vmax.f32 %v7175, 0.0
      %v7208 = vmax.f32 %v7176, 0.0
      %v7209 = vmax.f32 %v7177, 0.0
      %v7210 = vmax.f32 %v7178, 0.0
      %v7211 = vmax.f32 %v7179, 0.0
      %v7212 = vmax.f32 %v7180, 0.0
      %v7213 = vmax.f32 %v7181, 0.0
      %v7214 = vmax.f32 %v7182, 0.0
      %v7215 = vmax.f32 %v7183, 0.0
      %v7216 = vmax.f32 %v7184, 0.0
      %v7217 = vmax.f32 %v7185, 0.0
      %v7218 = vmax.f32 %v7186, 0.0
      %v7219 = vmax.f32 %v7187, 0.0
      %v7220 = vmax.f32 %v7188, 0.0
      %v7221 = vmax.f32 %v7189, 0.0
      %v7222 = vmax.f32 %v7190, 0.0
      %v7223 = vmax.f32 %v7191, 0.0
      %v7224 = vmax.f32 %v7192, 0.0
      %v7225 = vmax.f32 %v7193, 0.0
      %v7226 = vmax.f32 %v7194, 0.0
      %v7227 = vmax.f32 %v7195, 0.0
      %v7228 = vmax.f32 %v7196, 0.0
      %v7229 = vmax.f32 %v7197, 0.0
      %v7230 = vmax.f32 %v7198, 0.0
      %v7231 = vmax.f32 %v7199, 0.0
      %v7232 = vmul.f32 %v471, %v1512
      %v7233 = vmul.f32 %v472, %v1517
      %v7234 = vmul.f32 %v473, %v1522
      %v7235 = vmul.f32 %v474, %v1527
      %v7236 = vmul.f32 %v475, %v1532
      %v7237 = vmul.f32 %v476, %v1537
      %v7238 = vmul.f32 %v477, %v1542
      %v7239 = vmul.f32 %v478, %v1547
      %v7240 = vmul.f32 %v479, %v1552
      %v7241 = vmul.f32 %v480, %v1557
      %v7242 = vmul.f32 %v481, %v1562
      %v7243 = vmul.f32 %v482, %v1567
      %v7244 = vmul.f32 %v483, %v1572
      %v7245 = vmul.f32 %v484, %v1577
      %v7246 = vmul.f32 %v485, %v1582
      %v7247 = vmul.f32 %v486, %v1587
      %v7248 = vmul.f32 %v487, %v1592
      %v7249 = vmul.f32 %v488, %v1597
      %v7250 = vmul.f32 %v489, %v1602
      %v7251 = vmul.f32 %v490, %v1607
      %v7252 = vmul.f32 %v491, %v1612
      %v7253 = vmul.f32 %v492, %v1617
      %v7254 = vmul.f32 %v493, %v1622
      %v7255 = vmul.f32 %v494, %v1627
      %v7256 = vmul.f32 %v495, %v1632
      %v7257 = vmul.f32 %v496, %v1637
      %v7258 = vmul.f32 %v497, %v1642
      %v7259 = vmul.f32 %v498, %v1647
      %v7260 = vmul.f32 %v499, %v1652
      %v7261 = vmul.f32 %v500, %v1657
      %v7262 = vmul.f32 %v501, %v1662
      %v7263 = vmul.f32 %v502, %v1667
      %v7264 = vmul.f32 %v503, %v1672
      %v7265 = vmul.f32 %v504, %v1677
      %v7266 = vmul.f32 %v505, %v1682
      %v7267 = vmul.f32 %v506, %v1687
      %v7268 = vmul.f32 %v507, %v1692
      %v7269 = vmul.f32 %v508, %v1697
      %v7270 = vmul.f32 %v509, %v1702
      %v7271 = vmul.f32 %v510, %v1707
      %v7272 = vmul.f32 %v511, %v1712
      %v7273 = vmul.f32 %v512, %v1717
      %v7274 = vmul.f32 %v513, %v1722
      %v7275 = vmul.f32 %v514, %v1727
      %v7276 = vmul.f32 %v515, %v1732
      %v7277 = vmul.f32 %v516, %v1737
      %v7278 = vmul.f32 %v517, %v1742
      %v7279 = vmul.f32 %v518, %v1747
      %v7280 = vmul.f32 %v519, %v1752
      %v7281 = vmul.f32 %v520, %v1757
      %v7282 = vmul.f32 %v521, %v1762
      %v7283 = vmul.f32 %v522, %v1767
      %v7284 = vmul.f32 %v523, %v1772
      %v7285 = vmul.f32 %v524, %v1777
      %v7286 = vsub.f32 1.0, %v531
      %v7287 = vsub.f32 1.0, %v532
      %v7288 = vsub.f32 1.0, %v533
      %v7289 = vsub.f32 1.0, %v534
      %v7290 = vsub.f32 1.0, %v535
      %v7291 = vsub.f32 1.0, %v536
      %v7292 = vsub.f32 1.0, %v537
      %v7293 = vsub.f32 1.0, %v538
      %v7294 = vsub.f32 1.0, %v539
      %v7295 = vsub.f32 1.0, %v540
      %v7296 = vsub.f32 1.0, %v541
      %v7297 = vsub.f32 1.0, %v542
      %v7298 = vsub.f32 1.0, %v543
      %v7299 = vsub.f32 1.0, %v544
      %v7300 = vsub.f32 1.0, %v545
      %v7301 = vsub.f32 1.0, %v546
      %v7302 = vsub.f32 1.0, %v547
      %v7303 = vsub.f32 1.0, %v548
      %v7304 = vsub.f32 1.0, %v549
      %v7305 = vsub.f32 1.0, %v550
      %v7306 = vsub.f32 1.0, %v551
      %v7307 = vsub.f32 1.0, %v552
      %v7308 = vsub.f32 1.0, %v553
      %v7309 = vsub.f32 1.0, %v554
      %v7310 = vsub.f32 1.0, %v555
      %v7311 = vsub.f32 1.0, %v556
      %v7312 = vsub.f32 1.0, %v557
      %v7313 = vsub.f32 1.0, %v558
      %v7314 = vsub.f32 1.0, %v559
      %v7315 = vsub.f32 1.0, %v560
      %v7316 = vsub.f32 1.0, %v561
      %v7317 = vsub.f32 1.0, %v562
      %v7318 = vsub.f32 1.0, %v563
      %v7319 = vsub.f32 1.0, %v564
      %v7320 = vsub.f32 1.0, %v565
      %v7321 = vsub.f32 1.0, %v566
      %v7322 = vsub.f32 1.0, %v567
      %v7323 = vsub.f32 1.0, %v568
      %v7324 = vsub.f32 1.0, %v569
      %v7325 = vsub.f32 1.0, %v570
      %v7326 = vsub.f32 1.0, %v571
      %v7327 = vsub.f32 1.0, %v572
      %v7328 = vsub.f32 1.0, %v573
      %v7329 = vsub.f32 1.0, %v574
      %v7330 = vsub.f32 1.0, %v575
      %v7331 = vsub.f32 1.0, %v576
      %v7332 = vsub.f32 1.0, %v577
      %v7333 = vsub.f32 1.0, %v578
      %v7334 = vsub.f32 1.0, %v579
      %v7335 = vsub.f32 1.0, %v580
      %v7336 = vsub.f32 1.0, %v581
      %v7337 = vsub.f32 1.0, %v582
      %v7338 = vsub.f32 1.0, %v583
      %v7339 = vsub.f32 1.0, %v584
      %v7340 = vmul.f32 %v7286, 1e+30
      %v7341 = vmul.f32 %v7287, 1e+30
      %v7342 = vmul.f32 %v7288, 1e+30
      %v7343 = vmul.f32 %v7289, 1e+30
      %v7344 = vmul.f32 %v7290, 1e+30
      %v7345 = vmul.f32 %v7291, 1e+30
      %v7346 = vmul.f32 %v7292, 1e+30
      %v7347 = vmul.f32 %v7293, 1e+30
      %v7348 = vmul.f32 %v7294, 1e+30
      %v7349 = vmul.f32 %v7295, 1e+30
      %v7350 = vmul.f32 %v7296, 1e+30
      %v7351 = vmul.f32 %v7297, 1e+30
      %v7352 = vmul.f32 %v7298, 1e+30
      %v7353 = vmul.f32 %v7299, 1e+30
      %v7354 = vmul.f32 %v7300, 1e+30
      %v7355 = vmul.f32 %v7301, 1e+30
      %v7356 = vmul.f32 %v7302, 1e+30
      %v7357 = vmul.f32 %v7303, 1e+30
      %v7358 = vmul.f32 %v7304, 1e+30
      %v7359 = vmul.f32 %v7305, 1e+30
      %v7360 = vmul.f32 %v7306, 1e+30
      %v7361 = vmul.f32 %v7307, 1e+30
      %v7362 = vmul.f32 %v7308, 1e+30
      %v7363 = vmul.f32 %v7309, 1e+30
      %v7364 = vmul.f32 %v7310, 1e+30
      %v7365 = vmul.f32 %v7311, 1e+30
      %v7366 = vmul.f32 %v7312, 1e+30
      %v7367 = vmul.f32 %v7313, 1e+30
      %v7368 = vmul.f32 %v7314, 1e+30
      %v7369 = vmul.f32 %v7315, 1e+30
      %v7370 = vmul.f32 %v7316, 1e+30
      %v7371 = vmul.f32 %v7317, 1e+30
      %v7372 = vmul.f32 %v7318, 1e+30
      %v7373 = vmul.f32 %v7319, 1e+30
      %v7374 = vmul.f32 %v7320, 1e+30
      %v7375 = vmul.f32 %v7321, 1e+30
      %v7376 = vmul.f32 %v7322, 1e+30
      %v7377 = vmul.f32 %v7323, 1e+30
      %v7378 = vmul.f32 %v7324, 1e+30
      %v7379 = vmul.f32 %v7325, 1e+30
      %v7380 = vmul.f32 %v7326, 1e+30
      %v7381 = vmul.f32 %v7327, 1e+30
      %v7382 = vmul.f32 %v7328, 1e+30
      %v7383 = vmul.f32 %v7329, 1e+30
      %v7384 = vmul.f32 %v7330, 1e+30
      %v7385 = vmul.f32 %v7331, 1e+30
      %v7386 = vmul.f32 %v7332, 1e+30
      %v7387 = vmul.f32 %v7333, 1e+30
      %v7388 = vmul.f32 %v7334, 1e+30
      %v7389 = vmul.f32 %v7335, 1e+30
      %v7390 = vmul.f32 %v7336, 1e+30
      %v7391 = vmul.f32 %v7337, 1e+30
      %v7392 = vmul.f32 %v7338, 1e+30
      %v7393 = vmul.f32 %v7339, 1e+30
      %7395 = vset.pattern.permute.xlu0 0
      %7396 = vperm.xlu0 %7395, %v7340
      %v7397 = vpop.permute.xlu0 %7396
      %7400 = vset.pattern.permute.xlu0 0
      %7401 = vperm.xlu0 %7400, %v7341
      %v7402 = vpop.permute.xlu0 %7401
      %7405 = vset.pattern.permute.xlu0 0
      %7406 = vperm.xlu0 %7405, %v7342
      %v7407 = vpop.permute.xlu0 %7406
      %7410 = vset.pattern.permute.xlu0 0
      %7411 = vperm.xlu0 %7410, %v7343
      %v7412 = vpop.permute.xlu0 %7411
      %7415 = vset.pattern.permute.xlu0 0
      %7416 = vperm.xlu0 %7415, %v7344
      %v7417 = vpop.permute.xlu0 %7416
      %7420 = vset.pattern.permute.xlu0 0
      %7421 = vperm.xlu0 %7420, %v7345
      %v7422 = vpop.permute.xlu0 %7421
      %7425 = vset.pattern.permute.xlu0 0
      %7426 = vperm.xlu0 %7425, %v7346
      %v7427 = vpop.permute.xlu0 %7426
      %7430 = vset.pattern.permute.xlu0 0
      %7431 = vperm.xlu0 %7430, %v7347
      %v7432 = vpop.permute.xlu0 %7431
      %7435 = vset.pattern.permute.xlu0 0
      %7436 = vperm.xlu0 %7435, %v7348
      %v7437 = vpop.permute.xlu0 %7436
      %7440 = vset.pattern.permute.xlu0 0
      %7441 = vperm.xlu0 %7440, %v7349
      %v7442 = vpop.permute.xlu0 %7441
      %7445 = vset.pattern.permute.xlu0 0
      %7446 = vperm.xlu0 %7445, %v7350
      %v7447 = vpop.permute.xlu0 %7446
      %7450 = vset.pattern.permute.xlu0 0
      %7451 = vperm.xlu0 %7450, %v7351
      %v7452 = vpop.permute.xlu0 %7451
      %7455 = vset.pattern.permute.xlu0 0
      %7456 = vperm.xlu0 %7455, %v7352
      %v7457 = vpop.permute.xlu0 %7456
      %7460 = vset.pattern.permute.xlu0 0
      %7461 = vperm.xlu0 %7460, %v7353
      %v7462 = vpop.permute.xlu0 %7461
      %7465 = vset.pattern.permute.xlu0 0
      %7466 = vperm.xlu0 %7465, %v7354
      %v7467 = vpop.permute.xlu0 %7466
      %7470 = vset.pattern.permute.xlu0 0
      %7471 = vperm.xlu0 %7470, %v7355
      %v7472 = vpop.permute.xlu0 %7471
      %7475 = vset.pattern.permute.xlu0 0
      %7476 = vperm.xlu0 %7475, %v7356
      %v7477 = vpop.permute.xlu0 %7476
      %7480 = vset.pattern.permute.xlu0 0
      %7481 = vperm.xlu0 %7480, %v7357
      %v7482 = vpop.permute.xlu0 %7481
      %7485 = vset.pattern.permute.xlu0 0
      %7486 = vperm.xlu0 %7485, %v7358
      %v7487 = vpop.permute.xlu0 %7486
      %7490 = vset.pattern.permute.xlu0 0
      %7491 = vperm.xlu0 %7490, %v7359
      %v7492 = vpop.permute.xlu0 %7491
      %7495 = vset.pattern.permute.xlu0 0
      %7496 = vperm.xlu0 %7495, %v7360
      %v7497 = vpop.permute.xlu0 %7496
      %7500 = vset.pattern.permute.xlu0 0
      %7501 = vperm.xlu0 %7500, %v7361
      %v7502 = vpop.permute.xlu0 %7501
      %7505 = vset.pattern.permute.xlu0 0
      %7506 = vperm.xlu0 %7505, %v7362
      %v7507 = vpop.permute.xlu0 %7506
      %7510 = vset.pattern.permute.xlu0 0
      %7511 = vperm.xlu0 %7510, %v7363
      %v7512 = vpop.permute.xlu0 %7511
      %7515 = vset.pattern.permute.xlu0 0
      %7516 = vperm.xlu0 %7515, %v7364
      %v7517 = vpop.permute.xlu0 %7516
      %7520 = vset.pattern.permute.xlu0 0
      %7521 = vperm.xlu0 %7520, %v7365
      %v7522 = vpop.permute.xlu0 %7521
      %7525 = vset.pattern.permute.xlu0 0
      %7526 = vperm.xlu0 %7525, %v7366
      %v7527 = vpop.permute.xlu0 %7526
      %7530 = vset.pattern.permute.xlu0 0
      %7531 = vperm.xlu0 %7530, %v7367
      %v7532 = vpop.permute.xlu0 %7531
      %7535 = vset.pattern.permute.xlu0 0
      %7536 = vperm.xlu0 %7535, %v7368
      %v7537 = vpop.permute.xlu0 %7536
      %7540 = vset.pattern.permute.xlu0 0
      %7541 = vperm.xlu0 %7540, %v7369
      %v7542 = vpop.permute.xlu0 %7541
      %7545 = vset.pattern.permute.xlu0 0
      %7546 = vperm.xlu0 %7545, %v7370
      %v7547 = vpop.permute.xlu0 %7546
      %7550 = vset.pattern.permute.xlu0 0
      %7551 = vperm.xlu0 %7550, %v7371
      %v7552 = vpop.permute.xlu0 %7551
      %7555 = vset.pattern.permute.xlu0 0
      %7556 = vperm.xlu0 %7555, %v7372
      %v7557 = vpop.permute.xlu0 %7556
      %7560 = vset.pattern.permute.xlu0 0
      %7561 = vperm.xlu0 %7560, %v7373
      %v7562 = vpop.permute.xlu0 %7561
      %7565 = vset.pattern.permute.xlu0 0
      %7566 = vperm.xlu0 %7565, %v7374
      %v7567 = vpop.permute.xlu0 %7566
      %7570 = vset.pattern.permute.xlu0 0
      %7571 = vperm.xlu0 %7570, %v7375
      %v7572 = vpop.permute.xlu0 %7571
      %7575 = vset.pattern.permute.xlu0 0
      %7576 = vperm.xlu0 %7575, %v7376
      %v7577 = vpop.permute.xlu0 %7576
      %7580 = vset.pattern.permute.xlu0 0
      %7581 = vperm.xlu0 %7580, %v7377
      %v7582 = vpop.permute.xlu0 %7581
      %7585 = vset.pattern.permute.xlu0 0
      %7586 = vperm.xlu0 %7585, %v7378
      %v7587 = vpop.permute.xlu0 %7586
      %7590 = vset.pattern.permute.xlu0 0
      %7591 = vperm.xlu0 %7590, %v7379
      %v7592 = vpop.permute.xlu0 %7591
      %7595 = vset.pattern.permute.xlu0 0
      %7596 = vperm.xlu0 %7595, %v7380
      %v7597 = vpop.permute.xlu0 %7596
      %7600 = vset.pattern.permute.xlu0 0
      %7601 = vperm.xlu0 %7600, %v7381
      %v7602 = vpop.permute.xlu0 %7601
      %7605 = vset.pattern.permute.xlu0 0
      %7606 = vperm.xlu0 %7605, %v7382
      %v7607 = vpop.permute.xlu0 %7606
      %7610 = vset.pattern.permute.xlu0 0
      %7611 = vperm.xlu0 %7610, %v7383
      %v7612 = vpop.permute.xlu0 %7611
      %7615 = vset.pattern.permute.xlu0 0
      %7616 = vperm.xlu0 %7615, %v7384
      %v7617 = vpop.permute.xlu0 %7616
      %7620 = vset.pattern.permute.xlu0 0
      %7621 = vperm.xlu0 %7620, %v7385
      %v7622 = vpop.permute.xlu0 %7621
      %7625 = vset.pattern.permute.xlu0 0
      %7626 = vperm.xlu0 %7625, %v7386
      %v7627 = vpop.permute.xlu0 %7626
      %7630 = vset.pattern.permute.xlu0 0
      %7631 = vperm.xlu0 %7630, %v7387
      %v7632 = vpop.permute.xlu0 %7631
      %7635 = vset.pattern.permute.xlu0 0
      %7636 = vperm.xlu0 %7635, %v7388
      %v7637 = vpop.permute.xlu0 %7636
      %7640 = vset.pattern.permute.xlu0 0
      %7641 = vperm.xlu0 %7640, %v7389
      %v7642 = vpop.permute.xlu0 %7641
      %7645 = vset.pattern.permute.xlu0 0
      %7646 = vperm.xlu0 %7645, %v7390
      %v7647 = vpop.permute.xlu0 %7646
      %7650 = vset.pattern.permute.xlu0 0
      %7651 = vperm.xlu0 %7650, %v7391
      %v7652 = vpop.permute.xlu0 %7651
      %7655 = vset.pattern.permute.xlu0 0
      %7656 = vperm.xlu0 %7655, %v7392
      %v7657 = vpop.permute.xlu0 %7656
      %7660 = vset.pattern.permute.xlu0 0
      %7661 = vperm.xlu0 %7660, %v7393
      %v7662 = vpop.permute.xlu0 %7661
      %v7664 = vsub.f32 %v7232, %v7397
      %v7665 = vsub.f32 %v7233, %v7402
      %v7666 = vsub.f32 %v7234, %v7407
      %v7667 = vsub.f32 %v7235, %v7412
      %v7668 = vsub.f32 %v7236, %v7417
      %v7669 = vsub.f32 %v7237, %v7422
      %v7670 = vsub.f32 %v7238, %v7427
      %v7671 = vsub.f32 %v7239, %v7432
      %v7672 = vsub.f32 %v7240, %v7437
      %v7673 = vsub.f32 %v7241, %v7442
      %v7674 = vsub.f32 %v7242, %v7447
      %v7675 = vsub.f32 %v7243, %v7452
      %v7676 = vsub.f32 %v7244, %v7457
      %v7677 = vsub.f32 %v7245, %v7462
      %v7678 = vsub.f32 %v7246, %v7467
      %v7679 = vsub.f32 %v7247, %v7472
      %v7680 = vsub.f32 %v7248, %v7477
      %v7681 = vsub.f32 %v7249, %v7482
      %v7682 = vsub.f32 %v7250, %v7487
      %v7683 = vsub.f32 %v7251, %v7492
      %v7684 = vsub.f32 %v7252, %v7497
      %v7685 = vsub.f32 %v7253, %v7502
      %v7686 = vsub.f32 %v7254, %v7507
      %v7687 = vsub.f32 %v7255, %v7512
      %v7688 = vsub.f32 %v7256, %v7517
      %v7689 = vsub.f32 %v7257, %v7522
      %v7690 = vsub.f32 %v7258, %v7527
      %v7691 = vsub.f32 %v7259, %v7532
      %v7692 = vsub.f32 %v7260, %v7537
      %v7693 = vsub.f32 %v7261, %v7542
      %v7694 = vsub.f32 %v7262, %v7547
      %v7695 = vsub.f32 %v7263, %v7552
      %v7696 = vsub.f32 %v7264, %v7557
      %v7697 = vsub.f32 %v7265, %v7562
      %v7698 = vsub.f32 %v7266, %v7567
      %v7699 = vsub.f32 %v7267, %v7572
      %v7700 = vsub.f32 %v7268, %v7577
      %v7701 = vsub.f32 %v7269, %v7582
      %v7702 = vsub.f32 %v7270, %v7587
      %v7703 = vsub.f32 %v7271, %v7592
      %v7704 = vsub.f32 %v7272, %v7597
      %v7705 = vsub.f32 %v7273, %v7602
      %v7706 = vsub.f32 %v7274, %v7607
      %v7707 = vsub.f32 %v7275, %v7612
      %v7708 = vsub.f32 %v7276, %v7617
      %v7709 = vsub.f32 %v7277, %v7622
      %v7710 = vsub.f32 %v7278, %v7627
      %v7711 = vsub.f32 %v7279, %v7632
      %v7712 = vsub.f32 %v7280, %v7637
      %v7713 = vsub.f32 %v7281, %v7642
      %v7714 = vsub.f32 %v7282, %v7647
      %v7715 = vsub.f32 %v7283, %v7652
      %v7716 = vsub.f32 %v7284, %v7657
      %v7717 = vsub.f32 %v7285, %v7662
      %v7766 = vrot.slane %v7664, 1
      %v7767 = vrot.slane %v7665, 1
      %v7768 = vsel %vm1902, %v7766, %v7767
      %v7769 = vrot.slane %v7666, 1
      %v7770 = vsel %vm1902, %v7767, %v7769
      %v7771 = vrot.slane %v7667, 1
      %v7772 = vrot.slane %v7668, 1
      %v7773 = vsel %vm1902, %v7771, %v7772
      %v7774 = vrot.slane %v7669, 1
      %v7775 = vsel %vm1902, %v7772, %v7774
      %v7776 = vrot.slane %v7670, 1
      %v7777 = vrot.slane %v7671, 1
      %v7778 = vsel %vm1902, %v7776, %v7777
      %v7779 = vrot.slane %v7672, 1
      %v7780 = vsel %vm1902, %v7777, %v7779
      %v7781 = vrot.slane %v7673, 1
      %v7782 = vrot.slane %v7674, 1
      %v7783 = vsel %vm1902, %v7781, %v7782
      %v7784 = vrot.slane %v7675, 1
      %v7785 = vsel %vm1902, %v7782, %v7784
      %v7786 = vrot.slane %v7676, 1
      %v7787 = vrot.slane %v7677, 1
      %v7788 = vsel %vm1902, %v7786, %v7787
      %v7789 = vrot.slane %v7678, 1
      %v7790 = vsel %vm1902, %v7787, %v7789
      %v7791 = vrot.slane %v7679, 1
      %v7792 = vrot.slane %v7680, 1
      %v7793 = vsel %vm1902, %v7791, %v7792
      %v7794 = vrot.slane %v7681, 1
      %v7795 = vsel %vm1902, %v7792, %v7794
      %v7796 = vrot.slane %v7682, 1
      %v7797 = vrot.slane %v7683, 1
      %v7798 = vsel %vm1902, %v7796, %v7797
      %v7799 = vrot.slane %v7684, 1
      %v7800 = vsel %vm1902, %v7797, %v7799
      %v7801 = vrot.slane %v7685, 1
      %v7802 = vrot.slane %v7686, 1
      %v7803 = vsel %vm1902, %v7801, %v7802
      %v7804 = vrot.slane %v7687, 1
      %v7805 = vsel %vm1902, %v7802, %v7804
      %v7806 = vrot.slane %v7688, 1
      %v7807 = vrot.slane %v7689, 1
      %v7808 = vsel %vm1902, %v7806, %v7807
      %v7809 = vrot.slane %v7690, 1
      %v7810 = vsel %vm1902, %v7807, %v7809
      %v7811 = vrot.slane %v7691, 1
      %v7812 = vrot.slane %v7692, 1
      %v7813 = vsel %vm1902, %v7811, %v7812
      %v7814 = vrot.slane %v7693, 1
      %v7815 = vsel %vm1902, %v7812, %v7814
      %v7816 = vrot.slane %v7694, 1
      %v7817 = vrot.slane %v7695, 1
      %v7818 = vsel %vm1902, %v7816, %v7817
      %v7819 = vrot.slane %v7696, 1
      %v7820 = vsel %vm1902, %v7817, %v7819
      %v7821 = vrot.slane %v7697, 1
      %v7822 = vrot.slane %v7698, 1
      %v7823 = vsel %vm1902, %v7821, %v7822
      %v7824 = vrot.slane %v7699, 1
      %v7825 = vsel %vm1902, %v7822, %v7824
      %v7826 = vrot.slane %v7700, 1
      %v7827 = vrot.slane %v7701, 1
      %v7828 = vsel %vm1902, %v7826, %v7827
      %v7829 = vrot.slane %v7702, 1
      %v7830 = vsel %vm1902, %v7827, %v7829
      %v7831 = vrot.slane %v7703, 1
      %v7832 = vrot.slane %v7704, 1
      %v7833 = vsel %vm1902, %v7831, %v7832
      %v7834 = vrot.slane %v7705, 1
      %v7835 = vsel %vm1902, %v7832, %v7834
      %v7836 = vrot.slane %v7706, 1
      %v7837 = vrot.slane %v7707, 1
      %v7838 = vsel %vm1902, %v7836, %v7837
      %v7839 = vrot.slane %v7708, 1
      %v7840 = vsel %vm1902, %v7837, %v7839
      %v7841 = vrot.slane %v7709, 1
      %v7842 = vrot.slane %v7710, 1
      %v7843 = vsel %vm1902, %v7841, %v7842
      %v7844 = vrot.slane %v7711, 1
      %v7845 = vsel %vm1902, %v7842, %v7844
      %v7894 = vmax.f32 %v7664, %v7768
      %v7895 = vmax.f32 %v7665, %v7770
      %v7896 = vmax.f32 %v7666, %v7769
      %v7897 = vmax.f32 %v7667, %v7773
      %v7898 = vmax.f32 %v7668, %v7775
      %v7899 = vmax.f32 %v7669, %v7774
      %v7900 = vmax.f32 %v7670, %v7778
      %v7901 = vmax.f32 %v7671, %v7780
      %v7902 = vmax.f32 %v7672, %v7779
      %v7903 = vmax.f32 %v7673, %v7783
      %v7904 = vmax.f32 %v7674, %v7785
      %v7905 = vmax.f32 %v7675, %v7784
      %v7906 = vmax.f32 %v7676, %v7788
      %v7907 = vmax.f32 %v7677, %v7790
      %v7908 = vmax.f32 %v7678, %v7789
      %v7909 = vmax.f32 %v7679, %v7793
      %v7910 = vmax.f32 %v7680, %v7795
      %v7911 = vmax.f32 %v7681, %v7794
      %v7912 = vmax.f32 %v7682, %v7798
      %v7913 = vmax.f32 %v7683, %v7800
      %v7914 = vmax.f32 %v7684, %v7799
      %v7915 = vmax.f32 %v7685, %v7803
      %v7916 = vmax.f32 %v7686, %v7805
      %v7917 = vmax.f32 %v7687, %v7804
      %v7918 = vmax.f32 %v7688, %v7808
      %v7919 = vmax.f32 %v7689, %v7810
      %v7920 = vmax.f32 %v7690, %v7809
      %v7921 = vmax.f32 %v7691, %v7813
      %v7922 = vmax.f32 %v7692, %v7815
      %v7923 = vmax.f32 %v7693, %v7814
      %v7924 = vmax.f32 %v7694, %v7818
      %v7925 = vmax.f32 %v7695, %v7820
      %v7926 = vmax.f32 %v7696, %v7819
      %v7927 = vmax.f32 %v7697, %v7823
      %v7928 = vmax.f32 %v7698, %v7825
      %v7929 = vmax.f32 %v7699, %v7824
      %v7930 = vmax.f32 %v7700, %v7828
      %v7931 = vmax.f32 %v7701, %v7830
      %v7932 = vmax.f32 %v7702, %v7829
      %v7933 = vmax.f32 %v7703, %v7833
      %v7934 = vmax.f32 %v7704, %v7835
      %v7935 = vmax.f32 %v7705, %v7834
      %v7936 = vmax.f32 %v7706, %v7838
      %v7937 = vmax.f32 %v7707, %v7840
      %v7938 = vmax.f32 %v7708, %v7839
      %v7939 = vmax.f32 %v7709, %v7843
      %v7940 = vmax.f32 %v7710, %v7845
      %v7941 = vmax.f32 %v7711, %v7844
      %v7942 = vrot.slane %v7664, 2
      %v7943 = vrot.slane %v7665, 2
      %v7944 = vsel %vm1381, %v7942, %v7943
      %v7945 = vrot.slane %v7666, 2
      %v7946 = vsel %vm1381, %v7943, %v7945
      %v7947 = vrot.slane %v7667, 2
      %v7948 = vrot.slane %v7668, 2
      %v7949 = vsel %vm1381, %v7947, %v7948
      %v7950 = vrot.slane %v7669, 2
      %v7951 = vsel %vm1381, %v7948, %v7950
      %v7952 = vrot.slane %v7670, 2
      %v7953 = vrot.slane %v7671, 2
      %v7954 = vsel %vm1381, %v7952, %v7953
      %v7955 = vrot.slane %v7672, 2
      %v7956 = vsel %vm1381, %v7953, %v7955
      %v7957 = vrot.slane %v7673, 2
      %v7958 = vrot.slane %v7674, 2
      %v7959 = vsel %vm1381, %v7957, %v7958
      %v7960 = vrot.slane %v7675, 2
      %v7961 = vsel %vm1381, %v7958, %v7960
      %v7962 = vrot.slane %v7676, 2
      %v7963 = vrot.slane %v7677, 2
      %v7964 = vsel %vm1381, %v7962, %v7963
      %v7965 = vrot.slane %v7678, 2
      %v7966 = vsel %vm1381, %v7963, %v7965
      %v7967 = vrot.slane %v7679, 2
      %v7968 = vrot.slane %v7680, 2
      %v7969 = vsel %vm1381, %v7967, %v7968
      %v7970 = vrot.slane %v7681, 2
      %v7971 = vsel %vm1381, %v7968, %v7970
      %v7972 = vrot.slane %v7682, 2
      %v7973 = vrot.slane %v7683, 2
      %v7974 = vsel %vm1381, %v7972, %v7973
      %v7975 = vrot.slane %v7684, 2
      %v7976 = vsel %vm1381, %v7973, %v7975
      %v7977 = vrot.slane %v7685, 2
      %v7978 = vrot.slane %v7686, 2
      %v7979 = vsel %vm1381, %v7977, %v7978
      %v7980 = vrot.slane %v7687, 2
      %v7981 = vsel %vm1381, %v7978, %v7980
      %v7982 = vrot.slane %v7688, 2
      %v7983 = vrot.slane %v7689, 2
      %v7984 = vsel %vm1381, %v7982, %v7983
      %v7985 = vrot.slane %v7690, 2
      %v7986 = vsel %vm1381, %v7983, %v7985
      %v7987 = vrot.slane %v7691, 2
      %v7988 = vrot.slane %v7692, 2
      %v7989 = vsel %vm1381, %v7987, %v7988
      %v7990 = vrot.slane %v7693, 2
      %v7991 = vsel %vm1381, %v7988, %v7990
      %v7992 = vrot.slane %v7694, 2
      %v7993 = vrot.slane %v7695, 2
      %v7994 = vsel %vm1381, %v7992, %v7993
      %v7995 = vrot.slane %v7696, 2
      %v7996 = vsel %vm1381, %v7993, %v7995
      %v7997 = vrot.slane %v7697, 2
      %v7998 = vrot.slane %v7698, 2
      %v7999 = vsel %vm1381, %v7997, %v7998
      %v8000 = vrot.slane %v7699, 2
      %v8001 = vsel %vm1381, %v7998, %v8000
      %v8002 = vrot.slane %v7700, 2
      %v8003 = vrot.slane %v7701, 2
      %v8004 = vsel %vm1381, %v8002, %v8003
      %v8005 = vrot.slane %v7702, 2
      %v8006 = vsel %vm1381, %v8003, %v8005
      %v8007 = vrot.slane %v7703, 2
      %v8008 = vrot.slane %v7704, 2
      %v8009 = vsel %vm1381, %v8007, %v8008
      %v8010 = vrot.slane %v7705, 2
      %v8011 = vsel %vm1381, %v8008, %v8010
      %v8012 = vrot.slane %v7706, 2
      %v8013 = vrot.slane %v7707, 2
      %v8014 = vsel %vm1381, %v8012, %v8013
      %v8015 = vrot.slane %v7708, 2
      %v8016 = vsel %vm1381, %v8013, %v8015
      %v8017 = vrot.slane %v7709, 2
      %v8018 = vrot.slane %v7710, 2
      %v8019 = vsel %vm1381, %v8017, %v8018
      %v8020 = vrot.slane %v7711, 2
      %v8021 = vsel %vm1381, %v8018, %v8020
      %v8070 = vmax.f32 %v7894, %v7944
      %v8071 = vmax.f32 %v7895, %v7946
      %v8072 = vmax.f32 %v7896, %v7945
      %v8073 = vmax.f32 %v7897, %v7949
      %v8074 = vmax.f32 %v7898, %v7951
      %v8075 = vmax.f32 %v7899, %v7950
      %v8076 = vmax.f32 %v7900, %v7954
      %v8077 = vmax.f32 %v7901, %v7956
      %v8078 = vmax.f32 %v7902, %v7955
      %v8079 = vmax.f32 %v7903, %v7959
      %v8080 = vmax.f32 %v7904, %v7961
      %v8081 = vmax.f32 %v7905, %v7960
      %v8082 = vmax.f32 %v7906, %v7964
      %v8083 = vmax.f32 %v7907, %v7966
      %v8084 = vmax.f32 %v7908, %v7965
      %v8085 = vmax.f32 %v7909, %v7969
      %v8086 = vmax.f32 %v7910, %v7971
      %v8087 = vmax.f32 %v7911, %v7970
      %v8088 = vmax.f32 %v7912, %v7974
      %v8089 = vmax.f32 %v7913, %v7976
      %v8090 = vmax.f32 %v7914, %v7975
      %v8091 = vmax.f32 %v7915, %v7979
      %v8092 = vmax.f32 %v7916, %v7981
      %v8093 = vmax.f32 %v7917, %v7980
      %v8094 = vmax.f32 %v7918, %v7984
      %v8095 = vmax.f32 %v7919, %v7986
      %v8096 = vmax.f32 %v7920, %v7985
      %v8097 = vmax.f32 %v7921, %v7989
      %v8098 = vmax.f32 %v7922, %v7991
      %v8099 = vmax.f32 %v7923, %v7990
      %v8100 = vmax.f32 %v7924, %v7994
      %v8101 = vmax.f32 %v7925, %v7996
      %v8102 = vmax.f32 %v7926, %v7995
      %v8103 = vmax.f32 %v7927, %v7999
      %v8104 = vmax.f32 %v7928, %v8001
      %v8105 = vmax.f32 %v7929, %v8000
      %v8106 = vmax.f32 %v7930, %v8004
      %v8107 = vmax.f32 %v7931, %v8006
      %v8108 = vmax.f32 %v7932, %v8005
      %v8109 = vmax.f32 %v7933, %v8009
      %v8110 = vmax.f32 %v7934, %v8011
      %v8111 = vmax.f32 %v7935, %v8010
      %v8112 = vmax.f32 %v7936, %v8014
      %v8113 = vmax.f32 %v7937, %v8016
      %v8114 = vmax.f32 %v7938, %v8015
      %v8115 = vmax.f32 %v7939, %v8019
      %v8116 = vmax.f32 %v7940, %v8021
      %v8117 = vmax.f32 %v7941, %v8020
      %v8118 = vmax.f32 %v8070, %v7667
      %v8119 = vmax.f32 %v8071, %v7668
      %v8120 = vmax.f32 %v8072, %v7669
      %v8121 = vmax.f32 %v8073, %v7670
      %v8122 = vmax.f32 %v8074, %v7671
      %v8123 = vmax.f32 %v8075, %v7672
      %v8124 = vmax.f32 %v8076, %v7673
      %v8125 = vmax.f32 %v8077, %v7674
      %v8126 = vmax.f32 %v8078, %v7675
      %v8127 = vmax.f32 %v8079, %v7676
      %v8128 = vmax.f32 %v8080, %v7677
      %v8129 = vmax.f32 %v8081, %v7678
      %v8130 = vmax.f32 %v8082, %v7679
      %v8131 = vmax.f32 %v8083, %v7680
      %v8132 = vmax.f32 %v8084, %v7681
      %v8133 = vmax.f32 %v8085, %v7682
      %v8134 = vmax.f32 %v8086, %v7683
      %v8135 = vmax.f32 %v8087, %v7684
      %v8136 = vmax.f32 %v8088, %v7685
      %v8137 = vmax.f32 %v8089, %v7686
      %v8138 = vmax.f32 %v8090, %v7687
      %v8139 = vmax.f32 %v8091, %v7688
      %v8140 = vmax.f32 %v8092, %v7689
      %v8141 = vmax.f32 %v8093, %v7690
      %v8142 = vmax.f32 %v8094, %v7691
      %v8143 = vmax.f32 %v8095, %v7692
      %v8144 = vmax.f32 %v8096, %v7693
      %v8145 = vmax.f32 %v8097, %v7694
      %v8146 = vmax.f32 %v8098, %v7695
      %v8147 = vmax.f32 %v8099, %v7696
      %v8148 = vmax.f32 %v8100, %v7697
      %v8149 = vmax.f32 %v8101, %v7698
      %v8150 = vmax.f32 %v8102, %v7699
      %v8151 = vmax.f32 %v8103, %v7700
      %v8152 = vmax.f32 %v8104, %v7701
      %v8153 = vmax.f32 %v8105, %v7702
      %v8154 = vmax.f32 %v8106, %v7703
      %v8155 = vmax.f32 %v8107, %v7704
      %v8156 = vmax.f32 %v8108, %v7705
      %v8157 = vmax.f32 %v8109, %v7706
      %v8158 = vmax.f32 %v8110, %v7707
      %v8159 = vmax.f32 %v8111, %v7708
      %v8160 = vmax.f32 %v8112, %v7709
      %v8161 = vmax.f32 %v8113, %v7710
      %v8162 = vmax.f32 %v8114, %v7711
      %v8163 = vmax.f32 %v8115, %v7712
      %v8164 = vmax.f32 %v8116, %v7713
      %v8165 = vmax.f32 %v8117, %v7714
      %v8169 = vrot.slane %v7712, 1
      %v8170 = vrot.slane %v7713, 1
      %v8171 = vsel %vm1902, %v8169, %v8170
      %v8172 = vrot.slane %v7714, 1
      %v8173 = vsel %vm1902, %v8170, %v8172
      %v8177 = vmax.f32 %v8118, %v7773
      %v8178 = vmax.f32 %v8119, %v7775
      %v8179 = vmax.f32 %v8120, %v7774
      %v8180 = vmax.f32 %v8121, %v7778
      %v8181 = vmax.f32 %v8122, %v7780
      %v8182 = vmax.f32 %v8123, %v7779
      %v8183 = vmax.f32 %v8124, %v7783
      %v8184 = vmax.f32 %v8125, %v7785
      %v8185 = vmax.f32 %v8126, %v7784
      %v8186 = vmax.f32 %v8127, %v7788
      %v8187 = vmax.f32 %v8128, %v7790
      %v8188 = vmax.f32 %v8129, %v7789
      %v8189 = vmax.f32 %v8130, %v7793
      %v8190 = vmax.f32 %v8131, %v7795
      %v8191 = vmax.f32 %v8132, %v7794
      %v8192 = vmax.f32 %v8133, %v7798
      %v8193 = vmax.f32 %v8134, %v7800
      %v8194 = vmax.f32 %v8135, %v7799
      %v8195 = vmax.f32 %v8136, %v7803
      %v8196 = vmax.f32 %v8137, %v7805
      %v8197 = vmax.f32 %v8138, %v7804
      %v8198 = vmax.f32 %v8139, %v7808
      %v8199 = vmax.f32 %v8140, %v7810
      %v8200 = vmax.f32 %v8141, %v7809
      %v8201 = vmax.f32 %v8142, %v7813
      %v8202 = vmax.f32 %v8143, %v7815
      %v8203 = vmax.f32 %v8144, %v7814
      %v8204 = vmax.f32 %v8145, %v7818
      %v8205 = vmax.f32 %v8146, %v7820
      %v8206 = vmax.f32 %v8147, %v7819
      %v8207 = vmax.f32 %v8148, %v7823
      %v8208 = vmax.f32 %v8149, %v7825
      %v8209 = vmax.f32 %v8150, %v7824
      %v8210 = vmax.f32 %v8151, %v7828
      %v8211 = vmax.f32 %v8152, %v7830
      %v8212 = vmax.f32 %v8153, %v7829
      %v8213 = vmax.f32 %v8154, %v7833
      %v8214 = vmax.f32 %v8155, %v7835
      %v8215 = vmax.f32 %v8156, %v7834
      %v8216 = vmax.f32 %v8157, %v7838
      %v8217 = vmax.f32 %v8158, %v7840
      %v8218 = vmax.f32 %v8159, %v7839
      %v8219 = vmax.f32 %v8160, %v7843
      %v8220 = vmax.f32 %v8161, %v7845
      %v8221 = vmax.f32 %v8162, %v7844
      %v8222 = vmax.f32 %v8163, %v8171
      %v8223 = vmax.f32 %v8164, %v8173
      %v8224 = vmax.f32 %v8165, %v8172
      %v8225 = vrot.slane %v7712, 2
      %v8226 = vrot.slane %v7713, 2
      %v8227 = vsel %vm1381, %v8225, %v8226
      %v8228 = vrot.slane %v7714, 2
      %v8229 = vsel %vm1381, %v8226, %v8228
      %v8233 = vmax.f32 %v8177, %v7949
      %v8234 = vmax.f32 %v8178, %v7951
      %v8235 = vmax.f32 %v8179, %v7950
      %v8236 = vmax.f32 %v8180, %v7954
      %v8237 = vmax.f32 %v8181, %v7956
      %v8238 = vmax.f32 %v8182, %v7955
      %v8239 = vmax.f32 %v8183, %v7959
      %v8240 = vmax.f32 %v8184, %v7961
      %v8241 = vmax.f32 %v8185, %v7960
      %v8242 = vmax.f32 %v8186, %v7964
      %v8243 = vmax.f32 %v8187, %v7966
      %v8244 = vmax.f32 %v8188, %v7965
      %v8245 = vmax.f32 %v8189, %v7969
      %v8246 = vmax.f32 %v8190, %v7971
      %v8247 = vmax.f32 %v8191, %v7970
      %v8248 = vmax.f32 %v8192, %v7974
      %v8249 = vmax.f32 %v8193, %v7976
      %v8250 = vmax.f32 %v8194, %v7975
      %v8251 = vmax.f32 %v8195, %v7979
      %v8252 = vmax.f32 %v8196, %v7981
      %v8253 = vmax.f32 %v8197, %v7980
      %v8254 = vmax.f32 %v8198, %v7984
      %v8255 = vmax.f32 %v8199, %v7986
      %v8256 = vmax.f32 %v8200, %v7985
      %v8257 = vmax.f32 %v8201, %v7989
      %v8258 = vmax.f32 %v8202, %v7991
      %v8259 = vmax.f32 %v8203, %v7990
      %v8260 = vmax.f32 %v8204, %v7994
      %v8261 = vmax.f32 %v8205, %v7996
      %v8262 = vmax.f32 %v8206, %v7995
      %v8263 = vmax.f32 %v8207, %v7999
      %v8264 = vmax.f32 %v8208, %v8001
      %v8265 = vmax.f32 %v8209, %v8000
      %v8266 = vmax.f32 %v8210, %v8004
      %v8267 = vmax.f32 %v8211, %v8006
      %v8268 = vmax.f32 %v8212, %v8005
      %v8269 = vmax.f32 %v8213, %v8009
      %v8270 = vmax.f32 %v8214, %v8011
      %v8271 = vmax.f32 %v8215, %v8010
      %v8272 = vmax.f32 %v8216, %v8014
      %v8273 = vmax.f32 %v8217, %v8016
      %v8274 = vmax.f32 %v8218, %v8015
      %v8275 = vmax.f32 %v8219, %v8019
      %v8276 = vmax.f32 %v8220, %v8021
      %v8277 = vmax.f32 %v8221, %v8020
      %v8278 = vmax.f32 %v8222, %v8227
      %v8279 = vmax.f32 %v8223, %v8229
      %v8280 = vmax.f32 %v8224, %v8228
      %v8281 = vmax.f32 %v8233, %v7670
      %v8282 = vmax.f32 %v8234, %v7671
      %v8283 = vmax.f32 %v8235, %v7672
      %v8284 = vmax.f32 %v8236, %v7673
      %v8285 = vmax.f32 %v8237, %v7674
      %v8286 = vmax.f32 %v8238, %v7675
      %v8287 = vmax.f32 %v8239, %v7676
      %v8288 = vmax.f32 %v8240, %v7677
      %v8289 = vmax.f32 %v8241, %v7678
      %v8290 = vmax.f32 %v8242, %v7679
      %v8291 = vmax.f32 %v8243, %v7680
      %v8292 = vmax.f32 %v8244, %v7681
      %v8293 = vmax.f32 %v8245, %v7682
      %v8294 = vmax.f32 %v8246, %v7683
      %v8295 = vmax.f32 %v8247, %v7684
      %v8296 = vmax.f32 %v8248, %v7685
      %v8297 = vmax.f32 %v8249, %v7686
      %v8298 = vmax.f32 %v8250, %v7687
      %v8299 = vmax.f32 %v8251, %v7688
      %v8300 = vmax.f32 %v8252, %v7689
      %v8301 = vmax.f32 %v8253, %v7690
      %v8302 = vmax.f32 %v8254, %v7691
      %v8303 = vmax.f32 %v8255, %v7692
      %v8304 = vmax.f32 %v8256, %v7693
      %v8305 = vmax.f32 %v8257, %v7694
      %v8306 = vmax.f32 %v8258, %v7695
      %v8307 = vmax.f32 %v8259, %v7696
      %v8308 = vmax.f32 %v8260, %v7697
      %v8309 = vmax.f32 %v8261, %v7698
      %v8310 = vmax.f32 %v8262, %v7699
      %v8311 = vmax.f32 %v8263, %v7700
      %v8312 = vmax.f32 %v8264, %v7701
      %v8313 = vmax.f32 %v8265, %v7702
      %v8314 = vmax.f32 %v8266, %v7703
      %v8315 = vmax.f32 %v8267, %v7704
      %v8316 = vmax.f32 %v8268, %v7705
      %v8317 = vmax.f32 %v8269, %v7706
      %v8318 = vmax.f32 %v8270, %v7707
      %v8319 = vmax.f32 %v8271, %v7708
      %v8320 = vmax.f32 %v8272, %v7709
      %v8321 = vmax.f32 %v8273, %v7710
      %v8322 = vmax.f32 %v8274, %v7711
      %v8323 = vmax.f32 %v8275, %v7712
      %v8324 = vmax.f32 %v8276, %v7713
      %v8325 = vmax.f32 %v8277, %v7714
      %v8326 = vmax.f32 %v8278, %v7715
      %v8327 = vmax.f32 %v8279, %v7716
      %v8328 = vmax.f32 %v8280, %v7717
      %v8332 = vrot.slane %v7715, 1
      %v8333 = vrot.slane %v7716, 1
      %v8334 = vsel %vm1902, %v8332, %v8333
      %v8335 = vrot.slane %v7717, 1
      %v8336 = vsel %vm1902, %v8333, %v8335
      %v8340 = vmax.f32 %v8281, %v7778
      %v8341 = vmax.f32 %v8282, %v7780
      %v8342 = vmax.f32 %v8283, %v7779
      %v8343 = vmax.f32 %v8284, %v7783
      %v8344 = vmax.f32 %v8285, %v7785
      %v8345 = vmax.f32 %v8286, %v7784
      %v8346 = vmax.f32 %v8287, %v7788
      %v8347 = vmax.f32 %v8288, %v7790
      %v8348 = vmax.f32 %v8289, %v7789
      %v8349 = vmax.f32 %v8290, %v7793
      %v8350 = vmax.f32 %v8291, %v7795
      %v8351 = vmax.f32 %v8292, %v7794
      %v8352 = vmax.f32 %v8293, %v7798
      %v8353 = vmax.f32 %v8294, %v7800
      %v8354 = vmax.f32 %v8295, %v7799
      %v8355 = vmax.f32 %v8296, %v7803
      %v8356 = vmax.f32 %v8297, %v7805
      %v8357 = vmax.f32 %v8298, %v7804
      %v8358 = vmax.f32 %v8299, %v7808
      %v8359 = vmax.f32 %v8300, %v7810
      %v8360 = vmax.f32 %v8301, %v7809
      %v8361 = vmax.f32 %v8302, %v7813
      %v8362 = vmax.f32 %v8303, %v7815
      %v8363 = vmax.f32 %v8304, %v7814
      %v8364 = vmax.f32 %v8305, %v7818
      %v8365 = vmax.f32 %v8306, %v7820
      %v8366 = vmax.f32 %v8307, %v7819
      %v8367 = vmax.f32 %v8308, %v7823
      %v8368 = vmax.f32 %v8309, %v7825
      %v8369 = vmax.f32 %v8310, %v7824
      %v8370 = vmax.f32 %v8311, %v7828
      %v8371 = vmax.f32 %v8312, %v7830
      %v8372 = vmax.f32 %v8313, %v7829
      %v8373 = vmax.f32 %v8314, %v7833
      %v8374 = vmax.f32 %v8315, %v7835
      %v8375 = vmax.f32 %v8316, %v7834
      %v8376 = vmax.f32 %v8317, %v7838
      %v8377 = vmax.f32 %v8318, %v7840
      %v8378 = vmax.f32 %v8319, %v7839
      %v8379 = vmax.f32 %v8320, %v7843
      %v8380 = vmax.f32 %v8321, %v7845
      %v8381 = vmax.f32 %v8322, %v7844
      %v8382 = vmax.f32 %v8323, %v8171
      %v8383 = vmax.f32 %v8324, %v8173
      %v8384 = vmax.f32 %v8325, %v8172
      %v8385 = vmax.f32 %v8326, %v8334
      %v8386 = vmax.f32 %v8327, %v8336
      %v8387 = vmax.f32 %v8328, %v8335
      %v8388 = vrot.slane %v7715, 2
      %v8389 = vrot.slane %v7716, 2
      %v8390 = vsel %vm1381, %v8388, %v8389
      %v8391 = vrot.slane %v7717, 2
      %v8392 = vsel %vm1381, %v8389, %v8391
      %v8396 = vmax.f32 %v8340, %v7954
      %v8397 = vmax.f32 %v8341, %v7956
      %v8398 = vmax.f32 %v8342, %v7955
      %v8399 = vmax.f32 %v8343, %v7959
      %v8400 = vmax.f32 %v8344, %v7961
      %v8401 = vmax.f32 %v8345, %v7960
      %v8402 = vmax.f32 %v8346, %v7964
      %v8403 = vmax.f32 %v8347, %v7966
      %v8404 = vmax.f32 %v8348, %v7965
      %v8405 = vmax.f32 %v8349, %v7969
      %v8406 = vmax.f32 %v8350, %v7971
      %v8407 = vmax.f32 %v8351, %v7970
      %v8408 = vmax.f32 %v8352, %v7974
      %v8409 = vmax.f32 %v8353, %v7976
      %v8410 = vmax.f32 %v8354, %v7975
      %v8411 = vmax.f32 %v8355, %v7979
      %v8412 = vmax.f32 %v8356, %v7981
      %v8413 = vmax.f32 %v8357, %v7980
      %v8414 = vmax.f32 %v8358, %v7984
      %v8415 = vmax.f32 %v8359, %v7986
      %v8416 = vmax.f32 %v8360, %v7985
      %v8417 = vmax.f32 %v8361, %v7989
      %v8418 = vmax.f32 %v8362, %v7991
      %v8419 = vmax.f32 %v8363, %v7990
      %v8420 = vmax.f32 %v8364, %v7994
      %v8421 = vmax.f32 %v8365, %v7996
      %v8422 = vmax.f32 %v8366, %v7995
      %v8423 = vmax.f32 %v8367, %v7999
      %v8424 = vmax.f32 %v8368, %v8001
      %v8425 = vmax.f32 %v8369, %v8000
      %v8426 = vmax.f32 %v8370, %v8004
      %v8427 = vmax.f32 %v8371, %v8006
      %v8428 = vmax.f32 %v8372, %v8005
      %v8429 = vmax.f32 %v8373, %v8009
      %v8430 = vmax.f32 %v8374, %v8011
      %v8431 = vmax.f32 %v8375, %v8010
      %v8432 = vmax.f32 %v8376, %v8014
      %v8433 = vmax.f32 %v8377, %v8016
      %v8434 = vmax.f32 %v8378, %v8015
      %v8435 = vmax.f32 %v8379, %v8019
      %v8436 = vmax.f32 %v8380, %v8021
      %v8437 = vmax.f32 %v8381, %v8020
      %v8438 = vmax.f32 %v8382, %v8227
      %v8439 = vmax.f32 %v8383, %v8229
      %v8440 = vmax.f32 %v8384, %v8228
      %v8441 = vmax.f32 %v8385, %v8390
      %v8442 = vmax.f32 %v8386, %v8392
      %v8443 = vmax.f32 %v8387, %v8391
      %v8492 = vrot.slane %v8396, 1
      %v8493 = vrot.slane %v8397, 1
      %v8494 = vsel %vm1902, %v8492, %v8493
      %v8495 = vrot.slane %v8398, 1
      %v8496 = vsel %vm1902, %v8493, %v8495
      %v8497 = vrot.slane %v8399, 1
      %v8498 = vrot.slane %v8400, 1
      %v8499 = vsel %vm1902, %v8497, %v8498
      %v8500 = vrot.slane %v8401, 1
      %v8501 = vsel %vm1902, %v8498, %v8500
      %v8502 = vrot.slane %v8402, 1
      %v8503 = vrot.slane %v8403, 1
      %v8504 = vsel %vm1902, %v8502, %v8503
      %v8505 = vrot.slane %v8404, 1
      %v8506 = vsel %vm1902, %v8503, %v8505
      %v8507 = vrot.slane %v8405, 1
      %v8508 = vrot.slane %v8406, 1
      %v8509 = vsel %vm1902, %v8507, %v8508
      %v8510 = vrot.slane %v8407, 1
      %v8511 = vsel %vm1902, %v8508, %v8510
      %v8512 = vrot.slane %v8408, 1
      %v8513 = vrot.slane %v8409, 1
      %v8514 = vsel %vm1902, %v8512, %v8513
      %v8515 = vrot.slane %v8410, 1
      %v8516 = vsel %vm1902, %v8513, %v8515
      %v8517 = vrot.slane %v8411, 1
      %v8518 = vrot.slane %v8412, 1
      %v8519 = vsel %vm1902, %v8517, %v8518
      %v8520 = vrot.slane %v8413, 1
      %v8521 = vsel %vm1902, %v8518, %v8520
      %v8522 = vrot.slane %v8414, 1
      %v8523 = vrot.slane %v8415, 1
      %v8524 = vsel %vm1902, %v8522, %v8523
      %v8525 = vrot.slane %v8416, 1
      %v8526 = vsel %vm1902, %v8523, %v8525
      %v8527 = vrot.slane %v8417, 1
      %v8528 = vrot.slane %v8418, 1
      %v8529 = vsel %vm1902, %v8527, %v8528
      %v8530 = vrot.slane %v8419, 1
      %v8531 = vsel %vm1902, %v8528, %v8530
      %v8532 = vrot.slane %v8420, 1
      %v8533 = vrot.slane %v8421, 1
      %v8534 = vsel %vm1902, %v8532, %v8533
      %v8535 = vrot.slane %v8422, 1
      %v8536 = vsel %vm1902, %v8533, %v8535
      %v8537 = vrot.slane %v8423, 1
      %v8538 = vrot.slane %v8424, 1
      %v8539 = vsel %vm1902, %v8537, %v8538
      %v8540 = vrot.slane %v8425, 1
      %v8541 = vsel %vm1902, %v8538, %v8540
      %v8542 = vrot.slane %v8426, 1
      %v8543 = vrot.slane %v8427, 1
      %v8544 = vsel %vm1902, %v8542, %v8543
      %v8545 = vrot.slane %v8428, 1
      %v8546 = vsel %vm1902, %v8543, %v8545
      %v8547 = vrot.slane %v8429, 1
      %v8548 = vrot.slane %v8430, 1
      %v8549 = vsel %vm1902, %v8547, %v8548
      %v8550 = vrot.slane %v8431, 1
      %v8551 = vsel %vm1902, %v8548, %v8550
      %v8552 = vrot.slane %v8432, 1
      %v8553 = vrot.slane %v8433, 1
      %v8554 = vsel %vm1902, %v8552, %v8553
      %v8555 = vrot.slane %v8434, 1
      %v8556 = vsel %vm1902, %v8553, %v8555
      %v8557 = vrot.slane %v8435, 1
      %v8558 = vrot.slane %v8436, 1
      %v8559 = vsel %vm1902, %v8557, %v8558
      %v8560 = vrot.slane %v8437, 1
      %v8561 = vsel %vm1902, %v8558, %v8560
      %v8562 = vrot.slane %v8438, 1
      %v8563 = vrot.slane %v8439, 1
      %v8564 = vsel %vm1902, %v8562, %v8563
      %v8565 = vrot.slane %v8440, 1
      %v8566 = vsel %vm1902, %v8563, %v8565
      %v8567 = vrot.slane %v8441, 1
      %v8568 = vrot.slane %v8442, 1
      %v8569 = vsel %vm1902, %v8567, %v8568
      %v8570 = vrot.slane %v8443, 1
      %v8571 = vsel %vm1902, %v8568, %v8570
      %v8572 = vld [vmem:[%s11] sm:$0xf]
      %v8573 = vsel %vm589, %v8494, 0
      %v8575 = vsel %vm589, %v8496, 0
      %v8577 = vsel %vm589, %v8499, 0
      %v8579 = vsel %vm589, %v8501, 0
      %v8581 = vsel %vm589, %v8504, 0
      %v8583 = vsel %vm589, %v8506, 0
      %v8585 = vsel %vm589, %v8509, 0
      %v8587 = vsel %vm589, %v8511, 0
      %v8589 = vsel %vm589, %v8514, 0
      %v8591 = vsel %vm589, %v8516, 0
      %v8593 = vsel %vm589, %v8519, 0
      %v8595 = vsel %vm589, %v8521, 0
      %v8597 = vsel %vm589, %v8524, 0
      %v8599 = vsel %vm589, %v8526, 0
      %v8601 = vsel %vm589, %v8529, 0
      %v8603 = vsel %vm589, %v8531, 0
      %v8605 = vsel %vm589, %v8534, 0
      %v8607 = vsel %vm589, %v8536, 0
      %v8609 = vsel %vm589, %v8539, 0
      %v8611 = vsel %vm589, %v8541, 0
      %v8613 = vsel %vm589, %v8544, 0
      %v8615 = vsel %vm589, %v8546, 0
      %v8617 = vsel %vm589, %v8549, 0
      %v8619 = vsel %vm589, %v8551, 0
      %v8621 = vsel %vm589, %v8554, 0
      %v8623 = vsel %vm589, %v8556, 0
      %v8625 = vsel %vm589, %v8559, 0
      %v8627 = vsel %vm589, %v8561, 0
      %v8629 = vsel %vm589, %v8564, 0
      %v8631 = vsel %vm589, %v8566, 0
      %v8633 = vsel %vm589, %v8569, 0
      %v8635 = vsel %vm589, %v8571, 0
      %v8638 = vsel %vm770, %v8572, 0
      %8640 = vmatprep.subr.mxu0 0.0
      %8641 = vmatpush1.msra.mxu0 %v8638
      %8642 = vmatprep.subr.mxu0 0.0
      %8643 = vmatpush1.msra.mxu0 0.0
      %8644 = vmatprep.subr.mxu0 0.0
      %8645 = vmatpush1.msra.mxu0 0.0
      %8646 = vmatprep.subr.mxu0 0.0
      %8647 = vmatpush1.msra.mxu0 0.0
      %8648 = vmatprep.subr.mxu0 0.0
      %8649 = vmatpush1.msra.mxu0 0.0
      %8650 = vmatprep.subr.mxu0 0.0
      %8651 = vmatpush1.msra.mxu0 0.0
      %8652 = vmatprep.subr.mxu0 0.0
      %8653 = vmatpush1.msra.mxu0 0.0
      %8654 = vmatprep.subr.mxu0 0.0
      %8655 = vmatpush1.msra.mxu0 0.0
      %8656 = vmatprep.subr.mxu0 0.0
      %8657 = vmatpush1.msra.mxu0 0.0
      %8658 = vmatprep.subr.mxu0 0.0
      %8659 = vmatpush1.msra.mxu0 0.0
      %8660 = vmatprep.subr.mxu0 0.0
      %8661 = vmatpush1.msra.mxu0 0.0
      %8662 = vmatprep.subr.mxu0 0.0
      %8663 = vmatpush1.msra.mxu0 0.0
      %8664 = vmatprep.subr.mxu0 0.0
      %8665 = vmatpush1.msra.mxu0 0.0
      %8666 = vmatprep.subr.mxu0 0.0
      %8667 = vmatpush1.msra.mxu0 0.0
      %8668 = vmatprep.subr.mxu0 0.0
      %8669 = vmatpush1.msra.mxu0 0.0
      %8670 = vmatprep.subr.mxu0 0.0
      %8671 = vmatpush1.msra.mxu0 0.0
      %8672 = vmatprep.subr.mxu0 0.0
      %8673 = vmatpush1.msra.mxu0 0.0
      %8674 = vmatprep.subr.mxu0 0.0
      %8675 = vmatpush1.msra.mxu0 0.0
      %8676 = vmatprep.subr.mxu0 0.0
      %8677 = vmatpush1.msra.mxu0 0.0
      %8678 = vmatprep.subr.mxu0 0.0
      %8679 = vmatpush1.msra.mxu0 0.0
      %8680 = vmatprep.subr.mxu0 0.0
      %8681 = vmatpush1.msra.mxu0 0.0
      %8682 = vmatprep.subr.mxu0 0.0
      %8683 = vmatpush1.msra.mxu0 0.0
      %8684 = vmatprep.subr.mxu0 0.0
      %8685 = vmatpush1.msra.mxu0 0.0
      %8686 = vmatprep.subr.mxu0 0.0
      %8687 = vmatpush1.msra.mxu0 0.0
      %8688 = vmatprep.subr.mxu0 0.0
      %8689 = vmatpush1.msra.mxu0 0.0
      %8690 = vmatprep.subr.mxu0 0.0
      %8691 = vmatpush1.msra.mxu0 0.0
      %8692 = vmatprep.subr.mxu0 0.0
      %8693 = vmatpush1.msra.mxu0 0.0
      %8694 = vmatprep.subr.mxu0 0.0
      %8695 = vmatpush1.msra.mxu0 0.0
      %8696 = vmatprep.subr.mxu0 0.0
      %8697 = vmatpush1.msra.mxu0 0.0
      %8698 = vmatprep.subr.mxu0 0.0
      %8699 = vmatpush1.msra.mxu0 0.0
      %8700 = vmatprep.subr.mxu0 0.0
      %8701 = vmatpush1.msra.mxu0 0.0
      %8702 = vmatprep.subr.mxu0 0.0
      %8703 = vmatpush1.msra.mxu0 0.0
      %8704 = vmatprep.mubr.f32.mxu0 0.0
      %8705 = vmatmul.mubr.f32.gmra.mrb[0].mxu0 %v8573
      %v8706 = vpop.f32.mrb[0].mxu0
      %v8707 = vadd.f32 0.0, %v8706
      %v8708 = vpop.f32.mrb[0].mxu0
      %8709 = vmatprep.mubr.f32.mxu0 0.0
      %8710 = vmatmul.mubr.f32.gmra.mrb[0].mxu0 %v8575
      %v8711 = vpop.f32.mrb[0].mxu0
      %v8712 = vadd.f32 0.0, %v8711
      %v8713 = vpop.f32.mrb[0].mxu0
      %8714 = vmatprep.mubr.f32.mxu0 0.0
      %8715 = vmatmul.mubr.f32.gmra.mrb[0].mxu0 %v8577
      %v8716 = vpop.f32.mrb[0].mxu0
      %v8717 = vadd.f32 0.0, %v8716
      %v8718 = vpop.f32.mrb[0].mxu0
      %8719 = vmatprep.mubr.f32.mxu0 0.0
      %8720 = vmatmul.mubr.f32.gmra.mrb[0].mxu0 %v8579
      %v8721 = vpop.f32.mrb[0].mxu0
      %v8722 = vadd.f32 0.0, %v8721
      %v8723 = vpop.f32.mrb[0].mxu0
      %8724 = vmatprep.mubr.f32.mxu0 0.0
      %8725 = vmatmul.mubr.f32.gmra.mrb[0].mxu0 %v8581
      %v8726 = vpop.f32.mrb[0].mxu0
      %v8727 = vadd.f32 0.0, %v8726
      %v8728 = vpop.f32.mrb[0].mxu0
      %8729 = vmatprep.mubr.f32.mxu0 0.0
      %8730 = vmatmul.mubr.f32.gmra.mrb[0].mxu0 %v8583
      %v8731 = vpop.f32.mrb[0].mxu0
      %v8732 = vadd.f32 0.0, %v8731
      %v8733 = vpop.f32.mrb[0].mxu0
      %8734 = vmatprep.mubr.f32.mxu0 0.0
      %8735 = vmatmul.mubr.f32.gmra.mrb[0].mxu0 %v8585
      %v8736 = vpop.f32.mrb[0].mxu0
      %v8737 = vadd.f32 0.0, %v8736
      %v8738 = vpop.f32.mrb[0].mxu0
      %8739 = vmatprep.mubr.f32.mxu0 0.0
      %8740 = vmatmul.mubr.f32.gmra.mrb[0].mxu0 %v8587
      %v8741 = vpop.f32.mrb[0].mxu0
      %v8742 = vadd.f32 0.0, %v8741
      %v8743 = vpop.f32.mrb[0].mxu0
      %8744 = vmatprep.mubr.f32.mxu0 0.0
      %8745 = vmatmul.mubr.f32.gmra.mrb[0].mxu0 %v8589
      %v8746 = vpop.f32.mrb[0].mxu0
      %v8747 = vadd.f32 0.0, %v8746
      %v8748 = vpop.f32.mrb[0].mxu0
      %8749 = vmatprep.mubr.f32.mxu0 0.0
      %8750 = vmatmul.mubr.f32.gmra.mrb[0].mxu0 %v8591
      %v8751 = vpop.f32.mrb[0].mxu0
      %v8752 = vadd.f32 0.0, %v8751
      %v8753 = vpop.f32.mrb[0].mxu0
      %8754 = vmatprep.mubr.f32.mxu0 0.0
      %8755 = vmatmul.mubr.f32.gmra.mrb[0].mxu0 %v8593
      %v8756 = vpop.f32.mrb[0].mxu0
      %v8757 = vadd.f32 0.0, %v8756
      %v8758 = vpop.f32.mrb[0].mxu0
      %8759 = vmatprep.mubr.f32.mxu0 0.0
      %8760 = vmatmul.mubr.f32.gmra.mrb[0].mxu0 %v8595
      %v8761 = vpop.f32.mrb[0].mxu0
      %v8762 = vadd.f32 0.0, %v8761
      %v8763 = vpop.f32.mrb[0].mxu0
      %8764 = vmatprep.mubr.f32.mxu0 0.0
      %8765 = vmatmul.mubr.f32.gmra.mrb[0].mxu0 %v8597
      %v8766 = vpop.f32.mrb[0].mxu0
      %v8767 = vadd.f32 0.0, %v8766
      %v8768 = vpop.f32.mrb[0].mxu0
      %8769 = vmatprep.mubr.f32.mxu0 0.0
      %8770 = vmatmul.mubr.f32.gmra.mrb[0].mxu0 %v8599
      %v8771 = vpop.f32.mrb[0].mxu0
      %v8772 = vadd.f32 0.0, %v8771
      %v8773 = vpop.f32.mrb[0].mxu0
      %8774 = vmatprep.mubr.f32.mxu0 0.0
      %8775 = vmatmul.mubr.f32.gmra.mrb[0].mxu0 %v8601
      %v8776 = vpop.f32.mrb[0].mxu0
      %v8777 = vadd.f32 0.0, %v8776
      %v8778 = vpop.f32.mrb[0].mxu0
      %8779 = vmatprep.mubr.f32.mxu0 0.0
      %8780 = vmatmul.mubr.f32.gmra.mrb[0].mxu0 %v8603
      %v8781 = vpop.f32.mrb[0].mxu0
      %v8782 = vadd.f32 0.0, %v8781
      %v8783 = vpop.f32.mrb[0].mxu0
      %8784 = vmatprep.mubr.f32.mxu0 0.0
      %8785 = vmatmul.mubr.f32.gmra.mrb[0].mxu0 %v8605
      %v8786 = vpop.f32.mrb[0].mxu0
      %v8787 = vadd.f32 0.0, %v8786
      %v8788 = vpop.f32.mrb[0].mxu0
      %8789 = vmatprep.mubr.f32.mxu0 0.0
      %8790 = vmatmul.mubr.f32.gmra.mrb[0].mxu0 %v8607
      %v8791 = vpop.f32.mrb[0].mxu0
      %v8792 = vadd.f32 0.0, %v8791
      %v8793 = vpop.f32.mrb[0].mxu0
      %8794 = vmatprep.mubr.f32.mxu0 0.0
      %8795 = vmatmul.mubr.f32.gmra.mrb[0].mxu0 %v8609
      %v8796 = vpop.f32.mrb[0].mxu0
      %v8797 = vadd.f32 0.0, %v8796
      %v8798 = vpop.f32.mrb[0].mxu0
      %8799 = vmatprep.mubr.f32.mxu0 0.0
      %8800 = vmatmul.mubr.f32.gmra.mrb[0].mxu0 %v8611
      %v8801 = vpop.f32.mrb[0].mxu0
      %v8802 = vadd.f32 0.0, %v8801
      %v8803 = vpop.f32.mrb[0].mxu0
      %8804 = vmatprep.mubr.f32.mxu0 0.0
      %8805 = vmatmul.mubr.f32.gmra.mrb[0].mxu0 %v8613
      %v8806 = vpop.f32.mrb[0].mxu0
      %v8807 = vadd.f32 0.0, %v8806
      %v8808 = vpop.f32.mrb[0].mxu0
      %8809 = vmatprep.mubr.f32.mxu0 0.0
      %8810 = vmatmul.mubr.f32.gmra.mrb[0].mxu0 %v8615
      %v8811 = vpop.f32.mrb[0].mxu0
      %v8812 = vadd.f32 0.0, %v8811
      %v8813 = vpop.f32.mrb[0].mxu0
      %8814 = vmatprep.mubr.f32.mxu0 0.0
      %8815 = vmatmul.mubr.f32.gmra.mrb[0].mxu0 %v8617
      %v8816 = vpop.f32.mrb[0].mxu0
      %v8817 = vadd.f32 0.0, %v8816
      %v8818 = vpop.f32.mrb[0].mxu0
      %8819 = vmatprep.mubr.f32.mxu0 0.0
      %8820 = vmatmul.mubr.f32.gmra.mrb[0].mxu0 %v8619
      %v8821 = vpop.f32.mrb[0].mxu0
      %v8822 = vadd.f32 0.0, %v8821
      %v8823 = vpop.f32.mrb[0].mxu0
      %8824 = vmatprep.mubr.f32.mxu0 0.0
      %8825 = vmatmul.mubr.f32.gmra.mrb[0].mxu0 %v8621
      %v8826 = vpop.f32.mrb[0].mxu0
      %v8827 = vadd.f32 0.0, %v8826
      %v8828 = vpop.f32.mrb[0].mxu0
      %8829 = vmatprep.mubr.f32.mxu0 0.0
      %8830 = vmatmul.mubr.f32.gmra.mrb[0].mxu0 %v8623
      %v8831 = vpop.f32.mrb[0].mxu0
      %v8832 = vadd.f32 0.0, %v8831
      %v8833 = vpop.f32.mrb[0].mxu0
      %8834 = vmatprep.mubr.f32.mxu0 0.0
      %8835 = vmatmul.mubr.f32.gmra.mrb[0].mxu0 %v8625
      %v8836 = vpop.f32.mrb[0].mxu0
      %v8837 = vadd.f32 0.0, %v8836
      %v8838 = vpop.f32.mrb[0].mxu0
      %8839 = vmatprep.mubr.f32.mxu0 0.0
      %8840 = vmatmul.mubr.f32.gmra.mrb[0].mxu0 %v8627
      %v8841 = vpop.f32.mrb[0].mxu0
      %v8842 = vadd.f32 0.0, %v8841
      %v8843 = vpop.f32.mrb[0].mxu0
      %8844 = vmatprep.mubr.f32.mxu0 0.0
      %8845 = vmatmul.mubr.f32.gmra.mrb[0].mxu0 %v8629
      %v8846 = vpop.f32.mrb[0].mxu0
      %v8847 = vadd.f32 0.0, %v8846
      %v8848 = vpop.f32.mrb[0].mxu0
      %8849 = vmatprep.mubr.f32.mxu0 0.0
      %8850 = vmatmul.mubr.f32.gmra.mrb[0].mxu0 %v8631
      %v8851 = vpop.f32.mrb[0].mxu0
      %v8852 = vadd.f32 0.0, %v8851
      %v8853 = vpop.f32.mrb[0].mxu0
      %8854 = vmatprep.mubr.f32.mxu0 0.0
      %8855 = vmatmul.mubr.f32.gmra.mrb[0].mxu0 %v8633
      %v8856 = vpop.f32.mrb[0].mxu0
      %v8857 = vadd.f32 0.0, %v8856
      %v8858 = vpop.f32.mrb[0].mxu0
      %8859 = vmatprep.mubr.f32.mxu0 0.0
      %8860 = vmatmul.mubr.f32.gmra.mrb[0].mxu0 %v8635
      %v8861 = vpop.f32.mrb[0].mxu0
      %v8862 = vadd.f32 0.0, %v8861
      %v8863 = vpop.f32.mrb[0].mxu0
      %8864 = vdwg.mxu0
      %v8865 = vld [vmem:[%s12] sm:$0x1]
      %v8867 = vlaneseq
      %v8868 = vshrl.u32 %v8867, 7
      %v8869 = vsub.s32 0, %v8868
      %v8870 = vrot.slane %v8865, %v8869
      %v8872 = vmul.f32 %v8707, %v8870
      %v8873 = vmul.f32 %v8712, %v8870
      %v8874 = vmul.f32 %v8717, %v8870
      %v8875 = vmul.f32 %v8722, %v8870
      %v8876 = vmul.f32 %v8727, %v8870
      %v8877 = vmul.f32 %v8732, %v8870
      %v8878 = vmul.f32 %v8737, %v8870
      %v8879 = vmul.f32 %v8742, %v8870
      %v8880 = vmul.f32 %v8747, %v8870
      %v8881 = vmul.f32 %v8752, %v8870
      %v8882 = vmul.f32 %v8757, %v8870
      %v8883 = vmul.f32 %v8762, %v8870
      %v8884 = vmul.f32 %v8767, %v8870
      %v8885 = vmul.f32 %v8772, %v8870
      %v8886 = vmul.f32 %v8777, %v8870
      %v8887 = vmul.f32 %v8782, %v8870
      %v8888 = vmul.f32 %v8787, %v8870
      %v8889 = vmul.f32 %v8792, %v8870
      %v8890 = vmul.f32 %v8797, %v8870
      %v8891 = vmul.f32 %v8802, %v8870
      %v8892 = vmul.f32 %v8807, %v8870
      %v8893 = vmul.f32 %v8812, %v8870
      %v8894 = vmul.f32 %v8817, %v8870
      %v8895 = vmul.f32 %v8822, %v8870
      %v8896 = vmul.f32 %v8827, %v8870
      %v8897 = vmul.f32 %v8832, %v8870
      %v8898 = vmul.f32 %v8837, %v8870
      %v8899 = vmul.f32 %v8842, %v8870
      %v8900 = vmul.f32 %v8847, %v8870
      %v8901 = vmul.f32 %v8852, %v8870
      %v8902 = vmul.f32 %v8857, %v8870
      %v8903 = vmul.f32 %v8862, %v8870
      %v8904 = vld [vmem:[%s13] sm:$0x1]
      %v8906 = vlaneseq
      %v8907 = vshrl.u32 %v8906, 7
      %v8908 = vsub.s32 0, %v8907
      %v8909 = vrot.slane %v8904, %v8908
      %v8911 = vadd.f32 %v8872, %v8909
      %v8912 = vadd.f32 %v8873, %v8909
      %v8913 = vadd.f32 %v8874, %v8909
      %v8914 = vadd.f32 %v8875, %v8909
      %v8915 = vadd.f32 %v8876, %v8909
      %v8916 = vadd.f32 %v8877, %v8909
      %v8917 = vadd.f32 %v8878, %v8909
      %v8918 = vadd.f32 %v8879, %v8909
      %v8919 = vadd.f32 %v8880, %v8909
      %v8920 = vadd.f32 %v8881, %v8909
      %v8921 = vadd.f32 %v8882, %v8909
      %v8922 = vadd.f32 %v8883, %v8909
      %v8923 = vadd.f32 %v8884, %v8909
      %v8924 = vadd.f32 %v8885, %v8909
      %v8925 = vadd.f32 %v8886, %v8909
      %v8926 = vadd.f32 %v8887, %v8909
      %v8927 = vadd.f32 %v8888, %v8909
      %v8928 = vadd.f32 %v8889, %v8909
      %v8929 = vadd.f32 %v8890, %v8909
      %v8930 = vadd.f32 %v8891, %v8909
      %v8931 = vadd.f32 %v8892, %v8909
      %v8932 = vadd.f32 %v8893, %v8909
      %v8933 = vadd.f32 %v8894, %v8909
      %v8934 = vadd.f32 %v8895, %v8909
      %v8935 = vadd.f32 %v8896, %v8909
      %v8936 = vadd.f32 %v8897, %v8909
      %v8937 = vadd.f32 %v8898, %v8909
      %v8938 = vadd.f32 %v8899, %v8909
      %v8939 = vadd.f32 %v8900, %v8909
      %v8940 = vadd.f32 %v8901, %v8909
      %v8941 = vadd.f32 %v8902, %v8909
      %v8942 = vadd.f32 %v8903, %v8909
      %v8943 = vmax.f32 %v8911, 0.0
      %v8944 = vmax.f32 %v8912, 0.0
      %v8945 = vmax.f32 %v8913, 0.0
      %v8946 = vmax.f32 %v8914, 0.0
      %v8947 = vmax.f32 %v8915, 0.0
      %v8948 = vmax.f32 %v8916, 0.0
      %v8949 = vmax.f32 %v8917, 0.0
      %v8950 = vmax.f32 %v8918, 0.0
      %v8951 = vmax.f32 %v8919, 0.0
      %v8952 = vmax.f32 %v8920, 0.0
      %v8953 = vmax.f32 %v8921, 0.0
      %v8954 = vmax.f32 %v8922, 0.0
      %v8955 = vmax.f32 %v8923, 0.0
      %v8956 = vmax.f32 %v8924, 0.0
      %v8957 = vmax.f32 %v8925, 0.0
      %v8958 = vmax.f32 %v8926, 0.0
      %v8959 = vmax.f32 %v8927, 0.0
      %v8960 = vmax.f32 %v8928, 0.0
      %v8961 = vmax.f32 %v8929, 0.0
      %v8962 = vmax.f32 %v8930, 0.0
      %v8963 = vmax.f32 %v8931, 0.0
      %v8964 = vmax.f32 %v8932, 0.0
      %v8965 = vmax.f32 %v8933, 0.0
      %v8966 = vmax.f32 %v8934, 0.0
      %v8967 = vmax.f32 %v8935, 0.0
      %v8968 = vmax.f32 %v8936, 0.0
      %v8969 = vmax.f32 %v8937, 0.0
      %v8970 = vmax.f32 %v8938, 0.0
      %v8971 = vmax.f32 %v8939, 0.0
      %v8972 = vmax.f32 %v8940, 0.0
      %v8973 = vmax.f32 %v8941, 0.0
      %v8974 = vmax.f32 %v8942, 0.0
      %8975 = vxpose.xlu0.b32.start [1/16] %v1384, 128
      %8976 = vxpose.xlu0.b32.cont [2/16] %v1386, 128
      %8977 = vxpose.xlu0.b32.cont [3/16] %v1389, 128
      %8978 = vxpose.xlu0.b32.cont [4/16] %v1391, 128
      %8979 = vxpose.xlu0.b32.cont [5/16] %v1394, 128
      %8980 = vxpose.xlu0.b32.cont [6/16] %v1396, 128
      %8981 = vxpose.xlu0.b32.cont [7/16] %v1399, 128
      %8982 = vxpose.xlu0.b32.cont [8/16] %v1401, 128
      %8983 = vxpose.xlu0.b32.cont [9/16] %v1404, 128
      %8984 = vxpose.xlu0.b32.cont [10/16] %v1406, 128
      %8985 = vxpose.xlu0.b32.cont [11/16] %v1409, 128
      %8986 = vxpose.xlu0.b32.cont [12/16] %v1411, 128
      %8987 = vxpose.xlu0.b32.cont [13/16] %v1414, 128
      %8988 = vxpose.xlu0.b32.cont [14/16] %v1416, 128
      %8989 = vxpose.xlu0.b32.cont [15/16] %v1419, 128
      %8990 = vxpose.xlu0.b32.end [16/16] %v1421, 128
      %v8991 = vpop.trf.xlu0
      %v8992 = vpop.trf.xlu0
      %v8993 = vpop.trf.xlu0
      %v8994 = vpop.trf.xlu0
      %v8995 = vpop.trf.xlu0
      %v8996 = vpop.trf.xlu0
      %v8997 = vpop.trf.xlu0
      %v8998 = vpop.trf.xlu0
      %v8999 = vpop.trf.xlu0
      %v9000 = vpop.trf.xlu0
      %v9001 = vpop.trf.xlu0
      %v9002 = vpop.trf.xlu0
      %v9003 = vpop.trf.xlu0
      %v9004 = vpop.trf.xlu0
      %v9005 = vpop.trf.xlu0
      %v9006 = vpop.trf.xlu0
      %9007 = vxpose.xlu0.b32.start [1/16] %v1424, 128
      %9008 = vxpose.xlu0.b32.cont [2/16] %v1426, 128
      %9009 = vxpose.xlu0.b32.cont [3/16] %v1429, 128
      %9010 = vxpose.xlu0.b32.cont [4/16] %v1431, 128
      %9011 = vxpose.xlu0.b32.cont [5/16] %v1434, 128
      %9012 = vxpose.xlu0.b32.cont [6/16] %v1436, 128
      %9013 = vxpose.xlu0.b32.cont [7/16] %v1439, 128
      %9014 = vxpose.xlu0.b32.cont [8/16] %v1441, 128
      %9015 = vxpose.xlu0.b32.cont [9/16] %v1444, 128
      %9016 = vxpose.xlu0.b32.cont [10/16] %v1446, 128
      %9017 = vxpose.xlu0.b32.cont [11/16] %v1449, 128
      %9018 = vxpose.xlu0.b32.cont [12/16] %v1451, 128
      %9019 = vxpose.xlu0.b32.cont [13/16] %v1454, 128
      %9020 = vxpose.xlu0.b32.cont [14/16] %v1456, 128
      %9021 = vxpose.xlu0.b32.cont [15/16] %v1459, 128
      %9022 = vxpose.xlu0.b32.end [16/16] %v1461, 128
      %v9023 = vpop.trf.xlu0
      %v9024 = vpop.trf.xlu0
      %v9025 = vpop.trf.xlu0
      %v9026 = vpop.trf.xlu0
      %v9027 = vpop.trf.xlu0
      %v9028 = vpop.trf.xlu0
      %v9029 = vpop.trf.xlu0
      %v9030 = vpop.trf.xlu0
      %v9031 = vpop.trf.xlu0
      %v9032 = vpop.trf.xlu0
      %v9033 = vpop.trf.xlu0
      %v9034 = vpop.trf.xlu0
      %v9035 = vpop.trf.xlu0
      %v9036 = vpop.trf.xlu0
      %v9037 = vpop.trf.xlu0
      %v9038 = vpop.trf.xlu0
      %9039 = vst [vmem:[%s467] sm:$0xff] %v8991
      %9040 = vst [vmem:[%s467 + $0x8] sm:$0xff] %v9023
      %9041 = vxpose.xlu0.b32.start [1/16] %v3651, 128
      %9042 = vxpose.xlu0.b32.cont [2/16] %v3652, 128
      %9043 = vxpose.xlu0.b32.cont [3/16] %v3653, 128
      %9044 = vxpose.xlu0.b32.cont [4/16] %v3654, 128
      %9045 = vxpose.xlu0.b32.cont [5/16] %v3655, 128
      %9046 = vxpose.xlu0.b32.cont [6/16] %v3656, 128
      %9047 = vxpose.xlu0.b32.cont [7/16] %v3657, 128
      %9048 = vxpose.xlu0.b32.cont [8/16] %v3658, 128
      %9049 = vxpose.xlu0.b32.cont [9/16] %v3659, 128
      %9050 = vxpose.xlu0.b32.cont [10/16] %v3660, 128
      %9051 = vxpose.xlu0.b32.cont [11/16] %v3661, 128
      %9052 = vxpose.xlu0.b32.cont [12/16] %v3662, 128
      %9053 = vxpose.xlu0.b32.cont [13/16] %v3663, 128
      %9054 = vxpose.xlu0.b32.cont [14/16] %v3664, 128
      %9055 = vxpose.xlu0.b32.cont [15/16] %v3665, 128
      %9056 = vxpose.xlu0.b32.end [16/16] %v3666, 128
      %v9057 = vpop.trf.xlu0
      %v9058 = vpop.trf.xlu0
      %v9059 = vpop.trf.xlu0
      %v9060 = vpop.trf.xlu0
      %v9061 = vpop.trf.xlu0
      %v9062 = vpop.trf.xlu0
      %v9063 = vpop.trf.xlu0
      %v9064 = vpop.trf.xlu0
      %v9065 = vpop.trf.xlu0
      %v9066 = vpop.trf.xlu0
      %v9067 = vpop.trf.xlu0
      %v9068 = vpop.trf.xlu0
      %v9069 = vpop.trf.xlu0
      %v9070 = vpop.trf.xlu0
      %v9071 = vpop.trf.xlu0
      %v9072 = vpop.trf.xlu0
      %9073 = vxpose.xlu0.b32.start [1/16] %v3667, 128
      %9074 = vxpose.xlu0.b32.cont [2/16] %v3668, 128
      %9075 = vxpose.xlu0.b32.cont [3/16] %v3669, 128
      %9076 = vxpose.xlu0.b32.cont [4/16] %v3670, 128
      %9077 = vxpose.xlu0.b32.cont [5/16] %v3671, 128
      %9078 = vxpose.xlu0.b32.cont [6/16] %v3672, 128
      %9079 = vxpose.xlu0.b32.cont [7/16] %v3673, 128
      %9080 = vxpose.xlu0.b32.cont [8/16] %v3674, 128
      %9081 = vxpose.xlu0.b32.cont [9/16] %v3675, 128
      %9082 = vxpose.xlu0.b32.cont [10/16] %v3676, 128
      %9083 = vxpose.xlu0.b32.cont [11/16] %v3677, 128
      %9084 = vxpose.xlu0.b32.cont [12/16] %v3678, 128
      %9085 = vxpose.xlu0.b32.cont [13/16] %v3679, 128
      %9086 = vxpose.xlu0.b32.cont [14/16] %v3680, 128
      %9087 = vxpose.xlu0.b32.cont [15/16] %v3681, 128
      %9088 = vxpose.xlu0.b32.end [16/16] %v3682, 128
      %v9089 = vpop.trf.xlu0
      %v9090 = vpop.trf.xlu0
      %v9091 = vpop.trf.xlu0
      %v9092 = vpop.trf.xlu0
      %v9093 = vpop.trf.xlu0
      %v9094 = vpop.trf.xlu0
      %v9095 = vpop.trf.xlu0
      %v9096 = vpop.trf.xlu0
      %v9097 = vpop.trf.xlu0
      %v9098 = vpop.trf.xlu0
      %v9099 = vpop.trf.xlu0
      %v9100 = vpop.trf.xlu0
      %v9101 = vpop.trf.xlu0
      %v9102 = vpop.trf.xlu0
      %v9103 = vpop.trf.xlu0
      %v9104 = vpop.trf.xlu0
      %9105 = vst [vmem:[%s467 + $0x10] sm:$0xff] %v9057
      %9106 = vst [vmem:[%s467 + $0x18] sm:$0xff] %v9089
      %9107 = vxpose.xlu0.b32.start [1/16] %v7200, 128
      %9108 = vxpose.xlu0.b32.cont [2/16] %v7201, 128
      %9109 = vxpose.xlu0.b32.cont [3/16] %v7202, 128
      %9110 = vxpose.xlu0.b32.cont [4/16] %v7203, 128
      %9111 = vxpose.xlu0.b32.cont [5/16] %v7204, 128
      %9112 = vxpose.xlu0.b32.cont [6/16] %v7205, 128
      %9113 = vxpose.xlu0.b32.cont [7/16] %v7206, 128
      %9114 = vxpose.xlu0.b32.cont [8/16] %v7207, 128
      %9115 = vxpose.xlu0.b32.cont [9/16] %v7208, 128
      %9116 = vxpose.xlu0.b32.cont [10/16] %v7209, 128
      %9117 = vxpose.xlu0.b32.cont [11/16] %v7210, 128
      %9118 = vxpose.xlu0.b32.cont [12/16] %v7211, 128
      %9119 = vxpose.xlu0.b32.cont [13/16] %v7212, 128
      %9120 = vxpose.xlu0.b32.cont [14/16] %v7213, 128
      %9121 = vxpose.xlu0.b32.cont [15/16] %v7214, 128
      %9122 = vxpose.xlu0.b32.end [16/16] %v7215, 128
      %v9123 = vpop.trf.xlu0
      %v9124 = vpop.trf.xlu0
      %v9125 = vpop.trf.xlu0
      %v9126 = vpop.trf.xlu0
      %v9127 = vpop.trf.xlu0
      %v9128 = vpop.trf.xlu0
      %v9129 = vpop.trf.xlu0
      %v9130 = vpop.trf.xlu0
      %v9131 = vpop.trf.xlu0
      %v9132 = vpop.trf.xlu0
      %v9133 = vpop.trf.xlu0
      %v9134 = vpop.trf.xlu0
      %v9135 = vpop.trf.xlu0
      %v9136 = vpop.trf.xlu0
      %v9137 = vpop.trf.xlu0
      %v9138 = vpop.trf.xlu0
      %9139 = vxpose.xlu0.b32.start [1/16] %v7216, 128
      %9140 = vxpose.xlu0.b32.cont [2/16] %v7217, 128
      %9141 = vxpose.xlu0.b32.cont [3/16] %v7218, 128
      %9142 = vxpose.xlu0.b32.cont [4/16] %v7219, 128
      %9143 = vxpose.xlu0.b32.cont [5/16] %v7220, 128
      %9144 = vxpose.xlu0.b32.cont [6/16] %v7221, 128
      %9145 = vxpose.xlu0.b32.cont [7/16] %v7222, 128
      %9146 = vxpose.xlu0.b32.cont [8/16] %v7223, 128
      %9147 = vxpose.xlu0.b32.cont [9/16] %v7224, 128
      %9148 = vxpose.xlu0.b32.cont [10/16] %v7225, 128
      %9149 = vxpose.xlu0.b32.cont [11/16] %v7226, 128
      %9150 = vxpose.xlu0.b32.cont [12/16] %v7227, 128
      %9151 = vxpose.xlu0.b32.cont [13/16] %v7228, 128
      %9152 = vxpose.xlu0.b32.cont [14/16] %v7229, 128
      %9153 = vxpose.xlu0.b32.cont [15/16] %v7230, 128
      %9154 = vxpose.xlu0.b32.end [16/16] %v7231, 128
      %v9155 = vpop.trf.xlu0
      %v9156 = vpop.trf.xlu0
      %v9157 = vpop.trf.xlu0
      %v9158 = vpop.trf.xlu0
      %v9159 = vpop.trf.xlu0
      %v9160 = vpop.trf.xlu0
      %v9161 = vpop.trf.xlu0
      %v9162 = vpop.trf.xlu0
      %v9163 = vpop.trf.xlu0
      %v9164 = vpop.trf.xlu0
      %v9165 = vpop.trf.xlu0
      %v9166 = vpop.trf.xlu0
      %v9167 = vpop.trf.xlu0
      %v9168 = vpop.trf.xlu0
      %v9169 = vpop.trf.xlu0
      %v9170 = vpop.trf.xlu0
      %9171 = vst [vmem:[%s467 + $0x20] sm:$0xff] %v9123
      %9172 = vst [vmem:[%s467 + $0x28] sm:$0xff] %v9155
      %9173 = vxpose.xlu0.b32.start [1/16] %v8943, 128
      %9174 = vxpose.xlu0.b32.cont [2/16] %v8944, 128
      %9175 = vxpose.xlu0.b32.cont [3/16] %v8945, 128
      %9176 = vxpose.xlu0.b32.cont [4/16] %v8946, 128
      %9177 = vxpose.xlu0.b32.cont [5/16] %v8947, 128
      %9178 = vxpose.xlu0.b32.cont [6/16] %v8948, 128
      %9179 = vxpose.xlu0.b32.cont [7/16] %v8949, 128
      %9180 = vxpose.xlu0.b32.cont [8/16] %v8950, 128
      %9181 = vxpose.xlu0.b32.cont [9/16] %v8951, 128
      %9182 = vxpose.xlu0.b32.cont [10/16] %v8952, 128
      %9183 = vxpose.xlu0.b32.cont [11/16] %v8953, 128
      %9184 = vxpose.xlu0.b32.cont [12/16] %v8954, 128
      %9185 = vxpose.xlu0.b32.cont [13/16] %v8955, 128
      %9186 = vxpose.xlu0.b32.cont [14/16] %v8956, 128
      %9187 = vxpose.xlu0.b32.cont [15/16] %v8957, 128
      %9188 = vxpose.xlu0.b32.end [16/16] %v8958, 128
      %v9189 = vpop.trf.xlu0
      %v9190 = vpop.trf.xlu0
      %v9191 = vpop.trf.xlu0
      %v9192 = vpop.trf.xlu0
      %v9193 = vpop.trf.xlu0
      %v9194 = vpop.trf.xlu0
      %v9195 = vpop.trf.xlu0
      %v9196 = vpop.trf.xlu0
      %v9197 = vpop.trf.xlu0
      %v9198 = vpop.trf.xlu0
      %v9199 = vpop.trf.xlu0
      %v9200 = vpop.trf.xlu0
      %v9201 = vpop.trf.xlu0
      %v9202 = vpop.trf.xlu0
      %v9203 = vpop.trf.xlu0
      %v9204 = vpop.trf.xlu0
      %9205 = vxpose.xlu0.b32.start [1/16] %v8959, 128
      %9206 = vxpose.xlu0.b32.cont [2/16] %v8960, 128
      %9207 = vxpose.xlu0.b32.cont [3/16] %v8961, 128
      %9208 = vxpose.xlu0.b32.cont [4/16] %v8962, 128
      %9209 = vxpose.xlu0.b32.cont [5/16] %v8963, 128
      %9210 = vxpose.xlu0.b32.cont [6/16] %v8964, 128
      %9211 = vxpose.xlu0.b32.cont [7/16] %v8965, 128
      %9212 = vxpose.xlu0.b32.cont [8/16] %v8966, 128
      %9213 = vxpose.xlu0.b32.cont [9/16] %v8967, 128
      %9214 = vxpose.xlu0.b32.cont [10/16] %v8968, 128
      %9215 = vxpose.xlu0.b32.cont [11/16] %v8969, 128
      %9216 = vxpose.xlu0.b32.cont [12/16] %v8970, 128
      %9217 = vxpose.xlu0.b32.cont [13/16] %v8971, 128
      %9218 = vxpose.xlu0.b32.cont [14/16] %v8972, 128
      %9219 = vxpose.xlu0.b32.cont [15/16] %v8973, 128
      %9220 = vxpose.xlu0.b32.end [16/16] %v8974, 128
      %v9221 = vpop.trf.xlu0
      %v9222 = vpop.trf.xlu0
      %v9223 = vpop.trf.xlu0
      %v9224 = vpop.trf.xlu0
      %v9225 = vpop.trf.xlu0
      %v9226 = vpop.trf.xlu0
      %v9227 = vpop.trf.xlu0
      %v9228 = vpop.trf.xlu0
      %v9229 = vpop.trf.xlu0
      %v9230 = vpop.trf.xlu0
      %v9231 = vpop.trf.xlu0
      %v9232 = vpop.trf.xlu0
      %v9233 = vpop.trf.xlu0
      %v9234 = vpop.trf.xlu0
      %v9235 = vpop.trf.xlu0
      %v9236 = vpop.trf.xlu0
      %9237 = vst [vmem:[%s467 + $0x30] sm:$0xff] %v9189
      %9238 = vst [vmem:[%s467 + $0x38] sm:$0xff] %v9221
      %p9239 = scmp.lt.s32.totalorder %s25, 1
      %s9240 = scalar_select %p9239, %s25, 1
      %s9241 = smul.addr %s9240, 8
      %s9242 = smul.addr %s9241, 8
      %s9243 = scalar_lea.vmem %s14, %s9242
      // Predicated region
      $region77: #{inception_forward.1} parent=75 // pred_check
        %p9244 = pneg %p342
      $region78: #{inception_forward.1} parent=75 // pred_check_branch
        %9246 = sbr.rel (%p9244) target = $region80
      $region79: #{inception_forward.1} parent=75 // pred_region
        _
      $region80: #{inception_forward.1} parent=75 // pred_fallthru
        _
    $region76: #{inception_forward.1} parent=5 // pred_fallthru
      _
    %p9247 = scmp.le.s32.totalorder 2, %s20
    // Predicated region
    $region81: #{inception_forward.1} parent=5 // pred_check
      %p9248 = pneg %p9247
    $region82: #{inception_forward.1} parent=5 // pred_check_branch
      %9250 = sbr.rel (%p9248) target = $region84
    $region83: #{inception_forward.1} parent=5 // pred_region
      %s9251 = ssub.s32 %s20, 2
      // Predicated region
      $region85: #{inception_forward.1} parent=83 // pred_check
        %p9252 = pneg %p348
      $region86: #{inception_forward.1} parent=83 // pred_check_branch
        %9254 = sbr.rel (%p9252) target = $region88
      $region87: #{inception_forward.1} parent=83 // pred_region
        %p9255 = scmp.lt.s32.totalorder %s26, 1
        %s9256 = scalar_select %p9255, %s26, 1
        %s9257 = smul.addr %s9256, 8
        %s9258 = smul.addr %s9257, 8
        %s9259 = scalar_lea.vmem %s14, %s9258
      $region88: #{inception_forward.1} parent=83 // pred_fallthru
        _
    $region84: #{inception_forward.1} parent=5 // pred_fallthru
      _
  $region6: #{inception_forward.1} parent=0 // loop_footer
    %s24 = sadd.s32 1, %s20
  $region7: #{inception_forward.1} parent=0 // loop_footer_branch
    %19 = sbr.rel target = $region3
  $region8: #{inception_forward.1} parent=0 // loop_exit
    _

</llo_original>
